<compile_context>
chip_gen: v5e
topology: v5e:2x2
jax: 0.10.0
libtpu: 0.0.40
codegen_flags: <defaults>
</compile_context>

<pallas_src>
import jax
import jax.numpy as jnp
import numpy as np
from jax.experimental import pallas as pl
from jax.experimental.pallas import tpu as pltpu


def _basic_block_kernel(x_ref, w1_ref, s1_ref, b1_ref, w2_ref, s2_ref, b2_ref,
                        out_ref, pad_ref, slab_ref):
    """One grid step = one batch image.

    x_ref   : (1, H, W, Cp)        bf16  input tile (NHWC, channels padded to Cp)
    w1_ref  : (3, 3*Cp, Cp)        bf16  conv1 weight, kx folded into contraction
    s1_ref  : (1, Cp)              f32   folded BN1 scale  (gamma / sqrt(var+eps))
    b1_ref  : (1, Cp)              f32   folded BN1 bias   (beta - mean*scale)
    w2_ref  : (3, 3*Cp, Cp)        bf16  conv2 weight
    s2_ref  : (1, Cp)              f32   folded BN2 scale
    b2_ref  : (1, Cp)              f32   folded BN2 bias
    out_ref : (1, H, W, Cp)        bf16  output tile
    pad_ref : (H+2, Wp+2, Cp)      bf16  shared haloed scratch (input, then mid act)
    slab_ref: (H+2, Wp, 3*Cp)      bf16  im2col slab (built once per conv)
    """
    H, W, Cp = out_ref.shape[1], out_ref.shape[2], out_ref.shape[3]
    Wp = slab_ref.shape[1]        # W rounded up to a sublane (8) multiple
    Wp2 = pad_ref.shape[1]        # Wp + 2
    dt = pad_ref.dtype

    # --- zero the 1-wide halo (and the W->Wp padding columns) of the shared
    # scratch.  Done every step (cheap) so it is safe under megacore sharding
    # of the parallel batch axis (each core owns its own scratch).
    pad_ref[0] = jnp.zeros((Wp2, Cp), dt)
    pad_ref[H + 1] = jnp.zeros((Wp2, Cp), dt)
    pad_ref[:, 0:1, :] = jnp.zeros((H + 2, 1, Cp), dt)
    pad_ref[:, W + 1:Wp2, :] = jnp.zeros((H + 2, Wp2 - (W + 1), Cp), dt)

    # --- in-kernel halo padding of the input (no wrapper-side jnp.pad pass).
    pad_ref[1:H + 1, 1:W + 1, :] = x_ref[0]

    def build_slab():
        # im2col over kx, built ONCE per conv:
        #   slab[r, w, kx*Cp:(kx+1)*Cp] = pad[r, w+kx, :]
        # Lane-dim slices land on 128-lane boundaries (Cp % 128 == 0).
        for kx in range(3):
            slab_ref[:, :, kx * Cp:(kx + 1) * Cp] = pad_ref[:, kx:kx + Wp, :]

    def conv3x3(w_ref):
        # 3x3 / stride 1 / pad 1 conv = 3 MXU matmuls with K = 3*Cp.
        # slab_ref[ky:ky+H] is an outer-row slice (zero-copy view of the slab).
        acc = jnp.zeros((H, Wp, Cp), jnp.float32)
        for ky in range(3):
            acc = acc + jnp.einsum(
                "hwk,ko->hwo", slab_ref[ky:ky + H], w_ref[ky],
                preferred_element_type=jnp.float32)
        return acc

    # ---- conv1 -> bn1 (folded, f32) -> relu ----
    build_slab()
    y = conv3x3(w1_ref)
    y = jnp.maximum(y * s1_ref[0] + b1_ref[0], 0.0)
    if Wp > W:
        # keep the right halo / padding columns exactly zero for conv2
        col = jax.lax.broadcasted_iota(jnp.int32, (H, Wp, 1), 1)
        y = jnp.where(col < W, y, 0.0)
    # reuse the same haloed scratch for the intermediate activation
    pad_ref[1:H + 1, 1:Wp + 1, :] = y.astype(dt)

    # ---- conv2 -> bn2 (folded) -> + identity residual -> relu ----
    build_slab()
    z = conv3x3(w2_ref)[:, :W, :]
    out = jnp.maximum(z * s2_ref[0] + b2_ref[0] + x_ref[0].astype(jnp.float32),
                      0.0)
    out_ref[0] = out.astype(out_ref.dtype)


def basic_block_pallas(x, w1f, s1, b1, w2f, s2, b2):
    """TPU-native entry point.

    x          : (N, H, W, Cp) bf16, NHWC with channels padded to Cp (mult of 128)
    w1f, w2f   : (3, 3*Cp, Cp) bf16 fused conv weights (kx folded into K)
    s*, b*     : (1, Cp) f32 folded BN scale / bias (zero on padded channels)
    returns    : (N, H, W, Cp) bf16
    """
    N, H, W, Cp = x.shape
    assert Cp % 128 == 0, "channel dim must be lane-padded to a multiple of 128"
    Wp = ((W + 7) // 8) * 8   # sublane-aligned slab width

    const = dict(pipeline_mode=pl.Buffered(1))   # constant blocks: single-buffer

    return pl.pallas_call(
        _basic_block_kernel,
        out_shape=jax.ShapeDtypeStruct((N, H, W, Cp), jnp.bfloat16),
        grid_spec=pltpu.PrefetchScalarGridSpec(
            num_scalar_prefetch=0,
            grid=(N,),
            in_specs=[
                pl.BlockSpec((1, H, W, Cp), lambda n: (n, 0, 0, 0)),
                pl.BlockSpec((3, 3 * Cp, Cp), lambda n: (0, 0, 0), **const),
                pl.BlockSpec((1, Cp), lambda n: (0, 0), **const),
                pl.BlockSpec((1, Cp), lambda n: (0, 0), **const),
                pl.BlockSpec((3, 3 * Cp, Cp), lambda n: (0, 0, 0), **const),
                pl.BlockSpec((1, Cp), lambda n: (0, 0), **const),
                pl.BlockSpec((1, Cp), lambda n: (0, 0), **const),
            ],
            out_specs=pl.BlockSpec((1, H, W, Cp), lambda n: (n, 0, 0, 0)),
            scratch_shapes=[
                pltpu.VMEM((H + 2, Wp + 2, Cp), jnp.bfloat16),   # haloed input/mid
                pltpu.VMEM((H + 2, Wp, 3 * Cp), jnp.bfloat16),   # im2col slab
            ],
        ),
        compiler_params=pltpu.CompilerParams(
            dimension_semantics=("parallel",)),
    )(x, w1f, s1, b1, w2f, s2, b2)


def basic_block_nchw(x_nchw, w1, g1, be1, m1, v1, w2, g2, be2, m2, v2,
                     eps=1e-5):
    """Compatibility adapter for the PyTorch (NCHW, f32) calling convention.

    The layout glue here (NCHW->NHWC, channel pad, bf16 cast, and the inverse)
    is a one-off for parity with the PyTorch spec; a TPU model should keep
    activations NHWC/bf16 and call basic_block_pallas directly.
    """
    N, C, H, W = x_nchw.shape
    assert w1.shape == (C, C, 3, 3) and w2.shape == (C, C, 3, 3), (
        "identity residual requires inplanes == planes, stride=1, no downsample")

    LANE = 128
    Cp = ((C + LANE - 1) // LANE) * LANE

    x = jnp.transpose(x_nchw, (0, 2, 3, 1))                       # NHWC
    x = jnp.pad(x, ((0, 0), (0, 0), (0, 0), (0, Cp - C)))
    x = x.astype(jnp.bfloat16)

    def fuse_weight(w):
        # OIHW -> HWIO, zero-pad both channel dims to Cp, fold kx into K:
        # (3, 3, Cp, Cp) -> (3, 3*Cp, Cp), contraction index = kx*Cp + c_in.
        w_hwio = jnp.transpose(w, (2, 3, 1, 0)).astype(jnp.float32)
        w_hwio = jnp.pad(w_hwio, ((0, 0), (0, 0), (0, Cp - C), (0, Cp - C)))
        return w_hwio.reshape(3, 3 * Cp, Cp).astype(jnp.bfloat16)

    def fold_bn(g, b, m, v):
        s = (g / jnp.sqrt(v + eps)).astype(jnp.float32)
        bias = (b - m * s).astype(jnp.float32)
        # padded channels get scale = 0 AND bias = 0 -> stay zero through the
        # whole block (relu + residual); do not change this invariant.
        s = jnp.pad(s, (0, Cp - C)).reshape(1, Cp)
        bias = jnp.pad(bias, (0, Cp - C)).reshape(1, Cp)
        return s, bias

    w1f, w2f = fuse_weight(w1), fuse_weight(w2)
    s1, b1 = fold_bn(g1, be1, m1, v1)
    s2, b2 = fold_bn(g2, be2, m2, v2)

    out = basic_block_pallas(x, w1f, s1, b1, w2f, s2, b2)   # (N,H,W,Cp) bf16
    return jnp.transpose(out[..., :C].astype(jnp.float32), (0, 3, 1, 2))


# ---------------- pure-JAX reference (correctness check) ----------------
def basic_block_ref(x_nchw, w1, g1, be1, m1, v1, w2, g2, be2, m2, v2, eps=1e-5):
    x = jnp.transpose(x_nchw, (0, 2, 3, 1)).astype(jnp.float32)

    def conv(inp, w):
        w_hwio = jnp.transpose(w, (2, 3, 1, 0)).astype(jnp.float32)
        return jax.lax.conv_general_dilated(
            inp, w_hwio, window_strides=(1, 1), padding="SAME",
            dimension_numbers=("NHWC", "HWIO", "NHWC"))

    def bn(inp, g, b, m, v):
        return (inp - m) / jnp.sqrt(v + eps) * g + b

    out = jnp.maximum(bn(conv(x, w1), g1, be1, m1, v1), 0.0)
    out = bn(conv(out, w2), g2, be2, m2, v2)
    out = jnp.maximum(out + x, 0.0)
    return jnp.transpose(out, (0, 3, 1, 2))


if __name__ == "__main__":
    N, C, H, W = 2, 8, 16, 16   # inplanes == planes, stride=1, no downsample

    key = jax.random.PRNGKey(0)
    ks = jax.random.split(key, 8)

    x = jax.random.normal(ks[0], (N, C, H, W), jnp.float32)

    fan = C * 3 * 3
    w1 = jax.random.normal(ks[1], (C, C, 3, 3), jnp.float32) * (2.0 / fan) ** 0.5
    w2 = jax.random.normal(ks[2], (C, C, 3, 3), jnp.float32) * (2.0 / fan) ** 0.5

    g1 = 1.0 + 0.1 * jax.random.normal(ks[3], (C,), jnp.float32)
    be1 = 0.1 * jax.random.normal(ks[4], (C,), jnp.float32)
    m1 = 0.05 * jax.random.normal(ks[5], (C,), jnp.float32)
    v1 = 1.0 + 0.1 * jnp.abs(jax.random.normal(ks[6], (C,), jnp.float32))

    g2 = jnp.ones((C,), jnp.float32)
    be2 = jnp.zeros((C,), jnp.float32)
    m2 = 0.05 * jax.random.normal(ks[7], (C,), jnp.float32)
    v2 = jnp.ones((C,), jnp.float32)

    out = basic_block_nchw(x, w1, g1, be1, m1, v1, w2, g2, be2, m2, v2)
    out = jax.block_until_ready(out)

    ref = basic_block_ref(x, w1, g1, be1, m1, v1, w2, g2, be2, m2, v2)
    # tolerance reflects bf16 MXU operands, bf16 intermediate/outputs and a
    # bf16 residual add (f32 accumulation everywhere) — precision tradeoff,
    # not a bug.
    np.testing.assert_allclose(np.asarray(out), np.asarray(ref),
                               rtol=5e-2, atol=5e-2)

    print("KERNEL_OK")
</pallas_src>

<mosaic_0001>
module attributes {stable_mosaic.version = 11 : i64} {
  func.func @_basic_block_kernel(%arg0: i32, %arg1: memref<1x16x16x128xbf16, #tpu.memory_space<vmem>>, %arg2: memref<3x384x128xbf16, #tpu.memory_space<vmem>>, %arg3: memref<1x128xf32, #tpu.memory_space<vmem>>, %arg4: memref<1x128xf32, #tpu.memory_space<vmem>>, %arg5: memref<3x384x128xbf16, #tpu.memory_space<vmem>>, %arg6: memref<1x128xf32, #tpu.memory_space<vmem>>, %arg7: memref<1x128xf32, #tpu.memory_space<vmem>>, %arg8: memref<1x16x16x128xbf16, #tpu.memory_space<vmem>>, %arg9: memref<18x18x128xbf16, #tpu.memory_space<vmem>>, %arg10: memref<18x16x384xbf16, #tpu.memory_space<vmem>>) attributes {dimension_semantics = [#tpu.dimension_semantics<parallel>], iteration_bounds = array<i64: 2>, scalar_prefetch = 0 : i64, scratch_operands = 2 : i64, tpu.core_type = #tpu.core_type<tc>, window_params = [{transform_indices = @transform_0, window_bounds = array<i64: 1, 16, 16, 128>}, {pipeline_mode = #tpu.pipeline_mode<synchronous>, transform_indices = @transform_1, window_bounds = array<i64: 3, 384, 128>}, {pipeline_mode = #tpu.pipeline_mode<synchronous>, transform_indices = @transform_2, window_bounds = array<i64: 1, 128>}, {pipeline_mode = #tpu.pipeline_mode<synchronous>, transform_indices = @transform_3, window_bounds = array<i64: 1, 128>}, {pipeline_mode = #tpu.pipeline_mode<synchronous>, transform_indices = @transform_4, window_bounds = array<i64: 3, 384, 128>}, {pipeline_mode = #tpu.pipeline_mode<synchronous>, transform_indices = @transform_5, window_bounds = array<i64: 1, 128>}, {pipeline_mode = #tpu.pipeline_mode<synchronous>, transform_indices = @transform_6, window_bounds = array<i64: 1, 128>}, {transform_indices = @transform_7, window_bounds = array<i64: 1, 16, 16, 128>}]} {
    %cst = arith.constant 0.000000e+00 : bf16
    %0 = vector.broadcast %cst : bf16 to vector<18x128xbf16>
    %c0 = arith.constant 0 : index
    %c0_0 = arith.constant 0 : index
    %c0_1 = arith.constant 0 : index
    %1 = vector.load %arg9[%c0, %c0_0, %c0_1] : memref<18x18x128xbf16, #tpu.memory_space<vmem>>, vector<1x18x128xbf16>
    %2 = vector.shape_cast %1 : vector<1x18x128xbf16> to vector<18x128xbf16>
    %3 = vector.shape_cast %0 : vector<18x128xbf16> to vector<1x18x128xbf16>
    tpu.vector_store %arg9[%c0, %c0_0, %c0_1], %3 {strides = array<i32>} : memref<18x18x128xbf16, #tpu.memory_space<vmem>>, vector<1x18x128xbf16>,
    %cst_2 = arith.constant 0.000000e+00 : bf16
    %4 = vector.broadcast %cst_2 : bf16 to vector<18x128xbf16>
    %c17 = arith.constant 17 : index
    %c0_3 = arith.constant 0 : index
    %c0_4 = arith.constant 0 : index
    %5 = vector.load %arg9[%c17, %c0_3, %c0_4] : memref<18x18x128xbf16, #tpu.memory_space<vmem>>, vector<1x18x128xbf16>
    %6 = vector.shape_cast %5 : vector<1x18x128xbf16> to vector<18x128xbf16>
    %7 = vector.shape_cast %4 : vector<18x128xbf16> to vector<1x18x128xbf16>
    tpu.vector_store %arg9[%c17, %c0_3, %c0_4], %7 {strides = array<i32>} : memref<18x18x128xbf16, #tpu.memory_space<vmem>>, vector<1x18x128xbf16>,
    %cst_5 = arith.constant 0.000000e+00 : bf16
    %8 = vector.broadcast %cst_5 : bf16 to vector<18x1x128xbf16>
    %c0_6 = arith.constant 0 : index
    %c0_7 = arith.constant 0 : index
    %c0_8 = arith.constant 0 : index
    %9 = vector.load %arg9[%c0_6, %c0_7, %c0_8] : memref<18x18x128xbf16, #tpu.memory_space<vmem>>, vector<18x1x128xbf16>
    tpu.vector_store %arg9[%c0_6, %c0_7, %c0_8], %8 {strides = array<i32>} : memref<18x18x128xbf16, #tpu.memory_space<vmem>>, vector<18x1x128xbf16>,
    %cst_9 = arith.constant 0.000000e+00 : bf16
    %10 = vector.broadcast %cst_9 : bf16 to vector<18x1x128xbf16>
    %c0_10 = arith.constant 0 : index
    %c17_11 = arith.constant 17 : index
    %c0_12 = arith.constant 0 : index
    %11 = vector.load %arg9[%c0_10, %c17_11, %c0_12] : memref<18x18x128xbf16, #tpu.memory_space<vmem>>, vector<18x1x128xbf16>
    tpu.vector_store %arg9[%c0_10, %c17_11, %c0_12], %10 {strides = array<i32>} : memref<18x18x128xbf16, #tpu.memory_space<vmem>>, vector<18x1x128xbf16>,
    %c0_13 = arith.constant 0 : index
    %c0_14 = arith.constant 0 : index
    %c0_15 = arith.constant 0 : index
    %c0_16 = arith.constant 0 : index
    %12 = vector.load %arg1[%c0_13, %c0_14, %c0_15, %c0_16] : memref<1x16x16x128xbf16, #tpu.memory_space<vmem>>, vector<1x16x16x128xbf16>
    %13 = vector.shape_cast %12 : vector<1x16x16x128xbf16> to vector<16x16x128xbf16>
    %c1 = arith.constant 1 : index
    %c1_17 = arith.constant 1 : index
    %c0_18 = arith.constant 0 : index
    %14 = vector.load %arg9[%c1, %c1_17, %c0_18] : memref<18x18x128xbf16, #tpu.memory_space<vmem>>, vector<16x16x128xbf16>
    tpu.vector_store %arg9[%c1, %c1_17, %c0_18], %13 {strides = array<i32>} : memref<18x18x128xbf16, #tpu.memory_space<vmem>>, vector<16x16x128xbf16>,
    %c0_19 = arith.constant 0 : index
    %c0_20 = arith.constant 0 : index
    %c0_21 = arith.constant 0 : index
    %15 = vector.load %arg9[%c0_19, %c0_20, %c0_21] : memref<18x18x128xbf16, #tpu.memory_space<vmem>>, vector<18x16x128xbf16>
    %c0_22 = arith.constant 0 : index
    %c0_23 = arith.constant 0 : index
    %c0_24 = arith.constant 0 : index
    %16 = vector.load %arg10[%c0_22, %c0_23, %c0_24] : memref<18x16x384xbf16, #tpu.memory_space<vmem>>, vector<18x16x128xbf16>
    tpu.vector_store %arg10[%c0_22, %c0_23, %c0_24], %15 {strides = array<i32>} : memref<18x16x384xbf16, #tpu.memory_space<vmem>>, vector<18x16x128xbf16>,
    %c0_25 = arith.constant 0 : index
    %c1_26 = arith.constant 1 : index
    %c0_27 = arith.constant 0 : index
    %17 = vector.load %arg9[%c0_25, %c1_26, %c0_27] : memref<18x18x128xbf16, #tpu.memory_space<vmem>>, vector<18x16x128xbf16>
    %c0_28 = arith.constant 0 : index
    %c0_29 = arith.constant 0 : index
    %c128 = arith.constant 128 : index
    %18 = vector.load %arg10[%c0_28, %c0_29, %c128] : memref<18x16x384xbf16, #tpu.memory_space<vmem>>, vector<18x16x128xbf16>
    tpu.vector_store %arg10[%c0_28, %c0_29, %c128], %17 {strides = array<i32>} : memref<18x16x384xbf16, #tpu.memory_space<vmem>>, vector<18x16x128xbf16>,
    %c0_30 = arith.constant 0 : index
    %c2 = arith.constant 2 : index
    %c0_31 = arith.constant 0 : index
    %19 = vector.load %arg9[%c0_30, %c2, %c0_31] : memref<18x18x128xbf16, #tpu.memory_space<vmem>>, vector<18x16x128xbf16>
    %c0_32 = arith.constant 0 : index
    %c0_33 = arith.constant 0 : index
    %c256 = arith.constant 256 : index
    %20 = vector.load %arg10[%c0_32, %c0_33, %c256] : memref<18x16x384xbf16, #tpu.memory_space<vmem>>, vector<18x16x128xbf16>
    tpu.vector_store %arg10[%c0_32, %c0_33, %c256], %19 {strides = array<i32>} : memref<18x16x384xbf16, #tpu.memory_space<vmem>>, vector<18x16x128xbf16>,
    %cst_34 = arith.constant 0.000000e+00 : f32
    %21 = vector.broadcast %cst_34 : f32 to vector<16x16x128xf32>
    %c0_35 = arith.constant 0 : index
    %c0_36 = arith.constant 0 : index
    %c0_37 = arith.constant 0 : index
    %22 = vector.load %arg10[%c0_35, %c0_36, %c0_37] : memref<18x16x384xbf16, #tpu.memory_space<vmem>>, vector<16x16x384xbf16>
    %c0_38 = arith.constant 0 : index
    %c0_39 = arith.constant 0 : index
    %c0_40 = arith.constant 0 : index
    %23 = vector.load %arg2[%c0_38, %c0_39, %c0_40] : memref<3x384x128xbf16, #tpu.memory_space<vmem>>, vector<1x384x128xbf16>
    %24 = vector.shape_cast %23 : vector<1x384x128xbf16> to vector<384x128xbf16>
    "tpu.trace_start"() <{level = 10 : i32, message = "hwk,ko->hwo"}> : () -> ()
    %cst_41 = arith.constant dense<0.000000e+00> : vector<16x16x128xf32>
    %25 = tpu.matmul %22, %24, %cst_41 {dimension_numbers = #tpu.dot_dimension_numbers<[2], [0], [0, 1], [1], [0, 0, 0, 1, 1, 1], [], []>} : vector<16x16x384xbf16>, vector<384x128xbf16>, vector<16x16x128xf32> -> vector<16x16x128xf32>
    "tpu.trace_stop"() : () -> ()
    %26 = arith.addf %21, %25 : vector<16x16x128xf32>
    %c1_42 = arith.constant 1 : index
    %c0_43 = arith.constant 0 : index
    %c0_44 = arith.constant 0 : index
    %27 = vector.load %arg10[%c1_42, %c0_43, %c0_44] : memref<18x16x384xbf16, #tpu.memory_space<vmem>>, vector<16x16x384xbf16>
    %c1_45 = arith.constant 1 : index
    %c0_46 = arith.constant 0 : index
    %c0_47 = arith.constant 0 : index
    %28 = vector.load %arg2[%c1_45, %c0_46, %c0_47] : memref<3x384x128xbf16, #tpu.memory_space<vmem>>, vector<1x384x128xbf16>
    %29 = vector.shape_cast %28 : vector<1x384x128xbf16> to vector<384x128xbf16>
    "tpu.trace_start"() <{level = 10 : i32, message = "hwk,ko->hwo"}> : () -> ()
    %cst_48 = arith.constant dense<0.000000e+00> : vector<16x16x128xf32>
    %30 = tpu.matmul %27, %29, %cst_48 {dimension_numbers = #tpu.dot_dimension_numbers<[2], [0], [0, 1], [1], [0, 0, 0, 1, 1, 1], [], []>} : vector<16x16x384xbf16>, vector<384x128xbf16>, vector<16x16x128xf32> -> vector<16x16x128xf32>
    "tpu.trace_stop"() : () -> ()
    %31 = arith.addf %26, %30 : vector<16x16x128xf32>
    %c2_49 = arith.constant 2 : index
    %c0_50 = arith.constant 0 : index
    %c0_51 = arith.constant 0 : index
    %32 = vector.load %arg10[%c2_49, %c0_50, %c0_51] : memref<18x16x384xbf16, #tpu.memory_space<vmem>>, vector<16x16x384xbf16>
    %c2_52 = arith.constant 2 : index
    %c0_53 = arith.constant 0 : index
    %c0_54 = arith.constant 0 : index
    %33 = vector.load %arg2[%c2_52, %c0_53, %c0_54] : memref<3x384x128xbf16, #tpu.memory_space<vmem>>, vector<1x384x128xbf16>
    %34 = vector.shape_cast %33 : vector<1x384x128xbf16> to vector<384x128xbf16>
    "tpu.trace_start"() <{level = 10 : i32, message = "hwk,ko->hwo"}> : () -> ()
    %cst_55 = arith.constant dense<0.000000e+00> : vector<16x16x128xf32>
    %35 = tpu.matmul %32, %34, %cst_55 {dimension_numbers = #tpu.dot_dimension_numbers<[2], [0], [0, 1], [1], [0, 0, 0, 1, 1, 1], [], []>} : vector<16x16x384xbf16>, vector<384x128xbf16>, vector<16x16x128xf32> -> vector<16x16x128xf32>
    "tpu.trace_stop"() : () -> ()
    %36 = arith.addf %31, %35 : vector<16x16x128xf32>
    %c0_56 = arith.constant 0 : index
    %c0_57 = arith.constant 0 : index
    %37 = vector.load %arg3[%c0_56, %c0_57] : memref<1x128xf32, #tpu.memory_space<vmem>>, vector<1x128xf32>
    %38 = vector.shape_cast %37 : vector<1x128xf32> to vector<128xf32>
    %39 = vector.shape_cast %38 : vector<128xf32> to vector<1x1x128xf32>
    %40 = vector.broadcast %39 : vector<1x1x128xf32> to vector<16x16x128xf32>
    %41 = arith.mulf %36, %40 : vector<16x16x128xf32>
    %c0_58 = arith.constant 0 : index
    %c0_59 = arith.constant 0 : index
    %42 = vector.load %arg4[%c0_58, %c0_59] : memref<1x128xf32, #tpu.memory_space<vmem>>, vector<1x128xf32>
    %43 = vector.shape_cast %42 : vector<1x128xf32> to vector<128xf32>
    %44 = vector.shape_cast %43 : vector<128xf32> to vector<1x1x128xf32>
    %45 = vector.broadcast %44 : vector<1x1x128xf32> to vector<16x16x128xf32>
    %46 = arith.addf %41, %45 : vector<16x16x128xf32>
    %cst_60 = arith.constant 0.000000e+00 : f32
    %47 = vector.broadcast %cst_60 : f32 to vector<16x16x128xf32>
    %48 = arith.maximumf %46, %47 : vector<16x16x128xf32>
    %49 = arith.truncf %48 : vector<16x16x128xf32> to vector<16x16x128xbf16>
    %c1_61 = arith.constant 1 : index
    %c1_62 = arith.constant 1 : index
    %c0_63 = arith.constant 0 : index
    %50 = vector.load %arg9[%c1_61, %c1_62, %c0_63] : memref<18x18x128xbf16, #tpu.memory_space<vmem>>, vector<16x16x128xbf16>
    tpu.vector_store %arg9[%c1_61, %c1_62, %c0_63], %49 {strides = array<i32>} : memref<18x18x128xbf16, #tpu.memory_space<vmem>>, vector<16x16x128xbf16>,
    %c0_64 = arith.constant 0 : index
    %c0_65 = arith.constant 0 : index
    %c0_66 = arith.constant 0 : index
    %51 = vector.load %arg9[%c0_64, %c0_65, %c0_66] : memref<18x18x128xbf16, #tpu.memory_space<vmem>>, vector<18x16x128xbf16>
    %c0_67 = arith.constant 0 : index
    %c0_68 = arith.constant 0 : index
    %c0_69 = arith.constant 0 : index
    %52 = vector.load %arg10[%c0_67, %c0_68, %c0_69] : memref<18x16x384xbf16, #tpu.memory_space<vmem>>, vector<18x16x128xbf16>
    tpu.vector_store %arg10[%c0_67, %c0_68, %c0_69], %51 {strides = array<i32>} : memref<18x16x384xbf16, #tpu.memory_space<vmem>>, vector<18x16x128xbf16>,
    %c0_70 = arith.constant 0 : index
    %c1_71 = arith.constant 1 : index
    %c0_72 = arith.constant 0 : index
    %53 = vector.load %arg9[%c0_70, %c1_71, %c0_72] : memref<18x18x128xbf16, #tpu.memory_space<vmem>>, vector<18x16x128xbf16>
    %c0_73 = arith.constant 0 : index
    %c0_74 = arith.constant 0 : index
    %c128_75 = arith.constant 128 : index
    %54 = vector.load %arg10[%c0_73, %c0_74, %c128_75] : memref<18x16x384xbf16, #tpu.memory_space<vmem>>, vector<18x16x128xbf16>
    tpu.vector_store %arg10[%c0_73, %c0_74, %c128_75], %53 {strides = array<i32>} : memref<18x16x384xbf16, #tpu.memory_space<vmem>>, vector<18x16x128xbf16>,
    %c0_76 = arith.constant 0 : index
    %c2_77 = arith.constant 2 : index
    %c0_78 = arith.constant 0 : index
    %55 = vector.load %arg9[%c0_76, %c2_77, %c0_78] : memref<18x18x128xbf16, #tpu.memory_space<vmem>>, vector<18x16x128xbf16>
    %c0_79 = arith.constant 0 : index
    %c0_80 = arith.constant 0 : index
    %c256_81 = arith.constant 256 : index
    %56 = vector.load %arg10[%c0_79, %c0_80, %c256_81] : memref<18x16x384xbf16, #tpu.memory_space<vmem>>, vector<18x16x128xbf16>
    tpu.vector_store %arg10[%c0_79, %c0_80, %c256_81], %55 {strides = array<i32>} : memref<18x16x384xbf16, #tpu.memory_space<vmem>>, vector<18x16x128xbf16>,
    %cst_82 = arith.constant 0.000000e+00 : f32
    %57 = vector.broadcast %cst_82 : f32 to vector<16x16x128xf32>
    %c0_83 = arith.constant 0 : index
    %c0_84 = arith.constant 0 : index
    %c0_85 = arith.constant 0 : index
    %58 = vector.load %arg10[%c0_83, %c0_84, %c0_85] : memref<18x16x384xbf16, #tpu.memory_space<vmem>>, vector<16x16x384xbf16>
    %c0_86 = arith.constant 0 : index
    %c0_87 = arith.constant 0 : index
    %c0_88 = arith.constant 0 : index
    %59 = vector.load %arg5[%c0_86, %c0_87, %c0_88] : memref<3x384x128xbf16, #tpu.memory_space<vmem>>, vector<1x384x128xbf16>
    %60 = vector.shape_cast %59 : vector<1x384x128xbf16> to vector<384x128xbf16>
    "tpu.trace_start"() <{level = 10 : i32, message = "hwk,ko->hwo"}> : () -> ()
    %cst_89 = arith.constant dense<0.000000e+00> : vector<16x16x128xf32>
    %61 = tpu.matmul %58, %60, %cst_89 {dimension_numbers = #tpu.dot_dimension_numbers<[2], [0], [0, 1], [1], [0, 0, 0, 1, 1, 1], [], []>} : vector<16x16x384xbf16>, vector<384x128xbf16>, vector<16x16x128xf32> -> vector<16x16x128xf32>
    "tpu.trace_stop"() : () -> ()
    %62 = arith.addf %57, %61 : vector<16x16x128xf32>
    %c1_90 = arith.constant 1 : index
    %c0_91 = arith.constant 0 : index
    %c0_92 = arith.constant 0 : index
    %63 = vector.load %arg10[%c1_90, %c0_91, %c0_92] : memref<18x16x384xbf16, #tpu.memory_space<vmem>>, vector<16x16x384xbf16>
    %c1_93 = arith.constant 1 : index
    %c0_94 = arith.constant 0 : index
    %c0_95 = arith.constant 0 : index
    %64 = vector.load %arg5[%c1_93, %c0_94, %c0_95] : memref<3x384x128xbf16, #tpu.memory_space<vmem>>, vector<1x384x128xbf16>
    %65 = vector.shape_cast %64 : vector<1x384x128xbf16> to vector<384x128xbf16>
    "tpu.trace_start"() <{level = 10 : i32, message = "hwk,ko->hwo"}> : () -> ()
    %cst_96 = arith.constant dense<0.000000e+00> : vector<16x16x128xf32>
    %66 = tpu.matmul %63, %65, %cst_96 {dimension_numbers = #tpu.dot_dimension_numbers<[2], [0], [0, 1], [1], [0, 0, 0, 1, 1, 1], [], []>} : vector<16x16x384xbf16>, vector<384x128xbf16>, vector<16x16x128xf32> -> vector<16x16x128xf32>
    "tpu.trace_stop"() : () -> ()
    %67 = arith.addf %62, %66 : vector<16x16x128xf32>
    %c2_97 = arith.constant 2 : index
    %c0_98 = arith.constant 0 : index
    %c0_99 = arith.constant 0 : index
    %68 = vector.load %arg10[%c2_97, %c0_98, %c0_99] : memref<18x16x384xbf16, #tpu.memory_space<vmem>>, vector<16x16x384xbf16>
    %c2_100 = arith.constant 2 : index
    %c0_101 = arith.constant 0 : index
    %c0_102 = arith.constant 0 : index
    %69 = vector.load %arg5[%c2_100, %c0_101, %c0_102] : memref<3x384x128xbf16, #tpu.memory_space<vmem>>, vector<1x384x128xbf16>
    %70 = vector.shape_cast %69 : vector<1x384x128xbf16> to vector<384x128xbf16>
    "tpu.trace_start"() <{level = 10 : i32, message = "hwk,ko->hwo"}> : () -> ()
    %cst_103 = arith.constant dense<0.000000e+00> : vector<16x16x128xf32>
    %71 = tpu.matmul %68, %70, %cst_103 {dimension_numbers = #tpu.dot_dimension_numbers<[2], [0], [0, 1], [1], [0, 0, 0, 1, 1, 1], [], []>} : vector<16x16x384xbf16>, vector<384x128xbf16>, vector<16x16x128xf32> -> vector<16x16x128xf32>
    "tpu.trace_stop"() : () -> ()
    %72 = arith.addf %67, %71 : vector<16x16x128xf32>
    %c0_104 = arith.constant 0 : index
    %c0_105 = arith.constant 0 : index
    %73 = vector.load %arg6[%c0_104, %c0_105] : memref<1x128xf32, #tpu.memory_space<vmem>>, vector<1x128xf32>
    %74 = vector.shape_cast %73 : vector<1x128xf32> to vector<128xf32>
    %75 = vector.shape_cast %74 : vector<128xf32> to vector<1x1x128xf32>
    %76 = vector.broadcast %75 : vector<1x1x128xf32> to vector<16x16x128xf32>
    %77 = arith.mulf %72, %76 : vector<16x16x128xf32>
    %c0_106 = arith.constant 0 : index
    %c0_107 = arith.constant 0 : index
    %78 = vector.load %arg7[%c0_106, %c0_107] : memref<1x128xf32, #tpu.memory_space<vmem>>, vector<1x128xf32>
    %79 = vector.shape_cast %78 : vector<1x128xf32> to vector<128xf32>
    %80 = vector.shape_cast %79 : vector<128xf32> to vector<1x1x128xf32>
    %81 = vector.broadcast %80 : vector<1x1x128xf32> to vector<16x16x128xf32>
    %82 = arith.addf %77, %81 : vector<16x16x128xf32>
    %c0_108 = arith.constant 0 : index
    %c0_109 = arith.constant 0 : index
    %c0_110 = arith.constant 0 : index
    %c0_111 = arith.constant 0 : index
    %83 = vector.load %arg1[%c0_108, %c0_109, %c0_110, %c0_111] : memref<1x16x16x128xbf16, #tpu.memory_space<vmem>>, vector<1x16x16x128xbf16>
    %84 = vector.shape_cast %83 : vector<1x16x16x128xbf16> to vector<16x16x128xbf16>
    %85 = arith.extf %84 : vector<16x16x128xbf16> to vector<16x16x128xf32>
    %86 = arith.addf %82, %85 : vector<16x16x128xf32>
    %cst_112 = arith.constant 0.000000e+00 : f32
    %87 = vector.broadcast %cst_112 : f32 to vector<16x16x128xf32>
    %88 = arith.maximumf %86, %87 : vector<16x16x128xf32>
    %89 = arith.truncf %88 : vector<16x16x128xf32> to vector<16x16x128xbf16>
    %c0_113 = arith.constant 0 : index
    %c0_114 = arith.constant 0 : index
    %c0_115 = arith.constant 0 : index
    %c0_116 = arith.constant 0 : index
    %90 = vector.load %arg8[%c0_113, %c0_114, %c0_115, %c0_116] : memref<1x16x16x128xbf16, #tpu.memory_space<vmem>>, vector<1x16x16x128xbf16>
    %91 = vector.shape_cast %90 : vector<1x16x16x128xbf16> to vector<16x16x128xbf16>
    %92 = vector.shape_cast %89 : vector<16x16x128xbf16> to vector<1x16x16x128xbf16>
    tpu.vector_store %arg8[%c0_113, %c0_114, %c0_115, %c0_116], %92 {strides = array<i32>} : memref<1x16x16x128xbf16, #tpu.memory_space<vmem>>, vector<1x16x16x128xbf16>,
    return
  }
  func.func @transform_0(%arg0: i32) -> (i32, i32, i32, i32) {
    %c0_i32 = arith.constant 0 : i32
    %c0_i32_0 = arith.constant 0 : i32
    %c0_i32_1 = arith.constant 0 : i32
    %c0_i32_2 = arith.constant 0 : i32
    return %arg0, %c0_i32, %c0_i32_0, %c0_i32_1 : i32, i32, i32, i32
  }
  func.func @transform_1(%arg0: i32) -> (i32, i32, i32) {
    %c0_i32 = arith.constant 0 : i32
    %c0_i32_0 = arith.constant 0 : i32
    %c0_i32_1 = arith.constant 0 : i32
    %c0_i32_2 = arith.constant 0 : i32
    return %c0_i32, %c0_i32_0, %c0_i32_1 : i32, i32, i32
  }
  func.func @transform_2(%arg0: i32) -> (i32, i32) {
    %c0_i32 = arith.constant 0 : i32
    %c0_i32_0 = arith.constant 0 : i32
    %c0_i32_1 = arith.constant 0 : i32
    return %c0_i32, %c0_i32_0 : i32, i32
  }
  func.func @transform_3(%arg0: i32) -> (i32, i32) {
    %c0_i32 = arith.constant 0 : i32
    %c0_i32_0 = arith.constant 0 : i32
    %c0_i32_1 = arith.constant 0 : i32
    return %c0_i32, %c0_i32_0 : i32, i32
  }
  func.func @transform_4(%arg0: i32) -> (i32, i32, i32) {
    %c0_i32 = arith.constant 0 : i32
    %c0_i32_0 = arith.constant 0 : i32
    %c0_i32_1 = arith.constant 0 : i32
    %c0_i32_2 = arith.constant 0 : i32
    return %c0_i32, %c0_i32_0, %c0_i32_1 : i32, i32, i32
  }
  func.func @transform_5(%arg0: i32) -> (i32, i32) {
    %c0_i32 = arith.constant 0 : i32
    %c0_i32_0 = arith.constant 0 : i32
    %c0_i32_1 = arith.constant 0 : i32
    return %c0_i32, %c0_i32_0 : i32, i32
  }
  func.func @transform_6(%arg0: i32) -> (i32, i32) {
    %c0_i32 = arith.constant 0 : i32
    %c0_i32_0 = arith.constant 0 : i32
    %c0_i32_1 = arith.constant 0 : i32
    return %c0_i32, %c0_i32_0 : i32, i32
  }
  func.func @transform_7(%arg0: i32) -> (i32, i32, i32, i32) {
    %c0_i32 = arith.constant 0 : i32
    %c0_i32_0 = arith.constant 0 : i32
    %c0_i32_1 = arith.constant 0 : i32
    %c0_i32_2 = arith.constant 0 : i32
    return %arg0, %c0_i32, %c0_i32_0, %c0_i32_1 : i32, i32, i32, i32
  }
}

</mosaic_0001>

<llo_original>
// kernel: tpu_custom_call.1
$region0: #{tpu_custom_call.1}
  #allocation0 [shape = 'u32[]', space=smem, size = 0x4, offset = 0x4, fixed_abs, tag = 'smem constant byte address 0x4 - core index']
  #allocation1 [shape = 'u32[72,128]{1,0:T(1,128)}', space=vmem, size = 0x9000, scoped, tag = 'internal scratch']
  #allocation2 [shape = 'bf16[18,18,128]{2,1,0:T(8,128)(2,1)}', space=vmem, size = 0x1b000, scoped, tag = 'scratch operand']
  #allocation3 [shape = 'bf16[18,16,384]{2,1,0:T(8,128)(2,1)}', space=vmem, size = 0x36000, scoped, tag = 'scratch operand']
  %s0 = inlined_call_operand.hbm [shape: bf16[2,16,16,128], index: 0, kind: input, shape index: {}]
  %s1 = inlined_call_operand.hbm [shape: bf16[3,384,128], index: 1, kind: input, shape index: {}]
  %s2 = inlined_call_operand.vmem [shape: f32[1,128], index: 2, kind: input, shape index: {}]
  %s3 = inlined_call_operand.vmem [shape: f32[1,128], index: 3, kind: input, shape index: {}]
  %s4 = inlined_call_operand.hbm [shape: bf16[3,384,128], index: 4, kind: input, shape index: {}]
  %s5 = inlined_call_operand.vmem [shape: f32[1,128], index: 5, kind: input, shape index: {}]
  %s6 = inlined_call_operand.vmem [shape: f32[1,128], index: 6, kind: input, shape index: {}]
  %s7 = inlined_call_operand.hbm [shape: bf16[2,16,16,128], index: 7, kind: output, shape index: {}]
  %s8 = sld [smem:[#allocation0]]
  $region73: #{tpu_custom_call.1} parent=0
    _
  %s10 = ssub.s32 1, %s8
  %s11 = scalar_select 0, %s10, %s8
  $region1: #{tpu_custom_call.1} parent=0
    #allocation4 [shape = 'u8[131072]{0}', space=vmem, size = 0x20000, scoped, tag = 'input window, operand 0']
    #allocation5 [shape = 's32[2]{0}', space=sflag, size = 0x8, scoped, tag = 'scoped memory for tpu_custom_call.1']
    #allocation6 [shape = 's32[2]{0}', space=sflag, size = 0x8, scoped, tag = 'scoped memory for tpu_custom_call.1']
    #allocation7 [shape = 'u8[294912]{0}', space=vmem, size = 0x48000, scoped, tag = 'input window, operand 1, single buffered']
    #allocation8 [shape = 's32[1]{0}', space=sflag, size = 0x4, scoped, tag = 'scoped memory for tpu_custom_call.1']
    #allocation9 [shape = 'u8[294912]{0}', space=vmem, size = 0x48000, scoped, tag = 'input window, operand 4, single buffered']
    #allocation10 [shape = 'u8[131072]{0}', space=vmem, size = 0x20000, scoped, tag = 'output window, operand 0']
    %12 = vsyncpa [#allocation5], 0
    %s13 = scalar_lea.sflag [#allocation5], 1
    %14 = vsyncpa %s13, 0
    %15 = vsyncpa [#allocation8], 0
    %16 = vsyncpa [#allocation6], 0
    %s17 = scalar_lea.sflag [#allocation6], 1
    %18 = vsyncpa %s17, 0
    loop: start=0, step=1, limit=4
    $region2: #{tpu_custom_call.1} parent=1 // loop_pre_header
      _
    $region3: #{tpu_custom_call.1} parent=1 // loop_header
      %s20 = sphi 0, %s24
      %p21 = scmp.ge.s32.totalorder %s20, 4
      %s30 = sphi 0, %s32
      %s33 = sphi 0, %s30
      %s34 = sphi 0, %s33
      %s50 = sphi 0, %s34
      %s54 = sphi 0, %s54
      %s56 = sphi 0, %s54
      %s57 = sphi 0, %s56
      %s71 = sphi 0, %s57
      %s75 = sphi 0, %s75
      %s77 = sphi 0, %s75
      %s78 = sphi 0, %s77
      %s92 = sphi 0, %s78
      %s96 = sphi 0, %s96
      %s98 = sphi 0, %s96
      %s99 = sphi 0, %s98
      %s113 = sphi 0, %s99
      %s117 = sphi 0, %s117
      %s119 = sphi 0, %s117
      %s120 = sphi 0, %s119
      %s134 = sphi 0, %s120
      %s138 = sphi 0, %s138
      %s140 = sphi 0, %s138
      %s141 = sphi 0, %s140
      %s155 = sphi 0, %s141
      %s159 = sphi 0, %s159
      %s161 = sphi 0, %s159
      %s162 = sphi 0, %s161
      %s176 = sphi 0, %s162
      %s182 = sphi 0, %s184
      %s185 = sphi 0, %s182
      %s186 = sphi 0, %s185
      %s202 = sphi 0, %s186
    $region4: #{tpu_custom_call.1} parent=1 // loop_header_branch
      %23 = sbr.rel (%p21) target = $region8
    $region5: #{tpu_custom_call.1} parent=1 // loop_body
      %s25 = ssub.s32 %s20, 1
      %s26 = ssub.s32 %s20, 2
      %s27 = sadd.s32 %s20, 1
      %s28 = ssub.s32 %s20, %s27
      %p29 = scmp.eq.s32.totalorder %s28, 0
      %s31 = sadd.s32 %s30, 1
      %s32 = scalar_select %p29, %s30, %s31
      %p35 = pneg %p29
      %p36 = scmp.eq.s32.totalorder %s20, 1
      %p37 = por %p35, %p36
      %p38 = scmp.ne.s32.totalorder %s30, %s33
      %p39 = scmp.eq.s32.totalorder %s20, 0
      %p40 = por %p38, %p39
      %p41 = scmp.ne.s32.totalorder %s30, %s33
      %p42 = scmp.eq.s32.totalorder %s25, 1
      %p43 = por %p41, %p42
      %p44 = scmp.ne.s32.totalorder %s33, %s34
      %p45 = scmp.eq.s32.totalorder %s25, 0
      %p46 = por %p44, %p45
      %p47 = scmp.ne.s32.totalorder %s33, %s34
      %p48 = scmp.eq.s32.totalorder %s26, 1
      %p49 = por %p47, %p48
      %p51 = scmp.ne.s32.totalorder %s34, %s50
      %p52 = scmp.eq.s32.totalorder %s26, 0
      %p53 = por %p51, %p52
      %s55 = sadd.s32 %s54, 1
      %p58 = scmp.eq.s32.totalorder %s20, 1
      %p59 = scmp.ne.s32.totalorder %s54, %s56
      %p60 = scmp.eq.s32.totalorder %s20, 0
      %p61 = por %p59, %p60
      %p62 = scmp.ne.s32.totalorder %s54, %s56
      %p63 = scmp.eq.s32.totalorder %s25, 1
      %p64 = por %p62, %p63
      %p65 = scmp.ne.s32.totalorder %s56, %s57
      %p66 = scmp.eq.s32.totalorder %s25, 0
      %p67 = por %p65, %p66
      %p68 = scmp.ne.s32.totalorder %s56, %s57
      %p69 = scmp.eq.s32.totalorder %s26, 1
      %p70 = por %p68, %p69
      %p72 = scmp.ne.s32.totalorder %s57, %s71
      %p73 = scmp.eq.s32.totalorder %s26, 0
      %p74 = por %p72, %p73
      %s76 = sadd.s32 %s75, 1
      %p79 = scmp.eq.s32.totalorder %s20, 1
      %p80 = scmp.ne.s32.totalorder %s75, %s77
      %p81 = scmp.eq.s32.totalorder %s20, 0
      %p82 = por %p80, %p81
      %p83 = scmp.ne.s32.totalorder %s75, %s77
      %p84 = scmp.eq.s32.totalorder %s25, 1
      %p85 = por %p83, %p84
      %p86 = scmp.ne.s32.totalorder %s77, %s78
      %p87 = scmp.eq.s32.totalorder %s25, 0
      %p88 = por %p86, %p87
      %p89 = scmp.ne.s32.totalorder %s77, %s78
      %p90 = scmp.eq.s32.totalorder %s26, 1
      %p91 = por %p89, %p90
      %p93 = scmp.ne.s32.totalorder %s78, %s92
      %p94 = scmp.eq.s32.totalorder %s26, 0
      %p95 = por %p93, %p94
      %s97 = sadd.s32 %s96, 1
      %p100 = scmp.eq.s32.totalorder %s20, 1
      %p101 = scmp.ne.s32.totalorder %s96, %s98
      %p102 = scmp.eq.s32.totalorder %s20, 0
      %p103 = por %p101, %p102
      %p104 = scmp.ne.s32.totalorder %s96, %s98
      %p105 = scmp.eq.s32.totalorder %s25, 1
      %p106 = por %p104, %p105
      %p107 = scmp.ne.s32.totalorder %s98, %s99
      %p108 = scmp.eq.s32.totalorder %s25, 0
      %p109 = por %p107, %p108
      %p110 = scmp.ne.s32.totalorder %s98, %s99
      %p111 = scmp.eq.s32.totalorder %s26, 1
      %p112 = por %p110, %p111
      %p114 = scmp.ne.s32.totalorder %s99, %s113
      %p115 = scmp.eq.s32.totalorder %s26, 0
      %p116 = por %p114, %p115
      %s118 = sadd.s32 %s117, 1
      %p121 = scmp.eq.s32.totalorder %s20, 1
      %p122 = scmp.ne.s32.totalorder %s117, %s119
      %p123 = scmp.eq.s32.totalorder %s20, 0
      %p124 = por %p122, %p123
      %p125 = scmp.ne.s32.totalorder %s117, %s119
      %p126 = scmp.eq.s32.totalorder %s25, 1
      %p127 = por %p125, %p126
      %p128 = scmp.ne.s32.totalorder %s119, %s120
      %p129 = scmp.eq.s32.totalorder %s25, 0
      %p130 = por %p128, %p129
      %p131 = scmp.ne.s32.totalorder %s119, %s120
      %p132 = scmp.eq.s32.totalorder %s26, 1
      %p133 = por %p131, %p132
      %p135 = scmp.ne.s32.totalorder %s120, %s134
      %p136 = scmp.eq.s32.totalorder %s26, 0
      %p137 = por %p135, %p136
      %s139 = sadd.s32 %s138, 1
      %p142 = scmp.eq.s32.totalorder %s20, 1
      %p143 = scmp.ne.s32.totalorder %s138, %s140
      %p144 = scmp.eq.s32.totalorder %s20, 0
      %p145 = por %p143, %p144
      %p146 = scmp.ne.s32.totalorder %s138, %s140
      %p147 = scmp.eq.s32.totalorder %s25, 1
      %p148 = por %p146, %p147
      %p149 = scmp.ne.s32.totalorder %s140, %s141
      %p150 = scmp.eq.s32.totalorder %s25, 0
      %p151 = por %p149, %p150
      %p152 = scmp.ne.s32.totalorder %s140, %s141
      %p153 = scmp.eq.s32.totalorder %s26, 1
      %p154 = por %p152, %p153
      %p156 = scmp.ne.s32.totalorder %s141, %s155
      %p157 = scmp.eq.s32.totalorder %s26, 0
      %p158 = por %p156, %p157
      %s160 = sadd.s32 %s159, 1
      %p163 = scmp.eq.s32.totalorder %s20, 1
      %p164 = scmp.ne.s32.totalorder %s159, %s161
      %p165 = scmp.eq.s32.totalorder %s20, 0
      %p166 = por %p164, %p165
      %p167 = scmp.ne.s32.totalorder %s159, %s161
      %p168 = scmp.eq.s32.totalorder %s25, 1
      %p169 = por %p167, %p168
      %p170 = scmp.ne.s32.totalorder %s161, %s162
      %p171 = scmp.eq.s32.totalorder %s25, 0
      %p172 = por %p170, %p171
      %p173 = scmp.ne.s32.totalorder %s161, %s162
      %p174 = scmp.eq.s32.totalorder %s26, 1
      %p175 = por %p173, %p174
      %p177 = scmp.ne.s32.totalorder %s162, %s176
      %p178 = scmp.eq.s32.totalorder %s26, 0
      %p179 = por %p177, %p178
      %s180 = ssub.s32 %s20, %s27
      %p181 = scmp.eq.s32.totalorder %s180, 0
      %s183 = sadd.s32 %s182, 1
      %s184 = scalar_select %p181, %s182, %s183
      %p187 = pneg %p181
      %p188 = scmp.eq.s32.totalorder %s20, 1
      %p189 = por %p187, %p188
      %p190 = scmp.ne.s32.totalorder %s182, %s185
      %p191 = scmp.eq.s32.totalorder %s20, 0
      %p192 = por %p190, %p191
      %p193 = scmp.ne.s32.totalorder %s182, %s185
      %p194 = scmp.eq.s32.totalorder %s25, 1
      %p195 = por %p193, %p194
      %p196 = scmp.ne.s32.totalorder %s185, %s186
      %p197 = scmp.eq.s32.totalorder %s25, 0
      %p198 = por %p196, %p197
      %p199 = scmp.ne.s32.totalorder %s185, %s186
      %p200 = scmp.eq.s32.totalorder %s26, 1
      %p201 = por %p199, %p200
      %p203 = scmp.ne.s32.totalorder %s186, %s202
      %p204 = scmp.eq.s32.totalorder %s26, 0
      %p205 = por %p203, %p204
      %p206 = scmp.le.s32.totalorder 1, %s20
      %p207 = scmp.lt.s32.totalorder %s20, 3
      %p208 = pnand %p206, %p207
      %p209 = pneg %p208
      // Predicated region
      $region9: #{tpu_custom_call.1} parent=5 // pred_check
        _
      $region10: #{tpu_custom_call.1} parent=5 // pred_check_branch
        %211 = sbr.rel (%p208) target = $region12
      $region11: #{tpu_custom_call.1} parent=5 // pred_region
        %s212 = ssub.s32 %s20, 1
        // Predicated region
        $region13: #{tpu_custom_call.1} parent=11 // pred_check
          %p213 = pneg %p67
        $region14: #{tpu_custom_call.1} parent=11 // pred_check_branch
          %215 = sbr.rel (%p213) target = $region16
        $region15: #{tpu_custom_call.1} parent=11 // pred_region
          %217 = vsyncadd [#allocation8], 0
          %s218 = sshll.u32 %s1, 4
          %s219 = int_to_ptr.hbm [resolvable:$true] %s218
          %s220 = sshll.u32 [#allocation7], 4
          %s221 = int_to_ptr.vmem [resolvable:$true] %s220
          %226 = dma.hbm_to_vmem [thread:$0]  %s219, 9216, %s221, [#allocation8], 64, 64, 4
        $region16: #{tpu_custom_call.1} parent=11 // pred_fallthru
          _
        // Predicated region
        $region17: #{tpu_custom_call.1} parent=11 // pred_check
          %p227 = pneg %p88
        $region18: #{tpu_custom_call.1} parent=11 // pred_check_branch
          %229 = sbr.rel (%p227) target = $region20
        $region19: #{tpu_custom_call.1} parent=11 // pred_region
          _
        $region20: #{tpu_custom_call.1} parent=11 // pred_fallthru
          _
        // Predicated region
        $region21: #{tpu_custom_call.1} parent=11 // pred_check
          %p230 = pneg %p109
        $region22: #{tpu_custom_call.1} parent=11 // pred_check_branch
          %232 = sbr.rel (%p230) target = $region24
        $region23: #{tpu_custom_call.1} parent=11 // pred_region
          _
        $region24: #{tpu_custom_call.1} parent=11 // pred_fallthru
          _
        // Predicated region
        $region25: #{tpu_custom_call.1} parent=11 // pred_check
          %p233 = pneg %p130
        $region26: #{tpu_custom_call.1} parent=11 // pred_check_branch
          %235 = sbr.rel (%p233) target = $region28
        $region27: #{tpu_custom_call.1} parent=11 // pred_region
          %237 = vsyncadd [#allocation8], 0
          %s238 = sshll.u32 %s4, 4
          %s239 = int_to_ptr.hbm [resolvable:$true] %s238
          %s240 = sshll.u32 [#allocation9], 4
          %s241 = int_to_ptr.vmem [resolvable:$true] %s240
          %246 = dma.hbm_to_vmem [thread:$0]  %s239, 9216, %s241, [#allocation8], 64, 64, 4
        $region28: #{tpu_custom_call.1} parent=11 // pred_fallthru
          _
        // Predicated region
        $region29: #{tpu_custom_call.1} parent=11 // pred_check
          %p247 = pneg %p151
        $region30: #{tpu_custom_call.1} parent=11 // pred_check_branch
          %249 = sbr.rel (%p247) target = $region32
        $region31: #{tpu_custom_call.1} parent=11 // pred_region
          _
        $region32: #{tpu_custom_call.1} parent=11 // pred_fallthru
          _
        // Predicated region
        $region33: #{tpu_custom_call.1} parent=11 // pred_check
          %p250 = pneg %p172
        $region34: #{tpu_custom_call.1} parent=11 // pred_check_branch
          %252 = sbr.rel (%p250) target = $region36
        $region35: #{tpu_custom_call.1} parent=11 // pred_region
          _
        $region36: #{tpu_custom_call.1} parent=11 // pred_fallthru
          _
      $region12: #{tpu_custom_call.1} parent=5 // pred_fallthru
        _
      %p253 = scmp.lt.s32.totalorder %s20, 2
      // Predicated region
      $region37: #{tpu_custom_call.1} parent=5 // pred_check
        %p254 = pneg %p253
      $region38: #{tpu_custom_call.1} parent=5 // pred_check_branch
        %256 = sbr.rel (%p254) target = $region40
      $region39: #{tpu_custom_call.1} parent=5 // pred_region
        // Predicated region
        $region41: #{tpu_custom_call.1} parent=39 // pred_check
          %p257 = pneg %p40
        $region42: #{tpu_custom_call.1} parent=39 // pred_check_branch
          %259 = sbr.rel (%p257) target = $region44
        $region43: #{tpu_custom_call.1} parent=39 // pred_region
          %s260 = sand.u32 %s30, 1
          %s261 = scalar_lea.sflag [#allocation5], %s260
          %s262 = sand.u32 %s30, 1
          %s263 = smul.addr %s262, 128
          %s264 = scalar_lea.vmem [#allocation4], %s263
          %266 = vsyncadd %s261, 0
          %s267 = smul.addr %s20, 32
          %s268 = smul.addr %s267, 4
          %s269 = scalar_lea.hbm %s0, %s268
          %s270 = sshll.u32 %s269, 4
          %s271 = int_to_ptr.hbm [resolvable:$true] %s270
          %s272 = sshll.u32 %s264, 4
          %s273 = int_to_ptr.vmem [resolvable:$true] %s272
          %278 = dma.hbm_to_vmem [thread:$0]  %s271, 2048, %s273, %s261, 64, 64, 4
        $region44: #{tpu_custom_call.1} parent=39 // pred_fallthru
          _
      $region40: #{tpu_custom_call.1} parent=5 // pred_fallthru
        _
      %p279 = scmp.le.s32.totalorder 1, %s20
      %p280 = scmp.lt.s32.totalorder %s20, 3
      %p281 = pnand %p279, %p280
      %p282 = pneg %p281
      // Predicated region
      $region45: #{tpu_custom_call.1} parent=5 // pred_check
        _
      $region46: #{tpu_custom_call.1} parent=5 // pred_check_branch
        %284 = sbr.rel (%p281) target = $region48
      $region47: #{tpu_custom_call.1} parent=5 // pred_region
        %s285 = ssub.s32 %s20, 1
        %s286 = sand.u32 %s33, 1
        %s287 = scalar_lea.sflag [#allocation5], %s286
        %s288 = sand.u32 %s33, 1
        %s289 = smul.addr %s288, 128
        %s290 = scalar_lea.vmem [#allocation4], %s289
        // Predicated region
        $region49: #{tpu_custom_call.1} parent=47 // pred_check
          %p291 = pneg %p46
        $region50: #{tpu_custom_call.1} parent=47 // pred_check_branch
          %293 = sbr.rel (%p291) target = $region52
        $region51: #{tpu_custom_call.1} parent=47 // pred_region
          %295 = dma.done %s287, 2048
        $region52: #{tpu_custom_call.1} parent=47 // pred_fallthru
          _
        // Predicated region
        $region53: #{tpu_custom_call.1} parent=47 // pred_check
          %p296 = pneg %p67
        $region54: #{tpu_custom_call.1} parent=47 // pred_check_branch
          %298 = sbr.rel (%p296) target = $region56
        $region55: #{tpu_custom_call.1} parent=47 // pred_region
          %300 = dma.done [#allocation8], 9216
        $region56: #{tpu_custom_call.1} parent=47 // pred_fallthru
          _
        // Predicated region
        $region57: #{tpu_custom_call.1} parent=47 // pred_check
          %p301 = pneg %p130
        $region58: #{tpu_custom_call.1} parent=47 // pred_check_branch
          %303 = sbr.rel (%p301) target = $region60
        $region59: #{tpu_custom_call.1} parent=47 // pred_region
          %305 = dma.done [#allocation8], 9216
        $region60: #{tpu_custom_call.1} parent=47 // pred_fallthru
          _
        %s306 = sand.u32 %s33, 1
        %s307 = scalar_lea.sflag [#allocation5], %s306
        %s308 = sand.u32 %s33, 1
        %s309 = smul.addr %s308, 128
        %s310 = scalar_lea.vmem [#allocation4], %s309
        %p311 = pneg %p46
        %p312 = pneg %p43
        %p313 = pneg %p67
        %p314 = pneg %p64
        %p315 = pneg %p88
        %p316 = pneg %p85
        %p317 = pneg %p109
        %p318 = pneg %p106
        %p319 = pneg %p130
        %p320 = pneg %p127
        %p321 = pneg %p151
        %p322 = pneg %p148
        %p323 = pneg %p172
        %p324 = pneg %p169
        %p325 = pneg %p198
        %p326 = pneg %p195
        %s327 = sand.u32 %s185, 1
        %s328 = scalar_lea.sflag [#allocation6], %s327
        %s329 = sand.u32 %s185, 1
        %s330 = smul.addr %s329, 128
        %s331 = scalar_lea.vmem [#allocation10], %s330
        %333 = vst [vmem:[#allocation2] sm:$0xf] 0
        %334 = vst [vmem:[#allocation2 + $0x4] sm:$0xf] 0
        %335 = vst [vmem:[#allocation2 + $0x8] sm:$0x1] 0
        %s336 = scalar_lea.vmem [#allocation2], 204
        %337 = vst [vmem:[%s336] sm:$0xf] 0
        %338 = vst [vmem:[%s336 + $0x4] sm:$0xf] 0
        %339 = vst [vmem:[%s336 + $0x8] sm:$0x1] 0
        %vm340 = vcmask 1040384
        %vm341 = vsmask.f32 256
        %vm342 = vmand %vm340, %vm341
        %v343 = vld [vmem:[#allocation2] sm:$0x1]
        %v344 = vsel %vm342, 0, %v343
        %345 = vst [vmem:[#allocation2] sm:$0x1] %v344
        %v346 = vld [vmem:[#allocation2 + $0xc] sm:$0x1]
        %v347 = vsel %vm342, 0, %v346
        %348 = vst [vmem:[#allocation2 + $0xc] sm:$0x1] %v347
        %v349 = vld [vmem:[#allocation2 + $0x18] sm:$0x1]
        %v350 = vsel %vm342, 0, %v349
        %351 = vst [vmem:[#allocation2 + $0x18] sm:$0x1] %v350
        %v352 = vld [vmem:[#allocation2 + $0x24] sm:$0x1]
        %v353 = vsel %vm342, 0, %v352
        %354 = vst [vmem:[#allocation2 + $0x24] sm:$0x1] %v353
        %v355 = vld [vmem:[#allocation2 + $0x30] sm:$0x1]
        %v356 = vsel %vm342, 0, %v355
        %357 = vst [vmem:[#allocation2 + $0x30] sm:$0x1] %v356
        %v358 = vld [vmem:[#allocation2 + $0x3c] sm:$0x1]
        %v359 = vsel %vm342, 0, %v358
        %360 = vst [vmem:[#allocation2 + $0x3c] sm:$0x1] %v359
        %v361 = vld [vmem:[#allocation2 + $0x48] sm:$0x1]
        %v362 = vsel %vm342, 0, %v361
        %363 = vst [vmem:[#allocation2 + $0x48] sm:$0x1] %v362
        %v364 = vld [vmem:[#allocation2 + $0x54] sm:$0x1]
        %v365 = vsel %vm342, 0, %v364
        %366 = vst [vmem:[#allocation2 + $0x54] sm:$0x1] %v365
        %v367 = vld [vmem:[#allocation2 + $0x60] sm:$0x1]
        %v368 = vsel %vm342, 0, %v367
        %369 = vst [vmem:[#allocation2 + $0x60] sm:$0x1] %v368
        %v370 = vld [vmem:[#allocation2 + $0x6c] sm:$0x1]
        %v371 = vsel %vm342, 0, %v370
        %372 = vst [vmem:[#allocation2 + $0x6c] sm:$0x1] %v371
        %v373 = vld [vmem:[#allocation2 + $0x78] sm:$0x1]
        %v374 = vsel %vm342, 0, %v373
        %375 = vst [vmem:[#allocation2 + $0x78] sm:$0x1] %v374
        %v376 = vld [vmem:[#allocation2 + $0x84] sm:$0x1]
        %v377 = vsel %vm342, 0, %v376
        %378 = vst [vmem:[#allocation2 + $0x84] sm:$0x1] %v377
        %v379 = vld [vmem:[#allocation2 + $0x90] sm:$0x1]
        %v380 = vsel %vm342, 0, %v379
        %381 = vst [vmem:[#allocation2 + $0x90] sm:$0x1] %v380
        %v382 = vld [vmem:[#allocation2 + $0x9c] sm:$0x1]
        %v383 = vsel %vm342, 0, %v382
        %384 = vst [vmem:[#allocation2 + $0x9c] sm:$0x1] %v383
        %v385 = vld [vmem:[#allocation2 + $0xa8] sm:$0x1]
        %v386 = vsel %vm342, 0, %v385
        %387 = vst [vmem:[#allocation2 + $0xa8] sm:$0x1] %v386
        %v388 = vld [vmem:[#allocation2 + $0xb4] sm:$0x1]
        %v389 = vsel %vm342, 0, %v388
        %390 = vst [vmem:[#allocation2 + $0xb4] sm:$0x1] %v389
        %v391 = vld [vmem:[#allocation2 + $0xc0] sm:$0x1]
        %v392 = vsel %vm342, 0, %v391
        %393 = vst [vmem:[#allocation2 + $0xc0] sm:$0x1] %v392
        %v394 = vld [vmem:[#allocation2 + $0xcc] sm:$0x1]
        %v395 = vsel %vm342, 0, %v394
        %396 = vst [vmem:[#allocation2 + $0xcc] sm:$0x1] %v395
        %vm397 = vsmask.f32 7938
        %vm398 = vmand %vm340, %vm397
        %v399 = vld [vmem:[#allocation2 + $0x8] sm:$0x1]
        %v400 = vsel %vm398, 0, %v399
        %401 = vst [vmem:[#allocation2 + $0x8] sm:$0x1] %v400
        %v402 = vld [vmem:[#allocation2 + $0x14] sm:$0x1]
        %v403 = vsel %vm398, 0, %v402
        %404 = vst [vmem:[#allocation2 + $0x14] sm:$0x1] %v403
        %v405 = vld [vmem:[#allocation2 + $0x20] sm:$0x1]
        %v406 = vsel %vm398, 0, %v405
        %407 = vst [vmem:[#allocation2 + $0x20] sm:$0x1] %v406
        %v408 = vld [vmem:[#allocation2 + $0x2c] sm:$0x1]
        %v409 = vsel %vm398, 0, %v408
        %410 = vst [vmem:[#allocation2 + $0x2c] sm:$0x1] %v409
        %v411 = vld [vmem:[#allocation2 + $0x38] sm:$0x1]
        %v412 = vsel %vm398, 0, %v411
        %413 = vst [vmem:[#allocation2 + $0x38] sm:$0x1] %v412
        %v414 = vld [vmem:[#allocation2 + $0x44] sm:$0x1]
        %v415 = vsel %vm398, 0, %v414
        %416 = vst [vmem:[#allocation2 + $0x44] sm:$0x1] %v415
        %v417 = vld [vmem:[#allocation2 + $0x50] sm:$0x1]
        %v418 = vsel %vm398, 0, %v417
        %419 = vst [vmem:[#allocation2 + $0x50] sm:$0x1] %v418
        %v420 = vld [vmem:[#allocation2 + $0x5c] sm:$0x1]
        %v421 = vsel %vm398, 0, %v420
        %422 = vst [vmem:[#allocation2 + $0x5c] sm:$0x1] %v421
        %v423 = vld [vmem:[#allocation2 + $0x68] sm:$0x1]
        %v424 = vsel %vm398, 0, %v423
        %425 = vst [vmem:[#allocation2 + $0x68] sm:$0x1] %v424
        %v426 = vld [vmem:[#allocation2 + $0x74] sm:$0x1]
        %v427 = vsel %vm398, 0, %v426
        %428 = vst [vmem:[#allocation2 + $0x74] sm:$0x1] %v427
        %v429 = vld [vmem:[#allocation2 + $0x80] sm:$0x1]
        %v430 = vsel %vm398, 0, %v429
        %431 = vst [vmem:[#allocation2 + $0x80] sm:$0x1] %v430
        %v432 = vld [vmem:[#allocation2 + $0x8c] sm:$0x1]
        %v433 = vsel %vm398, 0, %v432
        %434 = vst [vmem:[#allocation2 + $0x8c] sm:$0x1] %v433
        %v435 = vld [vmem:[#allocation2 + $0x98] sm:$0x1]
        %v436 = vsel %vm398, 0, %v435
        %437 = vst [vmem:[#allocation2 + $0x98] sm:$0x1] %v436
        %v438 = vld [vmem:[#allocation2 + $0xa4] sm:$0x1]
        %v439 = vsel %vm398, 0, %v438
        %440 = vst [vmem:[#allocation2 + $0xa4] sm:$0x1] %v439
        %v441 = vld [vmem:[#allocation2 + $0xb0] sm:$0x1]
        %v442 = vsel %vm398, 0, %v441
        %443 = vst [vmem:[#allocation2 + $0xb0] sm:$0x1] %v442
        %v444 = vld [vmem:[#allocation2 + $0xbc] sm:$0x1]
        %v445 = vsel %vm398, 0, %v444
        %446 = vst [vmem:[#allocation2 + $0xbc] sm:$0x1] %v445
        %v447 = vld [vmem:[#allocation2 + $0xc8] sm:$0x1]
        %v448 = vsel %vm398, 0, %v447
        %449 = vst [vmem:[#allocation2 + $0xc8] sm:$0x1] %v448
        %v450 = vld [vmem:[#allocation2 + $0xd4] sm:$0x1]
        %v451 = vsel %vm398, 0, %v450
        %452 = vst [vmem:[#allocation2 + $0xd4] sm:$0x1] %v451
        %v453 = vld [vmem:[%s290] sm:$0xf]
        %v454 = vld [vmem:[%s290 + $0x4] sm:$0xf]
        %v455 = vld [vmem:[%s290 + $0x8] sm:$0xf]
        %v456 = vld [vmem:[%s290 + $0xc] sm:$0xf]
        %v457 = vld [vmem:[%s290 + $0x10] sm:$0xf]
        %v458 = vld [vmem:[%s290 + $0x14] sm:$0xf]
        %v459 = vld [vmem:[%s290 + $0x18] sm:$0xf]
        %v460 = vld [vmem:[%s290 + $0x1c] sm:$0xf]
        %v461 = vld [vmem:[%s290 + $0x20] sm:$0xf]
        %v462 = vld [vmem:[%s290 + $0x24] sm:$0xf]
        %v463 = vld [vmem:[%s290 + $0x28] sm:$0xf]
        %v464 = vld [vmem:[%s290 + $0x2c] sm:$0xf]
        %v465 = vld [vmem:[%s290 + $0x30] sm:$0xf]
        %v466 = vld [vmem:[%s290 + $0x34] sm:$0xf]
        %v467 = vld [vmem:[%s290 + $0x38] sm:$0xf]
        %v468 = vld [vmem:[%s290 + $0x3c] sm:$0xf]
        %v469 = vld [vmem:[%s290 + $0x40] sm:$0xf]
        %v470 = vld [vmem:[%s290 + $0x44] sm:$0xf]
        %v471 = vld [vmem:[%s290 + $0x48] sm:$0xf]
        %v472 = vld [vmem:[%s290 + $0x4c] sm:$0xf]
        %v473 = vld [vmem:[%s290 + $0x50] sm:$0xf]
        %v474 = vld [vmem:[%s290 + $0x54] sm:$0xf]
        %v475 = vld [vmem:[%s290 + $0x58] sm:$0xf]
        %v476 = vld [vmem:[%s290 + $0x5c] sm:$0xf]
        %v477 = vld [vmem:[%s290 + $0x60] sm:$0xf]
        %v478 = vld [vmem:[%s290 + $0x64] sm:$0xf]
        %v479 = vld [vmem:[%s290 + $0x68] sm:$0xf]
        %v480 = vld [vmem:[%s290 + $0x6c] sm:$0xf]
        %v481 = vld [vmem:[%s290 + $0x70] sm:$0xf]
        %v482 = vld [vmem:[%s290 + $0x74] sm:$0xf]
        %v483 = vld [vmem:[%s290 + $0x78] sm:$0xf]
        %v484 = vld [vmem:[%s290 + $0x7c] sm:$0xf]
        %vm485 = vsmask.f32 4368
        %vm486 = vmor %vm341, %vm485
        %v488 = vshrl.u32 %v453, 16
        %v490 = vrot.slane %v488, 7
        %v491 = vshll.u32 %v453, 16
        %v493 = vor.u32 %v490, %v491
        %v494 = vrot.slane %v490, 4
        %v496 = vshrl.u32 %v454, 16
        %v498 = vrot.slane %v496, 7
        %v499 = vshll.u32 %v454, 16
        %v501 = vor.u32 %v498, %v499
        %v502 = vsel %vm486, %v494, %v501
        %v503 = vrot.slane %v498, 4
        %v505 = vshrl.u32 %v455, 16
        %v507 = vrot.slane %v505, 7
        %v508 = vshll.u32 %v455, 16
        %v510 = vor.u32 %v507, %v508
        %v511 = vrot.slane %v507, 4
        %v513 = vshrl.u32 %v456, 16
        %v515 = vrot.slane %v513, 7
        %v516 = vshll.u32 %v456, 16
        %v518 = vor.u32 %v515, %v516
        %v519 = vsel %vm486, %v511, %v518
        %v520 = vrot.slane %v515, 4
        %v522 = vshrl.u32 %v457, 16
        %v524 = vrot.slane %v522, 7
        %v525 = vshll.u32 %v457, 16
        %v527 = vor.u32 %v524, %v525
        %v528 = vrot.slane %v524, 4
        %v530 = vshrl.u32 %v458, 16
        %v532 = vrot.slane %v530, 7
        %v533 = vshll.u32 %v458, 16
        %v535 = vor.u32 %v532, %v533
        %v536 = vsel %vm486, %v528, %v535
        %v537 = vrot.slane %v532, 4
        %v539 = vshrl.u32 %v459, 16
        %v541 = vrot.slane %v539, 7
        %v542 = vshll.u32 %v459, 16
        %v544 = vor.u32 %v541, %v542
        %v545 = vrot.slane %v541, 4
        %v547 = vshrl.u32 %v460, 16
        %v549 = vrot.slane %v547, 7
        %v550 = vshll.u32 %v460, 16
        %v552 = vor.u32 %v549, %v550
        %v553 = vsel %vm486, %v545, %v552
        %v554 = vrot.slane %v549, 4
        %v556 = vshrl.u32 %v461, 16
        %v558 = vrot.slane %v556, 7
        %v559 = vshll.u32 %v461, 16
        %v561 = vor.u32 %v558, %v559
        %v562 = vrot.slane %v558, 4
        %v564 = vshrl.u32 %v462, 16
        %v566 = vrot.slane %v564, 7
        %v567 = vshll.u32 %v462, 16
        %v569 = vor.u32 %v566, %v567
        %v570 = vsel %vm486, %v562, %v569
        %v571 = vrot.slane %v566, 4
        %v573 = vshrl.u32 %v463, 16
        %v575 = vrot.slane %v573, 7
        %v576 = vshll.u32 %v463, 16
        %v578 = vor.u32 %v575, %v576
        %v579 = vrot.slane %v575, 4
        %v581 = vshrl.u32 %v464, 16
        %v583 = vrot.slane %v581, 7
        %v584 = vshll.u32 %v464, 16
        %v586 = vor.u32 %v583, %v584
        %v587 = vsel %vm486, %v579, %v586
        %v588 = vrot.slane %v583, 4
        %v590 = vshrl.u32 %v465, 16
        %v592 = vrot.slane %v590, 7
        %v593 = vshll.u32 %v465, 16
        %v595 = vor.u32 %v592, %v593
        %v596 = vrot.slane %v592, 4
        %v598 = vshrl.u32 %v466, 16
        %v600 = vrot.slane %v598, 7
        %v601 = vshll.u32 %v466, 16
        %v603 = vor.u32 %v600, %v601
        %v604 = vsel %vm486, %v596, %v603
        %v605 = vrot.slane %v600, 4
        %v607 = vshrl.u32 %v467, 16
        %v609 = vrot.slane %v607, 7
        %v610 = vshll.u32 %v467, 16
        %v612 = vor.u32 %v609, %v610
        %v613 = vrot.slane %v609, 4
        %v615 = vshrl.u32 %v468, 16
        %v617 = vrot.slane %v615, 7
        %v618 = vshll.u32 %v468, 16
        %v620 = vor.u32 %v617, %v618
        %v621 = vsel %vm486, %v613, %v620
        %v622 = vrot.slane %v617, 4
        %v624 = vshrl.u32 %v469, 16
        %v626 = vrot.slane %v624, 7
        %v627 = vshll.u32 %v469, 16
        %v629 = vor.u32 %v626, %v627
        %v630 = vrot.slane %v626, 4
        %v632 = vshrl.u32 %v470, 16
        %v634 = vrot.slane %v632, 7
        %v635 = vshll.u32 %v470, 16
        %v637 = vor.u32 %v634, %v635
        %v638 = vsel %vm486, %v630, %v637
        %v639 = vrot.slane %v634, 4
        %v641 = vshrl.u32 %v471, 16
        %v643 = vrot.slane %v641, 7
        %v644 = vshll.u32 %v471, 16
        %v646 = vor.u32 %v643, %v644
        %v647 = vrot.slane %v643, 4
        %v649 = vshrl.u32 %v472, 16
        %v651 = vrot.slane %v649, 7
        %v652 = vshll.u32 %v472, 16
        %v654 = vor.u32 %v651, %v652
        %v655 = vsel %vm486, %v647, %v654
        %v656 = vrot.slane %v651, 4
        %v658 = vshrl.u32 %v473, 16
        %v660 = vrot.slane %v658, 7
        %v661 = vshll.u32 %v473, 16
        %v663 = vor.u32 %v660, %v661
        %v664 = vrot.slane %v660, 4
        %v666 = vshrl.u32 %v474, 16
        %v668 = vrot.slane %v666, 7
        %v669 = vshll.u32 %v474, 16
        %v671 = vor.u32 %v668, %v669
        %v672 = vsel %vm486, %v664, %v671
        %v673 = vrot.slane %v668, 4
        %v675 = vshrl.u32 %v475, 16
        %v677 = vrot.slane %v675, 7
        %v678 = vshll.u32 %v475, 16
        %v680 = vor.u32 %v677, %v678
        %v681 = vrot.slane %v677, 4
        %v683 = vshrl.u32 %v476, 16
        %v685 = vrot.slane %v683, 7
        %v686 = vshll.u32 %v476, 16
        %v688 = vor.u32 %v685, %v686
        %v689 = vsel %vm486, %v681, %v688
        %v690 = vrot.slane %v685, 4
        %v692 = vshrl.u32 %v477, 16
        %v694 = vrot.slane %v692, 7
        %v695 = vshll.u32 %v477, 16
        %v697 = vor.u32 %v694, %v695
        %v698 = vrot.slane %v694, 4
        %v700 = vshrl.u32 %v478, 16
        %v702 = vrot.slane %v700, 7
        %v703 = vshll.u32 %v478, 16
        %v705 = vor.u32 %v702, %v703
        %v706 = vsel %vm486, %v698, %v705
        %v707 = vrot.slane %v702, 4
        %v709 = vshrl.u32 %v479, 16
        %v711 = vrot.slane %v709, 7
        %v712 = vshll.u32 %v479, 16
        %v714 = vor.u32 %v711, %v712
        %v715 = vrot.slane %v711, 4
        %v717 = vshrl.u32 %v480, 16
        %v719 = vrot.slane %v717, 7
        %v720 = vshll.u32 %v480, 16
        %v722 = vor.u32 %v719, %v720
        %v723 = vsel %vm486, %v715, %v722
        %v724 = vrot.slane %v719, 4
        %v726 = vshrl.u32 %v481, 16
        %v728 = vrot.slane %v726, 7
        %v729 = vshll.u32 %v481, 16
        %v731 = vor.u32 %v728, %v729
        %v732 = vrot.slane %v728, 4
        %v734 = vshrl.u32 %v482, 16
        %v736 = vrot.slane %v734, 7
        %v737 = vshll.u32 %v482, 16
        %v739 = vor.u32 %v736, %v737
        %v740 = vsel %vm486, %v732, %v739
        %v741 = vrot.slane %v736, 4
        %v743 = vshrl.u32 %v483, 16
        %v745 = vrot.slane %v743, 7
        %v746 = vshll.u32 %v483, 16
        %v748 = vor.u32 %v745, %v746
        %v749 = vrot.slane %v745, 4
        %v751 = vshrl.u32 %v484, 16
        %v753 = vrot.slane %v751, 7
        %v754 = vshll.u32 %v484, 16
        %v756 = vor.u32 %v753, %v754
        %v757 = vsel %vm486, %v749, %v756
        %v758 = vrot.slane %v753, 4
        %s807 = scalar_lea.vmem [#allocation2], 12
        %vm808 = vcmask 1043456
        %vm809 = vmand %vm808, %vm397
        %v810 = vld [vmem:[%s807] sm:$0xf]
        %v811 = vsel %vm809, %v493, %v810
        %812 = vst [vmem:[%s807] sm:$0xf] %v811
        %813 = vst [vmem:[%s807 + $0x4] sm:$0xf] %v502
        %v814 = vld [vmem:[%s807 + $0x8] sm:$0x1]
        %v815 = vsel %vm342, %v503, %v814
        %816 = vst [vmem:[%s807 + $0x8] sm:$0x1] %v815
        %v817 = vld [vmem:[%s807 + $0xc] sm:$0xf]
        %v818 = vsel %vm809, %v510, %v817
        %819 = vst [vmem:[%s807 + $0xc] sm:$0xf] %v818
        %820 = vst [vmem:[%s807 + $0x10] sm:$0xf] %v519
        %v821 = vld [vmem:[%s807 + $0x14] sm:$0x1]
        %v822 = vsel %vm342, %v520, %v821
        %823 = vst [vmem:[%s807 + $0x14] sm:$0x1] %v822
        %v824 = vld [vmem:[%s807 + $0x18] sm:$0xf]
        %v825 = vsel %vm809, %v527, %v824
        %826 = vst [vmem:[%s807 + $0x18] sm:$0xf] %v825
        %827 = vst [vmem:[%s807 + $0x1c] sm:$0xf] %v536
        %v828 = vld [vmem:[%s807 + $0x20] sm:$0x1]
        %v829 = vsel %vm342, %v537, %v828
        %830 = vst [vmem:[%s807 + $0x20] sm:$0x1] %v829
        %v831 = vld [vmem:[%s807 + $0x24] sm:$0xf]
        %v832 = vsel %vm809, %v544, %v831
        %833 = vst [vmem:[%s807 + $0x24] sm:$0xf] %v832
        %834 = vst [vmem:[%s807 + $0x28] sm:$0xf] %v553
        %v835 = vld [vmem:[%s807 + $0x2c] sm:$0x1]
        %v836 = vsel %vm342, %v554, %v835
        %837 = vst [vmem:[%s807 + $0x2c] sm:$0x1] %v836
        %v838 = vld [vmem:[%s807 + $0x30] sm:$0xf]
        %v839 = vsel %vm809, %v561, %v838
        %840 = vst [vmem:[%s807 + $0x30] sm:$0xf] %v839
        %841 = vst [vmem:[%s807 + $0x34] sm:$0xf] %v570
        %v842 = vld [vmem:[%s807 + $0x38] sm:$0x1]
        %v843 = vsel %vm342, %v571, %v842
        %844 = vst [vmem:[%s807 + $0x38] sm:$0x1] %v843
        %v845 = vld [vmem:[%s807 + $0x3c] sm:$0xf]
        %v846 = vsel %vm809, %v578, %v845
        %847 = vst [vmem:[%s807 + $0x3c] sm:$0xf] %v846
        %848 = vst [vmem:[%s807 + $0x40] sm:$0xf] %v587
        %v849 = vld [vmem:[%s807 + $0x44] sm:$0x1]
        %v850 = vsel %vm342, %v588, %v849
        %851 = vst [vmem:[%s807 + $0x44] sm:$0x1] %v850
        %v852 = vld [vmem:[%s807 + $0x48] sm:$0xf]
        %v853 = vsel %vm809, %v595, %v852
        %854 = vst [vmem:[%s807 + $0x48] sm:$0xf] %v853
        %855 = vst [vmem:[%s807 + $0x4c] sm:$0xf] %v604
        %v856 = vld [vmem:[%s807 + $0x50] sm:$0x1]
        %v857 = vsel %vm342, %v605, %v856
        %858 = vst [vmem:[%s807 + $0x50] sm:$0x1] %v857
        %v859 = vld [vmem:[%s807 + $0x54] sm:$0xf]
        %v860 = vsel %vm809, %v612, %v859
        %861 = vst [vmem:[%s807 + $0x54] sm:$0xf] %v860
        %862 = vst [vmem:[%s807 + $0x58] sm:$0xf] %v621
        %v863 = vld [vmem:[%s807 + $0x5c] sm:$0x1]
        %v864 = vsel %vm342, %v622, %v863
        %865 = vst [vmem:[%s807 + $0x5c] sm:$0x1] %v864
        %v866 = vld [vmem:[%s807 + $0x60] sm:$0xf]
        %v867 = vsel %vm809, %v629, %v866
        %868 = vst [vmem:[%s807 + $0x60] sm:$0xf] %v867
        %869 = vst [vmem:[%s807 + $0x64] sm:$0xf] %v638
        %v870 = vld [vmem:[%s807 + $0x68] sm:$0x1]
        %v871 = vsel %vm342, %v639, %v870
        %872 = vst [vmem:[%s807 + $0x68] sm:$0x1] %v871
        %v873 = vld [vmem:[%s807 + $0x6c] sm:$0xf]
        %v874 = vsel %vm809, %v646, %v873
        %875 = vst [vmem:[%s807 + $0x6c] sm:$0xf] %v874
        %876 = vst [vmem:[%s807 + $0x70] sm:$0xf] %v655
        %v877 = vld [vmem:[%s807 + $0x74] sm:$0x1]
        %v878 = vsel %vm342, %v656, %v877
        %879 = vst [vmem:[%s807 + $0x74] sm:$0x1] %v878
        %v880 = vld [vmem:[%s807 + $0x78] sm:$0xf]
        %v881 = vsel %vm809, %v663, %v880
        %882 = vst [vmem:[%s807 + $0x78] sm:$0xf] %v881
        %883 = vst [vmem:[%s807 + $0x7c] sm:$0xf] %v672
        %v884 = vld [vmem:[%s807 + $0x80] sm:$0x1]
        %v885 = vsel %vm342, %v673, %v884
        %886 = vst [vmem:[%s807 + $0x80] sm:$0x1] %v885
        %v887 = vld [vmem:[%s807 + $0x84] sm:$0xf]
        %v888 = vsel %vm809, %v680, %v887
        %889 = vst [vmem:[%s807 + $0x84] sm:$0xf] %v888
        %890 = vst [vmem:[%s807 + $0x88] sm:$0xf] %v689
        %v891 = vld [vmem:[%s807 + $0x8c] sm:$0x1]
        %v892 = vsel %vm342, %v690, %v891
        %893 = vst [vmem:[%s807 + $0x8c] sm:$0x1] %v892
        %v894 = vld [vmem:[%s807 + $0x90] sm:$0xf]
        %v895 = vsel %vm809, %v697, %v894
        %896 = vst [vmem:[%s807 + $0x90] sm:$0xf] %v895
        %897 = vst [vmem:[%s807 + $0x94] sm:$0xf] %v706
        %v898 = vld [vmem:[%s807 + $0x98] sm:$0x1]
        %v899 = vsel %vm342, %v707, %v898
        %900 = vst [vmem:[%s807 + $0x98] sm:$0x1] %v899
        %v901 = vld [vmem:[%s807 + $0x9c] sm:$0xf]
        %v902 = vsel %vm809, %v714, %v901
        %903 = vst [vmem:[%s807 + $0x9c] sm:$0xf] %v902
        %904 = vst [vmem:[%s807 + $0xa0] sm:$0xf] %v723
        %v905 = vld [vmem:[%s807 + $0xa4] sm:$0x1]
        %v906 = vsel %vm342, %v724, %v905
        %907 = vst [vmem:[%s807 + $0xa4] sm:$0x1] %v906
        %v908 = vld [vmem:[%s807 + $0xa8] sm:$0xf]
        %v909 = vsel %vm809, %v731, %v908
        %910 = vst [vmem:[%s807 + $0xa8] sm:$0xf] %v909
        %911 = vst [vmem:[%s807 + $0xac] sm:$0xf] %v740
        %v912 = vld [vmem:[%s807 + $0xb0] sm:$0x1]
        %v913 = vsel %vm342, %v741, %v912
        %914 = vst [vmem:[%s807 + $0xb0] sm:$0x1] %v913
        %v915 = vld [vmem:[%s807 + $0xb4] sm:$0xf]
        %v916 = vsel %vm809, %v748, %v915
        %917 = vst [vmem:[%s807 + $0xb4] sm:$0xf] %v916
        %918 = vst [vmem:[%s807 + $0xb8] sm:$0xf] %v757
        %v919 = vld [vmem:[%s807 + $0xbc] sm:$0x1]
        %v920 = vsel %vm342, %v758, %v919
        %921 = vst [vmem:[%s807 + $0xbc] sm:$0x1] %v920
        %v922 = vld [vmem:[#allocation2] sm:$0xf]
        %v923 = vld [vmem:[#allocation2 + $0x4] sm:$0xf]
        %v924 = vld [vmem:[#allocation2 + $0xc] sm:$0xf]
        %v925 = vld [vmem:[#allocation2 + $0x10] sm:$0xf]
        %v926 = vld [vmem:[#allocation2 + $0x18] sm:$0xf]
        %v927 = vld [vmem:[#allocation2 + $0x1c] sm:$0xf]
        %v928 = vld [vmem:[#allocation2 + $0x24] sm:$0xf]
        %v929 = vld [vmem:[#allocation2 + $0x28] sm:$0xf]
        %v930 = vld [vmem:[#allocation2 + $0x30] sm:$0xf]
        %v931 = vld [vmem:[#allocation2 + $0x34] sm:$0xf]
        %v932 = vld [vmem:[#allocation2 + $0x3c] sm:$0xf]
        %v933 = vld [vmem:[#allocation2 + $0x40] sm:$0xf]
        %v934 = vld [vmem:[#allocation2 + $0x48] sm:$0xf]
        %v935 = vld [vmem:[#allocation2 + $0x4c] sm:$0xf]
        %v936 = vld [vmem:[#allocation2 + $0x54] sm:$0xf]
        %v937 = vld [vmem:[#allocation2 + $0x58] sm:$0xf]
        %v938 = vld [vmem:[#allocation2 + $0x60] sm:$0xf]
        %v939 = vld [vmem:[#allocation2 + $0x64] sm:$0xf]
        %v940 = vld [vmem:[#allocation2 + $0x6c] sm:$0xf]
        %v941 = vld [vmem:[#allocation2 + $0x70] sm:$0xf]
        %v942 = vld [vmem:[#allocation2 + $0x78] sm:$0xf]
        %v943 = vld [vmem:[#allocation2 + $0x7c] sm:$0xf]
        %v944 = vld [vmem:[#allocation2 + $0x84] sm:$0xf]
        %v945 = vld [vmem:[#allocation2 + $0x88] sm:$0xf]
        %v946 = vld [vmem:[#allocation2 + $0x90] sm:$0xf]
        %v947 = vld [vmem:[#allocation2 + $0x94] sm:$0xf]
        %v948 = vld [vmem:[#allocation2 + $0x9c] sm:$0xf]
        %v949 = vld [vmem:[#allocation2 + $0xa0] sm:$0xf]
        %v950 = vld [vmem:[#allocation2 + $0xa8] sm:$0xf]
        %v951 = vld [vmem:[#allocation2 + $0xac] sm:$0xf]
        %v952 = vld [vmem:[#allocation2 + $0xb4] sm:$0xf]
        %v953 = vld [vmem:[#allocation2 + $0xb8] sm:$0xf]
        %v954 = vld [vmem:[#allocation2 + $0xc0] sm:$0xf]
        %v955 = vld [vmem:[#allocation2 + $0xc4] sm:$0xf]
        %v956 = vld [vmem:[#allocation2 + $0xcc] sm:$0xf]
        %v957 = vld [vmem:[#allocation2 + $0xd0] sm:$0xf]
        %958 = vst [vmem:[#allocation3] sm:$0xf] %v922
        %959 = vst [vmem:[#allocation3 + $0xc] sm:$0xf] %v923
        %960 = vst [vmem:[#allocation3 + $0x18] sm:$0xf] %v924
        %961 = vst [vmem:[#allocation3 + $0x24] sm:$0xf] %v925
        %962 = vst [vmem:[#allocation3 + $0x30] sm:$0xf] %v926
        %963 = vst [vmem:[#allocation3 + $0x3c] sm:$0xf] %v927
        %964 = vst [vmem:[#allocation3 + $0x48] sm:$0xf] %v928
        %965 = vst [vmem:[#allocation3 + $0x54] sm:$0xf] %v929
        %966 = vst [vmem:[#allocation3 + $0x60] sm:$0xf] %v930
        %967 = vst [vmem:[#allocation3 + $0x6c] sm:$0xf] %v931
        %968 = vst [vmem:[#allocation3 + $0x78] sm:$0xf] %v932
        %969 = vst [vmem:[#allocation3 + $0x84] sm:$0xf] %v933
        %970 = vst [vmem:[#allocation3 + $0x90] sm:$0xf] %v934
        %971 = vst [vmem:[#allocation3 + $0x9c] sm:$0xf] %v935
        %972 = vst [vmem:[#allocation3 + $0xa8] sm:$0xf] %v936
        %973 = vst [vmem:[#allocation3 + $0xb4] sm:$0xf] %v937
        %974 = vst [vmem:[#allocation3 + $0xc0] sm:$0xf] %v938
        %975 = vst [vmem:[#allocation3 + $0xcc] sm:$0xf] %v939
        %976 = vst [vmem:[#allocation3 + $0xd8] sm:$0xf] %v940
        %977 = vst [vmem:[#allocation3 + $0xe4] sm:$0xf] %v941
        %978 = vst [vmem:[#allocation3 + $0xf0] sm:$0xf] %v942
        %979 = vst [vmem:[#allocation3 + $0xfc] sm:$0xf] %v943
        %980 = vst [vmem:[#allocation3 + $0x108] sm:$0xf] %v944
        %981 = vst [vmem:[#allocation3 + $0x114] sm:$0xf] %v945
        %982 = vst [vmem:[#allocation3 + $0x120] sm:$0xf] %v946
        %983 = vst [vmem:[#allocation3 + $0x12c] sm:$0xf] %v947
        %984 = vst [vmem:[#allocation3 + $0x138] sm:$0xf] %v948
        %985 = vst [vmem:[#allocation3 + $0x144] sm:$0xf] %v949
        %986 = vst [vmem:[#allocation3 + $0x150] sm:$0xf] %v950
        %987 = vst [vmem:[#allocation3 + $0x15c] sm:$0xf] %v951
        %988 = vst [vmem:[#allocation3 + $0x168] sm:$0xf] %v952
        %989 = vst [vmem:[#allocation3 + $0x174] sm:$0xf] %v953
        %990 = vst [vmem:[#allocation3 + $0x180] sm:$0xf] %v954
        %991 = vst [vmem:[#allocation3 + $0x18c] sm:$0xf] %v955
        %992 = vst [vmem:[#allocation3 + $0x198] sm:$0xf] %v956
        %993 = vst [vmem:[#allocation3 + $0x1a4] sm:$0xf] %v957
        %v994 = vld [vmem:[#allocation2] sm:$0xf]
        %v995 = vld [vmem:[#allocation2 + $0x4] sm:$0xf]
        %v996 = vld [vmem:[#allocation2 + $0x8] sm:$0x1]
        %v997 = vld [vmem:[#allocation2 + $0xc] sm:$0xf]
        %v998 = vld [vmem:[#allocation2 + $0x10] sm:$0xf]
        %v999 = vld [vmem:[#allocation2 + $0x14] sm:$0x1]
        %v1000 = vld [vmem:[#allocation2 + $0x18] sm:$0xf]
        %v1001 = vld [vmem:[#allocation2 + $0x1c] sm:$0xf]
        %v1002 = vld [vmem:[#allocation2 + $0x20] sm:$0x1]
        %v1003 = vld [vmem:[#allocation2 + $0x24] sm:$0xf]
        %v1004 = vld [vmem:[#allocation2 + $0x28] sm:$0xf]
        %v1005 = vld [vmem:[#allocation2 + $0x2c] sm:$0x1]
        %v1006 = vld [vmem:[#allocation2 + $0x30] sm:$0xf]
        %v1007 = vld [vmem:[#allocation2 + $0x34] sm:$0xf]
        %v1008 = vld [vmem:[#allocation2 + $0x38] sm:$0x1]
        %v1009 = vld [vmem:[#allocation2 + $0x3c] sm:$0xf]
        %v1010 = vld [vmem:[#allocation2 + $0x40] sm:$0xf]
        %v1011 = vld [vmem:[#allocation2 + $0x44] sm:$0x1]
        %v1012 = vld [vmem:[#allocation2 + $0x48] sm:$0xf]
        %v1013 = vld [vmem:[#allocation2 + $0x4c] sm:$0xf]
        %v1014 = vld [vmem:[#allocation2 + $0x50] sm:$0x1]
        %v1015 = vld [vmem:[#allocation2 + $0x54] sm:$0xf]
        %v1016 = vld [vmem:[#allocation2 + $0x58] sm:$0xf]
        %v1017 = vld [vmem:[#allocation2 + $0x5c] sm:$0x1]
        %v1018 = vld [vmem:[#allocation2 + $0x60] sm:$0xf]
        %v1019 = vld [vmem:[#allocation2 + $0x64] sm:$0xf]
        %v1020 = vld [vmem:[#allocation2 + $0x68] sm:$0x1]
        %v1021 = vld [vmem:[#allocation2 + $0x6c] sm:$0xf]
        %v1022 = vld [vmem:[#allocation2 + $0x70] sm:$0xf]
        %v1023 = vld [vmem:[#allocation2 + $0x74] sm:$0x1]
        %v1024 = vld [vmem:[#allocation2 + $0x78] sm:$0xf]
        %v1025 = vld [vmem:[#allocation2 + $0x7c] sm:$0xf]
        %v1026 = vld [vmem:[#allocation2 + $0x80] sm:$0x1]
        %v1027 = vld [vmem:[#allocation2 + $0x84] sm:$0xf]
        %v1028 = vld [vmem:[#allocation2 + $0x88] sm:$0xf]
        %v1029 = vld [vmem:[#allocation2 + $0x8c] sm:$0x1]
        %v1030 = vld [vmem:[#allocation2 + $0x90] sm:$0xf]
        %v1031 = vld [vmem:[#allocation2 + $0x94] sm:$0xf]
        %v1032 = vld [vmem:[#allocation2 + $0x98] sm:$0x1]
        %v1033 = vld [vmem:[#allocation2 + $0x9c] sm:$0xf]
        %v1034 = vld [vmem:[#allocation2 + $0xa0] sm:$0xf]
        %v1035 = vld [vmem:[#allocation2 + $0xa4] sm:$0x1]
        %v1036 = vld [vmem:[#allocation2 + $0xa8] sm:$0xf]
        %v1037 = vld [vmem:[#allocation2 + $0xac] sm:$0xf]
        %v1038 = vld [vmem:[#allocation2 + $0xb0] sm:$0x1]
        %v1039 = vld [vmem:[#allocation2 + $0xb4] sm:$0xf]
        %v1040 = vld [vmem:[#allocation2 + $0xb8] sm:$0xf]
        %v1041 = vld [vmem:[#allocation2 + $0xbc] sm:$0x1]
        %v1042 = vld [vmem:[#allocation2 + $0xc0] sm:$0xf]
        %v1043 = vld [vmem:[#allocation2 + $0xc4] sm:$0xf]
        %v1044 = vld [vmem:[#allocation2 + $0xc8] sm:$0x1]
        %v1045 = vld [vmem:[#allocation2 + $0xcc] sm:$0xf]
        %v1046 = vld [vmem:[#allocation2 + $0xd0] sm:$0xf]
        %v1047 = vld [vmem:[#allocation2 + $0xd4] sm:$0x1]
        %vm1048 = vsmask.f32 3328
        %vm1049 = vsmask.f32 7440
        %vm1050 = vmor %vm1048, %vm1049
        %v1052 = vshrl.u32 %v994, 16
        %v1054 = vrot.slane %v1052, 4
        %v1055 = vshll.u32 %v994, 16
        %v1057 = vrot.slane %v1055, 5
        %v1058 = vor.u32 %v1054, %v1057
        %v1059 = vrot.slane %v1058, 4
        %v1061 = vshll.u32 %v995, 16
        %v1063 = vrot.slane %v1061, 5
        %v1064 = vsel %vm1050, %v1059, %v1063
        %v1065 = vshrl.u32 %v995, 16
        %v1067 = vrot.slane %v1065, 4
        %v1068 = vor.u32 %v1067, %v1063
        %v1069 = vrot.slane %v1068, 4
        %v1071 = vshll.u32 %v996, 16
        %v1073 = vrot.slane %v1071, 5
        %v1074 = vsel %vm1050, %v1069, %v1073
        %v1076 = vshrl.u32 %v997, 16
        %v1078 = vrot.slane %v1076, 4
        %v1079 = vshll.u32 %v997, 16
        %v1081 = vrot.slane %v1079, 5
        %v1082 = vor.u32 %v1078, %v1081
        %v1083 = vrot.slane %v1082, 4
        %v1085 = vshll.u32 %v998, 16
        %v1087 = vrot.slane %v1085, 5
        %v1088 = vsel %vm1050, %v1083, %v1087
        %v1089 = vshrl.u32 %v998, 16
        %v1091 = vrot.slane %v1089, 4
        %v1092 = vor.u32 %v1091, %v1087
        %v1093 = vrot.slane %v1092, 4
        %v1095 = vshll.u32 %v999, 16
        %v1097 = vrot.slane %v1095, 5
        %v1098 = vsel %vm1050, %v1093, %v1097
        %v1100 = vshrl.u32 %v1000, 16
        %v1102 = vrot.slane %v1100, 4
        %v1103 = vshll.u32 %v1000, 16
        %v1105 = vrot.slane %v1103, 5
        %v1106 = vor.u32 %v1102, %v1105
        %v1107 = vrot.slane %v1106, 4
        %v1109 = vshll.u32 %v1001, 16
        %v1111 = vrot.slane %v1109, 5
        %v1112 = vsel %vm1050, %v1107, %v1111
        %v1113 = vshrl.u32 %v1001, 16
        %v1115 = vrot.slane %v1113, 4
        %v1116 = vor.u32 %v1115, %v1111
        %v1117 = vrot.slane %v1116, 4
        %v1119 = vshll.u32 %v1002, 16
        %v1121 = vrot.slane %v1119, 5
        %v1122 = vsel %vm1050, %v1117, %v1121
        %v1124 = vshrl.u32 %v1003, 16
        %v1126 = vrot.slane %v1124, 4
        %v1127 = vshll.u32 %v1003, 16
        %v1129 = vrot.slane %v1127, 5
        %v1130 = vor.u32 %v1126, %v1129
        %v1131 = vrot.slane %v1130, 4
        %v1133 = vshll.u32 %v1004, 16
        %v1135 = vrot.slane %v1133, 5
        %v1136 = vsel %vm1050, %v1131, %v1135
        %v1137 = vshrl.u32 %v1004, 16
        %v1139 = vrot.slane %v1137, 4
        %v1140 = vor.u32 %v1139, %v1135
        %v1141 = vrot.slane %v1140, 4
        %v1143 = vshll.u32 %v1005, 16
        %v1145 = vrot.slane %v1143, 5
        %v1146 = vsel %vm1050, %v1141, %v1145
        %v1148 = vshrl.u32 %v1006, 16
        %v1150 = vrot.slane %v1148, 4
        %v1151 = vshll.u32 %v1006, 16
        %v1153 = vrot.slane %v1151, 5
        %v1154 = vor.u32 %v1150, %v1153
        %v1155 = vrot.slane %v1154, 4
        %v1157 = vshll.u32 %v1007, 16
        %v1159 = vrot.slane %v1157, 5
        %v1160 = vsel %vm1050, %v1155, %v1159
        %v1161 = vshrl.u32 %v1007, 16
        %v1163 = vrot.slane %v1161, 4
        %v1164 = vor.u32 %v1163, %v1159
        %v1165 = vrot.slane %v1164, 4
        %v1167 = vshll.u32 %v1008, 16
        %v1169 = vrot.slane %v1167, 5
        %v1170 = vsel %vm1050, %v1165, %v1169
        %v1172 = vshrl.u32 %v1009, 16
        %v1174 = vrot.slane %v1172, 4
        %v1175 = vshll.u32 %v1009, 16
        %v1177 = vrot.slane %v1175, 5
        %v1178 = vor.u32 %v1174, %v1177
        %v1179 = vrot.slane %v1178, 4
        %v1181 = vshll.u32 %v1010, 16
        %v1183 = vrot.slane %v1181, 5
        %v1184 = vsel %vm1050, %v1179, %v1183
        %v1185 = vshrl.u32 %v1010, 16
        %v1187 = vrot.slane %v1185, 4
        %v1188 = vor.u32 %v1187, %v1183
        %v1189 = vrot.slane %v1188, 4
        %v1191 = vshll.u32 %v1011, 16
        %v1193 = vrot.slane %v1191, 5
        %v1194 = vsel %vm1050, %v1189, %v1193
        %v1196 = vshrl.u32 %v1012, 16
        %v1198 = vrot.slane %v1196, 4
        %v1199 = vshll.u32 %v1012, 16
        %v1201 = vrot.slane %v1199, 5
        %v1202 = vor.u32 %v1198, %v1201
        %v1203 = vrot.slane %v1202, 4
        %v1205 = vshll.u32 %v1013, 16
        %v1207 = vrot.slane %v1205, 5
        %v1208 = vsel %vm1050, %v1203, %v1207
        %v1209 = vshrl.u32 %v1013, 16
        %v1211 = vrot.slane %v1209, 4
        %v1212 = vor.u32 %v1211, %v1207
        %v1213 = vrot.slane %v1212, 4
        %v1215 = vshll.u32 %v1014, 16
        %v1217 = vrot.slane %v1215, 5
        %v1218 = vsel %vm1050, %v1213, %v1217
        %v1220 = vshrl.u32 %v1015, 16
        %v1222 = vrot.slane %v1220, 4
        %v1223 = vshll.u32 %v1015, 16
        %v1225 = vrot.slane %v1223, 5
        %v1226 = vor.u32 %v1222, %v1225
        %v1227 = vrot.slane %v1226, 4
        %v1229 = vshll.u32 %v1016, 16
        %v1231 = vrot.slane %v1229, 5
        %v1232 = vsel %vm1050, %v1227, %v1231
        %v1233 = vshrl.u32 %v1016, 16
        %v1235 = vrot.slane %v1233, 4
        %v1236 = vor.u32 %v1235, %v1231
        %v1237 = vrot.slane %v1236, 4
        %v1239 = vshll.u32 %v1017, 16
        %v1241 = vrot.slane %v1239, 5
        %v1242 = vsel %vm1050, %v1237, %v1241
        %v1244 = vshrl.u32 %v1018, 16
        %v1246 = vrot.slane %v1244, 4
        %v1247 = vshll.u32 %v1018, 16
        %v1249 = vrot.slane %v1247, 5
        %v1250 = vor.u32 %v1246, %v1249
        %v1251 = vrot.slane %v1250, 4
        %v1253 = vshll.u32 %v1019, 16
        %v1255 = vrot.slane %v1253, 5
        %v1256 = vsel %vm1050, %v1251, %v1255
        %v1257 = vshrl.u32 %v1019, 16
        %v1259 = vrot.slane %v1257, 4
        %v1260 = vor.u32 %v1259, %v1255
        %v1261 = vrot.slane %v1260, 4
        %v1263 = vshll.u32 %v1020, 16
        %v1265 = vrot.slane %v1263, 5
        %v1266 = vsel %vm1050, %v1261, %v1265
        %v1268 = vshrl.u32 %v1021, 16
        %v1270 = vrot.slane %v1268, 4
        %v1271 = vshll.u32 %v1021, 16
        %v1273 = vrot.slane %v1271, 5
        %v1274 = vor.u32 %v1270, %v1273
        %v1275 = vrot.slane %v1274, 4
        %v1277 = vshll.u32 %v1022, 16
        %v1279 = vrot.slane %v1277, 5
        %v1280 = vsel %vm1050, %v1275, %v1279
        %v1281 = vshrl.u32 %v1022, 16
        %v1283 = vrot.slane %v1281, 4
        %v1284 = vor.u32 %v1283, %v1279
        %v1285 = vrot.slane %v1284, 4
        %v1287 = vshll.u32 %v1023, 16
        %v1289 = vrot.slane %v1287, 5
        %v1290 = vsel %vm1050, %v1285, %v1289
        %v1292 = vshrl.u32 %v1024, 16
        %v1294 = vrot.slane %v1292, 4
        %v1295 = vshll.u32 %v1024, 16
        %v1297 = vrot.slane %v1295, 5
        %v1298 = vor.u32 %v1294, %v1297
        %v1299 = vrot.slane %v1298, 4
        %v1301 = vshll.u32 %v1025, 16
        %v1303 = vrot.slane %v1301, 5
        %v1304 = vsel %vm1050, %v1299, %v1303
        %v1305 = vshrl.u32 %v1025, 16
        %v1307 = vrot.slane %v1305, 4
        %v1308 = vor.u32 %v1307, %v1303
        %v1309 = vrot.slane %v1308, 4
        %v1311 = vshll.u32 %v1026, 16
        %v1313 = vrot.slane %v1311, 5
        %v1314 = vsel %vm1050, %v1309, %v1313
        %v1316 = vshrl.u32 %v1027, 16
        %v1318 = vrot.slane %v1316, 4
        %v1319 = vshll.u32 %v1027, 16
        %v1321 = vrot.slane %v1319, 5
        %v1322 = vor.u32 %v1318, %v1321
        %v1323 = vrot.slane %v1322, 4
        %v1325 = vshll.u32 %v1028, 16
        %v1327 = vrot.slane %v1325, 5
        %v1328 = vsel %vm1050, %v1323, %v1327
        %v1329 = vshrl.u32 %v1028, 16
        %v1331 = vrot.slane %v1329, 4
        %v1332 = vor.u32 %v1331, %v1327
        %v1333 = vrot.slane %v1332, 4
        %v1335 = vshll.u32 %v1029, 16
        %v1337 = vrot.slane %v1335, 5
        %v1338 = vsel %vm1050, %v1333, %v1337
        %v1340 = vshrl.u32 %v1030, 16
        %v1342 = vrot.slane %v1340, 4
        %v1343 = vshll.u32 %v1030, 16
        %v1345 = vrot.slane %v1343, 5
        %v1346 = vor.u32 %v1342, %v1345
        %v1347 = vrot.slane %v1346, 4
        %v1349 = vshll.u32 %v1031, 16
        %v1351 = vrot.slane %v1349, 5
        %v1352 = vsel %vm1050, %v1347, %v1351
        %v1353 = vshrl.u32 %v1031, 16
        %v1355 = vrot.slane %v1353, 4
        %v1356 = vor.u32 %v1355, %v1351
        %v1357 = vrot.slane %v1356, 4
        %v1359 = vshll.u32 %v1032, 16
        %v1361 = vrot.slane %v1359, 5
        %v1362 = vsel %vm1050, %v1357, %v1361
        %v1364 = vshrl.u32 %v1033, 16
        %v1366 = vrot.slane %v1364, 4
        %v1367 = vshll.u32 %v1033, 16
        %v1369 = vrot.slane %v1367, 5
        %v1370 = vor.u32 %v1366, %v1369
        %v1371 = vrot.slane %v1370, 4
        %v1373 = vshll.u32 %v1034, 16
        %v1375 = vrot.slane %v1373, 5
        %v1376 = vsel %vm1050, %v1371, %v1375
        %v1377 = vshrl.u32 %v1034, 16
        %v1379 = vrot.slane %v1377, 4
        %v1380 = vor.u32 %v1379, %v1375
        %v1381 = vrot.slane %v1380, 4
        %v1383 = vshll.u32 %v1035, 16
        %v1385 = vrot.slane %v1383, 5
        %v1386 = vsel %vm1050, %v1381, %v1385
        %v1388 = vshrl.u32 %v1036, 16
        %v1390 = vrot.slane %v1388, 4
        %v1391 = vshll.u32 %v1036, 16
        %v1393 = vrot.slane %v1391, 5
        %v1394 = vor.u32 %v1390, %v1393
        %v1395 = vrot.slane %v1394, 4
        %v1397 = vshll.u32 %v1037, 16
        %v1399 = vrot.slane %v1397, 5
        %v1400 = vsel %vm1050, %v1395, %v1399
        %v1401 = vshrl.u32 %v1037, 16
        %v1403 = vrot.slane %v1401, 4
        %v1404 = vor.u32 %v1403, %v1399
        %v1405 = vrot.slane %v1404, 4
        %v1407 = vshll.u32 %v1038, 16
        %v1409 = vrot.slane %v1407, 5
        %v1410 = vsel %vm1050, %v1405, %v1409
        %v1412 = vshrl.u32 %v1039, 16
        %v1414 = vrot.slane %v1412, 4
        %v1415 = vshll.u32 %v1039, 16
        %v1417 = vrot.slane %v1415, 5
        %v1418 = vor.u32 %v1414, %v1417
        %v1419 = vrot.slane %v1418, 4
        %v1421 = vshll.u32 %v1040, 16
        %v1423 = vrot.slane %v1421, 5
        %v1424 = vsel %vm1050, %v1419, %v1423
        %v1425 = vshrl.u32 %v1040, 16
        %v1427 = vrot.slane %v1425, 4
        %v1428 = vor.u32 %v1427, %v1423
        %v1429 = vrot.slane %v1428, 4
        %v1431 = vshll.u32 %v1041, 16
        %v1433 = vrot.slane %v1431, 5
        %v1434 = vsel %vm1050, %v1429, %v1433
        %v1436 = vshrl.u32 %v1042, 16
        %v1438 = vrot.slane %v1436, 4
        %v1439 = vshll.u32 %v1042, 16
        %v1441 = vrot.slane %v1439, 5
        %v1442 = vor.u32 %v1438, %v1441
        %v1443 = vrot.slane %v1442, 4
        %v1445 = vshll.u32 %v1043, 16
        %v1447 = vrot.slane %v1445, 5
        %v1448 = vsel %vm1050, %v1443, %v1447
        %v1449 = vshrl.u32 %v1043, 16
        %v1451 = vrot.slane %v1449, 4
        %v1452 = vor.u32 %v1451, %v1447
        %v1453 = vrot.slane %v1452, 4
        %v1455 = vshll.u32 %v1044, 16
        %v1457 = vrot.slane %v1455, 5
        %v1458 = vsel %vm1050, %v1453, %v1457
        %v1460 = vshrl.u32 %v1045, 16
        %v1462 = vrot.slane %v1460, 4
        %v1463 = vshll.u32 %v1045, 16
        %v1465 = vrot.slane %v1463, 5
        %v1466 = vor.u32 %v1462, %v1465
        %v1467 = vrot.slane %v1466, 4
        %v1469 = vshll.u32 %v1046, 16
        %v1471 = vrot.slane %v1469, 5
        %v1472 = vsel %vm1050, %v1467, %v1471
        %v1473 = vshrl.u32 %v1046, 16
        %v1475 = vrot.slane %v1473, 4
        %v1476 = vor.u32 %v1475, %v1471
        %v1477 = vrot.slane %v1476, 4
        %v1479 = vshll.u32 %v1047, 16
        %v1481 = vrot.slane %v1479, 5
        %v1482 = vsel %vm1050, %v1477, %v1481
        %1519 = vst [vmem:[#allocation3 + $0x4] sm:$0xf] %v1064
        %1520 = vst [vmem:[#allocation3 + $0x10] sm:$0xf] %v1074
        %1521 = vst [vmem:[#allocation3 + $0x1c] sm:$0xf] %v1088
        %1522 = vst [vmem:[#allocation3 + $0x28] sm:$0xf] %v1098
        %1523 = vst [vmem:[#allocation3 + $0x34] sm:$0xf] %v1112
        %1524 = vst [vmem:[#allocation3 + $0x40] sm:$0xf] %v1122
        %1525 = vst [vmem:[#allocation3 + $0x4c] sm:$0xf] %v1136
        %1526 = vst [vmem:[#allocation3 + $0x58] sm:$0xf] %v1146
        %1527 = vst [vmem:[#allocation3 + $0x64] sm:$0xf] %v1160
        %1528 = vst [vmem:[#allocation3 + $0x70] sm:$0xf] %v1170
        %1529 = vst [vmem:[#allocation3 + $0x7c] sm:$0xf] %v1184
        %1530 = vst [vmem:[#allocation3 + $0x88] sm:$0xf] %v1194
        %1531 = vst [vmem:[#allocation3 + $0x94] sm:$0xf] %v1208
        %1532 = vst [vmem:[#allocation3 + $0xa0] sm:$0xf] %v1218
        %1533 = vst [vmem:[#allocation3 + $0xac] sm:$0xf] %v1232
        %1534 = vst [vmem:[#allocation3 + $0xb8] sm:$0xf] %v1242
        %1535 = vst [vmem:[#allocation3 + $0xc4] sm:$0xf] %v1256
        %1536 = vst [vmem:[#allocation3 + $0xd0] sm:$0xf] %v1266
        %1537 = vst [vmem:[#allocation3 + $0xdc] sm:$0xf] %v1280
        %1538 = vst [vmem:[#allocation3 + $0xe8] sm:$0xf] %v1290
        %1539 = vst [vmem:[#allocation3 + $0xf4] sm:$0xf] %v1304
        %1540 = vst [vmem:[#allocation3 + $0x100] sm:$0xf] %v1314
        %1541 = vst [vmem:[#allocation3 + $0x10c] sm:$0xf] %v1328
        %1542 = vst [vmem:[#allocation3 + $0x118] sm:$0xf] %v1338
        %1543 = vst [vmem:[#allocation3 + $0x124] sm:$0xf] %v1352
        %1544 = vst [vmem:[#allocation3 + $0x130] sm:$0xf] %v1362
        %1545 = vst [vmem:[#allocation3 + $0x13c] sm:$0xf] %v1376
        %1546 = vst [vmem:[#allocation3 + $0x148] sm:$0xf] %v1386
        %1547 = vst [vmem:[#allocation3 + $0x154] sm:$0xf] %v1400
        %1548 = vst [vmem:[#allocation3 + $0x160] sm:$0xf] %v1410
        %1549 = vst [vmem:[#allocation3 + $0x16c] sm:$0xf] %v1424
        %1550 = vst [vmem:[#allocation3 + $0x178] sm:$0xf] %v1434
        %1551 = vst [vmem:[#allocation3 + $0x184] sm:$0xf] %v1448
        %1552 = vst [vmem:[#allocation3 + $0x190] sm:$0xf] %v1458
        %1553 = vst [vmem:[#allocation3 + $0x19c] sm:$0xf] %v1472
        %1554 = vst [vmem:[#allocation3 + $0x1a8] sm:$0xf] %v1482
        %v1555 = vld [vmem:[#allocation2] sm:$0xe]
        %v1556 = vld [vmem:[#allocation2 + $0x4] sm:$0xf]
        %v1557 = vld [vmem:[#allocation2 + $0x8] sm:$0x1]
        %v1558 = vld [vmem:[#allocation2 + $0xc] sm:$0xe]
        %v1559 = vld [vmem:[#allocation2 + $0x10] sm:$0xf]
        %v1560 = vld [vmem:[#allocation2 + $0x14] sm:$0x1]
        %v1561 = vld [vmem:[#allocation2 + $0x18] sm:$0xe]
        %v1562 = vld [vmem:[#allocation2 + $0x1c] sm:$0xf]
        %v1563 = vld [vmem:[#allocation2 + $0x20] sm:$0x1]
        %v1564 = vld [vmem:[#allocation2 + $0x24] sm:$0xe]
        %v1565 = vld [vmem:[#allocation2 + $0x28] sm:$0xf]
        %v1566 = vld [vmem:[#allocation2 + $0x2c] sm:$0x1]
        %v1567 = vld [vmem:[#allocation2 + $0x30] sm:$0xe]
        %v1568 = vld [vmem:[#allocation2 + $0x34] sm:$0xf]
        %v1569 = vld [vmem:[#allocation2 + $0x38] sm:$0x1]
        %v1570 = vld [vmem:[#allocation2 + $0x3c] sm:$0xe]
        %v1571 = vld [vmem:[#allocation2 + $0x40] sm:$0xf]
        %v1572 = vld [vmem:[#allocation2 + $0x44] sm:$0x1]
        %v1573 = vld [vmem:[#allocation2 + $0x48] sm:$0xe]
        %v1574 = vld [vmem:[#allocation2 + $0x4c] sm:$0xf]
        %v1575 = vld [vmem:[#allocation2 + $0x50] sm:$0x1]
        %v1576 = vld [vmem:[#allocation2 + $0x54] sm:$0xe]
        %v1577 = vld [vmem:[#allocation2 + $0x58] sm:$0xf]
        %v1578 = vld [vmem:[#allocation2 + $0x5c] sm:$0x1]
        %v1579 = vld [vmem:[#allocation2 + $0x60] sm:$0xe]
        %v1580 = vld [vmem:[#allocation2 + $0x64] sm:$0xf]
        %v1581 = vld [vmem:[#allocation2 + $0x68] sm:$0x1]
        %v1582 = vld [vmem:[#allocation2 + $0x6c] sm:$0xe]
        %v1583 = vld [vmem:[#allocation2 + $0x70] sm:$0xf]
        %v1584 = vld [vmem:[#allocation2 + $0x74] sm:$0x1]
        %v1585 = vld [vmem:[#allocation2 + $0x78] sm:$0xe]
        %v1586 = vld [vmem:[#allocation2 + $0x7c] sm:$0xf]
        %v1587 = vld [vmem:[#allocation2 + $0x80] sm:$0x1]
        %v1588 = vld [vmem:[#allocation2 + $0x84] sm:$0xe]
        %v1589 = vld [vmem:[#allocation2 + $0x88] sm:$0xf]
        %v1590 = vld [vmem:[#allocation2 + $0x8c] sm:$0x1]
        %v1591 = vld [vmem:[#allocation2 + $0x90] sm:$0xe]
        %v1592 = vld [vmem:[#allocation2 + $0x94] sm:$0xf]
        %v1593 = vld [vmem:[#allocation2 + $0x98] sm:$0x1]
        %v1594 = vld [vmem:[#allocation2 + $0x9c] sm:$0xe]
        %v1595 = vld [vmem:[#allocation2 + $0xa0] sm:$0xf]
        %v1596 = vld [vmem:[#allocation2 + $0xa4] sm:$0x1]
        %v1597 = vld [vmem:[#allocation2 + $0xa8] sm:$0xe]
        %v1598 = vld [vmem:[#allocation2 + $0xac] sm:$0xf]
        %v1599 = vld [vmem:[#allocation2 + $0xb0] sm:$0x1]
        %v1600 = vld [vmem:[#allocation2 + $0xb4] sm:$0xe]
        %v1601 = vld [vmem:[#allocation2 + $0xb8] sm:$0xf]
        %v1602 = vld [vmem:[#allocation2 + $0xbc] sm:$0x1]
        %v1603 = vld [vmem:[#allocation2 + $0xc0] sm:$0xe]
        %v1604 = vld [vmem:[#allocation2 + $0xc4] sm:$0xf]
        %v1605 = vld [vmem:[#allocation2 + $0xc8] sm:$0x1]
        %v1606 = vld [vmem:[#allocation2 + $0xcc] sm:$0xe]
        %v1607 = vld [vmem:[#allocation2 + $0xd0] sm:$0xf]
        %v1608 = vld [vmem:[#allocation2 + $0xd4] sm:$0x1]
        %vm1663 = vcmask 1042432
        %vm1664 = vcmask 1046532
        %vm1665 = vmor %vm1663, %vm1664
        %v1666 = vrot.slane %v1555, 5
        %v1667 = vrot.slane %v1666, 4
        %v1668 = vrot.slane %v1556, 5
        %v1669 = vsel %vm1665, %v1667, %v1668
        %v1670 = vrot.slane %v1668, 4
        %v1671 = vrot.slane %v1557, 5
        %v1672 = vsel %vm1665, %v1670, %v1671
        %v1673 = vrot.slane %v1558, 5
        %v1674 = vrot.slane %v1673, 4
        %v1675 = vrot.slane %v1559, 5
        %v1676 = vsel %vm1665, %v1674, %v1675
        %v1677 = vrot.slane %v1675, 4
        %v1678 = vrot.slane %v1560, 5
        %v1679 = vsel %vm1665, %v1677, %v1678
        %v1680 = vrot.slane %v1561, 5
        %v1681 = vrot.slane %v1680, 4
        %v1682 = vrot.slane %v1562, 5
        %v1683 = vsel %vm1665, %v1681, %v1682
        %v1684 = vrot.slane %v1682, 4
        %v1685 = vrot.slane %v1563, 5
        %v1686 = vsel %vm1665, %v1684, %v1685
        %v1687 = vrot.slane %v1564, 5
        %v1688 = vrot.slane %v1687, 4
        %v1689 = vrot.slane %v1565, 5
        %v1690 = vsel %vm1665, %v1688, %v1689
        %v1691 = vrot.slane %v1689, 4
        %v1692 = vrot.slane %v1566, 5
        %v1693 = vsel %vm1665, %v1691, %v1692
        %v1694 = vrot.slane %v1567, 5
        %v1695 = vrot.slane %v1694, 4
        %v1696 = vrot.slane %v1568, 5
        %v1697 = vsel %vm1665, %v1695, %v1696
        %v1698 = vrot.slane %v1696, 4
        %v1699 = vrot.slane %v1569, 5
        %v1700 = vsel %vm1665, %v1698, %v1699
        %v1701 = vrot.slane %v1570, 5
        %v1702 = vrot.slane %v1701, 4
        %v1703 = vrot.slane %v1571, 5
        %v1704 = vsel %vm1665, %v1702, %v1703
        %v1705 = vrot.slane %v1703, 4
        %v1706 = vrot.slane %v1572, 5
        %v1707 = vsel %vm1665, %v1705, %v1706
        %v1708 = vrot.slane %v1573, 5
        %v1709 = vrot.slane %v1708, 4
        %v1710 = vrot.slane %v1574, 5
        %v1711 = vsel %vm1665, %v1709, %v1710
        %v1712 = vrot.slane %v1710, 4
        %v1713 = vrot.slane %v1575, 5
        %v1714 = vsel %vm1665, %v1712, %v1713
        %v1715 = vrot.slane %v1576, 5
        %v1716 = vrot.slane %v1715, 4
        %v1717 = vrot.slane %v1577, 5
        %v1718 = vsel %vm1665, %v1716, %v1717
        %v1719 = vrot.slane %v1717, 4
        %v1720 = vrot.slane %v1578, 5
        %v1721 = vsel %vm1665, %v1719, %v1720
        %v1722 = vrot.slane %v1579, 5
        %v1723 = vrot.slane %v1722, 4
        %v1724 = vrot.slane %v1580, 5
        %v1725 = vsel %vm1665, %v1723, %v1724
        %v1726 = vrot.slane %v1724, 4
        %v1727 = vrot.slane %v1581, 5
        %v1728 = vsel %vm1665, %v1726, %v1727
        %v1729 = vrot.slane %v1582, 5
        %v1730 = vrot.slane %v1729, 4
        %v1731 = vrot.slane %v1583, 5
        %v1732 = vsel %vm1665, %v1730, %v1731
        %v1733 = vrot.slane %v1731, 4
        %v1734 = vrot.slane %v1584, 5
        %v1735 = vsel %vm1665, %v1733, %v1734
        %v1736 = vrot.slane %v1585, 5
        %v1737 = vrot.slane %v1736, 4
        %v1738 = vrot.slane %v1586, 5
        %v1739 = vsel %vm1665, %v1737, %v1738
        %v1740 = vrot.slane %v1738, 4
        %v1741 = vrot.slane %v1587, 5
        %v1742 = vsel %vm1665, %v1740, %v1741
        %v1743 = vrot.slane %v1588, 5
        %v1744 = vrot.slane %v1743, 4
        %v1745 = vrot.slane %v1589, 5
        %v1746 = vsel %vm1665, %v1744, %v1745
        %v1747 = vrot.slane %v1745, 4
        %v1748 = vrot.slane %v1590, 5
        %v1749 = vsel %vm1665, %v1747, %v1748
        %v1750 = vrot.slane %v1591, 5
        %v1751 = vrot.slane %v1750, 4
        %v1752 = vrot.slane %v1592, 5
        %v1753 = vsel %vm1665, %v1751, %v1752
        %v1754 = vrot.slane %v1752, 4
        %v1755 = vrot.slane %v1593, 5
        %v1756 = vsel %vm1665, %v1754, %v1755
        %v1757 = vrot.slane %v1594, 5
        %v1758 = vrot.slane %v1757, 4
        %v1759 = vrot.slane %v1595, 5
        %v1760 = vsel %vm1665, %v1758, %v1759
        %v1761 = vrot.slane %v1759, 4
        %v1762 = vrot.slane %v1596, 5
        %v1763 = vsel %vm1665, %v1761, %v1762
        %v1764 = vrot.slane %v1597, 5
        %v1765 = vrot.slane %v1764, 4
        %v1766 = vrot.slane %v1598, 5
        %v1767 = vsel %vm1665, %v1765, %v1766
        %v1768 = vrot.slane %v1766, 4
        %v1769 = vrot.slane %v1599, 5
        %v1770 = vsel %vm1665, %v1768, %v1769
        %v1771 = vrot.slane %v1600, 5
        %v1772 = vrot.slane %v1771, 4
        %v1773 = vrot.slane %v1601, 5
        %v1774 = vsel %vm1665, %v1772, %v1773
        %v1775 = vrot.slane %v1773, 4
        %v1776 = vrot.slane %v1602, 5
        %v1777 = vsel %vm1665, %v1775, %v1776
        %v1778 = vrot.slane %v1603, 5
        %v1779 = vrot.slane %v1778, 4
        %v1780 = vrot.slane %v1604, 5
        %v1781 = vsel %vm1665, %v1779, %v1780
        %v1782 = vrot.slane %v1780, 4
        %v1783 = vrot.slane %v1605, 5
        %v1784 = vsel %vm1665, %v1782, %v1783
        %v1785 = vrot.slane %v1606, 5
        %v1786 = vrot.slane %v1785, 4
        %v1787 = vrot.slane %v1607, 5
        %v1788 = vsel %vm1665, %v1786, %v1787
        %v1789 = vrot.slane %v1787, 4
        %v1790 = vrot.slane %v1608, 5
        %v1791 = vsel %vm1665, %v1789, %v1790
        %1828 = vst [vmem:[#allocation3 + $0x8] sm:$0xf] %v1669
        %1829 = vst [vmem:[#allocation3 + $0x14] sm:$0xf] %v1672
        %1830 = vst [vmem:[#allocation3 + $0x20] sm:$0xf] %v1676
        %1831 = vst [vmem:[#allocation3 + $0x2c] sm:$0xf] %v1679
        %1832 = vst [vmem:[#allocation3 + $0x38] sm:$0xf] %v1683
        %1833 = vst [vmem:[#allocation3 + $0x44] sm:$0xf] %v1686
        %1834 = vst [vmem:[#allocation3 + $0x50] sm:$0xf] %v1690
        %1835 = vst [vmem:[#allocation3 + $0x5c] sm:$0xf] %v1693
        %1836 = vst [vmem:[#allocation3 + $0x68] sm:$0xf] %v1697
        %1837 = vst [vmem:[#allocation3 + $0x74] sm:$0xf] %v1700
        %1838 = vst [vmem:[#allocation3 + $0x80] sm:$0xf] %v1704
        %1839 = vst [vmem:[#allocation3 + $0x8c] sm:$0xf] %v1707
        %1840 = vst [vmem:[#allocation3 + $0x98] sm:$0xf] %v1711
        %1841 = vst [vmem:[#allocation3 + $0xa4] sm:$0xf] %v1714
        %1842 = vst [vmem:[#allocation3 + $0xb0] sm:$0xf] %v1718
        %1843 = vst [vmem:[#allocation3 + $0xbc] sm:$0xf] %v1721
        %1844 = vst [vmem:[#allocation3 + $0xc8] sm:$0xf] %v1725
        %1845 = vst [vmem:[#allocation3 + $0xd4] sm:$0xf] %v1728
        %1846 = vst [vmem:[#allocation3 + $0xe0] sm:$0xf] %v1732
        %1847 = vst [vmem:[#allocation3 + $0xec] sm:$0xf] %v1735
        %1848 = vst [vmem:[#allocation3 + $0xf8] sm:$0xf] %v1739
        %1849 = vst [vmem:[#allocation3 + $0x104] sm:$0xf] %v1742
        %1850 = vst [vmem:[#allocation3 + $0x110] sm:$0xf] %v1746
        %1851 = vst [vmem:[#allocation3 + $0x11c] sm:$0xf] %v1749
        %1852 = vst [vmem:[#allocation3 + $0x128] sm:$0xf] %v1753
        %1853 = vst [vmem:[#allocation3 + $0x134] sm:$0xf] %v1756
        %1854 = vst [vmem:[#allocation3 + $0x140] sm:$0xf] %v1760
        %1855 = vst [vmem:[#allocation3 + $0x14c] sm:$0xf] %v1763
        %1856 = vst [vmem:[#allocation3 + $0x158] sm:$0xf] %v1767
        %1857 = vst [vmem:[#allocation3 + $0x164] sm:$0xf] %v1770
        %1858 = vst [vmem:[#allocation3 + $0x170] sm:$0xf] %v1774
        %1859 = vst [vmem:[#allocation3 + $0x17c] sm:$0xf] %v1777
        %1860 = vst [vmem:[#allocation3 + $0x188] sm:$0xf] %v1781
        %1861 = vst [vmem:[#allocation3 + $0x194] sm:$0xf] %v1784
        %1862 = vst [vmem:[#allocation3 + $0x1a0] sm:$0xf] %v1788
        %1863 = vst [vmem:[#allocation3 + $0x1ac] sm:$0xf] %v1791
        %v1864 = vld [vmem:[#allocation3] sm:$0xff]
        %v1865 = vld [vmem:[#allocation3 + $0x8] sm:$0xf]
        %v1866 = vld [vmem:[#allocation3 + $0xc] sm:$0xff]
        %v1867 = vld [vmem:[#allocation3 + $0x14] sm:$0xf]
        %v1868 = vld [vmem:[#allocation3 + $0x18] sm:$0xff]
        %v1869 = vld [vmem:[#allocation3 + $0x20] sm:$0xf]
        %v1870 = vld [vmem:[#allocation3 + $0x24] sm:$0xff]
        %v1871 = vld [vmem:[#allocation3 + $0x2c] sm:$0xf]
        %v1872 = vld [vmem:[#allocation3 + $0x30] sm:$0xff]
        %v1873 = vld [vmem:[#allocation3 + $0x38] sm:$0xf]
        %v1874 = vld [vmem:[#allocation3 + $0x3c] sm:$0xff]
        %v1875 = vld [vmem:[#allocation3 + $0x44] sm:$0xf]
        %v1876 = vld [vmem:[#allocation3 + $0x48] sm:$0xff]
        %v1877 = vld [vmem:[#allocation3 + $0x50] sm:$0xf]
        %v1878 = vld [vmem:[#allocation3 + $0x54] sm:$0xff]
        %v1879 = vld [vmem:[#allocation3 + $0x5c] sm:$0xf]
        %v1880 = vld [vmem:[#allocation3 + $0x60] sm:$0xff]
        %v1881 = vld [vmem:[#allocation3 + $0x68] sm:$0xf]
        %v1882 = vld [vmem:[#allocation3 + $0x6c] sm:$0xff]
        %v1883 = vld [vmem:[#allocation3 + $0x74] sm:$0xf]
        %v1884 = vld [vmem:[#allocation3 + $0x78] sm:$0xff]
        %v1885 = vld [vmem:[#allocation3 + $0x80] sm:$0xf]
        %v1886 = vld [vmem:[#allocation3 + $0x84] sm:$0xff]
        %v1887 = vld [vmem:[#allocation3 + $0x8c] sm:$0xf]
        %v1888 = vld [vmem:[#allocation3 + $0x90] sm:$0xff]
        %v1889 = vld [vmem:[#allocation3 + $0x98] sm:$0xf]
        %v1890 = vld [vmem:[#allocation3 + $0x9c] sm:$0xff]
        %v1891 = vld [vmem:[#allocation3 + $0xa4] sm:$0xf]
        %v1892 = vld [vmem:[#allocation3 + $0xa8] sm:$0xff]
        %v1893 = vld [vmem:[#allocation3 + $0xb0] sm:$0xf]
        %v1894 = vld [vmem:[#allocation3 + $0xb4] sm:$0xff]
        %v1895 = vld [vmem:[#allocation3 + $0xbc] sm:$0xf]
        %v1896 = vld [vmem:[#allocation3 + $0xc0] sm:$0xff]
        %v1897 = vld [vmem:[#allocation3 + $0xc8] sm:$0xf]
        %v1898 = vld [vmem:[#allocation3 + $0xcc] sm:$0xff]
        %v1899 = vld [vmem:[#allocation3 + $0xd4] sm:$0xf]
        %v1900 = vld [vmem:[#allocation3 + $0xd8] sm:$0xff]
        %v1901 = vld [vmem:[#allocation3 + $0xe0] sm:$0xf]
        %v1902 = vld [vmem:[#allocation3 + $0xe4] sm:$0xff]
        %v1903 = vld [vmem:[#allocation3 + $0xec] sm:$0xf]
        %v1904 = vld [vmem:[#allocation3 + $0xf0] sm:$0xff]
        %v1905 = vld [vmem:[#allocation3 + $0xf8] sm:$0xf]
        %v1906 = vld [vmem:[#allocation3 + $0xfc] sm:$0xff]
        %v1907 = vld [vmem:[#allocation3 + $0x104] sm:$0xf]
        %v1908 = vld [vmem:[#allocation3 + $0x108] sm:$0xff]
        %v1909 = vld [vmem:[#allocation3 + $0x110] sm:$0xf]
        %v1910 = vld [vmem:[#allocation3 + $0x114] sm:$0xff]
        %v1911 = vld [vmem:[#allocation3 + $0x11c] sm:$0xf]
        %v1912 = vld [vmem:[#allocation3 + $0x120] sm:$0xff]
        %v1913 = vld [vmem:[#allocation3 + $0x128] sm:$0xf]
        %v1914 = vld [vmem:[#allocation3 + $0x12c] sm:$0xff]
        %v1915 = vld [vmem:[#allocation3 + $0x134] sm:$0xf]
        %v1916 = vld [vmem:[#allocation3 + $0x138] sm:$0xff]
        %v1917 = vld [vmem:[#allocation3 + $0x140] sm:$0xf]
        %v1918 = vld [vmem:[#allocation3 + $0x144] sm:$0xff]
        %v1919 = vld [vmem:[#allocation3 + $0x14c] sm:$0xf]
        %v1920 = vld [vmem:[#allocation3 + $0x150] sm:$0xff]
        %v1921 = vld [vmem:[#allocation3 + $0x158] sm:$0xf]
        %v1922 = vld [vmem:[#allocation3 + $0x15c] sm:$0xff]
        %v1923 = vld [vmem:[#allocation3 + $0x164] sm:$0xf]
        %v1924 = vld [vmem:[#allocation3 + $0x168] sm:$0xff]
        %v1925 = vld [vmem:[#allocation3 + $0x170] sm:$0xf]
        %v1926 = vld [vmem:[#allocation3 + $0x174] sm:$0xff]
        %v1927 = vld [vmem:[#allocation3 + $0x17c] sm:$0xf]
        %v1928 = vld [vmem:[#allocation7] sm:$0xf]
        %v1929 = vld [vmem:[#allocation7 + $0x4] sm:$0xf]
        %v1930 = vld [vmem:[#allocation7 + $0x8] sm:$0xf]
        %v1931 = vld [vmem:[#allocation7 + $0xc] sm:$0xf]
        %v1932 = vld [vmem:[#allocation7 + $0x10] sm:$0xf]
        %v1933 = vld [vmem:[#allocation7 + $0x14] sm:$0xf]
        %v1934 = vld [vmem:[#allocation7 + $0x18] sm:$0xf]
        %v1935 = vld [vmem:[#allocation7 + $0x1c] sm:$0xf]
        %v1936 = vld [vmem:[#allocation7 + $0x20] sm:$0xf]
        %v1937 = vld [vmem:[#allocation7 + $0x24] sm:$0xf]
        %v1938 = vld [vmem:[#allocation7 + $0x28] sm:$0xf]
        %v1939 = vld [vmem:[#allocation7 + $0x2c] sm:$0xf]
        %v1940 = vld [vmem:[#allocation7 + $0x30] sm:$0xf]
        %v1941 = vld [vmem:[#allocation7 + $0x34] sm:$0xf]
        %v1942 = vld [vmem:[#allocation7 + $0x38] sm:$0xf]
        %v1943 = vld [vmem:[#allocation7 + $0x3c] sm:$0xf]
        %v1944 = vld [vmem:[#allocation7 + $0x40] sm:$0xf]
        %v1945 = vld [vmem:[#allocation7 + $0x44] sm:$0xf]
        %v1946 = vld [vmem:[#allocation7 + $0x48] sm:$0xf]
        %v1947 = vld [vmem:[#allocation7 + $0x4c] sm:$0xf]
        %v1948 = vld [vmem:[#allocation7 + $0x50] sm:$0xf]
        %v1949 = vld [vmem:[#allocation7 + $0x54] sm:$0xf]
        %v1950 = vld [vmem:[#allocation7 + $0x58] sm:$0xf]
        %v1951 = vld [vmem:[#allocation7 + $0x5c] sm:$0xf]
        %v1952 = vld [vmem:[#allocation7 + $0x60] sm:$0xf]
        %v1953 = vld [vmem:[#allocation7 + $0x64] sm:$0xf]
        %v1954 = vld [vmem:[#allocation7 + $0x68] sm:$0xf]
        %v1955 = vld [vmem:[#allocation7 + $0x6c] sm:$0xf]
        %v1956 = vld [vmem:[#allocation7 + $0x70] sm:$0xf]
        %v1957 = vld [vmem:[#allocation7 + $0x74] sm:$0xf]
        %v1958 = vld [vmem:[#allocation7 + $0x78] sm:$0xf]
        %v1959 = vld [vmem:[#allocation7 + $0x7c] sm:$0xf]
        %v1960 = vld [vmem:[#allocation7 + $0x80] sm:$0xf]
        %v1961 = vld [vmem:[#allocation7 + $0x84] sm:$0xf]
        %v1962 = vld [vmem:[#allocation7 + $0x88] sm:$0xf]
        %v1963 = vld [vmem:[#allocation7 + $0x8c] sm:$0xf]
        %v1964 = vld [vmem:[#allocation7 + $0x90] sm:$0xf]
        %v1965 = vld [vmem:[#allocation7 + $0x94] sm:$0xf]
        %v1966 = vld [vmem:[#allocation7 + $0x98] sm:$0xf]
        %v1967 = vld [vmem:[#allocation7 + $0x9c] sm:$0xf]
        %v1968 = vld [vmem:[#allocation7 + $0xa0] sm:$0xf]
        %v1969 = vld [vmem:[#allocation7 + $0xa4] sm:$0xf]
        %v1970 = vld [vmem:[#allocation7 + $0xa8] sm:$0xf]
        %v1971 = vld [vmem:[#allocation7 + $0xac] sm:$0xf]
        %v1972 = vld [vmem:[#allocation7 + $0xb0] sm:$0xf]
        %v1973 = vld [vmem:[#allocation7 + $0xb4] sm:$0xf]
        %v1974 = vld [vmem:[#allocation7 + $0xb8] sm:$0xf]
        %v1975 = vld [vmem:[#allocation7 + $0xbc] sm:$0xf]
        %s1976 = scalar_lea.vmem [#allocation3], 24
        %v1977 = vld [vmem:[%s1976] sm:$0xff]
        %v1978 = vld [vmem:[%s1976 + $0x8] sm:$0xf]
        %v1979 = vld [vmem:[%s1976 + $0xc] sm:$0xff]
        %v1980 = vld [vmem:[%s1976 + $0x14] sm:$0xf]
        %v1981 = vld [vmem:[%s1976 + $0x18] sm:$0xff]
        %v1982 = vld [vmem:[%s1976 + $0x20] sm:$0xf]
        %v1983 = vld [vmem:[%s1976 + $0x24] sm:$0xff]
        %v1984 = vld [vmem:[%s1976 + $0x2c] sm:$0xf]
        %v1985 = vld [vmem:[%s1976 + $0x30] sm:$0xff]
        %v1986 = vld [vmem:[%s1976 + $0x38] sm:$0xf]
        %v1987 = vld [vmem:[%s1976 + $0x3c] sm:$0xff]
        %v1988 = vld [vmem:[%s1976 + $0x44] sm:$0xf]
        %v1989 = vld [vmem:[%s1976 + $0x48] sm:$0xff]
        %v1990 = vld [vmem:[%s1976 + $0x50] sm:$0xf]
        %v1991 = vld [vmem:[%s1976 + $0x54] sm:$0xff]
        %v1992 = vld [vmem:[%s1976 + $0x5c] sm:$0xf]
        %v1993 = vld [vmem:[%s1976 + $0x60] sm:$0xff]
        %v1994 = vld [vmem:[%s1976 + $0x68] sm:$0xf]
        %v1995 = vld [vmem:[%s1976 + $0x6c] sm:$0xff]
        %v1996 = vld [vmem:[%s1976 + $0x74] sm:$0xf]
        %v1997 = vld [vmem:[%s1976 + $0x78] sm:$0xff]
        %v1998 = vld [vmem:[%s1976 + $0x80] sm:$0xf]
        %v1999 = vld [vmem:[%s1976 + $0x84] sm:$0xff]
        %v2000 = vld [vmem:[%s1976 + $0x8c] sm:$0xf]
        %v2001 = vld [vmem:[%s1976 + $0x90] sm:$0xff]
        %v2002 = vld [vmem:[%s1976 + $0x98] sm:$0xf]
        %v2003 = vld [vmem:[%s1976 + $0x9c] sm:$0xff]
        %v2004 = vld [vmem:[%s1976 + $0xa4] sm:$0xf]
        %v2005 = vld [vmem:[%s1976 + $0xa8] sm:$0xff]
        %v2006 = vld [vmem:[%s1976 + $0xb0] sm:$0xf]
        %v2007 = vld [vmem:[%s1976 + $0xb4] sm:$0xff]
        %v2008 = vld [vmem:[%s1976 + $0xbc] sm:$0xf]
        %v2009 = vld [vmem:[%s1976 + $0xc0] sm:$0xff]
        %v2010 = vld [vmem:[%s1976 + $0xc8] sm:$0xf]
        %v2011 = vld [vmem:[%s1976 + $0xcc] sm:$0xff]
        %v2012 = vld [vmem:[%s1976 + $0xd4] sm:$0xf]
        %v2013 = vld [vmem:[%s1976 + $0xd8] sm:$0xff]
        %v2014 = vld [vmem:[%s1976 + $0xe0] sm:$0xf]
        %v2015 = vld [vmem:[%s1976 + $0xe4] sm:$0xff]
        %v2016 = vld [vmem:[%s1976 + $0xec] sm:$0xf]
        %v2017 = vld [vmem:[%s1976 + $0xf0] sm:$0xff]
        %v2018 = vld [vmem:[%s1976 + $0xf8] sm:$0xf]
        %v2019 = vld [vmem:[%s1976 + $0xfc] sm:$0xff]
        %v2020 = vld [vmem:[%s1976 + $0x104] sm:$0xf]
        %v2021 = vld [vmem:[%s1976 + $0x108] sm:$0xff]
        %v2022 = vld [vmem:[%s1976 + $0x110] sm:$0xf]
        %v2023 = vld [vmem:[%s1976 + $0x114] sm:$0xff]
        %v2024 = vld [vmem:[%s1976 + $0x11c] sm:$0xf]
        %v2025 = vld [vmem:[%s1976 + $0x120] sm:$0xff]
        %v2026 = vld [vmem:[%s1976 + $0x128] sm:$0xf]
        %v2027 = vld [vmem:[%s1976 + $0x12c] sm:$0xff]
        %v2028 = vld [vmem:[%s1976 + $0x134] sm:$0xf]
        %v2029 = vld [vmem:[%s1976 + $0x138] sm:$0xff]
        %v2030 = vld [vmem:[%s1976 + $0x140] sm:$0xf]
        %v2031 = vld [vmem:[%s1976 + $0x144] sm:$0xff]
        %v2032 = vld [vmem:[%s1976 + $0x14c] sm:$0xf]
        %v2033 = vld [vmem:[%s1976 + $0x150] sm:$0xff]
        %v2034 = vld [vmem:[%s1976 + $0x158] sm:$0xf]
        %v2035 = vld [vmem:[%s1976 + $0x15c] sm:$0xff]
        %v2036 = vld [vmem:[%s1976 + $0x164] sm:$0xf]
        %v2037 = vld [vmem:[%s1976 + $0x168] sm:$0xff]
        %v2038 = vld [vmem:[%s1976 + $0x170] sm:$0xf]
        %v2039 = vld [vmem:[%s1976 + $0x174] sm:$0xff]
        %v2040 = vld [vmem:[%s1976 + $0x17c] sm:$0xf]
        %s2041 = scalar_lea.vmem [#allocation7], 192
        %v2042 = vld [vmem:[%s2041] sm:$0xf]
        %v2043 = vld [vmem:[%s2041 + $0x4] sm:$0xf]
        %v2044 = vld [vmem:[%s2041 + $0x8] sm:$0xf]
        %v2045 = vld [vmem:[%s2041 + $0xc] sm:$0xf]
        %v2046 = vld [vmem:[%s2041 + $0x10] sm:$0xf]
        %v2047 = vld [vmem:[%s2041 + $0x14] sm:$0xf]
        %v2048 = vld [vmem:[%s2041 + $0x18] sm:$0xf]
        %v2049 = vld [vmem:[%s2041 + $0x1c] sm:$0xf]
        %v2050 = vld [vmem:[%s2041 + $0x20] sm:$0xf]
        %v2051 = vld [vmem:[%s2041 + $0x24] sm:$0xf]
        %v2052 = vld [vmem:[%s2041 + $0x28] sm:$0xf]
        %v2053 = vld [vmem:[%s2041 + $0x2c] sm:$0xf]
        %v2054 = vld [vmem:[%s2041 + $0x30] sm:$0xf]
        %v2055 = vld [vmem:[%s2041 + $0x34] sm:$0xf]
        %v2056 = vld [vmem:[%s2041 + $0x38] sm:$0xf]
        %v2057 = vld [vmem:[%s2041 + $0x3c] sm:$0xf]
        %v2058 = vld [vmem:[%s2041 + $0x40] sm:$0xf]
        %v2059 = vld [vmem:[%s2041 + $0x44] sm:$0xf]
        %v2060 = vld [vmem:[%s2041 + $0x48] sm:$0xf]
        %v2061 = vld [vmem:[%s2041 + $0x4c] sm:$0xf]
        %v2062 = vld [vmem:[%s2041 + $0x50] sm:$0xf]
        %v2063 = vld [vmem:[%s2041 + $0x54] sm:$0xf]
        %v2064 = vld [vmem:[%s2041 + $0x58] sm:$0xf]
        %v2065 = vld [vmem:[%s2041 + $0x5c] sm:$0xf]
        %v2066 = vld [vmem:[%s2041 + $0x60] sm:$0xf]
        %v2067 = vld [vmem:[%s2041 + $0x64] sm:$0xf]
        %v2068 = vld [vmem:[%s2041 + $0x68] sm:$0xf]
        %v2069 = vld [vmem:[%s2041 + $0x6c] sm:$0xf]
        %v2070 = vld [vmem:[%s2041 + $0x70] sm:$0xf]
        %v2071 = vld [vmem:[%s2041 + $0x74] sm:$0xf]
        %v2072 = vld [vmem:[%s2041 + $0x78] sm:$0xf]
        %v2073 = vld [vmem:[%s2041 + $0x7c] sm:$0xf]
        %v2074 = vld [vmem:[%s2041 + $0x80] sm:$0xf]
        %v2075 = vld [vmem:[%s2041 + $0x84] sm:$0xf]
        %v2076 = vld [vmem:[%s2041 + $0x88] sm:$0xf]
        %v2077 = vld [vmem:[%s2041 + $0x8c] sm:$0xf]
        %v2078 = vld [vmem:[%s2041 + $0x90] sm:$0xf]
        %v2079 = vld [vmem:[%s2041 + $0x94] sm:$0xf]
        %v2080 = vld [vmem:[%s2041 + $0x98] sm:$0xf]
        %v2081 = vld [vmem:[%s2041 + $0x9c] sm:$0xf]
        %v2082 = vld [vmem:[%s2041 + $0xa0] sm:$0xf]
        %v2083 = vld [vmem:[%s2041 + $0xa4] sm:$0xf]
        %v2084 = vld [vmem:[%s2041 + $0xa8] sm:$0xf]
        %v2085 = vld [vmem:[%s2041 + $0xac] sm:$0xf]
        %v2086 = vld [vmem:[%s2041 + $0xb0] sm:$0xf]
        %v2087 = vld [vmem:[%s2041 + $0xb4] sm:$0xf]
        %v2088 = vld [vmem:[%s2041 + $0xb8] sm:$0xf]
        %v2089 = vld [vmem:[%s2041 + $0xbc] sm:$0xf]
        %v2154 = vunpack.c.l.b16 %v1977
        %v2155 = vunpack.c.h.b16 %v1977
        %v2156 = vunpack.c.l.b16 %v1978
        %v2157 = vunpack.c.l.b16 %v1979
        %v2158 = vunpack.c.h.b16 %v1979
        %v2159 = vunpack.c.l.b16 %v1980
        %v2160 = vunpack.c.l.b16 %v1981
        %v2161 = vunpack.c.h.b16 %v1981
        %v2162 = vunpack.c.l.b16 %v1982
        %v2163 = vunpack.c.l.b16 %v1983
        %v2164 = vunpack.c.h.b16 %v1983
        %v2165 = vunpack.c.l.b16 %v1984
        %v2166 = vunpack.c.l.b16 %v1985
        %v2167 = vunpack.c.h.b16 %v1985
        %v2168 = vunpack.c.l.b16 %v1986
        %v2169 = vunpack.c.l.b16 %v1987
        %v2170 = vunpack.c.h.b16 %v1987
        %v2171 = vunpack.c.l.b16 %v1988
        %v2172 = vunpack.c.l.b16 %v1989
        %v2173 = vunpack.c.h.b16 %v1989
        %v2174 = vunpack.c.l.b16 %v1990
        %v2175 = vunpack.c.l.b16 %v1991
        %v2176 = vunpack.c.h.b16 %v1991
        %v2177 = vunpack.c.l.b16 %v1992
        %v2178 = vunpack.c.l.b16 %v1993
        %v2179 = vunpack.c.h.b16 %v1993
        %v2180 = vunpack.c.l.b16 %v1994
        %v2181 = vunpack.c.l.b16 %v1995
        %v2182 = vunpack.c.h.b16 %v1995
        %v2183 = vunpack.c.l.b16 %v1996
        %v2184 = vunpack.c.l.b16 %v1997
        %v2185 = vunpack.c.h.b16 %v1997
        %v2186 = vunpack.c.l.b16 %v1998
        %v2187 = vunpack.c.l.b16 %v1999
        %v2188 = vunpack.c.h.b16 %v1999
        %v2189 = vunpack.c.l.b16 %v2000
        %v2190 = vunpack.c.l.b16 %v2001
        %v2191 = vunpack.c.h.b16 %v2001
        %v2192 = vunpack.c.l.b16 %v2002
        %v2193 = vunpack.c.l.b16 %v2003
        %v2194 = vunpack.c.h.b16 %v2003
        %v2195 = vunpack.c.l.b16 %v2004
        %v2196 = vunpack.c.l.b16 %v2005
        %v2197 = vunpack.c.h.b16 %v2005
        %v2198 = vunpack.c.l.b16 %v2006
        %v2199 = vunpack.c.l.b16 %v2007
        %v2200 = vunpack.c.h.b16 %v2007
        %v2201 = vunpack.c.l.b16 %v2008
        %v2202 = vunpack.c.l.b16 %v2009
        %v2203 = vunpack.c.h.b16 %v2009
        %v2204 = vunpack.c.l.b16 %v2010
        %v2205 = vunpack.c.l.b16 %v2011
        %v2206 = vunpack.c.h.b16 %v2011
        %v2207 = vunpack.c.l.b16 %v2012
        %v2208 = vunpack.c.l.b16 %v2013
        %v2209 = vunpack.c.h.b16 %v2013
        %v2210 = vunpack.c.l.b16 %v2014
        %v2211 = vunpack.c.l.b16 %v2015
        %v2212 = vunpack.c.h.b16 %v2015
        %v2213 = vunpack.c.l.b16 %v2016
        %v2214 = vunpack.c.l.b16 %v2017
        %v2215 = vunpack.c.h.b16 %v2017
        %v2216 = vunpack.c.l.b16 %v2018
        %v2217 = vunpack.c.l.b16 %v2019
        %v2218 = vunpack.c.h.b16 %v2019
        %v2219 = vunpack.c.l.b16 %v2020
        %v2220 = vunpack.c.l.b16 %v2021
        %v2221 = vunpack.c.h.b16 %v2021
        %v2222 = vunpack.c.l.b16 %v2022
        %v2223 = vunpack.c.l.b16 %v2023
        %v2224 = vunpack.c.h.b16 %v2023
        %v2225 = vunpack.c.l.b16 %v2024
        %v2226 = vunpack.c.l.b16 %v2025
        %v2227 = vunpack.c.h.b16 %v2025
        %v2228 = vunpack.c.l.b16 %v2026
        %v2229 = vunpack.c.l.b16 %v2027
        %v2230 = vunpack.c.h.b16 %v2027
        %v2231 = vunpack.c.l.b16 %v2028
        %v2232 = vunpack.c.l.b16 %v2029
        %v2233 = vunpack.c.h.b16 %v2029
        %v2234 = vunpack.c.l.b16 %v2030
        %v2235 = vunpack.c.l.b16 %v2031
        %v2236 = vunpack.c.h.b16 %v2031
        %v2237 = vunpack.c.l.b16 %v2032
        %v2238 = vunpack.c.l.b16 %v2033
        %v2239 = vunpack.c.h.b16 %v2033
        %v2240 = vunpack.c.l.b16 %v2034
        %v2241 = vunpack.c.l.b16 %v2035
        %v2242 = vunpack.c.h.b16 %v2035
        %v2243 = vunpack.c.l.b16 %v2036
        %v2244 = vunpack.c.l.b16 %v2037
        %v2245 = vunpack.c.h.b16 %v2037
        %v2246 = vunpack.c.l.b16 %v2038
        %v2247 = vunpack.c.l.b16 %v2039
        %v2248 = vunpack.c.h.b16 %v2039
        %v2249 = vunpack.c.l.b16 %v2040
        %v2250 = vpack.c.b16 %v2157, %v2154
        %v2251 = vpack.c.b16 %v2158, %v2155
        %v2252 = vpack.c.b16 %v2159, %v2156
        %v2253 = vpack.c.b16 %v2163, %v2160
        %v2254 = vpack.c.b16 %v2164, %v2161
        %v2255 = vpack.c.b16 %v2165, %v2162
        %v2256 = vpack.c.b16 %v2169, %v2166
        %v2257 = vpack.c.b16 %v2170, %v2167
        %v2258 = vpack.c.b16 %v2171, %v2168
        %v2259 = vpack.c.b16 %v2175, %v2172
        %v2260 = vpack.c.b16 %v2176, %v2173
        %v2261 = vpack.c.b16 %v2177, %v2174
        %v2262 = vpack.c.b16 %v2181, %v2178
        %v2263 = vpack.c.b16 %v2182, %v2179
        %v2264 = vpack.c.b16 %v2183, %v2180
        %v2265 = vpack.c.b16 %v2187, %v2184
        %v2266 = vpack.c.b16 %v2188, %v2185
        %v2267 = vpack.c.b16 %v2189, %v2186
        %v2268 = vpack.c.b16 %v2193, %v2190
        %v2269 = vpack.c.b16 %v2194, %v2191
        %v2270 = vpack.c.b16 %v2195, %v2192
        %v2271 = vpack.c.b16 %v2199, %v2196
        %v2272 = vpack.c.b16 %v2200, %v2197
        %v2273 = vpack.c.b16 %v2201, %v2198
        %v2274 = vpack.c.b16 %v2205, %v2202
        %v2275 = vpack.c.b16 %v2206, %v2203
        %v2276 = vpack.c.b16 %v2207, %v2204
        %v2277 = vpack.c.b16 %v2211, %v2208
        %v2278 = vpack.c.b16 %v2212, %v2209
        %v2279 = vpack.c.b16 %v2213, %v2210
        %v2280 = vpack.c.b16 %v2217, %v2214
        %v2281 = vpack.c.b16 %v2218, %v2215
        %v2282 = vpack.c.b16 %v2219, %v2216
        %v2283 = vpack.c.b16 %v2223, %v2220
        %v2284 = vpack.c.b16 %v2224, %v2221
        %v2285 = vpack.c.b16 %v2225, %v2222
        %v2286 = vpack.c.b16 %v2229, %v2226
        %v2287 = vpack.c.b16 %v2230, %v2227
        %v2288 = vpack.c.b16 %v2231, %v2228
        %v2289 = vpack.c.b16 %v2235, %v2232
        %v2290 = vpack.c.b16 %v2236, %v2233
        %v2291 = vpack.c.b16 %v2237, %v2234
        %v2292 = vpack.c.b16 %v2241, %v2238
        %v2293 = vpack.c.b16 %v2242, %v2239
        %v2294 = vpack.c.b16 %v2243, %v2240
        %v2295 = vpack.c.b16 %v2247, %v2244
        %v2296 = vpack.c.b16 %v2248, %v2245
        %v2297 = vpack.c.b16 %v2249, %v2246
        %v2394 = vunpack.c.l.b16 %v2042
        %v2395 = vunpack.c.l.b16 %v2043
        %v2396 = vunpack.c.l.b16 %v2044
        %v2397 = vunpack.c.l.b16 %v2045
        %v2398 = vunpack.c.l.b16 %v2046
        %v2399 = vunpack.c.l.b16 %v2047
        %v2400 = vunpack.c.l.b16 %v2048
        %v2401 = vunpack.c.l.b16 %v2049
        %v2402 = vunpack.c.l.b16 %v2050
        %v2403 = vunpack.c.l.b16 %v2051
        %v2404 = vunpack.c.l.b16 %v2052
        %v2405 = vunpack.c.l.b16 %v2053
        %v2406 = vunpack.c.l.b16 %v2054
        %v2407 = vunpack.c.l.b16 %v2055
        %v2408 = vunpack.c.l.b16 %v2056
        %v2409 = vunpack.c.l.b16 %v2057
        %v2410 = vunpack.c.l.b16 %v2058
        %v2411 = vunpack.c.l.b16 %v2059
        %v2412 = vunpack.c.l.b16 %v2060
        %v2413 = vunpack.c.l.b16 %v2061
        %v2414 = vunpack.c.l.b16 %v2062
        %v2415 = vunpack.c.l.b16 %v2063
        %v2416 = vunpack.c.l.b16 %v2064
        %v2417 = vunpack.c.l.b16 %v2065
        %v2418 = vunpack.c.l.b16 %v2066
        %v2419 = vunpack.c.l.b16 %v2067
        %v2420 = vunpack.c.l.b16 %v2068
        %v2421 = vunpack.c.l.b16 %v2069
        %v2422 = vunpack.c.l.b16 %v2070
        %v2423 = vunpack.c.l.b16 %v2071
        %v2424 = vunpack.c.l.b16 %v2072
        %v2425 = vunpack.c.l.b16 %v2073
        %v2426 = vunpack.c.l.b16 %v2074
        %v2427 = vunpack.c.l.b16 %v2075
        %v2428 = vunpack.c.l.b16 %v2076
        %v2429 = vunpack.c.l.b16 %v2077
        %v2430 = vunpack.c.l.b16 %v2078
        %v2431 = vunpack.c.l.b16 %v2079
        %v2432 = vunpack.c.l.b16 %v2080
        %v2433 = vunpack.c.l.b16 %v2081
        %v2434 = vunpack.c.l.b16 %v2082
        %v2435 = vunpack.c.l.b16 %v2083
        %v2436 = vunpack.c.l.b16 %v2084
        %v2437 = vunpack.c.l.b16 %v2085
        %v2438 = vunpack.c.l.b16 %v2086
        %v2439 = vunpack.c.l.b16 %v2087
        %v2440 = vunpack.c.l.b16 %v2088
        %v2441 = vunpack.c.l.b16 %v2089
        %v2442 = vpack.c.b16 %v2395, %v2394
        %v2443 = vpack.c.b16 %v2397, %v2396
        %v2444 = vpack.c.b16 %v2399, %v2398
        %v2445 = vpack.c.b16 %v2401, %v2400
        %v2446 = vpack.c.b16 %v2403, %v2402
        %v2447 = vpack.c.b16 %v2405, %v2404
        %v2448 = vpack.c.b16 %v2407, %v2406
        %v2449 = vpack.c.b16 %v2409, %v2408
        %v2450 = vpack.c.b16 %v2411, %v2410
        %v2451 = vpack.c.b16 %v2413, %v2412
        %v2452 = vpack.c.b16 %v2415, %v2414
        %v2453 = vpack.c.b16 %v2417, %v2416
        %v2454 = vpack.c.b16 %v2419, %v2418
        %v2455 = vpack.c.b16 %v2421, %v2420
        %v2456 = vpack.c.b16 %v2423, %v2422
        %v2457 = vpack.c.b16 %v2425, %v2424
        %v2458 = vpack.c.b16 %v2427, %v2426
        %v2459 = vpack.c.b16 %v2429, %v2428
        %v2460 = vpack.c.b16 %v2431, %v2430
        %v2461 = vpack.c.b16 %v2433, %v2432
        %v2462 = vpack.c.b16 %v2435, %v2434
        %v2463 = vpack.c.b16 %v2437, %v2436
        %v2464 = vpack.c.b16 %v2439, %v2438
        %v2465 = vpack.c.b16 %v2441, %v2440
        %2490 = vmatpush.bf16.msra.mxu0 %v2449
        %2491 = vmatpush.bf16.msra.mxu0 %v2448
        %2492 = vmatpush.bf16.msra.mxu0 %v2447
        %2493 = vmatpush.bf16.msra.mxu0 %v2446
        %2494 = vmatpush.bf16.msra.mxu0 %v2445
        %2495 = vmatpush.bf16.msra.mxu0 %v2444
        %2496 = vmatpush.bf16.msra.mxu0 %v2443
        %2497 = vmatpush.bf16.msra.mxu0 %v2442
        %2498 = vmatmul.bf16.gmra.mxu0 %v2250
        %v2499 = vpop.f32.mrf.mxu0
        %v2500 = vadd.f32 0.0, %v2499
        %v2501 = vpop.f32.mrf.mxu0
        %v2502 = vadd.f32 0.0, %v2501
        %2503 = vmatmul.bf16.gmra.mxu0 %v2253
        %v2504 = vpop.f32.mrf.mxu0
        %v2505 = vadd.f32 0.0, %v2504
        %v2506 = vpop.f32.mrf.mxu0
        %v2507 = vadd.f32 0.0, %v2506
        %2508 = vmatmul.bf16.gmra.mxu0 %v2256
        %v2509 = vpop.f32.mrf.mxu0
        %v2510 = vadd.f32 0.0, %v2509
        %v2511 = vpop.f32.mrf.mxu0
        %v2512 = vadd.f32 0.0, %v2511
        %2513 = vmatmul.bf16.gmra.mxu0 %v2259
        %v2514 = vpop.f32.mrf.mxu0
        %v2515 = vadd.f32 0.0, %v2514
        %v2516 = vpop.f32.mrf.mxu0
        %v2517 = vadd.f32 0.0, %v2516
        %2518 = vmatmul.bf16.gmra.mxu0 %v2262
        %v2519 = vpop.f32.mrf.mxu0
        %v2520 = vadd.f32 0.0, %v2519
        %v2521 = vpop.f32.mrf.mxu0
        %v2522 = vadd.f32 0.0, %v2521
        %2523 = vmatmul.bf16.gmra.mxu0 %v2265
        %v2524 = vpop.f32.mrf.mxu0
        %v2525 = vadd.f32 0.0, %v2524
        %v2526 = vpop.f32.mrf.mxu0
        %v2527 = vadd.f32 0.0, %v2526
        %2528 = vmatmul.bf16.gmra.mxu0 %v2268
        %v2529 = vpop.f32.mrf.mxu0
        %v2530 = vadd.f32 0.0, %v2529
        %v2531 = vpop.f32.mrf.mxu0
        %v2532 = vadd.f32 0.0, %v2531
        %2533 = vmatmul.bf16.gmra.mxu0 %v2271
        %v2534 = vpop.f32.mrf.mxu0
        %v2535 = vadd.f32 0.0, %v2534
        %v2536 = vpop.f32.mrf.mxu0
        %v2537 = vadd.f32 0.0, %v2536
        %2538 = vmatmul.bf16.gmra.mxu0 %v2274
        %v2539 = vpop.f32.mrf.mxu0
        %v2540 = vadd.f32 0.0, %v2539
        %v2541 = vpop.f32.mrf.mxu0
        %v2542 = vadd.f32 0.0, %v2541
        %2543 = vmatmul.bf16.gmra.mxu0 %v2277
        %v2544 = vpop.f32.mrf.mxu0
        %v2545 = vadd.f32 0.0, %v2544
        %v2546 = vpop.f32.mrf.mxu0
        %v2547 = vadd.f32 0.0, %v2546
        %2548 = vmatmul.bf16.gmra.mxu0 %v2280
        %v2549 = vpop.f32.mrf.mxu0
        %v2550 = vadd.f32 0.0, %v2549
        %v2551 = vpop.f32.mrf.mxu0
        %v2552 = vadd.f32 0.0, %v2551
        %2553 = vmatmul.bf16.gmra.mxu0 %v2283
        %v2554 = vpop.f32.mrf.mxu0
        %v2555 = vadd.f32 0.0, %v2554
        %v2556 = vpop.f32.mrf.mxu0
        %v2557 = vadd.f32 0.0, %v2556
        %2558 = vmatmul.bf16.gmra.mxu0 %v2286
        %v2559 = vpop.f32.mrf.mxu0
        %v2560 = vadd.f32 0.0, %v2559
        %v2561 = vpop.f32.mrf.mxu0
        %v2562 = vadd.f32 0.0, %v2561
        %2563 = vmatmul.bf16.gmra.mxu0 %v2289
        %v2564 = vpop.f32.mrf.mxu0
        %v2565 = vadd.f32 0.0, %v2564
        %v2566 = vpop.f32.mrf.mxu0
        %v2567 = vadd.f32 0.0, %v2566
        %2568 = vmatmul.bf16.gmra.mxu0 %v2292
        %v2569 = vpop.f32.mrf.mxu0
        %v2570 = vadd.f32 0.0, %v2569
        %v2571 = vpop.f32.mrf.mxu0
        %v2572 = vadd.f32 0.0, %v2571
        %2573 = vmatmul.bf16.gmra.mxu0 %v2295
        %v2574 = vpop.f32.mrf.mxu0
        %v2575 = vadd.f32 0.0, %v2574
        %v2576 = vpop.f32.mrf.mxu0
        %v2577 = vadd.f32 0.0, %v2576
        %2578 = vdwg.mxu0
        %2579 = vmatpush.bf16.msra.mxu0 %v2457
        %2580 = vmatpush.bf16.msra.mxu0 %v2456
        %2581 = vmatpush.bf16.msra.mxu0 %v2455
        %2582 = vmatpush.bf16.msra.mxu0 %v2454
        %2583 = vmatpush.bf16.msra.mxu0 %v2453
        %2584 = vmatpush.bf16.msra.mxu0 %v2452
        %2585 = vmatpush.bf16.msra.mxu0 %v2451
        %2586 = vmatpush.bf16.msra.mxu0 %v2450
        %2587 = vmatmul.bf16.gmra.mxu0 %v2251
        %v2588 = vpop.f32.mrf.mxu0
        %v2589 = vadd.f32 %v2500, %v2588
        %v2590 = vpop.f32.mrf.mxu0
        %v2591 = vadd.f32 %v2502, %v2590
        %2592 = vmatmul.bf16.gmra.mxu0 %v2254
        %v2593 = vpop.f32.mrf.mxu0
        %v2594 = vadd.f32 %v2505, %v2593
        %v2595 = vpop.f32.mrf.mxu0
        %v2596 = vadd.f32 %v2507, %v2595
        %2597 = vmatmul.bf16.gmra.mxu0 %v2257
        %v2598 = vpop.f32.mrf.mxu0
        %v2599 = vadd.f32 %v2510, %v2598
        %v2600 = vpop.f32.mrf.mxu0
        %v2601 = vadd.f32 %v2512, %v2600
        %2602 = vmatmul.bf16.gmra.mxu0 %v2260
        %v2603 = vpop.f32.mrf.mxu0
        %v2604 = vadd.f32 %v2515, %v2603
        %v2605 = vpop.f32.mrf.mxu0
        %v2606 = vadd.f32 %v2517, %v2605
        %2607 = vmatmul.bf16.gmra.mxu0 %v2263
        %v2608 = vpop.f32.mrf.mxu0
        %v2609 = vadd.f32 %v2520, %v2608
        %v2610 = vpop.f32.mrf.mxu0
        %v2611 = vadd.f32 %v2522, %v2610
        %2612 = vmatmul.bf16.gmra.mxu0 %v2266
        %v2613 = vpop.f32.mrf.mxu0
        %v2614 = vadd.f32 %v2525, %v2613
        %v2615 = vpop.f32.mrf.mxu0
        %v2616 = vadd.f32 %v2527, %v2615
        %2617 = vmatmul.bf16.gmra.mxu0 %v2269
        %v2618 = vpop.f32.mrf.mxu0
        %v2619 = vadd.f32 %v2530, %v2618
        %v2620 = vpop.f32.mrf.mxu0
        %v2621 = vadd.f32 %v2532, %v2620
        %2622 = vmatmul.bf16.gmra.mxu0 %v2272
        %v2623 = vpop.f32.mrf.mxu0
        %v2624 = vadd.f32 %v2535, %v2623
        %v2625 = vpop.f32.mrf.mxu0
        %v2626 = vadd.f32 %v2537, %v2625
        %2627 = vmatmul.bf16.gmra.mxu0 %v2275
        %v2628 = vpop.f32.mrf.mxu0
        %v2629 = vadd.f32 %v2540, %v2628
        %v2630 = vpop.f32.mrf.mxu0
        %v2631 = vadd.f32 %v2542, %v2630
        %2632 = vmatmul.bf16.gmra.mxu0 %v2278
        %v2633 = vpop.f32.mrf.mxu0
        %v2634 = vadd.f32 %v2545, %v2633
        %v2635 = vpop.f32.mrf.mxu0
        %v2636 = vadd.f32 %v2547, %v2635
        %2637 = vmatmul.bf16.gmra.mxu0 %v2281
        %v2638 = vpop.f32.mrf.mxu0
        %v2639 = vadd.f32 %v2550, %v2638
        %v2640 = vpop.f32.mrf.mxu0
        %v2641 = vadd.f32 %v2552, %v2640
        %2642 = vmatmul.bf16.gmra.mxu0 %v2284
        %v2643 = vpop.f32.mrf.mxu0
        %v2644 = vadd.f32 %v2555, %v2643
        %v2645 = vpop.f32.mrf.mxu0
        %v2646 = vadd.f32 %v2557, %v2645
        %2647 = vmatmul.bf16.gmra.mxu0 %v2287
        %v2648 = vpop.f32.mrf.mxu0
        %v2649 = vadd.f32 %v2560, %v2648
        %v2650 = vpop.f32.mrf.mxu0
        %v2651 = vadd.f32 %v2562, %v2650
        %2652 = vmatmul.bf16.gmra.mxu0 %v2290
        %v2653 = vpop.f32.mrf.mxu0
        %v2654 = vadd.f32 %v2565, %v2653
        %v2655 = vpop.f32.mrf.mxu0
        %v2656 = vadd.f32 %v2567, %v2655
        %2657 = vmatmul.bf16.gmra.mxu0 %v2293
        %v2658 = vpop.f32.mrf.mxu0
        %v2659 = vadd.f32 %v2570, %v2658
        %v2660 = vpop.f32.mrf.mxu0
        %v2661 = vadd.f32 %v2572, %v2660
        %2662 = vmatmul.bf16.gmra.mxu0 %v2296
        %v2663 = vpop.f32.mrf.mxu0
        %v2664 = vadd.f32 %v2575, %v2663
        %v2665 = vpop.f32.mrf.mxu0
        %v2666 = vadd.f32 %v2577, %v2665
        %2667 = vdwg.mxu0
        %2668 = vmatpush.bf16.msra.mxu0 %v2465
        %2669 = vmatpush.bf16.msra.mxu0 %v2464
        %2670 = vmatpush.bf16.msra.mxu0 %v2463
        %2671 = vmatpush.bf16.msra.mxu0 %v2462
        %2672 = vmatpush.bf16.msra.mxu0 %v2461
        %2673 = vmatpush.bf16.msra.mxu0 %v2460
        %2674 = vmatpush.bf16.msra.mxu0 %v2459
        %2675 = vmatpush.bf16.msra.mxu0 %v2458
        %2676 = vmatmul.bf16.gmra.mxu0 %v2252
        %v2677 = vpop.f32.mrf.mxu0
        %v2678 = vadd.f32 %v2589, %v2677
        %v2679 = vpop.f32.mrf.mxu0
        %v2680 = vadd.f32 %v2591, %v2679
        %2681 = vmatmul.bf16.gmra.mxu0 %v2255
        %v2682 = vpop.f32.mrf.mxu0
        %v2683 = vadd.f32 %v2594, %v2682
        %v2684 = vpop.f32.mrf.mxu0
        %v2685 = vadd.f32 %v2596, %v2684
        %2686 = vmatmul.bf16.gmra.mxu0 %v2258
        %v2687 = vpop.f32.mrf.mxu0
        %v2688 = vadd.f32 %v2599, %v2687
        %v2689 = vpop.f32.mrf.mxu0
        %v2690 = vadd.f32 %v2601, %v2689
        %2691 = vmatmul.bf16.gmra.mxu0 %v2261
        %v2692 = vpop.f32.mrf.mxu0
        %v2693 = vadd.f32 %v2604, %v2692
        %v2694 = vpop.f32.mrf.mxu0
        %v2695 = vadd.f32 %v2606, %v2694
        %2696 = vmatmul.bf16.gmra.mxu0 %v2264
        %v2697 = vpop.f32.mrf.mxu0
        %v2698 = vadd.f32 %v2609, %v2697
        %v2699 = vpop.f32.mrf.mxu0
        %v2700 = vadd.f32 %v2611, %v2699
        %2701 = vmatmul.bf16.gmra.mxu0 %v2267
        %v2702 = vpop.f32.mrf.mxu0
        %v2703 = vadd.f32 %v2614, %v2702
        %v2704 = vpop.f32.mrf.mxu0
        %v2705 = vadd.f32 %v2616, %v2704
        %2706 = vmatmul.bf16.gmra.mxu0 %v2270
        %v2707 = vpop.f32.mrf.mxu0
        %v2708 = vadd.f32 %v2619, %v2707
        %v2709 = vpop.f32.mrf.mxu0
        %v2710 = vadd.f32 %v2621, %v2709
        %2711 = vmatmul.bf16.gmra.mxu0 %v2273
        %v2712 = vpop.f32.mrf.mxu0
        %v2713 = vadd.f32 %v2624, %v2712
        %v2714 = vpop.f32.mrf.mxu0
        %v2715 = vadd.f32 %v2626, %v2714
        %2716 = vmatmul.bf16.gmra.mxu0 %v2276
        %v2717 = vpop.f32.mrf.mxu0
        %v2718 = vadd.f32 %v2629, %v2717
        %v2719 = vpop.f32.mrf.mxu0
        %v2720 = vadd.f32 %v2631, %v2719
        %2721 = vmatmul.bf16.gmra.mxu0 %v2279
        %v2722 = vpop.f32.mrf.mxu0
        %v2723 = vadd.f32 %v2634, %v2722
        %v2724 = vpop.f32.mrf.mxu0
        %v2725 = vadd.f32 %v2636, %v2724
        %2726 = vmatmul.bf16.gmra.mxu0 %v2282
        %v2727 = vpop.f32.mrf.mxu0
        %v2728 = vadd.f32 %v2639, %v2727
        %v2729 = vpop.f32.mrf.mxu0
        %v2730 = vadd.f32 %v2641, %v2729
        %2731 = vmatmul.bf16.gmra.mxu0 %v2285
        %v2732 = vpop.f32.mrf.mxu0
        %v2733 = vadd.f32 %v2644, %v2732
        %v2734 = vpop.f32.mrf.mxu0
        %v2735 = vadd.f32 %v2646, %v2734
        %2736 = vmatmul.bf16.gmra.mxu0 %v2288
        %v2737 = vpop.f32.mrf.mxu0
        %v2738 = vadd.f32 %v2649, %v2737
        %v2739 = vpop.f32.mrf.mxu0
        %v2740 = vadd.f32 %v2651, %v2739
        %2741 = vmatmul.bf16.gmra.mxu0 %v2291
        %v2742 = vpop.f32.mrf.mxu0
        %v2743 = vadd.f32 %v2654, %v2742
        %v2744 = vpop.f32.mrf.mxu0
        %v2745 = vadd.f32 %v2656, %v2744
        %2746 = vmatmul.bf16.gmra.mxu0 %v2294
        %v2747 = vpop.f32.mrf.mxu0
        %v2748 = vadd.f32 %v2659, %v2747
        %v2749 = vpop.f32.mrf.mxu0
        %v2750 = vadd.f32 %v2661, %v2749
        %2751 = vmatmul.bf16.gmra.mxu0 %v2297
        %v2752 = vpop.f32.mrf.mxu0
        %v2753 = vadd.f32 %v2664, %v2752
        %v2754 = vpop.f32.mrf.mxu0
        %v2755 = vadd.f32 %v2666, %v2754
        %2756 = vdwg.mxu0
        %v2821 = vunpack.c.l.b16 %v1864
        %v2822 = vunpack.c.h.b16 %v1864
        %v2823 = vunpack.c.l.b16 %v1865
        %v2824 = vunpack.c.l.b16 %v1866
        %v2825 = vunpack.c.h.b16 %v1866
        %v2826 = vunpack.c.l.b16 %v1867
        %v2827 = vunpack.c.l.b16 %v1868
        %v2828 = vunpack.c.h.b16 %v1868
        %v2829 = vunpack.c.l.b16 %v1869
        %v2830 = vunpack.c.l.b16 %v1870
        %v2831 = vunpack.c.h.b16 %v1870
        %v2832 = vunpack.c.l.b16 %v1871
        %v2833 = vunpack.c.l.b16 %v1872
        %v2834 = vunpack.c.h.b16 %v1872
        %v2835 = vunpack.c.l.b16 %v1873
        %v2836 = vunpack.c.l.b16 %v1874
        %v2837 = vunpack.c.h.b16 %v1874
        %v2838 = vunpack.c.l.b16 %v1875
        %v2839 = vunpack.c.l.b16 %v1876
        %v2840 = vunpack.c.h.b16 %v1876
        %v2841 = vunpack.c.l.b16 %v1877
        %v2842 = vunpack.c.l.b16 %v1878
        %v2843 = vunpack.c.h.b16 %v1878
        %v2844 = vunpack.c.l.b16 %v1879
        %v2845 = vunpack.c.l.b16 %v1880
        %v2846 = vunpack.c.h.b16 %v1880
        %v2847 = vunpack.c.l.b16 %v1881
        %v2848 = vunpack.c.l.b16 %v1882
        %v2849 = vunpack.c.h.b16 %v1882
        %v2850 = vunpack.c.l.b16 %v1883
        %v2851 = vunpack.c.l.b16 %v1884
        %v2852 = vunpack.c.h.b16 %v1884
        %v2853 = vunpack.c.l.b16 %v1885
        %v2854 = vunpack.c.l.b16 %v1886
        %v2855 = vunpack.c.h.b16 %v1886
        %v2856 = vunpack.c.l.b16 %v1887
        %v2857 = vunpack.c.l.b16 %v1888
        %v2858 = vunpack.c.h.b16 %v1888
        %v2859 = vunpack.c.l.b16 %v1889
        %v2860 = vunpack.c.l.b16 %v1890
        %v2861 = vunpack.c.h.b16 %v1890
        %v2862 = vunpack.c.l.b16 %v1891
        %v2863 = vunpack.c.l.b16 %v1892
        %v2864 = vunpack.c.h.b16 %v1892
        %v2865 = vunpack.c.l.b16 %v1893
        %v2866 = vunpack.c.l.b16 %v1894
        %v2867 = vunpack.c.h.b16 %v1894
        %v2868 = vunpack.c.l.b16 %v1895
        %v2869 = vunpack.c.l.b16 %v1896
        %v2870 = vunpack.c.h.b16 %v1896
        %v2871 = vunpack.c.l.b16 %v1897
        %v2872 = vunpack.c.l.b16 %v1898
        %v2873 = vunpack.c.h.b16 %v1898
        %v2874 = vunpack.c.l.b16 %v1899
        %v2875 = vunpack.c.l.b16 %v1900
        %v2876 = vunpack.c.h.b16 %v1900
        %v2877 = vunpack.c.l.b16 %v1901
        %v2878 = vunpack.c.l.b16 %v1902
        %v2879 = vunpack.c.h.b16 %v1902
        %v2880 = vunpack.c.l.b16 %v1903
        %v2881 = vunpack.c.l.b16 %v1904
        %v2882 = vunpack.c.h.b16 %v1904
        %v2883 = vunpack.c.l.b16 %v1905
        %v2884 = vunpack.c.l.b16 %v1906
        %v2885 = vunpack.c.h.b16 %v1906
        %v2886 = vunpack.c.l.b16 %v1907
        %v2887 = vunpack.c.l.b16 %v1908
        %v2888 = vunpack.c.h.b16 %v1908
        %v2889 = vunpack.c.l.b16 %v1909
        %v2890 = vunpack.c.l.b16 %v1910
        %v2891 = vunpack.c.h.b16 %v1910
        %v2892 = vunpack.c.l.b16 %v1911
        %v2893 = vunpack.c.l.b16 %v1912
        %v2894 = vunpack.c.h.b16 %v1912
        %v2895 = vunpack.c.l.b16 %v1913
        %v2896 = vunpack.c.l.b16 %v1914
        %v2897 = vunpack.c.h.b16 %v1914
        %v2898 = vunpack.c.l.b16 %v1915
        %v2899 = vunpack.c.l.b16 %v1916
        %v2900 = vunpack.c.h.b16 %v1916
        %v2901 = vunpack.c.l.b16 %v1917
        %v2902 = vunpack.c.l.b16 %v1918
        %v2903 = vunpack.c.h.b16 %v1918
        %v2904 = vunpack.c.l.b16 %v1919
        %v2905 = vunpack.c.l.b16 %v1920
        %v2906 = vunpack.c.h.b16 %v1920
        %v2907 = vunpack.c.l.b16 %v1921
        %v2908 = vunpack.c.l.b16 %v1922
        %v2909 = vunpack.c.h.b16 %v1922
        %v2910 = vunpack.c.l.b16 %v1923
        %v2911 = vunpack.c.l.b16 %v1924
        %v2912 = vunpack.c.h.b16 %v1924
        %v2913 = vunpack.c.l.b16 %v1925
        %v2914 = vunpack.c.l.b16 %v1926
        %v2915 = vunpack.c.h.b16 %v1926
        %v2916 = vunpack.c.l.b16 %v1927
        %v2917 = vpack.c.b16 %v2824, %v2821
        %v2918 = vpack.c.b16 %v2825, %v2822
        %v2919 = vpack.c.b16 %v2826, %v2823
        %v2920 = vpack.c.b16 %v2830, %v2827
        %v2921 = vpack.c.b16 %v2831, %v2828
        %v2922 = vpack.c.b16 %v2832, %v2829
        %v2923 = vpack.c.b16 %v2836, %v2833
        %v2924 = vpack.c.b16 %v2837, %v2834
        %v2925 = vpack.c.b16 %v2838, %v2835
        %v2926 = vpack.c.b16 %v2842, %v2839
        %v2927 = vpack.c.b16 %v2843, %v2840
        %v2928 = vpack.c.b16 %v2844, %v2841
        %v2929 = vpack.c.b16 %v2848, %v2845
        %v2930 = vpack.c.b16 %v2849, %v2846
        %v2931 = vpack.c.b16 %v2850, %v2847
        %v2932 = vpack.c.b16 %v2854, %v2851
        %v2933 = vpack.c.b16 %v2855, %v2852
        %v2934 = vpack.c.b16 %v2856, %v2853
        %v2935 = vpack.c.b16 %v2860, %v2857
        %v2936 = vpack.c.b16 %v2861, %v2858
        %v2937 = vpack.c.b16 %v2862, %v2859
        %v2938 = vpack.c.b16 %v2866, %v2863
        %v2939 = vpack.c.b16 %v2867, %v2864
        %v2940 = vpack.c.b16 %v2868, %v2865
        %v2941 = vpack.c.b16 %v2872, %v2869
        %v2942 = vpack.c.b16 %v2873, %v2870
        %v2943 = vpack.c.b16 %v2874, %v2871
        %v2944 = vpack.c.b16 %v2878, %v2875
        %v2945 = vpack.c.b16 %v2879, %v2876
        %v2946 = vpack.c.b16 %v2880, %v2877
        %v2947 = vpack.c.b16 %v2884, %v2881
        %v2948 = vpack.c.b16 %v2885, %v2882
        %v2949 = vpack.c.b16 %v2886, %v2883
        %v2950 = vpack.c.b16 %v2890, %v2887
        %v2951 = vpack.c.b16 %v2891, %v2888
        %v2952 = vpack.c.b16 %v2892, %v2889
        %v2953 = vpack.c.b16 %v2896, %v2893
        %v2954 = vpack.c.b16 %v2897, %v2894
        %v2955 = vpack.c.b16 %v2898, %v2895
        %v2956 = vpack.c.b16 %v2902, %v2899
        %v2957 = vpack.c.b16 %v2903, %v2900
        %v2958 = vpack.c.b16 %v2904, %v2901
        %v2959 = vpack.c.b16 %v2908, %v2905
        %v2960 = vpack.c.b16 %v2909, %v2906
        %v2961 = vpack.c.b16 %v2910, %v2907
        %v2962 = vpack.c.b16 %v2914, %v2911
        %v2963 = vpack.c.b16 %v2915, %v2912
        %v2964 = vpack.c.b16 %v2916, %v2913
        %v3061 = vunpack.c.l.b16 %v1928
        %v3062 = vunpack.c.l.b16 %v1929
        %v3063 = vunpack.c.l.b16 %v1930
        %v3064 = vunpack.c.l.b16 %v1931
        %v3065 = vunpack.c.l.b16 %v1932
        %v3066 = vunpack.c.l.b16 %v1933
        %v3067 = vunpack.c.l.b16 %v1934
        %v3068 = vunpack.c.l.b16 %v1935
        %v3069 = vunpack.c.l.b16 %v1936
        %v3070 = vunpack.c.l.b16 %v1937
        %v3071 = vunpack.c.l.b16 %v1938
        %v3072 = vunpack.c.l.b16 %v1939
        %v3073 = vunpack.c.l.b16 %v1940
        %v3074 = vunpack.c.l.b16 %v1941
        %v3075 = vunpack.c.l.b16 %v1942
        %v3076 = vunpack.c.l.b16 %v1943
        %v3077 = vunpack.c.l.b16 %v1944
        %v3078 = vunpack.c.l.b16 %v1945
        %v3079 = vunpack.c.l.b16 %v1946
        %v3080 = vunpack.c.l.b16 %v1947
        %v3081 = vunpack.c.l.b16 %v1948
        %v3082 = vunpack.c.l.b16 %v1949
        %v3083 = vunpack.c.l.b16 %v1950
        %v3084 = vunpack.c.l.b16 %v1951
        %v3085 = vunpack.c.l.b16 %v1952
        %v3086 = vunpack.c.l.b16 %v1953
        %v3087 = vunpack.c.l.b16 %v1954
        %v3088 = vunpack.c.l.b16 %v1955
        %v3089 = vunpack.c.l.b16 %v1956
        %v3090 = vunpack.c.l.b16 %v1957
        %v3091 = vunpack.c.l.b16 %v1958
        %v3092 = vunpack.c.l.b16 %v1959
        %v3093 = vunpack.c.l.b16 %v1960
        %v3094 = vunpack.c.l.b16 %v1961
        %v3095 = vunpack.c.l.b16 %v1962
        %v3096 = vunpack.c.l.b16 %v1963
        %v3097 = vunpack.c.l.b16 %v1964
        %v3098 = vunpack.c.l.b16 %v1965
        %v3099 = vunpack.c.l.b16 %v1966
        %v3100 = vunpack.c.l.b16 %v1967
        %v3101 = vunpack.c.l.b16 %v1968
        %v3102 = vunpack.c.l.b16 %v1969
        %v3103 = vunpack.c.l.b16 %v1970
        %v3104 = vunpack.c.l.b16 %v1971
        %v3105 = vunpack.c.l.b16 %v1972
        %v3106 = vunpack.c.l.b16 %v1973
        %v3107 = vunpack.c.l.b16 %v1974
        %v3108 = vunpack.c.l.b16 %v1975
        %v3109 = vpack.c.b16 %v3062, %v3061
        %v3110 = vpack.c.b16 %v3064, %v3063
        %v3111 = vpack.c.b16 %v3066, %v3065
        %v3112 = vpack.c.b16 %v3068, %v3067
        %v3113 = vpack.c.b16 %v3070, %v3069
        %v3114 = vpack.c.b16 %v3072, %v3071
        %v3115 = vpack.c.b16 %v3074, %v3073
        %v3116 = vpack.c.b16 %v3076, %v3075
        %v3117 = vpack.c.b16 %v3078, %v3077
        %v3118 = vpack.c.b16 %v3080, %v3079
        %v3119 = vpack.c.b16 %v3082, %v3081
        %v3120 = vpack.c.b16 %v3084, %v3083
        %v3121 = vpack.c.b16 %v3086, %v3085
        %v3122 = vpack.c.b16 %v3088, %v3087
        %v3123 = vpack.c.b16 %v3090, %v3089
        %v3124 = vpack.c.b16 %v3092, %v3091
        %v3125 = vpack.c.b16 %v3094, %v3093
        %v3126 = vpack.c.b16 %v3096, %v3095
        %v3127 = vpack.c.b16 %v3098, %v3097
        %v3128 = vpack.c.b16 %v3100, %v3099
        %v3129 = vpack.c.b16 %v3102, %v3101
        %v3130 = vpack.c.b16 %v3104, %v3103
        %v3131 = vpack.c.b16 %v3106, %v3105
        %v3132 = vpack.c.b16 %v3108, %v3107
        %3157 = vmatpush.bf16.msra.mxu0 %v3116
        %3158 = vmatpush.bf16.msra.mxu0 %v3115
        %3159 = vmatpush.bf16.msra.mxu0 %v3114
        %3160 = vmatpush.bf16.msra.mxu0 %v3113
        %3161 = vmatpush.bf16.msra.mxu0 %v3112
        %3162 = vmatpush.bf16.msra.mxu0 %v3111
        %3163 = vmatpush.bf16.msra.mxu0 %v3110
        %3164 = vmatpush.bf16.msra.mxu0 %v3109
        %3165 = vmatmul.bf16.gmra.mxu0 %v2917
        %v3166 = vpop.f32.mrf.mxu0
        %v3167 = vadd.f32 %v2678, %v3166
        %v3168 = vpop.f32.mrf.mxu0
        %v3169 = vadd.f32 %v2680, %v3168
        %3170 = vmatmul.bf16.gmra.mxu0 %v2920
        %v3171 = vpop.f32.mrf.mxu0
        %v3172 = vadd.f32 %v2683, %v3171
        %v3173 = vpop.f32.mrf.mxu0
        %v3174 = vadd.f32 %v2685, %v3173
        %3175 = vmatmul.bf16.gmra.mxu0 %v2923
        %v3176 = vpop.f32.mrf.mxu0
        %v3177 = vadd.f32 %v2688, %v3176
        %v3178 = vpop.f32.mrf.mxu0
        %v3179 = vadd.f32 %v2690, %v3178
        %3180 = vmatmul.bf16.gmra.mxu0 %v2926
        %v3181 = vpop.f32.mrf.mxu0
        %v3182 = vadd.f32 %v2693, %v3181
        %v3183 = vpop.f32.mrf.mxu0
        %v3184 = vadd.f32 %v2695, %v3183
        %3185 = vmatmul.bf16.gmra.mxu0 %v2929
        %v3186 = vpop.f32.mrf.mxu0
        %v3187 = vadd.f32 %v2698, %v3186
        %v3188 = vpop.f32.mrf.mxu0
        %v3189 = vadd.f32 %v2700, %v3188
        %3190 = vmatmul.bf16.gmra.mxu0 %v2932
        %v3191 = vpop.f32.mrf.mxu0
        %v3192 = vadd.f32 %v2703, %v3191
        %v3193 = vpop.f32.mrf.mxu0
        %v3194 = vadd.f32 %v2705, %v3193
        %3195 = vmatmul.bf16.gmra.mxu0 %v2935
        %v3196 = vpop.f32.mrf.mxu0
        %v3197 = vadd.f32 %v2708, %v3196
        %v3198 = vpop.f32.mrf.mxu0
        %v3199 = vadd.f32 %v2710, %v3198
        %3200 = vmatmul.bf16.gmra.mxu0 %v2938
        %v3201 = vpop.f32.mrf.mxu0
        %v3202 = vadd.f32 %v2713, %v3201
        %v3203 = vpop.f32.mrf.mxu0
        %v3204 = vadd.f32 %v2715, %v3203
        %3205 = vmatmul.bf16.gmra.mxu0 %v2941
        %v3206 = vpop.f32.mrf.mxu0
        %v3207 = vadd.f32 %v2718, %v3206
        %v3208 = vpop.f32.mrf.mxu0
        %v3209 = vadd.f32 %v2720, %v3208
        %3210 = vmatmul.bf16.gmra.mxu0 %v2944
        %v3211 = vpop.f32.mrf.mxu0
        %v3212 = vadd.f32 %v2723, %v3211
        %v3213 = vpop.f32.mrf.mxu0
        %v3214 = vadd.f32 %v2725, %v3213
        %3215 = vmatmul.bf16.gmra.mxu0 %v2947
        %v3216 = vpop.f32.mrf.mxu0
        %v3217 = vadd.f32 %v2728, %v3216
        %v3218 = vpop.f32.mrf.mxu0
        %v3219 = vadd.f32 %v2730, %v3218
        %3220 = vmatmul.bf16.gmra.mxu0 %v2950
        %v3221 = vpop.f32.mrf.mxu0
        %v3222 = vadd.f32 %v2733, %v3221
        %v3223 = vpop.f32.mrf.mxu0
        %v3224 = vadd.f32 %v2735, %v3223
        %3225 = vmatmul.bf16.gmra.mxu0 %v2953
        %v3226 = vpop.f32.mrf.mxu0
        %v3227 = vadd.f32 %v2738, %v3226
        %v3228 = vpop.f32.mrf.mxu0
        %v3229 = vadd.f32 %v2740, %v3228
        %3230 = vmatmul.bf16.gmra.mxu0 %v2956
        %v3231 = vpop.f32.mrf.mxu0
        %v3232 = vadd.f32 %v2743, %v3231
        %v3233 = vpop.f32.mrf.mxu0
        %v3234 = vadd.f32 %v2745, %v3233
        %3235 = vmatmul.bf16.gmra.mxu0 %v2959
        %v3236 = vpop.f32.mrf.mxu0
        %v3237 = vadd.f32 %v2748, %v3236
        %v3238 = vpop.f32.mrf.mxu0
        %v3239 = vadd.f32 %v2750, %v3238
        %3240 = vmatmul.bf16.gmra.mxu0 %v2962
        %v3241 = vpop.f32.mrf.mxu0
        %v3242 = vadd.f32 %v2753, %v3241
        %v3243 = vpop.f32.mrf.mxu0
        %v3244 = vadd.f32 %v2755, %v3243
        %3245 = vdwg.mxu0
        %3246 = vmatpush.bf16.msra.mxu0 %v3124
        %3247 = vmatpush.bf16.msra.mxu0 %v3123
        %3248 = vmatpush.bf16.msra.mxu0 %v3122
        %3249 = vmatpush.bf16.msra.mxu0 %v3121
        %3250 = vmatpush.bf16.msra.mxu0 %v3120
        %3251 = vmatpush.bf16.msra.mxu0 %v3119
        %3252 = vmatpush.bf16.msra.mxu0 %v3118
        %3253 = vmatpush.bf16.msra.mxu0 %v3117
        %3254 = vmatmul.bf16.gmra.mxu0 %v2918
        %v3255 = vpop.f32.mrf.mxu0
        %v3256 = vadd.f32 %v3167, %v3255
        %v3257 = vpop.f32.mrf.mxu0
        %v3258 = vadd.f32 %v3169, %v3257
        %3259 = vmatmul.bf16.gmra.mxu0 %v2921
        %v3260 = vpop.f32.mrf.mxu0
        %v3261 = vadd.f32 %v3172, %v3260
        %v3262 = vpop.f32.mrf.mxu0
        %v3263 = vadd.f32 %v3174, %v3262
        %3264 = vmatmul.bf16.gmra.mxu0 %v2924
        %v3265 = vpop.f32.mrf.mxu0
        %v3266 = vadd.f32 %v3177, %v3265
        %v3267 = vpop.f32.mrf.mxu0
        %v3268 = vadd.f32 %v3179, %v3267
        %3269 = vmatmul.bf16.gmra.mxu0 %v2927
        %v3270 = vpop.f32.mrf.mxu0
        %v3271 = vadd.f32 %v3182, %v3270
        %v3272 = vpop.f32.mrf.mxu0
        %v3273 = vadd.f32 %v3184, %v3272
        %3274 = vmatmul.bf16.gmra.mxu0 %v2930
        %v3275 = vpop.f32.mrf.mxu0
        %v3276 = vadd.f32 %v3187, %v3275
        %v3277 = vpop.f32.mrf.mxu0
        %v3278 = vadd.f32 %v3189, %v3277
        %3279 = vmatmul.bf16.gmra.mxu0 %v2933
        %v3280 = vpop.f32.mrf.mxu0
        %v3281 = vadd.f32 %v3192, %v3280
        %v3282 = vpop.f32.mrf.mxu0
        %v3283 = vadd.f32 %v3194, %v3282
        %3284 = vmatmul.bf16.gmra.mxu0 %v2936
        %v3285 = vpop.f32.mrf.mxu0
        %v3286 = vadd.f32 %v3197, %v3285
        %v3287 = vpop.f32.mrf.mxu0
        %v3288 = vadd.f32 %v3199, %v3287
        %3289 = vmatmul.bf16.gmra.mxu0 %v2939
        %v3290 = vpop.f32.mrf.mxu0
        %v3291 = vadd.f32 %v3202, %v3290
        %v3292 = vpop.f32.mrf.mxu0
        %v3293 = vadd.f32 %v3204, %v3292
        %3294 = vmatmul.bf16.gmra.mxu0 %v2942
        %v3295 = vpop.f32.mrf.mxu0
        %v3296 = vadd.f32 %v3207, %v3295
        %v3297 = vpop.f32.mrf.mxu0
        %v3298 = vadd.f32 %v3209, %v3297
        %3299 = vmatmul.bf16.gmra.mxu0 %v2945
        %v3300 = vpop.f32.mrf.mxu0
        %v3301 = vadd.f32 %v3212, %v3300
        %v3302 = vpop.f32.mrf.mxu0
        %v3303 = vadd.f32 %v3214, %v3302
        %3304 = vmatmul.bf16.gmra.mxu0 %v2948
        %v3305 = vpop.f32.mrf.mxu0
        %v3306 = vadd.f32 %v3217, %v3305
        %v3307 = vpop.f32.mrf.mxu0
        %v3308 = vadd.f32 %v3219, %v3307
        %3309 = vmatmul.bf16.gmra.mxu0 %v2951
        %v3310 = vpop.f32.mrf.mxu0
        %v3311 = vadd.f32 %v3222, %v3310
        %v3312 = vpop.f32.mrf.mxu0
        %v3313 = vadd.f32 %v3224, %v3312
        %3314 = vmatmul.bf16.gmra.mxu0 %v2954
        %v3315 = vpop.f32.mrf.mxu0
        %v3316 = vadd.f32 %v3227, %v3315
        %v3317 = vpop.f32.mrf.mxu0
        %v3318 = vadd.f32 %v3229, %v3317
        %3319 = vmatmul.bf16.gmra.mxu0 %v2957
        %v3320 = vpop.f32.mrf.mxu0
        %v3321 = vadd.f32 %v3232, %v3320
        %v3322 = vpop.f32.mrf.mxu0
        %v3323 = vadd.f32 %v3234, %v3322
        %3324 = vmatmul.bf16.gmra.mxu0 %v2960
        %v3325 = vpop.f32.mrf.mxu0
        %v3326 = vadd.f32 %v3237, %v3325
        %v3327 = vpop.f32.mrf.mxu0
        %v3328 = vadd.f32 %v3239, %v3327
        %3329 = vmatmul.bf16.gmra.mxu0 %v2963
        %v3330 = vpop.f32.mrf.mxu0
        %v3331 = vadd.f32 %v3242, %v3330
        %v3332 = vpop.f32.mrf.mxu0
        %v3333 = vadd.f32 %v3244, %v3332
        %3334 = vdwg.mxu0
        %3335 = vmatpush.bf16.msra.mxu0 %v3132
        %3336 = vmatpush.bf16.msra.mxu0 %v3131
        %3337 = vmatpush.bf16.msra.mxu0 %v3130
        %3338 = vmatpush.bf16.msra.mxu0 %v3129
        %3339 = vmatpush.bf16.msra.mxu0 %v3128
        %3340 = vmatpush.bf16.msra.mxu0 %v3127
        %3341 = vmatpush.bf16.msra.mxu0 %v3126
        %3342 = vmatpush.bf16.msra.mxu0 %v3125
        %3343 = vmatmul.bf16.gmra.mxu0 %v2919
        %v3344 = vpop.f32.mrf.mxu0
        %v3345 = vadd.f32 %v3256, %v3344
        %v3346 = vpop.f32.mrf.mxu0
        %v3347 = vadd.f32 %v3258, %v3346
        %3348 = vmatmul.bf16.gmra.mxu0 %v2922
        %v3349 = vpop.f32.mrf.mxu0
        %v3350 = vadd.f32 %v3261, %v3349
        %v3351 = vpop.f32.mrf.mxu0
        %v3352 = vadd.f32 %v3263, %v3351
        %3353 = vmatmul.bf16.gmra.mxu0 %v2925
        %v3354 = vpop.f32.mrf.mxu0
        %v3355 = vadd.f32 %v3266, %v3354
        %v3356 = vpop.f32.mrf.mxu0
        %v3357 = vadd.f32 %v3268, %v3356
        %3358 = vmatmul.bf16.gmra.mxu0 %v2928
        %v3359 = vpop.f32.mrf.mxu0
        %v3360 = vadd.f32 %v3271, %v3359
        %v3361 = vpop.f32.mrf.mxu0
        %v3362 = vadd.f32 %v3273, %v3361
        %3363 = vmatmul.bf16.gmra.mxu0 %v2931
        %v3364 = vpop.f32.mrf.mxu0
        %v3365 = vadd.f32 %v3276, %v3364
        %v3366 = vpop.f32.mrf.mxu0
        %v3367 = vadd.f32 %v3278, %v3366
        %3368 = vmatmul.bf16.gmra.mxu0 %v2934
        %v3369 = vpop.f32.mrf.mxu0
        %v3370 = vadd.f32 %v3281, %v3369
        %v3371 = vpop.f32.mrf.mxu0
        %v3372 = vadd.f32 %v3283, %v3371
        %3373 = vmatmul.bf16.gmra.mxu0 %v2937
        %v3374 = vpop.f32.mrf.mxu0
        %v3375 = vadd.f32 %v3286, %v3374
        %v3376 = vpop.f32.mrf.mxu0
        %v3377 = vadd.f32 %v3288, %v3376
        %3378 = vmatmul.bf16.gmra.mxu0 %v2940
        %v3379 = vpop.f32.mrf.mxu0
        %v3380 = vadd.f32 %v3291, %v3379
        %v3381 = vpop.f32.mrf.mxu0
        %v3382 = vadd.f32 %v3293, %v3381
        %3383 = vmatmul.bf16.gmra.mxu0 %v2943
        %v3384 = vpop.f32.mrf.mxu0
        %v3385 = vadd.f32 %v3296, %v3384
        %v3386 = vpop.f32.mrf.mxu0
        %v3387 = vadd.f32 %v3298, %v3386
        %3388 = vmatmul.bf16.gmra.mxu0 %v2946
        %v3389 = vpop.f32.mrf.mxu0
        %v3390 = vadd.f32 %v3301, %v3389
        %v3391 = vpop.f32.mrf.mxu0
        %v3392 = vadd.f32 %v3303, %v3391
        %3393 = vmatmul.bf16.gmra.mxu0 %v2949
        %v3394 = vpop.f32.mrf.mxu0
        %v3395 = vadd.f32 %v3306, %v3394
        %v3396 = vpop.f32.mrf.mxu0
        %v3397 = vadd.f32 %v3308, %v3396
        %3398 = vmatmul.bf16.gmra.mxu0 %v2952
        %v3399 = vpop.f32.mrf.mxu0
        %v3400 = vadd.f32 %v3311, %v3399
        %v3401 = vpop.f32.mrf.mxu0
        %v3402 = vadd.f32 %v3313, %v3401
        %3403 = vmatmul.bf16.gmra.mxu0 %v2955
        %v3404 = vpop.f32.mrf.mxu0
        %v3405 = vadd.f32 %v3316, %v3404
        %v3406 = vpop.f32.mrf.mxu0
        %v3407 = vadd.f32 %v3318, %v3406
        %3408 = vmatmul.bf16.gmra.mxu0 %v2958
        %v3409 = vpop.f32.mrf.mxu0
        %v3410 = vadd.f32 %v3321, %v3409
        %v3411 = vpop.f32.mrf.mxu0
        %v3412 = vadd.f32 %v3323, %v3411
        %3413 = vmatmul.bf16.gmra.mxu0 %v2961
        %v3414 = vpop.f32.mrf.mxu0
        %v3415 = vadd.f32 %v3326, %v3414
        %v3416 = vpop.f32.mrf.mxu0
        %v3417 = vadd.f32 %v3328, %v3416
        %3418 = vmatmul.bf16.gmra.mxu0 %v2964
        %v3419 = vpop.f32.mrf.mxu0
        %v3420 = vadd.f32 %v3331, %v3419
        %v3421 = vpop.f32.mrf.mxu0
        %v3422 = vadd.f32 %v3333, %v3421
        %3423 = vdwg.mxu0
        %s3424 = scalar_lea.vmem [#allocation3], 48
        %v3425 = vld [vmem:[%s3424] sm:$0xff]
        %v3426 = vld [vmem:[%s3424 + $0x8] sm:$0xf]
        %v3427 = vld [vmem:[%s3424 + $0xc] sm:$0xff]
        %v3428 = vld [vmem:[%s3424 + $0x14] sm:$0xf]
        %v3429 = vld [vmem:[%s3424 + $0x18] sm:$0xff]
        %v3430 = vld [vmem:[%s3424 + $0x20] sm:$0xf]
        %v3431 = vld [vmem:[%s3424 + $0x24] sm:$0xff]
        %v3432 = vld [vmem:[%s3424 + $0x2c] sm:$0xf]
        %v3433 = vld [vmem:[%s3424 + $0x30] sm:$0xff]
        %v3434 = vld [vmem:[%s3424 + $0x38] sm:$0xf]
        %v3435 = vld [vmem:[%s3424 + $0x3c] sm:$0xff]
        %v3436 = vld [vmem:[%s3424 + $0x44] sm:$0xf]
        %v3437 = vld [vmem:[%s3424 + $0x48] sm:$0xff]
        %v3438 = vld [vmem:[%s3424 + $0x50] sm:$0xf]
        %v3439 = vld [vmem:[%s3424 + $0x54] sm:$0xff]
        %v3440 = vld [vmem:[%s3424 + $0x5c] sm:$0xf]
        %v3441 = vld [vmem:[%s3424 + $0x60] sm:$0xff]
        %v3442 = vld [vmem:[%s3424 + $0x68] sm:$0xf]
        %v3443 = vld [vmem:[%s3424 + $0x6c] sm:$0xff]
        %v3444 = vld [vmem:[%s3424 + $0x74] sm:$0xf]
        %v3445 = vld [vmem:[%s3424 + $0x78] sm:$0xff]
        %v3446 = vld [vmem:[%s3424 + $0x80] sm:$0xf]
        %v3447 = vld [vmem:[%s3424 + $0x84] sm:$0xff]
        %v3448 = vld [vmem:[%s3424 + $0x8c] sm:$0xf]
        %v3449 = vld [vmem:[%s3424 + $0x90] sm:$0xff]
        %v3450 = vld [vmem:[%s3424 + $0x98] sm:$0xf]
        %v3451 = vld [vmem:[%s3424 + $0x9c] sm:$0xff]
        %v3452 = vld [vmem:[%s3424 + $0xa4] sm:$0xf]
        %v3453 = vld [vmem:[%s3424 + $0xa8] sm:$0xff]
        %v3454 = vld [vmem:[%s3424 + $0xb0] sm:$0xf]
        %v3455 = vld [vmem:[%s3424 + $0xb4] sm:$0xff]
        %v3456 = vld [vmem:[%s3424 + $0xbc] sm:$0xf]
        %v3457 = vld [vmem:[%s3424 + $0xc0] sm:$0xff]
        %v3458 = vld [vmem:[%s3424 + $0xc8] sm:$0xf]
        %v3459 = vld [vmem:[%s3424 + $0xcc] sm:$0xff]
        %v3460 = vld [vmem:[%s3424 + $0xd4] sm:$0xf]
        %v3461 = vld [vmem:[%s3424 + $0xd8] sm:$0xff]
        %v3462 = vld [vmem:[%s3424 + $0xe0] sm:$0xf]
        %v3463 = vld [vmem:[%s3424 + $0xe4] sm:$0xff]
        %v3464 = vld [vmem:[%s3424 + $0xec] sm:$0xf]
        %v3465 = vld [vmem:[%s3424 + $0xf0] sm:$0xff]
        %v3466 = vld [vmem:[%s3424 + $0xf8] sm:$0xf]
        %v3467 = vld [vmem:[%s3424 + $0xfc] sm:$0xff]
        %v3468 = vld [vmem:[%s3424 + $0x104] sm:$0xf]
        %v3469 = vld [vmem:[%s3424 + $0x108] sm:$0xff]
        %v3470 = vld [vmem:[%s3424 + $0x110] sm:$0xf]
        %v3471 = vld [vmem:[%s3424 + $0x114] sm:$0xff]
        %v3472 = vld [vmem:[%s3424 + $0x11c] sm:$0xf]
        %v3473 = vld [vmem:[%s3424 + $0x120] sm:$0xff]
        %v3474 = vld [vmem:[%s3424 + $0x128] sm:$0xf]
        %v3475 = vld [vmem:[%s3424 + $0x12c] sm:$0xff]
        %v3476 = vld [vmem:[%s3424 + $0x134] sm:$0xf]
        %v3477 = vld [vmem:[%s3424 + $0x138] sm:$0xff]
        %v3478 = vld [vmem:[%s3424 + $0x140] sm:$0xf]
        %v3479 = vld [vmem:[%s3424 + $0x144] sm:$0xff]
        %v3480 = vld [vmem:[%s3424 + $0x14c] sm:$0xf]
        %v3481 = vld [vmem:[%s3424 + $0x150] sm:$0xff]
        %v3482 = vld [vmem:[%s3424 + $0x158] sm:$0xf]
        %v3483 = vld [vmem:[%s3424 + $0x15c] sm:$0xff]
        %v3484 = vld [vmem:[%s3424 + $0x164] sm:$0xf]
        %v3485 = vld [vmem:[%s3424 + $0x168] sm:$0xff]
        %v3486 = vld [vmem:[%s3424 + $0x170] sm:$0xf]
        %v3487 = vld [vmem:[%s3424 + $0x174] sm:$0xff]
        %v3488 = vld [vmem:[%s3424 + $0x17c] sm:$0xf]
        %s3489 = scalar_lea.vmem [#allocation7], 384
        %v3490 = vld [vmem:[%s3489] sm:$0xf]
        %v3491 = vld [vmem:[%s3489 + $0x4] sm:$0xf]
        %v3492 = vld [vmem:[%s3489 + $0x8] sm:$0xf]
        %v3493 = vld [vmem:[%s3489 + $0xc] sm:$0xf]
        %v3494 = vld [vmem:[%s3489 + $0x10] sm:$0xf]
        %v3495 = vld [vmem:[%s3489 + $0x14] sm:$0xf]
        %v3496 = vld [vmem:[%s3489 + $0x18] sm:$0xf]
        %v3497 = vld [vmem:[%s3489 + $0x1c] sm:$0xf]
        %v3498 = vld [vmem:[%s3489 + $0x20] sm:$0xf]
        %v3499 = vld [vmem:[%s3489 + $0x24] sm:$0xf]
        %v3500 = vld [vmem:[%s3489 + $0x28] sm:$0xf]
        %v3501 = vld [vmem:[%s3489 + $0x2c] sm:$0xf]
        %v3502 = vld [vmem:[%s3489 + $0x30] sm:$0xf]
        %v3503 = vld [vmem:[%s3489 + $0x34] sm:$0xf]
        %v3504 = vld [vmem:[%s3489 + $0x38] sm:$0xf]
        %v3505 = vld [vmem:[%s3489 + $0x3c] sm:$0xf]
        %v3506 = vld [vmem:[%s3489 + $0x40] sm:$0xf]
        %v3507 = vld [vmem:[%s3489 + $0x44] sm:$0xf]
        %v3508 = vld [vmem:[%s3489 + $0x48] sm:$0xf]
        %v3509 = vld [vmem:[%s3489 + $0x4c] sm:$0xf]
        %v3510 = vld [vmem:[%s3489 + $0x50] sm:$0xf]
        %v3511 = vld [vmem:[%s3489 + $0x54] sm:$0xf]
        %v3512 = vld [vmem:[%s3489 + $0x58] sm:$0xf]
        %v3513 = vld [vmem:[%s3489 + $0x5c] sm:$0xf]
        %v3514 = vld [vmem:[%s3489 + $0x60] sm:$0xf]
        %v3515 = vld [vmem:[%s3489 + $0x64] sm:$0xf]
        %v3516 = vld [vmem:[%s3489 + $0x68] sm:$0xf]
        %v3517 = vld [vmem:[%s3489 + $0x6c] sm:$0xf]
        %v3518 = vld [vmem:[%s3489 + $0x70] sm:$0xf]
        %v3519 = vld [vmem:[%s3489 + $0x74] sm:$0xf]
        %v3520 = vld [vmem:[%s3489 + $0x78] sm:$0xf]
        %v3521 = vld [vmem:[%s3489 + $0x7c] sm:$0xf]
        %v3522 = vld [vmem:[%s3489 + $0x80] sm:$0xf]
        %v3523 = vld [vmem:[%s3489 + $0x84] sm:$0xf]
        %v3524 = vld [vmem:[%s3489 + $0x88] sm:$0xf]
        %v3525 = vld [vmem:[%s3489 + $0x8c] sm:$0xf]
        %v3526 = vld [vmem:[%s3489 + $0x90] sm:$0xf]
        %v3527 = vld [vmem:[%s3489 + $0x94] sm:$0xf]
        %v3528 = vld [vmem:[%s3489 + $0x98] sm:$0xf]
        %v3529 = vld [vmem:[%s3489 + $0x9c] sm:$0xf]
        %v3530 = vld [vmem:[%s3489 + $0xa0] sm:$0xf]
        %v3531 = vld [vmem:[%s3489 + $0xa4] sm:$0xf]
        %v3532 = vld [vmem:[%s3489 + $0xa8] sm:$0xf]
        %v3533 = vld [vmem:[%s3489 + $0xac] sm:$0xf]
        %v3534 = vld [vmem:[%s3489 + $0xb0] sm:$0xf]
        %v3535 = vld [vmem:[%s3489 + $0xb4] sm:$0xf]
        %v3536 = vld [vmem:[%s3489 + $0xb8] sm:$0xf]
        %v3537 = vld [vmem:[%s3489 + $0xbc] sm:$0xf]
        %v3602 = vunpack.c.l.b16 %v3425
        %v3603 = vunpack.c.h.b16 %v3425
        %v3604 = vunpack.c.l.b16 %v3426
        %v3605 = vunpack.c.l.b16 %v3427
        %v3606 = vunpack.c.h.b16 %v3427
        %v3607 = vunpack.c.l.b16 %v3428
        %v3608 = vunpack.c.l.b16 %v3429
        %v3609 = vunpack.c.h.b16 %v3429
        %v3610 = vunpack.c.l.b16 %v3430
        %v3611 = vunpack.c.l.b16 %v3431
        %v3612 = vunpack.c.h.b16 %v3431
        %v3613 = vunpack.c.l.b16 %v3432
        %v3614 = vunpack.c.l.b16 %v3433
        %v3615 = vunpack.c.h.b16 %v3433
        %v3616 = vunpack.c.l.b16 %v3434
        %v3617 = vunpack.c.l.b16 %v3435
        %v3618 = vunpack.c.h.b16 %v3435
        %v3619 = vunpack.c.l.b16 %v3436
        %v3620 = vunpack.c.l.b16 %v3437
        %v3621 = vunpack.c.h.b16 %v3437
        %v3622 = vunpack.c.l.b16 %v3438
        %v3623 = vunpack.c.l.b16 %v3439
        %v3624 = vunpack.c.h.b16 %v3439
        %v3625 = vunpack.c.l.b16 %v3440
        %v3626 = vunpack.c.l.b16 %v3441
        %v3627 = vunpack.c.h.b16 %v3441
        %v3628 = vunpack.c.l.b16 %v3442
        %v3629 = vunpack.c.l.b16 %v3443
        %v3630 = vunpack.c.h.b16 %v3443
        %v3631 = vunpack.c.l.b16 %v3444
        %v3632 = vunpack.c.l.b16 %v3445
        %v3633 = vunpack.c.h.b16 %v3445
        %v3634 = vunpack.c.l.b16 %v3446
        %v3635 = vunpack.c.l.b16 %v3447
        %v3636 = vunpack.c.h.b16 %v3447
        %v3637 = vunpack.c.l.b16 %v3448
        %v3638 = vunpack.c.l.b16 %v3449
        %v3639 = vunpack.c.h.b16 %v3449
        %v3640 = vunpack.c.l.b16 %v3450
        %v3641 = vunpack.c.l.b16 %v3451
        %v3642 = vunpack.c.h.b16 %v3451
        %v3643 = vunpack.c.l.b16 %v3452
        %v3644 = vunpack.c.l.b16 %v3453
        %v3645 = vunpack.c.h.b16 %v3453
        %v3646 = vunpack.c.l.b16 %v3454
        %v3647 = vunpack.c.l.b16 %v3455
        %v3648 = vunpack.c.h.b16 %v3455
        %v3649 = vunpack.c.l.b16 %v3456
        %v3650 = vunpack.c.l.b16 %v3457
        %v3651 = vunpack.c.h.b16 %v3457
        %v3652 = vunpack.c.l.b16 %v3458
        %v3653 = vunpack.c.l.b16 %v3459
        %v3654 = vunpack.c.h.b16 %v3459
        %v3655 = vunpack.c.l.b16 %v3460
        %v3656 = vunpack.c.l.b16 %v3461
        %v3657 = vunpack.c.h.b16 %v3461
        %v3658 = vunpack.c.l.b16 %v3462
        %v3659 = vunpack.c.l.b16 %v3463
        %v3660 = vunpack.c.h.b16 %v3463
        %v3661 = vunpack.c.l.b16 %v3464
        %v3662 = vunpack.c.l.b16 %v3465
        %v3663 = vunpack.c.h.b16 %v3465
        %v3664 = vunpack.c.l.b16 %v3466
        %v3665 = vunpack.c.l.b16 %v3467
        %v3666 = vunpack.c.h.b16 %v3467
        %v3667 = vunpack.c.l.b16 %v3468
        %v3668 = vunpack.c.l.b16 %v3469
        %v3669 = vunpack.c.h.b16 %v3469
        %v3670 = vunpack.c.l.b16 %v3470
        %v3671 = vunpack.c.l.b16 %v3471
        %v3672 = vunpack.c.h.b16 %v3471
        %v3673 = vunpack.c.l.b16 %v3472
        %v3674 = vunpack.c.l.b16 %v3473
        %v3675 = vunpack.c.h.b16 %v3473
        %v3676 = vunpack.c.l.b16 %v3474
        %v3677 = vunpack.c.l.b16 %v3475
        %v3678 = vunpack.c.h.b16 %v3475
        %v3679 = vunpack.c.l.b16 %v3476
        %v3680 = vunpack.c.l.b16 %v3477
        %v3681 = vunpack.c.h.b16 %v3477
        %v3682 = vunpack.c.l.b16 %v3478
        %v3683 = vunpack.c.l.b16 %v3479
        %v3684 = vunpack.c.h.b16 %v3479
        %v3685 = vunpack.c.l.b16 %v3480
        %v3686 = vunpack.c.l.b16 %v3481
        %v3687 = vunpack.c.h.b16 %v3481
        %v3688 = vunpack.c.l.b16 %v3482
        %v3689 = vunpack.c.l.b16 %v3483
        %v3690 = vunpack.c.h.b16 %v3483
        %v3691 = vunpack.c.l.b16 %v3484
        %v3692 = vunpack.c.l.b16 %v3485
        %v3693 = vunpack.c.h.b16 %v3485
        %v3694 = vunpack.c.l.b16 %v3486
        %v3695 = vunpack.c.l.b16 %v3487
        %v3696 = vunpack.c.h.b16 %v3487
        %v3697 = vunpack.c.l.b16 %v3488
        %v3698 = vpack.c.b16 %v3605, %v3602
        %v3699 = vpack.c.b16 %v3606, %v3603
        %v3700 = vpack.c.b16 %v3607, %v3604
        %v3701 = vpack.c.b16 %v3611, %v3608
        %v3702 = vpack.c.b16 %v3612, %v3609
        %v3703 = vpack.c.b16 %v3613, %v3610
        %v3704 = vpack.c.b16 %v3617, %v3614
        %v3705 = vpack.c.b16 %v3618, %v3615
        %v3706 = vpack.c.b16 %v3619, %v3616
        %v3707 = vpack.c.b16 %v3623, %v3620
        %v3708 = vpack.c.b16 %v3624, %v3621
        %v3709 = vpack.c.b16 %v3625, %v3622
        %v3710 = vpack.c.b16 %v3629, %v3626
        %v3711 = vpack.c.b16 %v3630, %v3627
        %v3712 = vpack.c.b16 %v3631, %v3628
        %v3713 = vpack.c.b16 %v3635, %v3632
        %v3714 = vpack.c.b16 %v3636, %v3633
        %v3715 = vpack.c.b16 %v3637, %v3634
        %v3716 = vpack.c.b16 %v3641, %v3638
        %v3717 = vpack.c.b16 %v3642, %v3639
        %v3718 = vpack.c.b16 %v3643, %v3640
        %v3719 = vpack.c.b16 %v3647, %v3644
        %v3720 = vpack.c.b16 %v3648, %v3645
        %v3721 = vpack.c.b16 %v3649, %v3646
        %v3722 = vpack.c.b16 %v3653, %v3650
        %v3723 = vpack.c.b16 %v3654, %v3651
        %v3724 = vpack.c.b16 %v3655, %v3652
        %v3725 = vpack.c.b16 %v3659, %v3656
        %v3726 = vpack.c.b16 %v3660, %v3657
        %v3727 = vpack.c.b16 %v3661, %v3658
        %v3728 = vpack.c.b16 %v3665, %v3662
        %v3729 = vpack.c.b16 %v3666, %v3663
        %v3730 = vpack.c.b16 %v3667, %v3664
        %v3731 = vpack.c.b16 %v3671, %v3668
        %v3732 = vpack.c.b16 %v3672, %v3669
        %v3733 = vpack.c.b16 %v3673, %v3670
        %v3734 = vpack.c.b16 %v3677, %v3674
        %v3735 = vpack.c.b16 %v3678, %v3675
        %v3736 = vpack.c.b16 %v3679, %v3676
        %v3737 = vpack.c.b16 %v3683, %v3680
        %v3738 = vpack.c.b16 %v3684, %v3681
        %v3739 = vpack.c.b16 %v3685, %v3682
        %v3740 = vpack.c.b16 %v3689, %v3686
        %v3741 = vpack.c.b16 %v3690, %v3687
        %v3742 = vpack.c.b16 %v3691, %v3688
        %v3743 = vpack.c.b16 %v3695, %v3692
        %v3744 = vpack.c.b16 %v3696, %v3693
        %v3745 = vpack.c.b16 %v3697, %v3694
        %v3842 = vunpack.c.l.b16 %v3490
        %v3843 = vunpack.c.l.b16 %v3491
        %v3844 = vunpack.c.l.b16 %v3492
        %v3845 = vunpack.c.l.b16 %v3493
        %v3846 = vunpack.c.l.b16 %v3494
        %v3847 = vunpack.c.l.b16 %v3495
        %v3848 = vunpack.c.l.b16 %v3496
        %v3849 = vunpack.c.l.b16 %v3497
        %v3850 = vunpack.c.l.b16 %v3498
        %v3851 = vunpack.c.l.b16 %v3499
        %v3852 = vunpack.c.l.b16 %v3500
        %v3853 = vunpack.c.l.b16 %v3501
        %v3854 = vunpack.c.l.b16 %v3502
        %v3855 = vunpack.c.l.b16 %v3503
        %v3856 = vunpack.c.l.b16 %v3504
        %v3857 = vunpack.c.l.b16 %v3505
        %v3858 = vunpack.c.l.b16 %v3506
        %v3859 = vunpack.c.l.b16 %v3507
        %v3860 = vunpack.c.l.b16 %v3508
        %v3861 = vunpack.c.l.b16 %v3509
        %v3862 = vunpack.c.l.b16 %v3510
        %v3863 = vunpack.c.l.b16 %v3511
        %v3864 = vunpack.c.l.b16 %v3512
        %v3865 = vunpack.c.l.b16 %v3513
        %v3866 = vunpack.c.l.b16 %v3514
        %v3867 = vunpack.c.l.b16 %v3515
        %v3868 = vunpack.c.l.b16 %v3516
        %v3869 = vunpack.c.l.b16 %v3517
        %v3870 = vunpack.c.l.b16 %v3518
        %v3871 = vunpack.c.l.b16 %v3519
        %v3872 = vunpack.c.l.b16 %v3520
        %v3873 = vunpack.c.l.b16 %v3521
        %v3874 = vunpack.c.l.b16 %v3522
        %v3875 = vunpack.c.l.b16 %v3523
        %v3876 = vunpack.c.l.b16 %v3524
        %v3877 = vunpack.c.l.b16 %v3525
        %v3878 = vunpack.c.l.b16 %v3526
        %v3879 = vunpack.c.l.b16 %v3527
        %v3880 = vunpack.c.l.b16 %v3528
        %v3881 = vunpack.c.l.b16 %v3529
        %v3882 = vunpack.c.l.b16 %v3530
        %v3883 = vunpack.c.l.b16 %v3531
        %v3884 = vunpack.c.l.b16 %v3532
        %v3885 = vunpack.c.l.b16 %v3533
        %v3886 = vunpack.c.l.b16 %v3534
        %v3887 = vunpack.c.l.b16 %v3535
        %v3888 = vunpack.c.l.b16 %v3536
        %v3889 = vunpack.c.l.b16 %v3537
        %v3890 = vpack.c.b16 %v3843, %v3842
        %v3891 = vpack.c.b16 %v3845, %v3844
        %v3892 = vpack.c.b16 %v3847, %v3846
        %v3893 = vpack.c.b16 %v3849, %v3848
        %v3894 = vpack.c.b16 %v3851, %v3850
        %v3895 = vpack.c.b16 %v3853, %v3852
        %v3896 = vpack.c.b16 %v3855, %v3854
        %v3897 = vpack.c.b16 %v3857, %v3856
        %v3898 = vpack.c.b16 %v3859, %v3858
        %v3899 = vpack.c.b16 %v3861, %v3860
        %v3900 = vpack.c.b16 %v3863, %v3862
        %v3901 = vpack.c.b16 %v3865, %v3864
        %v3902 = vpack.c.b16 %v3867, %v3866
        %v3903 = vpack.c.b16 %v3869, %v3868
        %v3904 = vpack.c.b16 %v3871, %v3870
        %v3905 = vpack.c.b16 %v3873, %v3872
        %v3906 = vpack.c.b16 %v3875, %v3874
        %v3907 = vpack.c.b16 %v3877, %v3876
        %v3908 = vpack.c.b16 %v3879, %v3878
        %v3909 = vpack.c.b16 %v3881, %v3880
        %v3910 = vpack.c.b16 %v3883, %v3882
        %v3911 = vpack.c.b16 %v3885, %v3884
        %v3912 = vpack.c.b16 %v3887, %v3886
        %v3913 = vpack.c.b16 %v3889, %v3888
        %3938 = vmatpush.bf16.msra.mxu0 %v3897
        %3939 = vmatpush.bf16.msra.mxu0 %v3896
        %3940 = vmatpush.bf16.msra.mxu0 %v3895
        %3941 = vmatpush.bf16.msra.mxu0 %v3894
        %3942 = vmatpush.bf16.msra.mxu0 %v3893
        %3943 = vmatpush.bf16.msra.mxu0 %v3892
        %3944 = vmatpush.bf16.msra.mxu0 %v3891
        %3945 = vmatpush.bf16.msra.mxu0 %v3890
        %3946 = vmatmul.bf16.gmra.mxu0 %v3698
        %v3947 = vpop.f32.mrf.mxu0
        %v3948 = vadd.f32 0.0, %v3947
        %v3949 = vpop.f32.mrf.mxu0
        %v3950 = vadd.f32 0.0, %v3949
        %3951 = vmatmul.bf16.gmra.mxu0 %v3701
        %v3952 = vpop.f32.mrf.mxu0
        %v3953 = vadd.f32 0.0, %v3952
        %v3954 = vpop.f32.mrf.mxu0
        %v3955 = vadd.f32 0.0, %v3954
        %3956 = vmatmul.bf16.gmra.mxu0 %v3704
        %v3957 = vpop.f32.mrf.mxu0
        %v3958 = vadd.f32 0.0, %v3957
        %v3959 = vpop.f32.mrf.mxu0
        %v3960 = vadd.f32 0.0, %v3959
        %3961 = vmatmul.bf16.gmra.mxu0 %v3707
        %v3962 = vpop.f32.mrf.mxu0
        %v3963 = vadd.f32 0.0, %v3962
        %v3964 = vpop.f32.mrf.mxu0
        %v3965 = vadd.f32 0.0, %v3964
        %3966 = vmatmul.bf16.gmra.mxu0 %v3710
        %v3967 = vpop.f32.mrf.mxu0
        %v3968 = vadd.f32 0.0, %v3967
        %v3969 = vpop.f32.mrf.mxu0
        %v3970 = vadd.f32 0.0, %v3969
        %3971 = vmatmul.bf16.gmra.mxu0 %v3713
        %v3972 = vpop.f32.mrf.mxu0
        %v3973 = vadd.f32 0.0, %v3972
        %v3974 = vpop.f32.mrf.mxu0
        %v3975 = vadd.f32 0.0, %v3974
        %3976 = vmatmul.bf16.gmra.mxu0 %v3716
        %v3977 = vpop.f32.mrf.mxu0
        %v3978 = vadd.f32 0.0, %v3977
        %v3979 = vpop.f32.mrf.mxu0
        %v3980 = vadd.f32 0.0, %v3979
        %3981 = vmatmul.bf16.gmra.mxu0 %v3719
        %v3982 = vpop.f32.mrf.mxu0
        %v3983 = vadd.f32 0.0, %v3982
        %v3984 = vpop.f32.mrf.mxu0
        %v3985 = vadd.f32 0.0, %v3984
        %3986 = vmatmul.bf16.gmra.mxu0 %v3722
        %v3987 = vpop.f32.mrf.mxu0
        %v3988 = vadd.f32 0.0, %v3987
        %v3989 = vpop.f32.mrf.mxu0
        %v3990 = vadd.f32 0.0, %v3989
        %3991 = vmatmul.bf16.gmra.mxu0 %v3725
        %v3992 = vpop.f32.mrf.mxu0
        %v3993 = vadd.f32 0.0, %v3992
        %v3994 = vpop.f32.mrf.mxu0
        %v3995 = vadd.f32 0.0, %v3994
        %3996 = vmatmul.bf16.gmra.mxu0 %v3728
        %v3997 = vpop.f32.mrf.mxu0
        %v3998 = vadd.f32 0.0, %v3997
        %v3999 = vpop.f32.mrf.mxu0
        %v4000 = vadd.f32 0.0, %v3999
        %4001 = vmatmul.bf16.gmra.mxu0 %v3731
        %v4002 = vpop.f32.mrf.mxu0
        %v4003 = vadd.f32 0.0, %v4002
        %v4004 = vpop.f32.mrf.mxu0
        %v4005 = vadd.f32 0.0, %v4004
        %4006 = vmatmul.bf16.gmra.mxu0 %v3734
        %v4007 = vpop.f32.mrf.mxu0
        %v4008 = vadd.f32 0.0, %v4007
        %v4009 = vpop.f32.mrf.mxu0
        %v4010 = vadd.f32 0.0, %v4009
        %4011 = vmatmul.bf16.gmra.mxu0 %v3737
        %v4012 = vpop.f32.mrf.mxu0
        %v4013 = vadd.f32 0.0, %v4012
        %v4014 = vpop.f32.mrf.mxu0
        %v4015 = vadd.f32 0.0, %v4014
        %4016 = vmatmul.bf16.gmra.mxu0 %v3740
        %v4017 = vpop.f32.mrf.mxu0
        %v4018 = vadd.f32 0.0, %v4017
        %v4019 = vpop.f32.mrf.mxu0
        %v4020 = vadd.f32 0.0, %v4019
        %4021 = vmatmul.bf16.gmra.mxu0 %v3743
        %v4022 = vpop.f32.mrf.mxu0
        %v4023 = vadd.f32 0.0, %v4022
        %v4024 = vpop.f32.mrf.mxu0
        %v4025 = vadd.f32 0.0, %v4024
        %4026 = vdwg.mxu0
        %4027 = vmatpush.bf16.msra.mxu0 %v3905
        %4028 = vmatpush.bf16.msra.mxu0 %v3904
        %4029 = vmatpush.bf16.msra.mxu0 %v3903
        %4030 = vmatpush.bf16.msra.mxu0 %v3902
        %4031 = vmatpush.bf16.msra.mxu0 %v3901
        %4032 = vmatpush.bf16.msra.mxu0 %v3900
        %4033 = vmatpush.bf16.msra.mxu0 %v3899
        %4034 = vmatpush.bf16.msra.mxu0 %v3898
        %4035 = vmatmul.bf16.gmra.mxu0 %v3699
        %v4036 = vpop.f32.mrf.mxu0
        %v4037 = vadd.f32 %v3948, %v4036
        %v4038 = vpop.f32.mrf.mxu0
        %v4039 = vadd.f32 %v3950, %v4038
        %4040 = vmatmul.bf16.gmra.mxu0 %v3702
        %v4041 = vpop.f32.mrf.mxu0
        %v4042 = vadd.f32 %v3953, %v4041
        %v4043 = vpop.f32.mrf.mxu0
        %v4044 = vadd.f32 %v3955, %v4043
        %4045 = vmatmul.bf16.gmra.mxu0 %v3705
        %v4046 = vpop.f32.mrf.mxu0
        %v4047 = vadd.f32 %v3958, %v4046
        %v4048 = vpop.f32.mrf.mxu0
        %v4049 = vadd.f32 %v3960, %v4048
        %4050 = vmatmul.bf16.gmra.mxu0 %v3708
        %v4051 = vpop.f32.mrf.mxu0
        %v4052 = vadd.f32 %v3963, %v4051
        %v4053 = vpop.f32.mrf.mxu0
        %v4054 = vadd.f32 %v3965, %v4053
        %4055 = vmatmul.bf16.gmra.mxu0 %v3711
        %v4056 = vpop.f32.mrf.mxu0
        %v4057 = vadd.f32 %v3968, %v4056
        %v4058 = vpop.f32.mrf.mxu0
        %v4059 = vadd.f32 %v3970, %v4058
        %4060 = vmatmul.bf16.gmra.mxu0 %v3714
        %v4061 = vpop.f32.mrf.mxu0
        %v4062 = vadd.f32 %v3973, %v4061
        %v4063 = vpop.f32.mrf.mxu0
        %v4064 = vadd.f32 %v3975, %v4063
        %4065 = vmatmul.bf16.gmra.mxu0 %v3717
        %v4066 = vpop.f32.mrf.mxu0
        %v4067 = vadd.f32 %v3978, %v4066
        %v4068 = vpop.f32.mrf.mxu0
        %v4069 = vadd.f32 %v3980, %v4068
        %4070 = vmatmul.bf16.gmra.mxu0 %v3720
        %v4071 = vpop.f32.mrf.mxu0
        %v4072 = vadd.f32 %v3983, %v4071
        %v4073 = vpop.f32.mrf.mxu0
        %v4074 = vadd.f32 %v3985, %v4073
        %4075 = vmatmul.bf16.gmra.mxu0 %v3723
        %v4076 = vpop.f32.mrf.mxu0
        %v4077 = vadd.f32 %v3988, %v4076
        %v4078 = vpop.f32.mrf.mxu0
        %v4079 = vadd.f32 %v3990, %v4078
        %4080 = vmatmul.bf16.gmra.mxu0 %v3726
        %v4081 = vpop.f32.mrf.mxu0
        %v4082 = vadd.f32 %v3993, %v4081
        %v4083 = vpop.f32.mrf.mxu0
        %v4084 = vadd.f32 %v3995, %v4083
        %4085 = vmatmul.bf16.gmra.mxu0 %v3729
        %v4086 = vpop.f32.mrf.mxu0
        %v4087 = vadd.f32 %v3998, %v4086
        %v4088 = vpop.f32.mrf.mxu0
        %v4089 = vadd.f32 %v4000, %v4088
        %4090 = vmatmul.bf16.gmra.mxu0 %v3732
        %v4091 = vpop.f32.mrf.mxu0
        %v4092 = vadd.f32 %v4003, %v4091
        %v4093 = vpop.f32.mrf.mxu0
        %v4094 = vadd.f32 %v4005, %v4093
        %4095 = vmatmul.bf16.gmra.mxu0 %v3735
        %v4096 = vpop.f32.mrf.mxu0
        %v4097 = vadd.f32 %v4008, %v4096
        %v4098 = vpop.f32.mrf.mxu0
        %v4099 = vadd.f32 %v4010, %v4098
        %4100 = vmatmul.bf16.gmra.mxu0 %v3738
        %v4101 = vpop.f32.mrf.mxu0
        %v4102 = vadd.f32 %v4013, %v4101
        %v4103 = vpop.f32.mrf.mxu0
        %v4104 = vadd.f32 %v4015, %v4103
        %4105 = vmatmul.bf16.gmra.mxu0 %v3741
        %v4106 = vpop.f32.mrf.mxu0
        %v4107 = vadd.f32 %v4018, %v4106
        %v4108 = vpop.f32.mrf.mxu0
        %v4109 = vadd.f32 %v4020, %v4108
        %4110 = vmatmul.bf16.gmra.mxu0 %v3744
        %v4111 = vpop.f32.mrf.mxu0
        %v4112 = vadd.f32 %v4023, %v4111
        %v4113 = vpop.f32.mrf.mxu0
        %v4114 = vadd.f32 %v4025, %v4113
        %4115 = vdwg.mxu0
        %4116 = vmatpush.bf16.msra.mxu0 %v3913
        %4117 = vmatpush.bf16.msra.mxu0 %v3912
        %4118 = vmatpush.bf16.msra.mxu0 %v3911
        %4119 = vmatpush.bf16.msra.mxu0 %v3910
        %4120 = vmatpush.bf16.msra.mxu0 %v3909
        %4121 = vmatpush.bf16.msra.mxu0 %v3908
        %4122 = vmatpush.bf16.msra.mxu0 %v3907
        %4123 = vmatpush.bf16.msra.mxu0 %v3906
        %4124 = vmatmul.bf16.gmra.mxu0 %v3700
        %v4125 = vpop.f32.mrf.mxu0
        %v4126 = vadd.f32 %v4037, %v4125
        %v4127 = vpop.f32.mrf.mxu0
        %v4128 = vadd.f32 %v4039, %v4127
        %4129 = vmatmul.bf16.gmra.mxu0 %v3703
        %v4130 = vpop.f32.mrf.mxu0
        %v4131 = vadd.f32 %v4042, %v4130
        %v4132 = vpop.f32.mrf.mxu0
        %v4133 = vadd.f32 %v4044, %v4132
        %4134 = vmatmul.bf16.gmra.mxu0 %v3706
        %v4135 = vpop.f32.mrf.mxu0
        %v4136 = vadd.f32 %v4047, %v4135
        %v4137 = vpop.f32.mrf.mxu0
        %v4138 = vadd.f32 %v4049, %v4137
        %4139 = vmatmul.bf16.gmra.mxu0 %v3709
        %v4140 = vpop.f32.mrf.mxu0
        %v4141 = vadd.f32 %v4052, %v4140
        %v4142 = vpop.f32.mrf.mxu0
        %v4143 = vadd.f32 %v4054, %v4142
        %4144 = vmatmul.bf16.gmra.mxu0 %v3712
        %v4145 = vpop.f32.mrf.mxu0
        %v4146 = vadd.f32 %v4057, %v4145
        %v4147 = vpop.f32.mrf.mxu0
        %v4148 = vadd.f32 %v4059, %v4147
        %4149 = vmatmul.bf16.gmra.mxu0 %v3715
        %v4150 = vpop.f32.mrf.mxu0
        %v4151 = vadd.f32 %v4062, %v4150
        %v4152 = vpop.f32.mrf.mxu0
        %v4153 = vadd.f32 %v4064, %v4152
        %4154 = vmatmul.bf16.gmra.mxu0 %v3718
        %v4155 = vpop.f32.mrf.mxu0
        %v4156 = vadd.f32 %v4067, %v4155
        %v4157 = vpop.f32.mrf.mxu0
        %v4158 = vadd.f32 %v4069, %v4157
        %4159 = vmatmul.bf16.gmra.mxu0 %v3721
        %v4160 = vpop.f32.mrf.mxu0
        %v4161 = vadd.f32 %v4072, %v4160
        %v4162 = vpop.f32.mrf.mxu0
        %v4163 = vadd.f32 %v4074, %v4162
        %4164 = vmatmul.bf16.gmra.mxu0 %v3724
        %v4165 = vpop.f32.mrf.mxu0
        %v4166 = vadd.f32 %v4077, %v4165
        %v4167 = vpop.f32.mrf.mxu0
        %v4168 = vadd.f32 %v4079, %v4167
        %4169 = vmatmul.bf16.gmra.mxu0 %v3727
        %v4170 = vpop.f32.mrf.mxu0
        %v4171 = vadd.f32 %v4082, %v4170
        %v4172 = vpop.f32.mrf.mxu0
        %v4173 = vadd.f32 %v4084, %v4172
        %4174 = vmatmul.bf16.gmra.mxu0 %v3730
        %v4175 = vpop.f32.mrf.mxu0
        %v4176 = vadd.f32 %v4087, %v4175
        %v4177 = vpop.f32.mrf.mxu0
        %v4178 = vadd.f32 %v4089, %v4177
        %4179 = vmatmul.bf16.gmra.mxu0 %v3733
        %v4180 = vpop.f32.mrf.mxu0
        %v4181 = vadd.f32 %v4092, %v4180
        %v4182 = vpop.f32.mrf.mxu0
        %v4183 = vadd.f32 %v4094, %v4182
        %4184 = vmatmul.bf16.gmra.mxu0 %v3736
        %v4185 = vpop.f32.mrf.mxu0
        %v4186 = vadd.f32 %v4097, %v4185
        %v4187 = vpop.f32.mrf.mxu0
        %v4188 = vadd.f32 %v4099, %v4187
        %4189 = vmatmul.bf16.gmra.mxu0 %v3739
        %v4190 = vpop.f32.mrf.mxu0
        %v4191 = vadd.f32 %v4102, %v4190
        %v4192 = vpop.f32.mrf.mxu0
        %v4193 = vadd.f32 %v4104, %v4192
        %4194 = vmatmul.bf16.gmra.mxu0 %v3742
        %v4195 = vpop.f32.mrf.mxu0
        %v4196 = vadd.f32 %v4107, %v4195
        %v4197 = vpop.f32.mrf.mxu0
        %v4198 = vadd.f32 %v4109, %v4197
        %4199 = vmatmul.bf16.gmra.mxu0 %v3745
        %v4200 = vpop.f32.mrf.mxu0
        %v4201 = vadd.f32 %v4112, %v4200
        %v4202 = vpop.f32.mrf.mxu0
        %v4203 = vadd.f32 %v4114, %v4202
        %4204 = vdwg.mxu0
        %v4205 = vadd.f32 %v3345, %v4126
        %v4206 = vadd.f32 %v3347, %v4128
        %v4207 = vadd.f32 %v3350, %v4131
        %v4208 = vadd.f32 %v3352, %v4133
        %v4209 = vadd.f32 %v3355, %v4136
        %v4210 = vadd.f32 %v3357, %v4138
        %v4211 = vadd.f32 %v3360, %v4141
        %v4212 = vadd.f32 %v3362, %v4143
        %v4213 = vadd.f32 %v3365, %v4146
        %v4214 = vadd.f32 %v3367, %v4148
        %v4215 = vadd.f32 %v3370, %v4151
        %v4216 = vadd.f32 %v3372, %v4153
        %v4217 = vadd.f32 %v3375, %v4156
        %v4218 = vadd.f32 %v3377, %v4158
        %v4219 = vadd.f32 %v3380, %v4161
        %v4220 = vadd.f32 %v3382, %v4163
        %v4221 = vadd.f32 %v3385, %v4166
        %v4222 = vadd.f32 %v3387, %v4168
        %v4223 = vadd.f32 %v3390, %v4171
        %v4224 = vadd.f32 %v3392, %v4173
        %v4225 = vadd.f32 %v3395, %v4176
        %v4226 = vadd.f32 %v3397, %v4178
        %v4227 = vadd.f32 %v3400, %v4181
        %v4228 = vadd.f32 %v3402, %v4183
        %v4229 = vadd.f32 %v3405, %v4186
        %v4230 = vadd.f32 %v3407, %v4188
        %v4231 = vadd.f32 %v3410, %v4191
        %v4232 = vadd.f32 %v3412, %v4193
        %v4233 = vadd.f32 %v3415, %v4196
        %v4234 = vadd.f32 %v3417, %v4198
        %v4235 = vadd.f32 %v3420, %v4201
        %v4236 = vadd.f32 %v3422, %v4203
        %v4237 = vld [vmem:[%s2] sm:$0x1]
        %v4239 = vperm.slane %v4237, 0
        %v4241 = vmul.f32 %v4205, %v4239
        %v4242 = vmul.f32 %v4206, %v4239
        %v4243 = vmul.f32 %v4207, %v4239
        %v4244 = vmul.f32 %v4208, %v4239
        %v4245 = vmul.f32 %v4209, %v4239
        %v4246 = vmul.f32 %v4210, %v4239
        %v4247 = vmul.f32 %v4211, %v4239
        %v4248 = vmul.f32 %v4212, %v4239
        %v4249 = vmul.f32 %v4213, %v4239
        %v4250 = vmul.f32 %v4214, %v4239
        %v4251 = vmul.f32 %v4215, %v4239
        %v4252 = vmul.f32 %v4216, %v4239
        %v4253 = vmul.f32 %v4217, %v4239
        %v4254 = vmul.f32 %v4218, %v4239
        %v4255 = vmul.f32 %v4219, %v4239
        %v4256 = vmul.f32 %v4220, %v4239
        %v4257 = vmul.f32 %v4221, %v4239
        %v4258 = vmul.f32 %v4222, %v4239
        %v4259 = vmul.f32 %v4223, %v4239
        %v4260 = vmul.f32 %v4224, %v4239
        %v4261 = vmul.f32 %v4225, %v4239
        %v4262 = vmul.f32 %v4226, %v4239
        %v4263 = vmul.f32 %v4227, %v4239
        %v4264 = vmul.f32 %v4228, %v4239
        %v4265 = vmul.f32 %v4229, %v4239
        %v4266 = vmul.f32 %v4230, %v4239
        %v4267 = vmul.f32 %v4231, %v4239
        %v4268 = vmul.f32 %v4232, %v4239
        %v4269 = vmul.f32 %v4233, %v4239
        %v4270 = vmul.f32 %v4234, %v4239
        %v4271 = vmul.f32 %v4235, %v4239
        %v4272 = vmul.f32 %v4236, %v4239
        %v4273 = vld [vmem:[%s3] sm:$0x1]
        %v4275 = vperm.slane %v4273, 0
        %v4277 = vadd.f32 %v4241, %v4275
        %v4278 = vadd.f32 %v4242, %v4275
        %v4279 = vadd.f32 %v4243, %v4275
        %v4280 = vadd.f32 %v4244, %v4275
        %v4281 = vadd.f32 %v4245, %v4275
        %v4282 = vadd.f32 %v4246, %v4275
        %v4283 = vadd.f32 %v4247, %v4275
        %v4284 = vadd.f32 %v4248, %v4275
        %v4285 = vadd.f32 %v4249, %v4275
        %v4286 = vadd.f32 %v4250, %v4275
        %v4287 = vadd.f32 %v4251, %v4275
        %v4288 = vadd.f32 %v4252, %v4275
        %v4289 = vadd.f32 %v4253, %v4275
        %v4290 = vadd.f32 %v4254, %v4275
        %v4291 = vadd.f32 %v4255, %v4275
        %v4292 = vadd.f32 %v4256, %v4275
        %v4293 = vadd.f32 %v4257, %v4275
        %v4294 = vadd.f32 %v4258, %v4275
        %v4295 = vadd.f32 %v4259, %v4275
        %v4296 = vadd.f32 %v4260, %v4275
        %v4297 = vadd.f32 %v4261, %v4275
        %v4298 = vadd.f32 %v4262, %v4275
        %v4299 = vadd.f32 %v4263, %v4275
        %v4300 = vadd.f32 %v4264, %v4275
        %v4301 = vadd.f32 %v4265, %v4275
        %v4302 = vadd.f32 %v4266, %v4275
        %v4303 = vadd.f32 %v4267, %v4275
        %v4304 = vadd.f32 %v4268, %v4275
        %v4305 = vadd.f32 %v4269, %v4275
        %v4306 = vadd.f32 %v4270, %v4275
        %v4307 = vadd.f32 %v4271, %v4275
        %v4308 = vadd.f32 %v4272, %v4275
        %v4309 = vmax.f32 %v4277, 0.0
        %v4310 = vmax.f32 %v4278, 0.0
        %v4311 = vmax.f32 %v4279, 0.0
        %v4312 = vmax.f32 %v4280, 0.0
        %v4313 = vmax.f32 %v4281, 0.0
        %v4314 = vmax.f32 %v4282, 0.0
        %v4315 = vmax.f32 %v4283, 0.0
        %v4316 = vmax.f32 %v4284, 0.0
        %v4317 = vmax.f32 %v4285, 0.0
        %v4318 = vmax.f32 %v4286, 0.0
        %v4319 = vmax.f32 %v4287, 0.0
        %v4320 = vmax.f32 %v4288, 0.0
        %v4321 = vmax.f32 %v4289, 0.0
        %v4322 = vmax.f32 %v4290, 0.0
        %v4323 = vmax.f32 %v4291, 0.0
        %v4324 = vmax.f32 %v4292, 0.0
        %v4325 = vmax.f32 %v4293, 0.0
        %v4326 = vmax.f32 %v4294, 0.0
        %v4327 = vmax.f32 %v4295, 0.0
        %v4328 = vmax.f32 %v4296, 0.0
        %v4329 = vmax.f32 %v4297, 0.0
        %v4330 = vmax.f32 %v4298, 0.0
        %v4331 = vmax.f32 %v4299, 0.0
        %v4332 = vmax.f32 %v4300, 0.0
        %v4333 = vmax.f32 %v4301, 0.0
        %v4334 = vmax.f32 %v4302, 0.0
        %v4335 = vmax.f32 %v4303, 0.0
        %v4336 = vmax.f32 %v4304, 0.0
        %v4337 = vmax.f32 %v4305, 0.0
        %v4338 = vmax.f32 %v4306, 0.0
        %v4339 = vmax.f32 %v4307, 0.0
        %v4340 = vmax.f32 %v4308, 0.0
        %v4341 = vpack.c.bf16 %v4309, %v4309
        %v4342 = vpack.c.bf16 %v4310, %v4310
        %v4343 = vpack.c.bf16 %v4311, %v4311
        %v4344 = vpack.c.bf16 %v4312, %v4312
        %v4345 = vpack.c.bf16 %v4313, %v4313
        %v4346 = vpack.c.bf16 %v4314, %v4314
        %v4347 = vpack.c.bf16 %v4315, %v4315
        %v4348 = vpack.c.bf16 %v4316, %v4316
        %v4349 = vpack.c.bf16 %v4317, %v4317
        %v4350 = vpack.c.bf16 %v4318, %v4318
        %v4351 = vpack.c.bf16 %v4319, %v4319
        %v4352 = vpack.c.bf16 %v4320, %v4320
        %v4353 = vpack.c.bf16 %v4321, %v4321
        %v4354 = vpack.c.bf16 %v4322, %v4322
        %v4355 = vpack.c.bf16 %v4323, %v4323
        %v4356 = vpack.c.bf16 %v4324, %v4324
        %v4357 = vpack.c.bf16 %v4325, %v4325
        %v4358 = vpack.c.bf16 %v4326, %v4326
        %v4359 = vpack.c.bf16 %v4327, %v4327
        %v4360 = vpack.c.bf16 %v4328, %v4328
        %v4361 = vpack.c.bf16 %v4329, %v4329
        %v4362 = vpack.c.bf16 %v4330, %v4330
        %v4363 = vpack.c.bf16 %v4331, %v4331
        %v4364 = vpack.c.bf16 %v4332, %v4332
        %v4365 = vpack.c.bf16 %v4333, %v4333
        %v4366 = vpack.c.bf16 %v4334, %v4334
        %v4367 = vpack.c.bf16 %v4335, %v4335
        %v4368 = vpack.c.bf16 %v4336, %v4336
        %v4369 = vpack.c.bf16 %v4337, %v4337
        %v4370 = vpack.c.bf16 %v4338, %v4338
        %v4371 = vpack.c.bf16 %v4339, %v4339
        %v4372 = vpack.c.bf16 %v4340, %v4340
        %v4374 = vshrl.u32 %v4341, 16
        %v4376 = vrot.slane %v4374, 7
        %v4377 = vshll.u32 %v4341, 16
        %v4379 = vor.u32 %v4376, %v4377
        %v4380 = vrot.slane %v4376, 4
        %v4382 = vshrl.u32 %v4342, 16
        %v4384 = vrot.slane %v4382, 7
        %v4385 = vshll.u32 %v4342, 16
        %v4387 = vor.u32 %v4384, %v4385
        %v4388 = vsel %vm486, %v4380, %v4387
        %v4389 = vrot.slane %v4384, 4
        %v4391 = vshrl.u32 %v4343, 16
        %v4393 = vrot.slane %v4391, 7
        %v4394 = vshll.u32 %v4343, 16
        %v4396 = vor.u32 %v4393, %v4394
        %v4397 = vrot.slane %v4393, 4
        %v4399 = vshrl.u32 %v4344, 16
        %v4401 = vrot.slane %v4399, 7
        %v4402 = vshll.u32 %v4344, 16
        %v4404 = vor.u32 %v4401, %v4402
        %v4405 = vsel %vm486, %v4397, %v4404
        %v4406 = vrot.slane %v4401, 4
        %v4408 = vshrl.u32 %v4345, 16
        %v4410 = vrot.slane %v4408, 7
        %v4411 = vshll.u32 %v4345, 16
        %v4413 = vor.u32 %v4410, %v4411
        %v4414 = vrot.slane %v4410, 4
        %v4416 = vshrl.u32 %v4346, 16
        %v4418 = vrot.slane %v4416, 7
        %v4419 = vshll.u32 %v4346, 16
        %v4421 = vor.u32 %v4418, %v4419
        %v4422 = vsel %vm486, %v4414, %v4421
        %v4423 = vrot.slane %v4418, 4
        %v4425 = vshrl.u32 %v4347, 16
        %v4427 = vrot.slane %v4425, 7
        %v4428 = vshll.u32 %v4347, 16
        %v4430 = vor.u32 %v4427, %v4428
        %v4431 = vrot.slane %v4427, 4
        %v4433 = vshrl.u32 %v4348, 16
        %v4435 = vrot.slane %v4433, 7
        %v4436 = vshll.u32 %v4348, 16
        %v4438 = vor.u32 %v4435, %v4436
        %v4439 = vsel %vm486, %v4431, %v4438
        %v4440 = vrot.slane %v4435, 4
        %v4442 = vshrl.u32 %v4349, 16
        %v4444 = vrot.slane %v4442, 7
        %v4445 = vshll.u32 %v4349, 16
        %v4447 = vor.u32 %v4444, %v4445
        %v4448 = vrot.slane %v4444, 4
        %v4450 = vshrl.u32 %v4350, 16
        %v4452 = vrot.slane %v4450, 7
        %v4453 = vshll.u32 %v4350, 16
        %v4455 = vor.u32 %v4452, %v4453
        %v4456 = vsel %vm486, %v4448, %v4455
        %v4457 = vrot.slane %v4452, 4
        %v4459 = vshrl.u32 %v4351, 16
        %v4461 = vrot.slane %v4459, 7
        %v4462 = vshll.u32 %v4351, 16
        %v4464 = vor.u32 %v4461, %v4462
        %v4465 = vrot.slane %v4461, 4
        %v4467 = vshrl.u32 %v4352, 16
        %v4469 = vrot.slane %v4467, 7
        %v4470 = vshll.u32 %v4352, 16
        %v4472 = vor.u32 %v4469, %v4470
        %v4473 = vsel %vm486, %v4465, %v4472
        %v4474 = vrot.slane %v4469, 4
        %v4476 = vshrl.u32 %v4353, 16
        %v4478 = vrot.slane %v4476, 7
        %v4479 = vshll.u32 %v4353, 16
        %v4481 = vor.u32 %v4478, %v4479
        %v4482 = vrot.slane %v4478, 4
        %v4484 = vshrl.u32 %v4354, 16
        %v4486 = vrot.slane %v4484, 7
        %v4487 = vshll.u32 %v4354, 16
        %v4489 = vor.u32 %v4486, %v4487
        %v4490 = vsel %vm486, %v4482, %v4489
        %v4491 = vrot.slane %v4486, 4
        %v4493 = vshrl.u32 %v4355, 16
        %v4495 = vrot.slane %v4493, 7
        %v4496 = vshll.u32 %v4355, 16
        %v4498 = vor.u32 %v4495, %v4496
        %v4499 = vrot.slane %v4495, 4
        %v4501 = vshrl.u32 %v4356, 16
        %v4503 = vrot.slane %v4501, 7
        %v4504 = vshll.u32 %v4356, 16
        %v4506 = vor.u32 %v4503, %v4504
        %v4507 = vsel %vm486, %v4499, %v4506
        %v4508 = vrot.slane %v4503, 4
        %v4510 = vshrl.u32 %v4357, 16
        %v4512 = vrot.slane %v4510, 7
        %v4513 = vshll.u32 %v4357, 16
        %v4515 = vor.u32 %v4512, %v4513
        %v4516 = vrot.slane %v4512, 4
        %v4518 = vshrl.u32 %v4358, 16
        %v4520 = vrot.slane %v4518, 7
        %v4521 = vshll.u32 %v4358, 16
        %v4523 = vor.u32 %v4520, %v4521
        %v4524 = vsel %vm486, %v4516, %v4523
        %v4525 = vrot.slane %v4520, 4
        %v4527 = vshrl.u32 %v4359, 16
        %v4529 = vrot.slane %v4527, 7
        %v4530 = vshll.u32 %v4359, 16
        %v4532 = vor.u32 %v4529, %v4530
        %v4533 = vrot.slane %v4529, 4
        %v4535 = vshrl.u32 %v4360, 16
        %v4537 = vrot.slane %v4535, 7
        %v4538 = vshll.u32 %v4360, 16
        %v4540 = vor.u32 %v4537, %v4538
        %v4541 = vsel %vm486, %v4533, %v4540
        %v4542 = vrot.slane %v4537, 4
        %v4544 = vshrl.u32 %v4361, 16
        %v4546 = vrot.slane %v4544, 7
        %v4547 = vshll.u32 %v4361, 16
        %v4549 = vor.u32 %v4546, %v4547
        %v4550 = vrot.slane %v4546, 4
        %v4552 = vshrl.u32 %v4362, 16
        %v4554 = vrot.slane %v4552, 7
        %v4555 = vshll.u32 %v4362, 16
        %v4557 = vor.u32 %v4554, %v4555
        %v4558 = vsel %vm486, %v4550, %v4557
        %v4559 = vrot.slane %v4554, 4
        %v4561 = vshrl.u32 %v4363, 16
        %v4563 = vrot.slane %v4561, 7
        %v4564 = vshll.u32 %v4363, 16
        %v4566 = vor.u32 %v4563, %v4564
        %v4567 = vrot.slane %v4563, 4
        %v4569 = vshrl.u32 %v4364, 16
        %v4571 = vrot.slane %v4569, 7
        %v4572 = vshll.u32 %v4364, 16
        %v4574 = vor.u32 %v4571, %v4572
        %v4575 = vsel %vm486, %v4567, %v4574
        %v4576 = vrot.slane %v4571, 4
        %v4578 = vshrl.u32 %v4365, 16
        %v4580 = vrot.slane %v4578, 7
        %v4581 = vshll.u32 %v4365, 16
        %v4583 = vor.u32 %v4580, %v4581
        %v4584 = vrot.slane %v4580, 4
        %v4586 = vshrl.u32 %v4366, 16
        %v4588 = vrot.slane %v4586, 7
        %v4589 = vshll.u32 %v4366, 16
        %v4591 = vor.u32 %v4588, %v4589
        %v4592 = vsel %vm486, %v4584, %v4591
        %v4593 = vrot.slane %v4588, 4
        %v4595 = vshrl.u32 %v4367, 16
        %v4597 = vrot.slane %v4595, 7
        %v4598 = vshll.u32 %v4367, 16
        %v4600 = vor.u32 %v4597, %v4598
        %v4601 = vrot.slane %v4597, 4
        %v4603 = vshrl.u32 %v4368, 16
        %v4605 = vrot.slane %v4603, 7
        %v4606 = vshll.u32 %v4368, 16
        %v4608 = vor.u32 %v4605, %v4606
        %v4609 = vsel %vm486, %v4601, %v4608
        %v4610 = vrot.slane %v4605, 4
        %v4612 = vshrl.u32 %v4369, 16
        %v4614 = vrot.slane %v4612, 7
        %v4615 = vshll.u32 %v4369, 16
        %v4617 = vor.u32 %v4614, %v4615
        %v4618 = vrot.slane %v4614, 4
        %v4620 = vshrl.u32 %v4370, 16
        %v4622 = vrot.slane %v4620, 7
        %v4623 = vshll.u32 %v4370, 16
        %v4625 = vor.u32 %v4622, %v4623
        %v4626 = vsel %vm486, %v4618, %v4625
        %v4627 = vrot.slane %v4622, 4
        %v4629 = vshrl.u32 %v4371, 16
        %v4631 = vrot.slane %v4629, 7
        %v4632 = vshll.u32 %v4371, 16
        %v4634 = vor.u32 %v4631, %v4632
        %v4635 = vrot.slane %v4631, 4
        %v4637 = vshrl.u32 %v4372, 16
        %v4639 = vrot.slane %v4637, 7
        %v4640 = vshll.u32 %v4372, 16
        %v4642 = vor.u32 %v4639, %v4640
        %v4643 = vsel %vm486, %v4635, %v4642
        %v4644 = vrot.slane %v4639, 4
        %v4693 = vld [vmem:[%s807] sm:$0xf]
        %v4694 = vsel %vm809, %v4379, %v4693
        %4695 = vst [vmem:[%s807] sm:$0xf] %v4694
        %4696 = vst [vmem:[%s807 + $0x4] sm:$0xf] %v4388
        %v4697 = vld [vmem:[%s807 + $0x8] sm:$0x1]
        %v4698 = vsel %vm342, %v4389, %v4697
        %4699 = vst [vmem:[%s807 + $0x8] sm:$0x1] %v4698
        %v4700 = vld [vmem:[%s807 + $0xc] sm:$0xf]
        %v4701 = vsel %vm809, %v4396, %v4700
        %4702 = vst [vmem:[%s807 + $0xc] sm:$0xf] %v4701
        %4703 = vst [vmem:[%s807 + $0x10] sm:$0xf] %v4405
        %v4704 = vld [vmem:[%s807 + $0x14] sm:$0x1]
        %v4705 = vsel %vm342, %v4406, %v4704
        %4706 = vst [vmem:[%s807 + $0x14] sm:$0x1] %v4705
        %v4707 = vld [vmem:[%s807 + $0x18] sm:$0xf]
        %v4708 = vsel %vm809, %v4413, %v4707
        %4709 = vst [vmem:[%s807 + $0x18] sm:$0xf] %v4708
        %4710 = vst [vmem:[%s807 + $0x1c] sm:$0xf] %v4422
        %v4711 = vld [vmem:[%s807 + $0x20] sm:$0x1]
        %v4712 = vsel %vm342, %v4423, %v4711
        %4713 = vst [vmem:[%s807 + $0x20] sm:$0x1] %v4712
        %v4714 = vld [vmem:[%s807 + $0x24] sm:$0xf]
        %v4715 = vsel %vm809, %v4430, %v4714
        %4716 = vst [vmem:[%s807 + $0x24] sm:$0xf] %v4715
        %4717 = vst [vmem:[%s807 + $0x28] sm:$0xf] %v4439
        %v4718 = vld [vmem:[%s807 + $0x2c] sm:$0x1]
        %v4719 = vsel %vm342, %v4440, %v4718
        %4720 = vst [vmem:[%s807 + $0x2c] sm:$0x1] %v4719
        %v4721 = vld [vmem:[%s807 + $0x30] sm:$0xf]
        %v4722 = vsel %vm809, %v4447, %v4721
        %4723 = vst [vmem:[%s807 + $0x30] sm:$0xf] %v4722
        %4724 = vst [vmem:[%s807 + $0x34] sm:$0xf] %v4456
        %v4725 = vld [vmem:[%s807 + $0x38] sm:$0x1]
        %v4726 = vsel %vm342, %v4457, %v4725
        %4727 = vst [vmem:[%s807 + $0x38] sm:$0x1] %v4726
        %v4728 = vld [vmem:[%s807 + $0x3c] sm:$0xf]
        %v4729 = vsel %vm809, %v4464, %v4728
        %4730 = vst [vmem:[%s807 + $0x3c] sm:$0xf] %v4729
        %4731 = vst [vmem:[%s807 + $0x40] sm:$0xf] %v4473
        %v4732 = vld [vmem:[%s807 + $0x44] sm:$0x1]
        %v4733 = vsel %vm342, %v4474, %v4732
        %4734 = vst [vmem:[%s807 + $0x44] sm:$0x1] %v4733
        %v4735 = vld [vmem:[%s807 + $0x48] sm:$0xf]
        %v4736 = vsel %vm809, %v4481, %v4735
        %4737 = vst [vmem:[%s807 + $0x48] sm:$0xf] %v4736
        %4738 = vst [vmem:[%s807 + $0x4c] sm:$0xf] %v4490
        %v4739 = vld [vmem:[%s807 + $0x50] sm:$0x1]
        %v4740 = vsel %vm342, %v4491, %v4739
        %4741 = vst [vmem:[%s807 + $0x50] sm:$0x1] %v4740
        %v4742 = vld [vmem:[%s807 + $0x54] sm:$0xf]
        %v4743 = vsel %vm809, %v4498, %v4742
        %4744 = vst [vmem:[%s807 + $0x54] sm:$0xf] %v4743
        %4745 = vst [vmem:[%s807 + $0x58] sm:$0xf] %v4507
        %v4746 = vld [vmem:[%s807 + $0x5c] sm:$0x1]
        %v4747 = vsel %vm342, %v4508, %v4746
        %4748 = vst [vmem:[%s807 + $0x5c] sm:$0x1] %v4747
        %v4749 = vld [vmem:[%s807 + $0x60] sm:$0xf]
        %v4750 = vsel %vm809, %v4515, %v4749
        %4751 = vst [vmem:[%s807 + $0x60] sm:$0xf] %v4750
        %4752 = vst [vmem:[%s807 + $0x64] sm:$0xf] %v4524
        %v4753 = vld [vmem:[%s807 + $0x68] sm:$0x1]
        %v4754 = vsel %vm342, %v4525, %v4753
        %4755 = vst [vmem:[%s807 + $0x68] sm:$0x1] %v4754
        %v4756 = vld [vmem:[%s807 + $0x6c] sm:$0xf]
        %v4757 = vsel %vm809, %v4532, %v4756
        %4758 = vst [vmem:[%s807 + $0x6c] sm:$0xf] %v4757
        %4759 = vst [vmem:[%s807 + $0x70] sm:$0xf] %v4541
        %v4760 = vld [vmem:[%s807 + $0x74] sm:$0x1]
        %v4761 = vsel %vm342, %v4542, %v4760
        %4762 = vst [vmem:[%s807 + $0x74] sm:$0x1] %v4761
        %v4763 = vld [vmem:[%s807 + $0x78] sm:$0xf]
        %v4764 = vsel %vm809, %v4549, %v4763
        %4765 = vst [vmem:[%s807 + $0x78] sm:$0xf] %v4764
        %4766 = vst [vmem:[%s807 + $0x7c] sm:$0xf] %v4558
        %v4767 = vld [vmem:[%s807 + $0x80] sm:$0x1]
        %v4768 = vsel %vm342, %v4559, %v4767
        %4769 = vst [vmem:[%s807 + $0x80] sm:$0x1] %v4768
        %v4770 = vld [vmem:[%s807 + $0x84] sm:$0xf]
        %v4771 = vsel %vm809, %v4566, %v4770
        %4772 = vst [vmem:[%s807 + $0x84] sm:$0xf] %v4771
        %4773 = vst [vmem:[%s807 + $0x88] sm:$0xf] %v4575
        %v4774 = vld [vmem:[%s807 + $0x8c] sm:$0x1]
        %v4775 = vsel %vm342, %v4576, %v4774
        %4776 = vst [vmem:[%s807 + $0x8c] sm:$0x1] %v4775
        %v4777 = vld [vmem:[%s807 + $0x90] sm:$0xf]
        %v4778 = vsel %vm809, %v4583, %v4777
        %4779 = vst [vmem:[%s807 + $0x90] sm:$0xf] %v4778
        %4780 = vst [vmem:[%s807 + $0x94] sm:$0xf] %v4592
        %v4781 = vld [vmem:[%s807 + $0x98] sm:$0x1]
        %v4782 = vsel %vm342, %v4593, %v4781
        %4783 = vst [vmem:[%s807 + $0x98] sm:$0x1] %v4782
        %v4784 = vld [vmem:[%s807 + $0x9c] sm:$0xf]
        %v4785 = vsel %vm809, %v4600, %v4784
        %4786 = vst [vmem:[%s807 + $0x9c] sm:$0xf] %v4785
        %4787 = vst [vmem:[%s807 + $0xa0] sm:$0xf] %v4609
        %v4788 = vld [vmem:[%s807 + $0xa4] sm:$0x1]
        %v4789 = vsel %vm342, %v4610, %v4788
        %4790 = vst [vmem:[%s807 + $0xa4] sm:$0x1] %v4789
        %v4791 = vld [vmem:[%s807 + $0xa8] sm:$0xf]
        %v4792 = vsel %vm809, %v4617, %v4791
        %4793 = vst [vmem:[%s807 + $0xa8] sm:$0xf] %v4792
        %4794 = vst [vmem:[%s807 + $0xac] sm:$0xf] %v4626
        %v4795 = vld [vmem:[%s807 + $0xb0] sm:$0x1]
        %v4796 = vsel %vm342, %v4627, %v4795
        %4797 = vst [vmem:[%s807 + $0xb0] sm:$0x1] %v4796
        %v4798 = vld [vmem:[%s807 + $0xb4] sm:$0xf]
        %v4799 = vsel %vm809, %v4634, %v4798
        %4800 = vst [vmem:[%s807 + $0xb4] sm:$0xf] %v4799
        %4801 = vst [vmem:[%s807 + $0xb8] sm:$0xf] %v4643
        %v4802 = vld [vmem:[%s807 + $0xbc] sm:$0x1]
        %v4803 = vsel %vm342, %v4644, %v4802
        %4804 = vst [vmem:[%s807 + $0xbc] sm:$0x1] %v4803
        %v4805 = vld [vmem:[#allocation2] sm:$0xf]
        %v4806 = vld [vmem:[#allocation2 + $0x4] sm:$0xf]
        %v4807 = vld [vmem:[#allocation2 + $0xc] sm:$0xf]
        %v4808 = vld [vmem:[#allocation2 + $0x10] sm:$0xf]
        %v4809 = vld [vmem:[#allocation2 + $0x18] sm:$0xf]
        %v4810 = vld [vmem:[#allocation2 + $0x1c] sm:$0xf]
        %v4811 = vld [vmem:[#allocation2 + $0x24] sm:$0xf]
        %v4812 = vld [vmem:[#allocation2 + $0x28] sm:$0xf]
        %v4813 = vld [vmem:[#allocation2 + $0x30] sm:$0xf]
        %v4814 = vld [vmem:[#allocation2 + $0x34] sm:$0xf]
        %v4815 = vld [vmem:[#allocation2 + $0x3c] sm:$0xf]
        %v4816 = vld [vmem:[#allocation2 + $0x40] sm:$0xf]
        %v4817 = vld [vmem:[#allocation2 + $0x48] sm:$0xf]
        %v4818 = vld [vmem:[#allocation2 + $0x4c] sm:$0xf]
        %v4819 = vld [vmem:[#allocation2 + $0x54] sm:$0xf]
        %v4820 = vld [vmem:[#allocation2 + $0x58] sm:$0xf]
        %v4821 = vld [vmem:[#allocation2 + $0x60] sm:$0xf]
        %v4822 = vld [vmem:[#allocation2 + $0x64] sm:$0xf]
        %v4823 = vld [vmem:[#allocation2 + $0x6c] sm:$0xf]
        %v4824 = vld [vmem:[#allocation2 + $0x70] sm:$0xf]
        %v4825 = vld [vmem:[#allocation2 + $0x78] sm:$0xf]
        %v4826 = vld [vmem:[#allocation2 + $0x7c] sm:$0xf]
        %v4827 = vld [vmem:[#allocation2 + $0x84] sm:$0xf]
        %v4828 = vld [vmem:[#allocation2 + $0x88] sm:$0xf]
        %v4829 = vld [vmem:[#allocation2 + $0x90] sm:$0xf]
        %v4830 = vld [vmem:[#allocation2 + $0x94] sm:$0xf]
        %v4831 = vld [vmem:[#allocation2 + $0x9c] sm:$0xf]
        %v4832 = vld [vmem:[#allocation2 + $0xa0] sm:$0xf]
        %v4833 = vld [vmem:[#allocation2 + $0xa8] sm:$0xf]
        %v4834 = vld [vmem:[#allocation2 + $0xac] sm:$0xf]
        %v4835 = vld [vmem:[#allocation2 + $0xb4] sm:$0xf]
        %v4836 = vld [vmem:[#allocation2 + $0xb8] sm:$0xf]
        %v4837 = vld [vmem:[#allocation2 + $0xc0] sm:$0xf]
        %v4838 = vld [vmem:[#allocation2 + $0xc4] sm:$0xf]
        %v4839 = vld [vmem:[#allocation2 + $0xcc] sm:$0xf]
        %v4840 = vld [vmem:[#allocation2 + $0xd0] sm:$0xf]
        %4841 = vst [vmem:[#allocation3] sm:$0xf] %v4805
        %4842 = vst [vmem:[#allocation3 + $0xc] sm:$0xf] %v4806
        %4843 = vst [vmem:[#allocation3 + $0x18] sm:$0xf] %v4807
        %4844 = vst [vmem:[#allocation3 + $0x24] sm:$0xf] %v4808
        %4845 = vst [vmem:[#allocation3 + $0x30] sm:$0xf] %v4809
        %4846 = vst [vmem:[#allocation3 + $0x3c] sm:$0xf] %v4810
        %4847 = vst [vmem:[#allocation3 + $0x48] sm:$0xf] %v4811
        %4848 = vst [vmem:[#allocation3 + $0x54] sm:$0xf] %v4812
        %4849 = vst [vmem:[#allocation3 + $0x60] sm:$0xf] %v4813
        %4850 = vst [vmem:[#allocation3 + $0x6c] sm:$0xf] %v4814
        %4851 = vst [vmem:[#allocation3 + $0x78] sm:$0xf] %v4815
        %4852 = vst [vmem:[#allocation3 + $0x84] sm:$0xf] %v4816
        %4853 = vst [vmem:[#allocation3 + $0x90] sm:$0xf] %v4817
        %4854 = vst [vmem:[#allocation3 + $0x9c] sm:$0xf] %v4818
        %4855 = vst [vmem:[#allocation3 + $0xa8] sm:$0xf] %v4819
        %4856 = vst [vmem:[#allocation3 + $0xb4] sm:$0xf] %v4820
        %4857 = vst [vmem:[#allocation3 + $0xc0] sm:$0xf] %v4821
        %4858 = vst [vmem:[#allocation3 + $0xcc] sm:$0xf] %v4822
        %4859 = vst [vmem:[#allocation3 + $0xd8] sm:$0xf] %v4823
        %4860 = vst [vmem:[#allocation3 + $0xe4] sm:$0xf] %v4824
        %4861 = vst [vmem:[#allocation3 + $0xf0] sm:$0xf] %v4825
        %4862 = vst [vmem:[#allocation3 + $0xfc] sm:$0xf] %v4826
        %4863 = vst [vmem:[#allocation3 + $0x108] sm:$0xf] %v4827
        %4864 = vst [vmem:[#allocation3 + $0x114] sm:$0xf] %v4828
        %4865 = vst [vmem:[#allocation3 + $0x120] sm:$0xf] %v4829
        %4866 = vst [vmem:[#allocation3 + $0x12c] sm:$0xf] %v4830
        %4867 = vst [vmem:[#allocation3 + $0x138] sm:$0xf] %v4831
        %4868 = vst [vmem:[#allocation3 + $0x144] sm:$0xf] %v4832
        %4869 = vst [vmem:[#allocation3 + $0x150] sm:$0xf] %v4833
        %4870 = vst [vmem:[#allocation3 + $0x15c] sm:$0xf] %v4834
        %4871 = vst [vmem:[#allocation3 + $0x168] sm:$0xf] %v4835
        %4872 = vst [vmem:[#allocation3 + $0x174] sm:$0xf] %v4836
        %4873 = vst [vmem:[#allocation3 + $0x180] sm:$0xf] %v4837
        %4874 = vst [vmem:[#allocation3 + $0x18c] sm:$0xf] %v4838
        %4875 = vst [vmem:[#allocation3 + $0x198] sm:$0xf] %v4839
        %4876 = vst [vmem:[#allocation3 + $0x1a4] sm:$0xf] %v4840
        %v4877 = vld [vmem:[#allocation2] sm:$0xf]
        %v4878 = vld [vmem:[#allocation2 + $0x4] sm:$0xf]
        %v4879 = vld [vmem:[#allocation2 + $0x8] sm:$0x1]
        %v4880 = vld [vmem:[#allocation2 + $0xc] sm:$0xf]
        %v4881 = vld [vmem:[#allocation2 + $0x10] sm:$0xf]
        %v4882 = vld [vmem:[#allocation2 + $0x14] sm:$0x1]
        %v4883 = vld [vmem:[#allocation2 + $0x18] sm:$0xf]
        %v4884 = vld [vmem:[#allocation2 + $0x1c] sm:$0xf]
        %v4885 = vld [vmem:[#allocation2 + $0x20] sm:$0x1]
        %v4886 = vld [vmem:[#allocation2 + $0x24] sm:$0xf]
        %v4887 = vld [vmem:[#allocation2 + $0x28] sm:$0xf]
        %v4888 = vld [vmem:[#allocation2 + $0x2c] sm:$0x1]
        %v4889 = vld [vmem:[#allocation2 + $0x30] sm:$0xf]
        %v4890 = vld [vmem:[#allocation2 + $0x34] sm:$0xf]
        %v4891 = vld [vmem:[#allocation2 + $0x38] sm:$0x1]
        %v4892 = vld [vmem:[#allocation2 + $0x3c] sm:$0xf]
        %v4893 = vld [vmem:[#allocation2 + $0x40] sm:$0xf]
        %v4894 = vld [vmem:[#allocation2 + $0x44] sm:$0x1]
        %v4895 = vld [vmem:[#allocation2 + $0x48] sm:$0xf]
        %v4896 = vld [vmem:[#allocation2 + $0x4c] sm:$0xf]
        %v4897 = vld [vmem:[#allocation2 + $0x50] sm:$0x1]
        %v4898 = vld [vmem:[#allocation2 + $0x54] sm:$0xf]
        %v4899 = vld [vmem:[#allocation2 + $0x58] sm:$0xf]
        %v4900 = vld [vmem:[#allocation2 + $0x5c] sm:$0x1]
        %v4901 = vld [vmem:[#allocation2 + $0x60] sm:$0xf]
        %v4902 = vld [vmem:[#allocation2 + $0x64] sm:$0xf]
        %v4903 = vld [vmem:[#allocation2 + $0x68] sm:$0x1]
        %v4904 = vld [vmem:[#allocation2 + $0x6c] sm:$0xf]
        %v4905 = vld [vmem:[#allocation2 + $0x70] sm:$0xf]
        %v4906 = vld [vmem:[#allocation2 + $0x74] sm:$0x1]
        %v4907 = vld [vmem:[#allocation2 + $0x78] sm:$0xf]
        %v4908 = vld [vmem:[#allocation2 + $0x7c] sm:$0xf]
        %v4909 = vld [vmem:[#allocation2 + $0x80] sm:$0x1]
        %v4910 = vld [vmem:[#allocation2 + $0x84] sm:$0xf]
        %v4911 = vld [vmem:[#allocation2 + $0x88] sm:$0xf]
        %v4912 = vld [vmem:[#allocation2 + $0x8c] sm:$0x1]
        %v4913 = vld [vmem:[#allocation2 + $0x90] sm:$0xf]
        %v4914 = vld [vmem:[#allocation2 + $0x94] sm:$0xf]
        %v4915 = vld [vmem:[#allocation2 + $0x98] sm:$0x1]
        %v4916 = vld [vmem:[#allocation2 + $0x9c] sm:$0xf]
        %v4917 = vld [vmem:[#allocation2 + $0xa0] sm:$0xf]
        %v4918 = vld [vmem:[#allocation2 + $0xa4] sm:$0x1]
        %v4919 = vld [vmem:[#allocation2 + $0xa8] sm:$0xf]
        %v4920 = vld [vmem:[#allocation2 + $0xac] sm:$0xf]
        %v4921 = vld [vmem:[#allocation2 + $0xb0] sm:$0x1]
        %v4922 = vld [vmem:[#allocation2 + $0xb4] sm:$0xf]
        %v4923 = vld [vmem:[#allocation2 + $0xb8] sm:$0xf]
        %v4924 = vld [vmem:[#allocation2 + $0xbc] sm:$0x1]
        %v4925 = vld [vmem:[#allocation2 + $0xc0] sm:$0xf]
        %v4926 = vld [vmem:[#allocation2 + $0xc4] sm:$0xf]
        %v4927 = vld [vmem:[#allocation2 + $0xc8] sm:$0x1]
        %v4928 = vld [vmem:[#allocation2 + $0xcc] sm:$0xf]
        %v4929 = vld [vmem:[#allocation2 + $0xd0] sm:$0xf]
        %v4930 = vld [vmem:[#allocation2 + $0xd4] sm:$0x1]
        %v4932 = vshrl.u32 %v4877, 16
        %v4934 = vrot.slane %v4932, 4
        %v4935 = vshll.u32 %v4877, 16
        %v4937 = vrot.slane %v4935, 5
        %v4938 = vor.u32 %v4934, %v4937
        %v4939 = vrot.slane %v4938, 4
        %v4941 = vshll.u32 %v4878, 16
        %v4943 = vrot.slane %v4941, 5
        %v4944 = vsel %vm1050, %v4939, %v4943
        %v4945 = vshrl.u32 %v4878, 16
        %v4947 = vrot.slane %v4945, 4
        %v4948 = vor.u32 %v4947, %v4943
        %v4949 = vrot.slane %v4948, 4
        %v4951 = vshll.u32 %v4879, 16
        %v4953 = vrot.slane %v4951, 5
        %v4954 = vsel %vm1050, %v4949, %v4953
        %v4956 = vshrl.u32 %v4880, 16
        %v4958 = vrot.slane %v4956, 4
        %v4959 = vshll.u32 %v4880, 16
        %v4961 = vrot.slane %v4959, 5
        %v4962 = vor.u32 %v4958, %v4961
        %v4963 = vrot.slane %v4962, 4
        %v4965 = vshll.u32 %v4881, 16
        %v4967 = vrot.slane %v4965, 5
        %v4968 = vsel %vm1050, %v4963, %v4967
        %v4969 = vshrl.u32 %v4881, 16
        %v4971 = vrot.slane %v4969, 4
        %v4972 = vor.u32 %v4971, %v4967
        %v4973 = vrot.slane %v4972, 4
        %v4975 = vshll.u32 %v4882, 16
        %v4977 = vrot.slane %v4975, 5
        %v4978 = vsel %vm1050, %v4973, %v4977
        %v4980 = vshrl.u32 %v4883, 16
        %v4982 = vrot.slane %v4980, 4
        %v4983 = vshll.u32 %v4883, 16
        %v4985 = vrot.slane %v4983, 5
        %v4986 = vor.u32 %v4982, %v4985
        %v4987 = vrot.slane %v4986, 4
        %v4989 = vshll.u32 %v4884, 16
        %v4991 = vrot.slane %v4989, 5
        %v4992 = vsel %vm1050, %v4987, %v4991
        %v4993 = vshrl.u32 %v4884, 16
        %v4995 = vrot.slane %v4993, 4
        %v4996 = vor.u32 %v4995, %v4991
        %v4997 = vrot.slane %v4996, 4
        %v4999 = vshll.u32 %v4885, 16
        %v5001 = vrot.slane %v4999, 5
        %v5002 = vsel %vm1050, %v4997, %v5001
        %v5004 = vshrl.u32 %v4886, 16
        %v5006 = vrot.slane %v5004, 4
        %v5007 = vshll.u32 %v4886, 16
        %v5009 = vrot.slane %v5007, 5
        %v5010 = vor.u32 %v5006, %v5009
        %v5011 = vrot.slane %v5010, 4
        %v5013 = vshll.u32 %v4887, 16
        %v5015 = vrot.slane %v5013, 5
        %v5016 = vsel %vm1050, %v5011, %v5015
        %v5017 = vshrl.u32 %v4887, 16
        %v5019 = vrot.slane %v5017, 4
        %v5020 = vor.u32 %v5019, %v5015
        %v5021 = vrot.slane %v5020, 4
        %v5023 = vshll.u32 %v4888, 16
        %v5025 = vrot.slane %v5023, 5
        %v5026 = vsel %vm1050, %v5021, %v5025
        %v5028 = vshrl.u32 %v4889, 16
        %v5030 = vrot.slane %v5028, 4
        %v5031 = vshll.u32 %v4889, 16
        %v5033 = vrot.slane %v5031, 5
        %v5034 = vor.u32 %v5030, %v5033
        %v5035 = vrot.slane %v5034, 4
        %v5037 = vshll.u32 %v4890, 16
        %v5039 = vrot.slane %v5037, 5
        %v5040 = vsel %vm1050, %v5035, %v5039
        %v5041 = vshrl.u32 %v4890, 16
        %v5043 = vrot.slane %v5041, 4
        %v5044 = vor.u32 %v5043, %v5039
        %v5045 = vrot.slane %v5044, 4
        %v5047 = vshll.u32 %v4891, 16
        %v5049 = vrot.slane %v5047, 5
        %v5050 = vsel %vm1050, %v5045, %v5049
        %v5052 = vshrl.u32 %v4892, 16
        %v5054 = vrot.slane %v5052, 4
        %v5055 = vshll.u32 %v4892, 16
        %v5057 = vrot.slane %v5055, 5
        %v5058 = vor.u32 %v5054, %v5057
        %v5059 = vrot.slane %v5058, 4
        %v5061 = vshll.u32 %v4893, 16
        %v5063 = vrot.slane %v5061, 5
        %v5064 = vsel %vm1050, %v5059, %v5063
        %v5065 = vshrl.u32 %v4893, 16
        %v5067 = vrot.slane %v5065, 4
        %v5068 = vor.u32 %v5067, %v5063
        %v5069 = vrot.slane %v5068, 4
        %v5071 = vshll.u32 %v4894, 16
        %v5073 = vrot.slane %v5071, 5
        %v5074 = vsel %vm1050, %v5069, %v5073
        %v5076 = vshrl.u32 %v4895, 16
        %v5078 = vrot.slane %v5076, 4
        %v5079 = vshll.u32 %v4895, 16
        %v5081 = vrot.slane %v5079, 5
        %v5082 = vor.u32 %v5078, %v5081
        %v5083 = vrot.slane %v5082, 4
        %v5085 = vshll.u32 %v4896, 16
        %v5087 = vrot.slane %v5085, 5
        %v5088 = vsel %vm1050, %v5083, %v5087
        %v5089 = vshrl.u32 %v4896, 16
        %v5091 = vrot.slane %v5089, 4
        %v5092 = vor.u32 %v5091, %v5087
        %v5093 = vrot.slane %v5092, 4
        %v5095 = vshll.u32 %v4897, 16
        %v5097 = vrot.slane %v5095, 5
        %v5098 = vsel %vm1050, %v5093, %v5097
        %v5100 = vshrl.u32 %v4898, 16
        %v5102 = vrot.slane %v5100, 4
        %v5103 = vshll.u32 %v4898, 16
        %v5105 = vrot.slane %v5103, 5
        %v5106 = vor.u32 %v5102, %v5105
        %v5107 = vrot.slane %v5106, 4
        %v5109 = vshll.u32 %v4899, 16
        %v5111 = vrot.slane %v5109, 5
        %v5112 = vsel %vm1050, %v5107, %v5111
        %v5113 = vshrl.u32 %v4899, 16
        %v5115 = vrot.slane %v5113, 4
        %v5116 = vor.u32 %v5115, %v5111
        %v5117 = vrot.slane %v5116, 4
        %v5119 = vshll.u32 %v4900, 16
        %v5121 = vrot.slane %v5119, 5
        %v5122 = vsel %vm1050, %v5117, %v5121
        %v5124 = vshrl.u32 %v4901, 16
        %v5126 = vrot.slane %v5124, 4
        %v5127 = vshll.u32 %v4901, 16
        %v5129 = vrot.slane %v5127, 5
        %v5130 = vor.u32 %v5126, %v5129
        %v5131 = vrot.slane %v5130, 4
        %v5133 = vshll.u32 %v4902, 16
        %v5135 = vrot.slane %v5133, 5
        %v5136 = vsel %vm1050, %v5131, %v5135
        %v5137 = vshrl.u32 %v4902, 16
        %v5139 = vrot.slane %v5137, 4
        %v5140 = vor.u32 %v5139, %v5135
        %v5141 = vrot.slane %v5140, 4
        %v5143 = vshll.u32 %v4903, 16
        %v5145 = vrot.slane %v5143, 5
        %v5146 = vsel %vm1050, %v5141, %v5145
        %v5148 = vshrl.u32 %v4904, 16
        %v5150 = vrot.slane %v5148, 4
        %v5151 = vshll.u32 %v4904, 16
        %v5153 = vrot.slane %v5151, 5
        %v5154 = vor.u32 %v5150, %v5153
        %v5155 = vrot.slane %v5154, 4
        %v5157 = vshll.u32 %v4905, 16
        %v5159 = vrot.slane %v5157, 5
        %v5160 = vsel %vm1050, %v5155, %v5159
        %v5161 = vshrl.u32 %v4905, 16
        %v5163 = vrot.slane %v5161, 4
        %v5164 = vor.u32 %v5163, %v5159
        %v5165 = vrot.slane %v5164, 4
        %v5167 = vshll.u32 %v4906, 16
        %v5169 = vrot.slane %v5167, 5
        %v5170 = vsel %vm1050, %v5165, %v5169
        %v5172 = vshrl.u32 %v4907, 16
        %v5174 = vrot.slane %v5172, 4
        %v5175 = vshll.u32 %v4907, 16
        %v5177 = vrot.slane %v5175, 5
        %v5178 = vor.u32 %v5174, %v5177
        %v5179 = vrot.slane %v5178, 4
        %v5181 = vshll.u32 %v4908, 16
        %v5183 = vrot.slane %v5181, 5
        %v5184 = vsel %vm1050, %v5179, %v5183
        %v5185 = vshrl.u32 %v4908, 16
        %v5187 = vrot.slane %v5185, 4
        %v5188 = vor.u32 %v5187, %v5183
        %v5189 = vrot.slane %v5188, 4
        %v5191 = vshll.u32 %v4909, 16
        %v5193 = vrot.slane %v5191, 5
        %v5194 = vsel %vm1050, %v5189, %v5193
        %v5196 = vshrl.u32 %v4910, 16
        %v5198 = vrot.slane %v5196, 4
        %v5199 = vshll.u32 %v4910, 16
        %v5201 = vrot.slane %v5199, 5
        %v5202 = vor.u32 %v5198, %v5201
        %v5203 = vrot.slane %v5202, 4
        %v5205 = vshll.u32 %v4911, 16
        %v5207 = vrot.slane %v5205, 5
        %v5208 = vsel %vm1050, %v5203, %v5207
        %v5209 = vshrl.u32 %v4911, 16
        %v5211 = vrot.slane %v5209, 4
        %v5212 = vor.u32 %v5211, %v5207
        %v5213 = vrot.slane %v5212, 4
        %v5215 = vshll.u32 %v4912, 16
        %v5217 = vrot.slane %v5215, 5
        %v5218 = vsel %vm1050, %v5213, %v5217
        %v5220 = vshrl.u32 %v4913, 16
        %v5222 = vrot.slane %v5220, 4
        %v5223 = vshll.u32 %v4913, 16
        %v5225 = vrot.slane %v5223, 5
        %v5226 = vor.u32 %v5222, %v5225
        %v5227 = vrot.slane %v5226, 4
        %v5229 = vshll.u32 %v4914, 16
        %v5231 = vrot.slane %v5229, 5
        %v5232 = vsel %vm1050, %v5227, %v5231
        %v5233 = vshrl.u32 %v4914, 16
        %v5235 = vrot.slane %v5233, 4
        %v5236 = vor.u32 %v5235, %v5231
        %v5237 = vrot.slane %v5236, 4
        %v5239 = vshll.u32 %v4915, 16
        %v5241 = vrot.slane %v5239, 5
        %v5242 = vsel %vm1050, %v5237, %v5241
        %v5244 = vshrl.u32 %v4916, 16
        %v5246 = vrot.slane %v5244, 4
        %v5247 = vshll.u32 %v4916, 16
        %v5249 = vrot.slane %v5247, 5
        %v5250 = vor.u32 %v5246, %v5249
        %v5251 = vrot.slane %v5250, 4
        %v5253 = vshll.u32 %v4917, 16
        %v5255 = vrot.slane %v5253, 5
        %v5256 = vsel %vm1050, %v5251, %v5255
        %v5257 = vshrl.u32 %v4917, 16
        %v5259 = vrot.slane %v5257, 4
        %v5260 = vor.u32 %v5259, %v5255
        %v5261 = vrot.slane %v5260, 4
        %v5263 = vshll.u32 %v4918, 16
        %v5265 = vrot.slane %v5263, 5
        %v5266 = vsel %vm1050, %v5261, %v5265
        %v5268 = vshrl.u32 %v4919, 16
        %v5270 = vrot.slane %v5268, 4
        %v5271 = vshll.u32 %v4919, 16
        %v5273 = vrot.slane %v5271, 5
        %v5274 = vor.u32 %v5270, %v5273
        %v5275 = vrot.slane %v5274, 4
        %v5277 = vshll.u32 %v4920, 16
        %v5279 = vrot.slane %v5277, 5
        %v5280 = vsel %vm1050, %v5275, %v5279
        %v5281 = vshrl.u32 %v4920, 16
        %v5283 = vrot.slane %v5281, 4
        %v5284 = vor.u32 %v5283, %v5279
        %v5285 = vrot.slane %v5284, 4
        %v5287 = vshll.u32 %v4921, 16
        %v5289 = vrot.slane %v5287, 5
        %v5290 = vsel %vm1050, %v5285, %v5289
        %v5292 = vshrl.u32 %v4922, 16
        %v5294 = vrot.slane %v5292, 4
        %v5295 = vshll.u32 %v4922, 16
        %v5297 = vrot.slane %v5295, 5
        %v5298 = vor.u32 %v5294, %v5297
        %v5299 = vrot.slane %v5298, 4
        %v5301 = vshll.u32 %v4923, 16
        %v5303 = vrot.slane %v5301, 5
        %v5304 = vsel %vm1050, %v5299, %v5303
        %v5305 = vshrl.u32 %v4923, 16
        %v5307 = vrot.slane %v5305, 4
        %v5308 = vor.u32 %v5307, %v5303
        %v5309 = vrot.slane %v5308, 4
        %v5311 = vshll.u32 %v4924, 16
        %v5313 = vrot.slane %v5311, 5
        %v5314 = vsel %vm1050, %v5309, %v5313
        %v5316 = vshrl.u32 %v4925, 16
        %v5318 = vrot.slane %v5316, 4
        %v5319 = vshll.u32 %v4925, 16
        %v5321 = vrot.slane %v5319, 5
        %v5322 = vor.u32 %v5318, %v5321
        %v5323 = vrot.slane %v5322, 4
        %v5325 = vshll.u32 %v4926, 16
        %v5327 = vrot.slane %v5325, 5
        %v5328 = vsel %vm1050, %v5323, %v5327
        %v5329 = vshrl.u32 %v4926, 16
        %v5331 = vrot.slane %v5329, 4
        %v5332 = vor.u32 %v5331, %v5327
        %v5333 = vrot.slane %v5332, 4
        %v5335 = vshll.u32 %v4927, 16
        %v5337 = vrot.slane %v5335, 5
        %v5338 = vsel %vm1050, %v5333, %v5337
        %v5340 = vshrl.u32 %v4928, 16
        %v5342 = vrot.slane %v5340, 4
        %v5343 = vshll.u32 %v4928, 16
        %v5345 = vrot.slane %v5343, 5
        %v5346 = vor.u32 %v5342, %v5345
        %v5347 = vrot.slane %v5346, 4
        %v5349 = vshll.u32 %v4929, 16
        %v5351 = vrot.slane %v5349, 5
        %v5352 = vsel %vm1050, %v5347, %v5351
        %v5353 = vshrl.u32 %v4929, 16
        %v5355 = vrot.slane %v5353, 4
        %v5356 = vor.u32 %v5355, %v5351
        %v5357 = vrot.slane %v5356, 4
        %v5359 = vshll.u32 %v4930, 16
        %v5361 = vrot.slane %v5359, 5
        %v5362 = vsel %vm1050, %v5357, %v5361
        %5399 = vst [vmem:[#allocation3 + $0x4] sm:$0xf] %v4944
        %5400 = vst [vmem:[#allocation3 + $0x10] sm:$0xf] %v4954
        %5401 = vst [vmem:[#allocation3 + $0x1c] sm:$0xf] %v4968
        %5402 = vst [vmem:[#allocation3 + $0x28] sm:$0xf] %v4978
        %5403 = vst [vmem:[#allocation3 + $0x34] sm:$0xf] %v4992
        %5404 = vst [vmem:[#allocation3 + $0x40] sm:$0xf] %v5002
        %5405 = vst [vmem:[#allocation3 + $0x4c] sm:$0xf] %v5016
        %5406 = vst [vmem:[#allocation3 + $0x58] sm:$0xf] %v5026
        %5407 = vst [vmem:[#allocation3 + $0x64] sm:$0xf] %v5040
        %5408 = vst [vmem:[#allocation3 + $0x70] sm:$0xf] %v5050
        %5409 = vst [vmem:[#allocation3 + $0x7c] sm:$0xf] %v5064
        %5410 = vst [vmem:[#allocation3 + $0x88] sm:$0xf] %v5074
        %5411 = vst [vmem:[#allocation3 + $0x94] sm:$0xf] %v5088
        %5412 = vst [vmem:[#allocation3 + $0xa0] sm:$0xf] %v5098
        %5413 = vst [vmem:[#allocation3 + $0xac] sm:$0xf] %v5112
        %5414 = vst [vmem:[#allocation3 + $0xb8] sm:$0xf] %v5122
        %5415 = vst [vmem:[#allocation3 + $0xc4] sm:$0xf] %v5136
        %5416 = vst [vmem:[#allocation3 + $0xd0] sm:$0xf] %v5146
        %5417 = vst [vmem:[#allocation3 + $0xdc] sm:$0xf] %v5160
        %5418 = vst [vmem:[#allocation3 + $0xe8] sm:$0xf] %v5170
        %5419 = vst [vmem:[#allocation3 + $0xf4] sm:$0xf] %v5184
        %5420 = vst [vmem:[#allocation3 + $0x100] sm:$0xf] %v5194
        %5421 = vst [vmem:[#allocation3 + $0x10c] sm:$0xf] %v5208
        %5422 = vst [vmem:[#allocation3 + $0x118] sm:$0xf] %v5218
        %5423 = vst [vmem:[#allocation3 + $0x124] sm:$0xf] %v5232
        %5424 = vst [vmem:[#allocation3 + $0x130] sm:$0xf] %v5242
        %5425 = vst [vmem:[#allocation3 + $0x13c] sm:$0xf] %v5256
        %5426 = vst [vmem:[#allocation3 + $0x148] sm:$0xf] %v5266
        %5427 = vst [vmem:[#allocation3 + $0x154] sm:$0xf] %v5280
        %5428 = vst [vmem:[#allocation3 + $0x160] sm:$0xf] %v5290
        %5429 = vst [vmem:[#allocation3 + $0x16c] sm:$0xf] %v5304
        %5430 = vst [vmem:[#allocation3 + $0x178] sm:$0xf] %v5314
        %5431 = vst [vmem:[#allocation3 + $0x184] sm:$0xf] %v5328
        %5432 = vst [vmem:[#allocation3 + $0x190] sm:$0xf] %v5338
        %5433 = vst [vmem:[#allocation3 + $0x19c] sm:$0xf] %v5352
        %5434 = vst [vmem:[#allocation3 + $0x1a8] sm:$0xf] %v5362
        %v5435 = vld [vmem:[#allocation2] sm:$0xe]
        %v5436 = vld [vmem:[#allocation2 + $0x4] sm:$0xf]
        %v5437 = vld [vmem:[#allocation2 + $0x8] sm:$0x1]
        %v5438 = vld [vmem:[#allocation2 + $0xc] sm:$0xe]
        %v5439 = vld [vmem:[#allocation2 + $0x10] sm:$0xf]
        %v5440 = vld [vmem:[#allocation2 + $0x14] sm:$0x1]
        %v5441 = vld [vmem:[#allocation2 + $0x18] sm:$0xe]
        %v5442 = vld [vmem:[#allocation2 + $0x1c] sm:$0xf]
        %v5443 = vld [vmem:[#allocation2 + $0x20] sm:$0x1]
        %v5444 = vld [vmem:[#allocation2 + $0x24] sm:$0xe]
        %v5445 = vld [vmem:[#allocation2 + $0x28] sm:$0xf]
        %v5446 = vld [vmem:[#allocation2 + $0x2c] sm:$0x1]
        %v5447 = vld [vmem:[#allocation2 + $0x30] sm:$0xe]
        %v5448 = vld [vmem:[#allocation2 + $0x34] sm:$0xf]
        %v5449 = vld [vmem:[#allocation2 + $0x38] sm:$0x1]
        %v5450 = vld [vmem:[#allocation2 + $0x3c] sm:$0xe]
        %v5451 = vld [vmem:[#allocation2 + $0x40] sm:$0xf]
        %v5452 = vld [vmem:[#allocation2 + $0x44] sm:$0x1]
        %v5453 = vld [vmem:[#allocation2 + $0x48] sm:$0xe]
        %v5454 = vld [vmem:[#allocation2 + $0x4c] sm:$0xf]
        %v5455 = vld [vmem:[#allocation2 + $0x50] sm:$0x1]
        %v5456 = vld [vmem:[#allocation2 + $0x54] sm:$0xe]
        %v5457 = vld [vmem:[#allocation2 + $0x58] sm:$0xf]
        %v5458 = vld [vmem:[#allocation2 + $0x5c] sm:$0x1]
        %v5459 = vld [vmem:[#allocation2 + $0x60] sm:$0xe]
        %v5460 = vld [vmem:[#allocation2 + $0x64] sm:$0xf]
        %v5461 = vld [vmem:[#allocation2 + $0x68] sm:$0x1]
        %v5462 = vld [vmem:[#allocation2 + $0x6c] sm:$0xe]
        %v5463 = vld [vmem:[#allocation2 + $0x70] sm:$0xf]
        %v5464 = vld [vmem:[#allocation2 + $0x74] sm:$0x1]
        %v5465 = vld [vmem:[#allocation2 + $0x78] sm:$0xe]
        %v5466 = vld [vmem:[#allocation2 + $0x7c] sm:$0xf]
        %v5467 = vld [vmem:[#allocation2 + $0x80] sm:$0x1]
        %v5468 = vld [vmem:[#allocation2 + $0x84] sm:$0xe]
        %v5469 = vld [vmem:[#allocation2 + $0x88] sm:$0xf]
        %v5470 = vld [vmem:[#allocation2 + $0x8c] sm:$0x1]
        %v5471 = vld [vmem:[#allocation2 + $0x90] sm:$0xe]
        %v5472 = vld [vmem:[#allocation2 + $0x94] sm:$0xf]
        %v5473 = vld [vmem:[#allocation2 + $0x98] sm:$0x1]
        %v5474 = vld [vmem:[#allocation2 + $0x9c] sm:$0xe]
        %v5475 = vld [vmem:[#allocation2 + $0xa0] sm:$0xf]
        %v5476 = vld [vmem:[#allocation2 + $0xa4] sm:$0x1]
        %v5477 = vld [vmem:[#allocation2 + $0xa8] sm:$0xe]
        %v5478 = vld [vmem:[#allocation2 + $0xac] sm:$0xf]
        %v5479 = vld [vmem:[#allocation2 + $0xb0] sm:$0x1]
        %v5480 = vld [vmem:[#allocation2 + $0xb4] sm:$0xe]
        %v5481 = vld [vmem:[#allocation2 + $0xb8] sm:$0xf]
        %v5482 = vld [vmem:[#allocation2 + $0xbc] sm:$0x1]
        %v5483 = vld [vmem:[#allocation2 + $0xc0] sm:$0xe]
        %v5484 = vld [vmem:[#allocation2 + $0xc4] sm:$0xf]
        %v5485 = vld [vmem:[#allocation2 + $0xc8] sm:$0x1]
        %v5486 = vld [vmem:[#allocation2 + $0xcc] sm:$0xe]
        %v5487 = vld [vmem:[#allocation2 + $0xd0] sm:$0xf]
        %v5488 = vld [vmem:[#allocation2 + $0xd4] sm:$0x1]
        %v5543 = vrot.slane %v5435, 5
        %v5544 = vrot.slane %v5543, 4
        %v5545 = vrot.slane %v5436, 5
        %v5546 = vsel %vm1665, %v5544, %v5545
        %v5547 = vrot.slane %v5545, 4
        %v5548 = vrot.slane %v5437, 5
        %v5549 = vsel %vm1665, %v5547, %v5548
        %v5550 = vrot.slane %v5438, 5
        %v5551 = vrot.slane %v5550, 4
        %v5552 = vrot.slane %v5439, 5
        %v5553 = vsel %vm1665, %v5551, %v5552
        %v5554 = vrot.slane %v5552, 4
        %v5555 = vrot.slane %v5440, 5
        %v5556 = vsel %vm1665, %v5554, %v5555
        %v5557 = vrot.slane %v5441, 5
        %v5558 = vrot.slane %v5557, 4
        %v5559 = vrot.slane %v5442, 5
        %v5560 = vsel %vm1665, %v5558, %v5559
        %v5561 = vrot.slane %v5559, 4
        %v5562 = vrot.slane %v5443, 5
        %v5563 = vsel %vm1665, %v5561, %v5562
        %v5564 = vrot.slane %v5444, 5
        %v5565 = vrot.slane %v5564, 4
        %v5566 = vrot.slane %v5445, 5
        %v5567 = vsel %vm1665, %v5565, %v5566
        %v5568 = vrot.slane %v5566, 4
        %v5569 = vrot.slane %v5446, 5
        %v5570 = vsel %vm1665, %v5568, %v5569
        %v5571 = vrot.slane %v5447, 5
        %v5572 = vrot.slane %v5571, 4
        %v5573 = vrot.slane %v5448, 5
        %v5574 = vsel %vm1665, %v5572, %v5573
        %v5575 = vrot.slane %v5573, 4
        %v5576 = vrot.slane %v5449, 5
        %v5577 = vsel %vm1665, %v5575, %v5576
        %v5578 = vrot.slane %v5450, 5
        %v5579 = vrot.slane %v5578, 4
        %v5580 = vrot.slane %v5451, 5
        %v5581 = vsel %vm1665, %v5579, %v5580
        %v5582 = vrot.slane %v5580, 4
        %v5583 = vrot.slane %v5452, 5
        %v5584 = vsel %vm1665, %v5582, %v5583
        %v5585 = vrot.slane %v5453, 5
        %v5586 = vrot.slane %v5585, 4
        %v5587 = vrot.slane %v5454, 5
        %v5588 = vsel %vm1665, %v5586, %v5587
        %v5589 = vrot.slane %v5587, 4
        %v5590 = vrot.slane %v5455, 5
        %v5591 = vsel %vm1665, %v5589, %v5590
        %v5592 = vrot.slane %v5456, 5
        %v5593 = vrot.slane %v5592, 4
        %v5594 = vrot.slane %v5457, 5
        %v5595 = vsel %vm1665, %v5593, %v5594
        %v5596 = vrot.slane %v5594, 4
        %v5597 = vrot.slane %v5458, 5
        %v5598 = vsel %vm1665, %v5596, %v5597
        %v5599 = vrot.slane %v5459, 5
        %v5600 = vrot.slane %v5599, 4
        %v5601 = vrot.slane %v5460, 5
        %v5602 = vsel %vm1665, %v5600, %v5601
        %v5603 = vrot.slane %v5601, 4
        %v5604 = vrot.slane %v5461, 5
        %v5605 = vsel %vm1665, %v5603, %v5604
        %v5606 = vrot.slane %v5462, 5
        %v5607 = vrot.slane %v5606, 4
        %v5608 = vrot.slane %v5463, 5
        %v5609 = vsel %vm1665, %v5607, %v5608
        %v5610 = vrot.slane %v5608, 4
        %v5611 = vrot.slane %v5464, 5
        %v5612 = vsel %vm1665, %v5610, %v5611
        %v5613 = vrot.slane %v5465, 5
        %v5614 = vrot.slane %v5613, 4
        %v5615 = vrot.slane %v5466, 5
        %v5616 = vsel %vm1665, %v5614, %v5615
        %v5617 = vrot.slane %v5615, 4
        %v5618 = vrot.slane %v5467, 5
        %v5619 = vsel %vm1665, %v5617, %v5618
        %v5620 = vrot.slane %v5468, 5
        %v5621 = vrot.slane %v5620, 4
        %v5622 = vrot.slane %v5469, 5
        %v5623 = vsel %vm1665, %v5621, %v5622
        %v5624 = vrot.slane %v5622, 4
        %v5625 = vrot.slane %v5470, 5
        %v5626 = vsel %vm1665, %v5624, %v5625
        %v5627 = vrot.slane %v5471, 5
        %v5628 = vrot.slane %v5627, 4
        %v5629 = vrot.slane %v5472, 5
        %v5630 = vsel %vm1665, %v5628, %v5629
        %v5631 = vrot.slane %v5629, 4
        %v5632 = vrot.slane %v5473, 5
        %v5633 = vsel %vm1665, %v5631, %v5632
        %v5634 = vrot.slane %v5474, 5
        %v5635 = vrot.slane %v5634, 4
        %v5636 = vrot.slane %v5475, 5
        %v5637 = vsel %vm1665, %v5635, %v5636
        %v5638 = vrot.slane %v5636, 4
        %v5639 = vrot.slane %v5476, 5
        %v5640 = vsel %vm1665, %v5638, %v5639
        %v5641 = vrot.slane %v5477, 5
        %v5642 = vrot.slane %v5641, 4
        %v5643 = vrot.slane %v5478, 5
        %v5644 = vsel %vm1665, %v5642, %v5643
        %v5645 = vrot.slane %v5643, 4
        %v5646 = vrot.slane %v5479, 5
        %v5647 = vsel %vm1665, %v5645, %v5646
        %v5648 = vrot.slane %v5480, 5
        %v5649 = vrot.slane %v5648, 4
        %v5650 = vrot.slane %v5481, 5
        %v5651 = vsel %vm1665, %v5649, %v5650
        %v5652 = vrot.slane %v5650, 4
        %v5653 = vrot.slane %v5482, 5
        %v5654 = vsel %vm1665, %v5652, %v5653
        %v5655 = vrot.slane %v5483, 5
        %v5656 = vrot.slane %v5655, 4
        %v5657 = vrot.slane %v5484, 5
        %v5658 = vsel %vm1665, %v5656, %v5657
        %v5659 = vrot.slane %v5657, 4
        %v5660 = vrot.slane %v5485, 5
        %v5661 = vsel %vm1665, %v5659, %v5660
        %v5662 = vrot.slane %v5486, 5
        %v5663 = vrot.slane %v5662, 4
        %v5664 = vrot.slane %v5487, 5
        %v5665 = vsel %vm1665, %v5663, %v5664
        %v5666 = vrot.slane %v5664, 4
        %v5667 = vrot.slane %v5488, 5
        %v5668 = vsel %vm1665, %v5666, %v5667
        %5705 = vst [vmem:[#allocation3 + $0x8] sm:$0xf] %v5546
        %5706 = vst [vmem:[#allocation3 + $0x14] sm:$0xf] %v5549
        %5707 = vst [vmem:[#allocation3 + $0x20] sm:$0xf] %v5553
        %5708 = vst [vmem:[#allocation3 + $0x2c] sm:$0xf] %v5556
        %5709 = vst [vmem:[#allocation3 + $0x38] sm:$0xf] %v5560
        %5710 = vst [vmem:[#allocation3 + $0x44] sm:$0xf] %v5563
        %5711 = vst [vmem:[#allocation3 + $0x50] sm:$0xf] %v5567
        %5712 = vst [vmem:[#allocation3 + $0x5c] sm:$0xf] %v5570
        %5713 = vst [vmem:[#allocation3 + $0x68] sm:$0xf] %v5574
        %5714 = vst [vmem:[#allocation3 + $0x74] sm:$0xf] %v5577
        %5715 = vst [vmem:[#allocation3 + $0x80] sm:$0xf] %v5581
        %5716 = vst [vmem:[#allocation3 + $0x8c] sm:$0xf] %v5584
        %5717 = vst [vmem:[#allocation3 + $0x98] sm:$0xf] %v5588
        %5718 = vst [vmem:[#allocation3 + $0xa4] sm:$0xf] %v5591
        %5719 = vst [vmem:[#allocation3 + $0xb0] sm:$0xf] %v5595
        %5720 = vst [vmem:[#allocation3 + $0xbc] sm:$0xf] %v5598
        %5721 = vst [vmem:[#allocation3 + $0xc8] sm:$0xf] %v5602
        %5722 = vst [vmem:[#allocation3 + $0xd4] sm:$0xf] %v5605
        %5723 = vst [vmem:[#allocation3 + $0xe0] sm:$0xf] %v5609
        %5724 = vst [vmem:[#allocation3 + $0xec] sm:$0xf] %v5612
        %5725 = vst [vmem:[#allocation3 + $0xf8] sm:$0xf] %v5616
        %5726 = vst [vmem:[#allocation3 + $0x104] sm:$0xf] %v5619
        %5727 = vst [vmem:[#allocation3 + $0x110] sm:$0xf] %v5623
        %5728 = vst [vmem:[#allocation3 + $0x11c] sm:$0xf] %v5626
        %5729 = vst [vmem:[#allocation3 + $0x128] sm:$0xf] %v5630
        %5730 = vst [vmem:[#allocation3 + $0x134] sm:$0xf] %v5633
        %5731 = vst [vmem:[#allocation3 + $0x140] sm:$0xf] %v5637
        %5732 = vst [vmem:[#allocation3 + $0x14c] sm:$0xf] %v5640
        %5733 = vst [vmem:[#allocation3 + $0x158] sm:$0xf] %v5644
        %5734 = vst [vmem:[#allocation3 + $0x164] sm:$0xf] %v5647
        %5735 = vst [vmem:[#allocation3 + $0x170] sm:$0xf] %v5651
        %5736 = vst [vmem:[#allocation3 + $0x17c] sm:$0xf] %v5654
        %5737 = vst [vmem:[#allocation3 + $0x188] sm:$0xf] %v5658
        %5738 = vst [vmem:[#allocation3 + $0x194] sm:$0xf] %v5661
        %5739 = vst [vmem:[#allocation3 + $0x1a0] sm:$0xf] %v5665
        %5740 = vst [vmem:[#allocation3 + $0x1ac] sm:$0xf] %v5668
        %v5741 = vld [vmem:[#allocation3] sm:$0xff]
        %v5742 = vld [vmem:[#allocation3 + $0x8] sm:$0xf]
        %v5743 = vld [vmem:[#allocation3 + $0xc] sm:$0xff]
        %v5744 = vld [vmem:[#allocation3 + $0x14] sm:$0xf]
        %v5745 = vld [vmem:[#allocation3 + $0x18] sm:$0xff]
        %v5746 = vld [vmem:[#allocation3 + $0x20] sm:$0xf]
        %v5747 = vld [vmem:[#allocation3 + $0x24] sm:$0xff]
        %v5748 = vld [vmem:[#allocation3 + $0x2c] sm:$0xf]
        %v5749 = vld [vmem:[#allocation3 + $0x30] sm:$0xff]
        %v5750 = vld [vmem:[#allocation3 + $0x38] sm:$0xf]
        %v5751 = vld [vmem:[#allocation3 + $0x3c] sm:$0xff]
        %v5752 = vld [vmem:[#allocation3 + $0x44] sm:$0xf]
        %v5753 = vld [vmem:[#allocation3 + $0x48] sm:$0xff]
        %v5754 = vld [vmem:[#allocation3 + $0x50] sm:$0xf]
        %v5755 = vld [vmem:[#allocation3 + $0x54] sm:$0xff]
        %v5756 = vld [vmem:[#allocation3 + $0x5c] sm:$0xf]
        %v5757 = vld [vmem:[#allocation3 + $0x60] sm:$0xff]
        %v5758 = vld [vmem:[#allocation3 + $0x68] sm:$0xf]
        %v5759 = vld [vmem:[#allocation3 + $0x6c] sm:$0xff]
        %v5760 = vld [vmem:[#allocation3 + $0x74] sm:$0xf]
        %v5761 = vld [vmem:[#allocation3 + $0x78] sm:$0xff]
        %v5762 = vld [vmem:[#allocation3 + $0x80] sm:$0xf]
        %v5763 = vld [vmem:[#allocation3 + $0x84] sm:$0xff]
        %v5764 = vld [vmem:[#allocation3 + $0x8c] sm:$0xf]
        %v5765 = vld [vmem:[#allocation3 + $0x90] sm:$0xff]
        %v5766 = vld [vmem:[#allocation3 + $0x98] sm:$0xf]
        %v5767 = vld [vmem:[#allocation3 + $0x9c] sm:$0xff]
        %v5768 = vld [vmem:[#allocation3 + $0xa4] sm:$0xf]
        %v5769 = vld [vmem:[#allocation3 + $0xa8] sm:$0xff]
        %v5770 = vld [vmem:[#allocation3 + $0xb0] sm:$0xf]
        %v5771 = vld [vmem:[#allocation3 + $0xb4] sm:$0xff]
        %v5772 = vld [vmem:[#allocation3 + $0xbc] sm:$0xf]
        %v5773 = vld [vmem:[#allocation3 + $0xc0] sm:$0xff]
        %v5774 = vld [vmem:[#allocation3 + $0xc8] sm:$0xf]
        %v5775 = vld [vmem:[#allocation3 + $0xcc] sm:$0xff]
        %v5776 = vld [vmem:[#allocation3 + $0xd4] sm:$0xf]
        %v5777 = vld [vmem:[#allocation3 + $0xd8] sm:$0xff]
        %v5778 = vld [vmem:[#allocation3 + $0xe0] sm:$0xf]
        %v5779 = vld [vmem:[#allocation3 + $0xe4] sm:$0xff]
        %v5780 = vld [vmem:[#allocation3 + $0xec] sm:$0xf]
        %v5781 = vld [vmem:[#allocation3 + $0xf0] sm:$0xff]
        %v5782 = vld [vmem:[#allocation3 + $0xf8] sm:$0xf]
        %v5783 = vld [vmem:[#allocation3 + $0xfc] sm:$0xff]
        %v5784 = vld [vmem:[#allocation3 + $0x104] sm:$0xf]
        %v5785 = vld [vmem:[#allocation3 + $0x108] sm:$0xff]
        %v5786 = vld [vmem:[#allocation3 + $0x110] sm:$0xf]
        %v5787 = vld [vmem:[#allocation3 + $0x114] sm:$0xff]
        %v5788 = vld [vmem:[#allocation3 + $0x11c] sm:$0xf]
        %v5789 = vld [vmem:[#allocation3 + $0x120] sm:$0xff]
        %v5790 = vld [vmem:[#allocation3 + $0x128] sm:$0xf]
        %v5791 = vld [vmem:[#allocation3 + $0x12c] sm:$0xff]
        %v5792 = vld [vmem:[#allocation3 + $0x134] sm:$0xf]
        %v5793 = vld [vmem:[#allocation3 + $0x138] sm:$0xff]
        %v5794 = vld [vmem:[#allocation3 + $0x140] sm:$0xf]
        %v5795 = vld [vmem:[#allocation3 + $0x144] sm:$0xff]
        %v5796 = vld [vmem:[#allocation3 + $0x14c] sm:$0xf]
        %v5797 = vld [vmem:[#allocation3 + $0x150] sm:$0xff]
        %v5798 = vld [vmem:[#allocation3 + $0x158] sm:$0xf]
        %v5799 = vld [vmem:[#allocation3 + $0x15c] sm:$0xff]
        %v5800 = vld [vmem:[#allocation3 + $0x164] sm:$0xf]
        %v5801 = vld [vmem:[#allocation3 + $0x168] sm:$0xff]
        %v5802 = vld [vmem:[#allocation3 + $0x170] sm:$0xf]
        %v5803 = vld [vmem:[#allocation3 + $0x174] sm:$0xff]
        %v5804 = vld [vmem:[#allocation3 + $0x17c] sm:$0xf]
        %v5805 = vld [vmem:[#allocation9] sm:$0xf]
        %v5806 = vld [vmem:[#allocation9 + $0x4] sm:$0xf]
        %v5807 = vld [vmem:[#allocation9 + $0x8] sm:$0xf]
        %v5808 = vld [vmem:[#allocation9 + $0xc] sm:$0xf]
        %v5809 = vld [vmem:[#allocation9 + $0x10] sm:$0xf]
        %v5810 = vld [vmem:[#allocation9 + $0x14] sm:$0xf]
        %v5811 = vld [vmem:[#allocation9 + $0x18] sm:$0xf]
        %v5812 = vld [vmem:[#allocation9 + $0x1c] sm:$0xf]
        %v5813 = vld [vmem:[#allocation9 + $0x20] sm:$0xf]
        %v5814 = vld [vmem:[#allocation9 + $0x24] sm:$0xf]
        %v5815 = vld [vmem:[#allocation9 + $0x28] sm:$0xf]
        %v5816 = vld [vmem:[#allocation9 + $0x2c] sm:$0xf]
        %v5817 = vld [vmem:[#allocation9 + $0x30] sm:$0xf]
        %v5818 = vld [vmem:[#allocation9 + $0x34] sm:$0xf]
        %v5819 = vld [vmem:[#allocation9 + $0x38] sm:$0xf]
        %v5820 = vld [vmem:[#allocation9 + $0x3c] sm:$0xf]
        %v5821 = vld [vmem:[#allocation9 + $0x40] sm:$0xf]
        %v5822 = vld [vmem:[#allocation9 + $0x44] sm:$0xf]
        %v5823 = vld [vmem:[#allocation9 + $0x48] sm:$0xf]
        %v5824 = vld [vmem:[#allocation9 + $0x4c] sm:$0xf]
        %v5825 = vld [vmem:[#allocation9 + $0x50] sm:$0xf]
        %v5826 = vld [vmem:[#allocation9 + $0x54] sm:$0xf]
        %v5827 = vld [vmem:[#allocation9 + $0x58] sm:$0xf]
        %v5828 = vld [vmem:[#allocation9 + $0x5c] sm:$0xf]
        %v5829 = vld [vmem:[#allocation9 + $0x60] sm:$0xf]
        %v5830 = vld [vmem:[#allocation9 + $0x64] sm:$0xf]
        %v5831 = vld [vmem:[#allocation9 + $0x68] sm:$0xf]
        %v5832 = vld [vmem:[#allocation9 + $0x6c] sm:$0xf]
        %v5833 = vld [vmem:[#allocation9 + $0x70] sm:$0xf]
        %v5834 = vld [vmem:[#allocation9 + $0x74] sm:$0xf]
        %v5835 = vld [vmem:[#allocation9 + $0x78] sm:$0xf]
        %v5836 = vld [vmem:[#allocation9 + $0x7c] sm:$0xf]
        %v5837 = vld [vmem:[#allocation9 + $0x80] sm:$0xf]
        %v5838 = vld [vmem:[#allocation9 + $0x84] sm:$0xf]
        %v5839 = vld [vmem:[#allocation9 + $0x88] sm:$0xf]
        %v5840 = vld [vmem:[#allocation9 + $0x8c] sm:$0xf]
        %v5841 = vld [vmem:[#allocation9 + $0x90] sm:$0xf]
        %v5842 = vld [vmem:[#allocation9 + $0x94] sm:$0xf]
        %v5843 = vld [vmem:[#allocation9 + $0x98] sm:$0xf]
        %v5844 = vld [vmem:[#allocation9 + $0x9c] sm:$0xf]
        %v5845 = vld [vmem:[#allocation9 + $0xa0] sm:$0xf]
        %v5846 = vld [vmem:[#allocation9 + $0xa4] sm:$0xf]
        %v5847 = vld [vmem:[#allocation9 + $0xa8] sm:$0xf]
        %v5848 = vld [vmem:[#allocation9 + $0xac] sm:$0xf]
        %v5849 = vld [vmem:[#allocation9 + $0xb0] sm:$0xf]
        %v5850 = vld [vmem:[#allocation9 + $0xb4] sm:$0xf]
        %v5851 = vld [vmem:[#allocation9 + $0xb8] sm:$0xf]
        %v5852 = vld [vmem:[#allocation9 + $0xbc] sm:$0xf]
        %v5853 = vld [vmem:[%s1976] sm:$0xff]
        %v5854 = vld [vmem:[%s1976 + $0x8] sm:$0xf]
        %v5855 = vld [vmem:[%s1976 + $0xc] sm:$0xff]
        %v5856 = vld [vmem:[%s1976 + $0x14] sm:$0xf]
        %v5857 = vld [vmem:[%s1976 + $0x18] sm:$0xff]
        %v5858 = vld [vmem:[%s1976 + $0x20] sm:$0xf]
        %v5859 = vld [vmem:[%s1976 + $0x24] sm:$0xff]
        %v5860 = vld [vmem:[%s1976 + $0x2c] sm:$0xf]
        %v5861 = vld [vmem:[%s1976 + $0x30] sm:$0xff]
        %v5862 = vld [vmem:[%s1976 + $0x38] sm:$0xf]
        %v5863 = vld [vmem:[%s1976 + $0x3c] sm:$0xff]
        %v5864 = vld [vmem:[%s1976 + $0x44] sm:$0xf]
        %v5865 = vld [vmem:[%s1976 + $0x48] sm:$0xff]
        %v5866 = vld [vmem:[%s1976 + $0x50] sm:$0xf]
        %v5867 = vld [vmem:[%s1976 + $0x54] sm:$0xff]
        %v5868 = vld [vmem:[%s1976 + $0x5c] sm:$0xf]
        %v5869 = vld [vmem:[%s1976 + $0x60] sm:$0xff]
        %v5870 = vld [vmem:[%s1976 + $0x68] sm:$0xf]
        %v5871 = vld [vmem:[%s1976 + $0x6c] sm:$0xff]
        %v5872 = vld [vmem:[%s1976 + $0x74] sm:$0xf]
        %v5873 = vld [vmem:[%s1976 + $0x78] sm:$0xff]
        %v5874 = vld [vmem:[%s1976 + $0x80] sm:$0xf]
        %v5875 = vld [vmem:[%s1976 + $0x84] sm:$0xff]
        %v5876 = vld [vmem:[%s1976 + $0x8c] sm:$0xf]
        %v5877 = vld [vmem:[%s1976 + $0x90] sm:$0xff]
        %v5878 = vld [vmem:[%s1976 + $0x98] sm:$0xf]
        %v5879 = vld [vmem:[%s1976 + $0x9c] sm:$0xff]
        %v5880 = vld [vmem:[%s1976 + $0xa4] sm:$0xf]
        %v5881 = vld [vmem:[%s1976 + $0xa8] sm:$0xff]
        %v5882 = vld [vmem:[%s1976 + $0xb0] sm:$0xf]
        %v5883 = vld [vmem:[%s1976 + $0xb4] sm:$0xff]
        %v5884 = vld [vmem:[%s1976 + $0xbc] sm:$0xf]
        %v5885 = vld [vmem:[%s1976 + $0xc0] sm:$0xff]
        %v5886 = vld [vmem:[%s1976 + $0xc8] sm:$0xf]
        %v5887 = vld [vmem:[%s1976 + $0xcc] sm:$0xff]
        %v5888 = vld [vmem:[%s1976 + $0xd4] sm:$0xf]
        %v5889 = vld [vmem:[%s1976 + $0xd8] sm:$0xff]
        %v5890 = vld [vmem:[%s1976 + $0xe0] sm:$0xf]
        %v5891 = vld [vmem:[%s1976 + $0xe4] sm:$0xff]
        %v5892 = vld [vmem:[%s1976 + $0xec] sm:$0xf]
        %v5893 = vld [vmem:[%s1976 + $0xf0] sm:$0xff]
        %v5894 = vld [vmem:[%s1976 + $0xf8] sm:$0xf]
        %v5895 = vld [vmem:[%s1976 + $0xfc] sm:$0xff]
        %v5896 = vld [vmem:[%s1976 + $0x104] sm:$0xf]
        %v5897 = vld [vmem:[%s1976 + $0x108] sm:$0xff]
        %v5898 = vld [vmem:[%s1976 + $0x110] sm:$0xf]
        %v5899 = vld [vmem:[%s1976 + $0x114] sm:$0xff]
        %v5900 = vld [vmem:[%s1976 + $0x11c] sm:$0xf]
        %v5901 = vld [vmem:[%s1976 + $0x120] sm:$0xff]
        %v5902 = vld [vmem:[%s1976 + $0x128] sm:$0xf]
        %v5903 = vld [vmem:[%s1976 + $0x12c] sm:$0xff]
        %v5904 = vld [vmem:[%s1976 + $0x134] sm:$0xf]
        %v5905 = vld [vmem:[%s1976 + $0x138] sm:$0xff]
        %v5906 = vld [vmem:[%s1976 + $0x140] sm:$0xf]
        %v5907 = vld [vmem:[%s1976 + $0x144] sm:$0xff]
        %v5908 = vld [vmem:[%s1976 + $0x14c] sm:$0xf]
        %v5909 = vld [vmem:[%s1976 + $0x150] sm:$0xff]
        %v5910 = vld [vmem:[%s1976 + $0x158] sm:$0xf]
        %v5911 = vld [vmem:[%s1976 + $0x15c] sm:$0xff]
        %v5912 = vld [vmem:[%s1976 + $0x164] sm:$0xf]
        %v5913 = vld [vmem:[%s1976 + $0x168] sm:$0xff]
        %v5914 = vld [vmem:[%s1976 + $0x170] sm:$0xf]
        %v5915 = vld [vmem:[%s1976 + $0x174] sm:$0xff]
        %v5916 = vld [vmem:[%s1976 + $0x17c] sm:$0xf]
        %s5917 = scalar_lea.vmem [#allocation9], 192
        %v5918 = vld [vmem:[%s5917] sm:$0xf]
        %v5919 = vld [vmem:[%s5917 + $0x4] sm:$0xf]
        %v5920 = vld [vmem:[%s5917 + $0x8] sm:$0xf]
        %v5921 = vld [vmem:[%s5917 + $0xc] sm:$0xf]
        %v5922 = vld [vmem:[%s5917 + $0x10] sm:$0xf]
        %v5923 = vld [vmem:[%s5917 + $0x14] sm:$0xf]
        %v5924 = vld [vmem:[%s5917 + $0x18] sm:$0xf]
        %v5925 = vld [vmem:[%s5917 + $0x1c] sm:$0xf]
        %v5926 = vld [vmem:[%s5917 + $0x20] sm:$0xf]
        %v5927 = vld [vmem:[%s5917 + $0x24] sm:$0xf]
        %v5928 = vld [vmem:[%s5917 + $0x28] sm:$0xf]
        %v5929 = vld [vmem:[%s5917 + $0x2c] sm:$0xf]
        %v5930 = vld [vmem:[%s5917 + $0x30] sm:$0xf]
        %v5931 = vld [vmem:[%s5917 + $0x34] sm:$0xf]
        %v5932 = vld [vmem:[%s5917 + $0x38] sm:$0xf]
        %v5933 = vld [vmem:[%s5917 + $0x3c] sm:$0xf]
        %v5934 = vld [vmem:[%s5917 + $0x40] sm:$0xf]
        %v5935 = vld [vmem:[%s5917 + $0x44] sm:$0xf]
        %v5936 = vld [vmem:[%s5917 + $0x48] sm:$0xf]
        %v5937 = vld [vmem:[%s5917 + $0x4c] sm:$0xf]
        %v5938 = vld [vmem:[%s5917 + $0x50] sm:$0xf]
        %v5939 = vld [vmem:[%s5917 + $0x54] sm:$0xf]
        %v5940 = vld [vmem:[%s5917 + $0x58] sm:$0xf]
        %v5941 = vld [vmem:[%s5917 + $0x5c] sm:$0xf]
        %v5942 = vld [vmem:[%s5917 + $0x60] sm:$0xf]
        %v5943 = vld [vmem:[%s5917 + $0x64] sm:$0xf]
        %v5944 = vld [vmem:[%s5917 + $0x68] sm:$0xf]
        %v5945 = vld [vmem:[%s5917 + $0x6c] sm:$0xf]
        %v5946 = vld [vmem:[%s5917 + $0x70] sm:$0xf]
        %v5947 = vld [vmem:[%s5917 + $0x74] sm:$0xf]
        %v5948 = vld [vmem:[%s5917 + $0x78] sm:$0xf]
        %v5949 = vld [vmem:[%s5917 + $0x7c] sm:$0xf]
        %v5950 = vld [vmem:[%s5917 + $0x80] sm:$0xf]
        %v5951 = vld [vmem:[%s5917 + $0x84] sm:$0xf]
        %v5952 = vld [vmem:[%s5917 + $0x88] sm:$0xf]
        %v5953 = vld [vmem:[%s5917 + $0x8c] sm:$0xf]
        %v5954 = vld [vmem:[%s5917 + $0x90] sm:$0xf]
        %v5955 = vld [vmem:[%s5917 + $0x94] sm:$0xf]
        %v5956 = vld [vmem:[%s5917 + $0x98] sm:$0xf]
        %v5957 = vld [vmem:[%s5917 + $0x9c] sm:$0xf]
        %v5958 = vld [vmem:[%s5917 + $0xa0] sm:$0xf]
        %v5959 = vld [vmem:[%s5917 + $0xa4] sm:$0xf]
        %v5960 = vld [vmem:[%s5917 + $0xa8] sm:$0xf]
        %v5961 = vld [vmem:[%s5917 + $0xac] sm:$0xf]
        %v5962 = vld [vmem:[%s5917 + $0xb0] sm:$0xf]
        %v5963 = vld [vmem:[%s5917 + $0xb4] sm:$0xf]
        %v5964 = vld [vmem:[%s5917 + $0xb8] sm:$0xf]
        %v5965 = vld [vmem:[%s5917 + $0xbc] sm:$0xf]
        %v6030 = vunpack.c.l.b16 %v5853
        %v6031 = vunpack.c.h.b16 %v5853
        %v6032 = vunpack.c.l.b16 %v5854
        %v6033 = vunpack.c.l.b16 %v5855
        %v6034 = vunpack.c.h.b16 %v5855
        %v6035 = vunpack.c.l.b16 %v5856
        %v6036 = vunpack.c.l.b16 %v5857
        %v6037 = vunpack.c.h.b16 %v5857
        %v6038 = vunpack.c.l.b16 %v5858
        %v6039 = vunpack.c.l.b16 %v5859
        %v6040 = vunpack.c.h.b16 %v5859
        %v6041 = vunpack.c.l.b16 %v5860
        %v6042 = vunpack.c.l.b16 %v5861
        %v6043 = vunpack.c.h.b16 %v5861
        %v6044 = vunpack.c.l.b16 %v5862
        %v6045 = vunpack.c.l.b16 %v5863
        %v6046 = vunpack.c.h.b16 %v5863
        %v6047 = vunpack.c.l.b16 %v5864
        %v6048 = vunpack.c.l.b16 %v5865
        %v6049 = vunpack.c.h.b16 %v5865
        %v6050 = vunpack.c.l.b16 %v5866
        %v6051 = vunpack.c.l.b16 %v5867
        %v6052 = vunpack.c.h.b16 %v5867
        %v6053 = vunpack.c.l.b16 %v5868
        %v6054 = vunpack.c.l.b16 %v5869
        %v6055 = vunpack.c.h.b16 %v5869
        %v6056 = vunpack.c.l.b16 %v5870
        %v6057 = vunpack.c.l.b16 %v5871
        %v6058 = vunpack.c.h.b16 %v5871
        %v6059 = vunpack.c.l.b16 %v5872
        %v6060 = vunpack.c.l.b16 %v5873
        %v6061 = vunpack.c.h.b16 %v5873
        %v6062 = vunpack.c.l.b16 %v5874
        %v6063 = vunpack.c.l.b16 %v5875
        %v6064 = vunpack.c.h.b16 %v5875
        %v6065 = vunpack.c.l.b16 %v5876
        %v6066 = vunpack.c.l.b16 %v5877
        %v6067 = vunpack.c.h.b16 %v5877
        %v6068 = vunpack.c.l.b16 %v5878
        %v6069 = vunpack.c.l.b16 %v5879
        %v6070 = vunpack.c.h.b16 %v5879
        %v6071 = vunpack.c.l.b16 %v5880
        %v6072 = vunpack.c.l.b16 %v5881
        %v6073 = vunpack.c.h.b16 %v5881
        %v6074 = vunpack.c.l.b16 %v5882
        %v6075 = vunpack.c.l.b16 %v5883
        %v6076 = vunpack.c.h.b16 %v5883
        %v6077 = vunpack.c.l.b16 %v5884
        %v6078 = vunpack.c.l.b16 %v5885
        %v6079 = vunpack.c.h.b16 %v5885
        %v6080 = vunpack.c.l.b16 %v5886
        %v6081 = vunpack.c.l.b16 %v5887
        %v6082 = vunpack.c.h.b16 %v5887
        %v6083 = vunpack.c.l.b16 %v5888
        %v6084 = vunpack.c.l.b16 %v5889
        %v6085 = vunpack.c.h.b16 %v5889
        %v6086 = vunpack.c.l.b16 %v5890
        %v6087 = vunpack.c.l.b16 %v5891
        %v6088 = vunpack.c.h.b16 %v5891
        %v6089 = vunpack.c.l.b16 %v5892
        %v6090 = vunpack.c.l.b16 %v5893
        %v6091 = vunpack.c.h.b16 %v5893
        %v6092 = vunpack.c.l.b16 %v5894
        %v6093 = vunpack.c.l.b16 %v5895
        %v6094 = vunpack.c.h.b16 %v5895
        %v6095 = vunpack.c.l.b16 %v5896
        %v6096 = vunpack.c.l.b16 %v5897
        %v6097 = vunpack.c.h.b16 %v5897
        %v6098 = vunpack.c.l.b16 %v5898
        %v6099 = vunpack.c.l.b16 %v5899
        %v6100 = vunpack.c.h.b16 %v5899
        %v6101 = vunpack.c.l.b16 %v5900
        %v6102 = vunpack.c.l.b16 %v5901
        %v6103 = vunpack.c.h.b16 %v5901
        %v6104 = vunpack.c.l.b16 %v5902
        %v6105 = vunpack.c.l.b16 %v5903
        %v6106 = vunpack.c.h.b16 %v5903
        %v6107 = vunpack.c.l.b16 %v5904
        %v6108 = vunpack.c.l.b16 %v5905
        %v6109 = vunpack.c.h.b16 %v5905
        %v6110 = vunpack.c.l.b16 %v5906
        %v6111 = vunpack.c.l.b16 %v5907
        %v6112 = vunpack.c.h.b16 %v5907
        %v6113 = vunpack.c.l.b16 %v5908
        %v6114 = vunpack.c.l.b16 %v5909
        %v6115 = vunpack.c.h.b16 %v5909
        %v6116 = vunpack.c.l.b16 %v5910
        %v6117 = vunpack.c.l.b16 %v5911
        %v6118 = vunpack.c.h.b16 %v5911
        %v6119 = vunpack.c.l.b16 %v5912
        %v6120 = vunpack.c.l.b16 %v5913
        %v6121 = vunpack.c.h.b16 %v5913
        %v6122 = vunpack.c.l.b16 %v5914
        %v6123 = vunpack.c.l.b16 %v5915
        %v6124 = vunpack.c.h.b16 %v5915
        %v6125 = vunpack.c.l.b16 %v5916
        %v6126 = vpack.c.b16 %v6033, %v6030
        %v6127 = vpack.c.b16 %v6034, %v6031
        %v6128 = vpack.c.b16 %v6035, %v6032
        %v6129 = vpack.c.b16 %v6039, %v6036
        %v6130 = vpack.c.b16 %v6040, %v6037
        %v6131 = vpack.c.b16 %v6041, %v6038
        %v6132 = vpack.c.b16 %v6045, %v6042
        %v6133 = vpack.c.b16 %v6046, %v6043
        %v6134 = vpack.c.b16 %v6047, %v6044
        %v6135 = vpack.c.b16 %v6051, %v6048
        %v6136 = vpack.c.b16 %v6052, %v6049
        %v6137 = vpack.c.b16 %v6053, %v6050
        %v6138 = vpack.c.b16 %v6057, %v6054
        %v6139 = vpack.c.b16 %v6058, %v6055
        %v6140 = vpack.c.b16 %v6059, %v6056
        %v6141 = vpack.c.b16 %v6063, %v6060
        %v6142 = vpack.c.b16 %v6064, %v6061
        %v6143 = vpack.c.b16 %v6065, %v6062
        %v6144 = vpack.c.b16 %v6069, %v6066
        %v6145 = vpack.c.b16 %v6070, %v6067
        %v6146 = vpack.c.b16 %v6071, %v6068
        %v6147 = vpack.c.b16 %v6075, %v6072
        %v6148 = vpack.c.b16 %v6076, %v6073
        %v6149 = vpack.c.b16 %v6077, %v6074
        %v6150 = vpack.c.b16 %v6081, %v6078
        %v6151 = vpack.c.b16 %v6082, %v6079
        %v6152 = vpack.c.b16 %v6083, %v6080
        %v6153 = vpack.c.b16 %v6087, %v6084
        %v6154 = vpack.c.b16 %v6088, %v6085
        %v6155 = vpack.c.b16 %v6089, %v6086
        %v6156 = vpack.c.b16 %v6093, %v6090
        %v6157 = vpack.c.b16 %v6094, %v6091
        %v6158 = vpack.c.b16 %v6095, %v6092
        %v6159 = vpack.c.b16 %v6099, %v6096
        %v6160 = vpack.c.b16 %v6100, %v6097
        %v6161 = vpack.c.b16 %v6101, %v6098
        %v6162 = vpack.c.b16 %v6105, %v6102
        %v6163 = vpack.c.b16 %v6106, %v6103
        %v6164 = vpack.c.b16 %v6107, %v6104
        %v6165 = vpack.c.b16 %v6111, %v6108
        %v6166 = vpack.c.b16 %v6112, %v6109
        %v6167 = vpack.c.b16 %v6113, %v6110
        %v6168 = vpack.c.b16 %v6117, %v6114
        %v6169 = vpack.c.b16 %v6118, %v6115
        %v6170 = vpack.c.b16 %v6119, %v6116
        %v6171 = vpack.c.b16 %v6123, %v6120
        %v6172 = vpack.c.b16 %v6124, %v6121
        %v6173 = vpack.c.b16 %v6125, %v6122
        %v6270 = vunpack.c.l.b16 %v5918
        %v6271 = vunpack.c.l.b16 %v5919
        %v6272 = vunpack.c.l.b16 %v5920
        %v6273 = vunpack.c.l.b16 %v5921
        %v6274 = vunpack.c.l.b16 %v5922
        %v6275 = vunpack.c.l.b16 %v5923
        %v6276 = vunpack.c.l.b16 %v5924
        %v6277 = vunpack.c.l.b16 %v5925
        %v6278 = vunpack.c.l.b16 %v5926
        %v6279 = vunpack.c.l.b16 %v5927
        %v6280 = vunpack.c.l.b16 %v5928
        %v6281 = vunpack.c.l.b16 %v5929
        %v6282 = vunpack.c.l.b16 %v5930
        %v6283 = vunpack.c.l.b16 %v5931
        %v6284 = vunpack.c.l.b16 %v5932
        %v6285 = vunpack.c.l.b16 %v5933
        %v6286 = vunpack.c.l.b16 %v5934
        %v6287 = vunpack.c.l.b16 %v5935
        %v6288 = vunpack.c.l.b16 %v5936
        %v6289 = vunpack.c.l.b16 %v5937
        %v6290 = vunpack.c.l.b16 %v5938
        %v6291 = vunpack.c.l.b16 %v5939
        %v6292 = vunpack.c.l.b16 %v5940
        %v6293 = vunpack.c.l.b16 %v5941
        %v6294 = vunpack.c.l.b16 %v5942
        %v6295 = vunpack.c.l.b16 %v5943
        %v6296 = vunpack.c.l.b16 %v5944
        %v6297 = vunpack.c.l.b16 %v5945
        %v6298 = vunpack.c.l.b16 %v5946
        %v6299 = vunpack.c.l.b16 %v5947
        %v6300 = vunpack.c.l.b16 %v5948
        %v6301 = vunpack.c.l.b16 %v5949
        %v6302 = vunpack.c.l.b16 %v5950
        %v6303 = vunpack.c.l.b16 %v5951
        %v6304 = vunpack.c.l.b16 %v5952
        %v6305 = vunpack.c.l.b16 %v5953
        %v6306 = vunpack.c.l.b16 %v5954
        %v6307 = vunpack.c.l.b16 %v5955
        %v6308 = vunpack.c.l.b16 %v5956
        %v6309 = vunpack.c.l.b16 %v5957
        %v6310 = vunpack.c.l.b16 %v5958
        %v6311 = vunpack.c.l.b16 %v5959
        %v6312 = vunpack.c.l.b16 %v5960
        %v6313 = vunpack.c.l.b16 %v5961
        %v6314 = vunpack.c.l.b16 %v5962
        %v6315 = vunpack.c.l.b16 %v5963
        %v6316 = vunpack.c.l.b16 %v5964
        %v6317 = vunpack.c.l.b16 %v5965
        %v6318 = vpack.c.b16 %v6271, %v6270
        %v6319 = vpack.c.b16 %v6273, %v6272
        %v6320 = vpack.c.b16 %v6275, %v6274
        %v6321 = vpack.c.b16 %v6277, %v6276
        %v6322 = vpack.c.b16 %v6279, %v6278
        %v6323 = vpack.c.b16 %v6281, %v6280
        %v6324 = vpack.c.b16 %v6283, %v6282
        %v6325 = vpack.c.b16 %v6285, %v6284
        %v6326 = vpack.c.b16 %v6287, %v6286
        %v6327 = vpack.c.b16 %v6289, %v6288
        %v6328 = vpack.c.b16 %v6291, %v6290
        %v6329 = vpack.c.b16 %v6293, %v6292
        %v6330 = vpack.c.b16 %v6295, %v6294
        %v6331 = vpack.c.b16 %v6297, %v6296
        %v6332 = vpack.c.b16 %v6299, %v6298
        %v6333 = vpack.c.b16 %v6301, %v6300
        %v6334 = vpack.c.b16 %v6303, %v6302
        %v6335 = vpack.c.b16 %v6305, %v6304
        %v6336 = vpack.c.b16 %v6307, %v6306
        %v6337 = vpack.c.b16 %v6309, %v6308
        %v6338 = vpack.c.b16 %v6311, %v6310
        %v6339 = vpack.c.b16 %v6313, %v6312
        %v6340 = vpack.c.b16 %v6315, %v6314
        %v6341 = vpack.c.b16 %v6317, %v6316
        %6366 = vmatpush.bf16.msra.mxu0 %v6325
        %6367 = vmatpush.bf16.msra.mxu0 %v6324
        %6368 = vmatpush.bf16.msra.mxu0 %v6323
        %6369 = vmatpush.bf16.msra.mxu0 %v6322
        %6370 = vmatpush.bf16.msra.mxu0 %v6321
        %6371 = vmatpush.bf16.msra.mxu0 %v6320
        %6372 = vmatpush.bf16.msra.mxu0 %v6319
        %6373 = vmatpush.bf16.msra.mxu0 %v6318
        %6374 = vmatmul.bf16.gmra.mxu0 %v6126
        %v6375 = vpop.f32.mrf.mxu0
        %v6376 = vadd.f32 0.0, %v6375
        %v6377 = vpop.f32.mrf.mxu0
        %v6378 = vadd.f32 0.0, %v6377
        %6379 = vmatmul.bf16.gmra.mxu0 %v6129
        %v6380 = vpop.f32.mrf.mxu0
        %v6381 = vadd.f32 0.0, %v6380
        %v6382 = vpop.f32.mrf.mxu0
        %v6383 = vadd.f32 0.0, %v6382
        %6384 = vmatmul.bf16.gmra.mxu0 %v6132
        %v6385 = vpop.f32.mrf.mxu0
        %v6386 = vadd.f32 0.0, %v6385
        %v6387 = vpop.f32.mrf.mxu0
        %v6388 = vadd.f32 0.0, %v6387
        %6389 = vmatmul.bf16.gmra.mxu0 %v6135
        %v6390 = vpop.f32.mrf.mxu0
        %v6391 = vadd.f32 0.0, %v6390
        %v6392 = vpop.f32.mrf.mxu0
        %v6393 = vadd.f32 0.0, %v6392
        %6394 = vmatmul.bf16.gmra.mxu0 %v6138
        %v6395 = vpop.f32.mrf.mxu0
        %v6396 = vadd.f32 0.0, %v6395
        %v6397 = vpop.f32.mrf.mxu0
        %v6398 = vadd.f32 0.0, %v6397
        %6399 = vmatmul.bf16.gmra.mxu0 %v6141
        %v6400 = vpop.f32.mrf.mxu0
        %v6401 = vadd.f32 0.0, %v6400
        %v6402 = vpop.f32.mrf.mxu0
        %v6403 = vadd.f32 0.0, %v6402
        %6404 = vmatmul.bf16.gmra.mxu0 %v6144
        %v6405 = vpop.f32.mrf.mxu0
        %v6406 = vadd.f32 0.0, %v6405
        %v6407 = vpop.f32.mrf.mxu0
        %v6408 = vadd.f32 0.0, %v6407
        %6409 = vmatmul.bf16.gmra.mxu0 %v6147
        %v6410 = vpop.f32.mrf.mxu0
        %v6411 = vadd.f32 0.0, %v6410
        %v6412 = vpop.f32.mrf.mxu0
        %v6413 = vadd.f32 0.0, %v6412
        %6414 = vmatmul.bf16.gmra.mxu0 %v6150
        %v6415 = vpop.f32.mrf.mxu0
        %v6416 = vadd.f32 0.0, %v6415
        %v6417 = vpop.f32.mrf.mxu0
        %v6418 = vadd.f32 0.0, %v6417
        %6419 = vmatmul.bf16.gmra.mxu0 %v6153
        %v6420 = vpop.f32.mrf.mxu0
        %v6421 = vadd.f32 0.0, %v6420
        %v6422 = vpop.f32.mrf.mxu0
        %v6423 = vadd.f32 0.0, %v6422
        %6424 = vmatmul.bf16.gmra.mxu0 %v6156
        %v6425 = vpop.f32.mrf.mxu0
        %v6426 = vadd.f32 0.0, %v6425
        %v6427 = vpop.f32.mrf.mxu0
        %v6428 = vadd.f32 0.0, %v6427
        %6429 = vmatmul.bf16.gmra.mxu0 %v6159
        %v6430 = vpop.f32.mrf.mxu0
        %v6431 = vadd.f32 0.0, %v6430
        %v6432 = vpop.f32.mrf.mxu0
        %v6433 = vadd.f32 0.0, %v6432
        %6434 = vmatmul.bf16.gmra.mxu0 %v6162
        %v6435 = vpop.f32.mrf.mxu0
        %v6436 = vadd.f32 0.0, %v6435
        %v6437 = vpop.f32.mrf.mxu0
        %v6438 = vadd.f32 0.0, %v6437
        %6439 = vmatmul.bf16.gmra.mxu0 %v6165
        %v6440 = vpop.f32.mrf.mxu0
        %v6441 = vadd.f32 0.0, %v6440
        %v6442 = vpop.f32.mrf.mxu0
        %v6443 = vadd.f32 0.0, %v6442
        %6444 = vmatmul.bf16.gmra.mxu0 %v6168
        %v6445 = vpop.f32.mrf.mxu0
        %v6446 = vadd.f32 0.0, %v6445
        %v6447 = vpop.f32.mrf.mxu0
        %v6448 = vadd.f32 0.0, %v6447
        %6449 = vmatmul.bf16.gmra.mxu0 %v6171
        %v6450 = vpop.f32.mrf.mxu0
        %v6451 = vadd.f32 0.0, %v6450
        %v6452 = vpop.f32.mrf.mxu0
        %v6453 = vadd.f32 0.0, %v6452
        %6454 = vdwg.mxu0
        %6455 = vmatpush.bf16.msra.mxu0 %v6333
        %6456 = vmatpush.bf16.msra.mxu0 %v6332
        %6457 = vmatpush.bf16.msra.mxu0 %v6331
        %6458 = vmatpush.bf16.msra.mxu0 %v6330
        %6459 = vmatpush.bf16.msra.mxu0 %v6329
        %6460 = vmatpush.bf16.msra.mxu0 %v6328
        %6461 = vmatpush.bf16.msra.mxu0 %v6327
        %6462 = vmatpush.bf16.msra.mxu0 %v6326
        %6463 = vmatmul.bf16.gmra.mxu0 %v6127
        %v6464 = vpop.f32.mrf.mxu0
        %v6465 = vadd.f32 %v6376, %v6464
        %v6466 = vpop.f32.mrf.mxu0
        %v6467 = vadd.f32 %v6378, %v6466
        %6468 = vmatmul.bf16.gmra.mxu0 %v6130
        %v6469 = vpop.f32.mrf.mxu0
        %v6470 = vadd.f32 %v6381, %v6469
        %v6471 = vpop.f32.mrf.mxu0
        %v6472 = vadd.f32 %v6383, %v6471
        %6473 = vmatmul.bf16.gmra.mxu0 %v6133
        %v6474 = vpop.f32.mrf.mxu0
        %v6475 = vadd.f32 %v6386, %v6474
        %v6476 = vpop.f32.mrf.mxu0
        %v6477 = vadd.f32 %v6388, %v6476
        %6478 = vmatmul.bf16.gmra.mxu0 %v6136
        %v6479 = vpop.f32.mrf.mxu0
        %v6480 = vadd.f32 %v6391, %v6479
        %v6481 = vpop.f32.mrf.mxu0
        %v6482 = vadd.f32 %v6393, %v6481
        %6483 = vmatmul.bf16.gmra.mxu0 %v6139
        %v6484 = vpop.f32.mrf.mxu0
        %v6485 = vadd.f32 %v6396, %v6484
        %v6486 = vpop.f32.mrf.mxu0
        %v6487 = vadd.f32 %v6398, %v6486
        %6488 = vmatmul.bf16.gmra.mxu0 %v6142
        %v6489 = vpop.f32.mrf.mxu0
        %v6490 = vadd.f32 %v6401, %v6489
        %v6491 = vpop.f32.mrf.mxu0
        %v6492 = vadd.f32 %v6403, %v6491
        %6493 = vmatmul.bf16.gmra.mxu0 %v6145
        %v6494 = vpop.f32.mrf.mxu0
        %v6495 = vadd.f32 %v6406, %v6494
        %v6496 = vpop.f32.mrf.mxu0
        %v6497 = vadd.f32 %v6408, %v6496
        %6498 = vmatmul.bf16.gmra.mxu0 %v6148
        %v6499 = vpop.f32.mrf.mxu0
        %v6500 = vadd.f32 %v6411, %v6499
        %v6501 = vpop.f32.mrf.mxu0
        %v6502 = vadd.f32 %v6413, %v6501
        %6503 = vmatmul.bf16.gmra.mxu0 %v6151
        %v6504 = vpop.f32.mrf.mxu0
        %v6505 = vadd.f32 %v6416, %v6504
        %v6506 = vpop.f32.mrf.mxu0
        %v6507 = vadd.f32 %v6418, %v6506
        %6508 = vmatmul.bf16.gmra.mxu0 %v6154
        %v6509 = vpop.f32.mrf.mxu0
        %v6510 = vadd.f32 %v6421, %v6509
        %v6511 = vpop.f32.mrf.mxu0
        %v6512 = vadd.f32 %v6423, %v6511
        %6513 = vmatmul.bf16.gmra.mxu0 %v6157
        %v6514 = vpop.f32.mrf.mxu0
        %v6515 = vadd.f32 %v6426, %v6514
        %v6516 = vpop.f32.mrf.mxu0
        %v6517 = vadd.f32 %v6428, %v6516
        %6518 = vmatmul.bf16.gmra.mxu0 %v6160
        %v6519 = vpop.f32.mrf.mxu0
        %v6520 = vadd.f32 %v6431, %v6519
        %v6521 = vpop.f32.mrf.mxu0
        %v6522 = vadd.f32 %v6433, %v6521
        %6523 = vmatmul.bf16.gmra.mxu0 %v6163
        %v6524 = vpop.f32.mrf.mxu0
        %v6525 = vadd.f32 %v6436, %v6524
        %v6526 = vpop.f32.mrf.mxu0
        %v6527 = vadd.f32 %v6438, %v6526
        %6528 = vmatmul.bf16.gmra.mxu0 %v6166
        %v6529 = vpop.f32.mrf.mxu0
        %v6530 = vadd.f32 %v6441, %v6529
        %v6531 = vpop.f32.mrf.mxu0
        %v6532 = vadd.f32 %v6443, %v6531
        %6533 = vmatmul.bf16.gmra.mxu0 %v6169
        %v6534 = vpop.f32.mrf.mxu0
        %v6535 = vadd.f32 %v6446, %v6534
        %v6536 = vpop.f32.mrf.mxu0
        %v6537 = vadd.f32 %v6448, %v6536
        %6538 = vmatmul.bf16.gmra.mxu0 %v6172
        %v6539 = vpop.f32.mrf.mxu0
        %v6540 = vadd.f32 %v6451, %v6539
        %v6541 = vpop.f32.mrf.mxu0
        %v6542 = vadd.f32 %v6453, %v6541
        %6543 = vdwg.mxu0
        %6544 = vmatpush.bf16.msra.mxu0 %v6341
        %6545 = vmatpush.bf16.msra.mxu0 %v6340
        %6546 = vmatpush.bf16.msra.mxu0 %v6339
        %6547 = vmatpush.bf16.msra.mxu0 %v6338
        %6548 = vmatpush.bf16.msra.mxu0 %v6337
        %6549 = vmatpush.bf16.msra.mxu0 %v6336
        %6550 = vmatpush.bf16.msra.mxu0 %v6335
        %6551 = vmatpush.bf16.msra.mxu0 %v6334
        %6552 = vmatmul.bf16.gmra.mxu0 %v6128
        %v6553 = vpop.f32.mrf.mxu0
        %v6554 = vadd.f32 %v6465, %v6553
        %v6555 = vpop.f32.mrf.mxu0
        %v6556 = vadd.f32 %v6467, %v6555
        %6557 = vmatmul.bf16.gmra.mxu0 %v6131
        %v6558 = vpop.f32.mrf.mxu0
        %v6559 = vadd.f32 %v6470, %v6558
        %v6560 = vpop.f32.mrf.mxu0
        %v6561 = vadd.f32 %v6472, %v6560
        %6562 = vmatmul.bf16.gmra.mxu0 %v6134
        %v6563 = vpop.f32.mrf.mxu0
        %v6564 = vadd.f32 %v6475, %v6563
        %v6565 = vpop.f32.mrf.mxu0
        %v6566 = vadd.f32 %v6477, %v6565
        %6567 = vmatmul.bf16.gmra.mxu0 %v6137
        %v6568 = vpop.f32.mrf.mxu0
        %v6569 = vadd.f32 %v6480, %v6568
        %v6570 = vpop.f32.mrf.mxu0
        %v6571 = vadd.f32 %v6482, %v6570
        %6572 = vmatmul.bf16.gmra.mxu0 %v6140
        %v6573 = vpop.f32.mrf.mxu0
        %v6574 = vadd.f32 %v6485, %v6573
        %v6575 = vpop.f32.mrf.mxu0
        %v6576 = vadd.f32 %v6487, %v6575
        %6577 = vmatmul.bf16.gmra.mxu0 %v6143
        %v6578 = vpop.f32.mrf.mxu0
        %v6579 = vadd.f32 %v6490, %v6578
        %v6580 = vpop.f32.mrf.mxu0
        %v6581 = vadd.f32 %v6492, %v6580
        %6582 = vmatmul.bf16.gmra.mxu0 %v6146
        %v6583 = vpop.f32.mrf.mxu0
        %v6584 = vadd.f32 %v6495, %v6583
        %v6585 = vpop.f32.mrf.mxu0
        %v6586 = vadd.f32 %v6497, %v6585
        %6587 = vmatmul.bf16.gmra.mxu0 %v6149
        %v6588 = vpop.f32.mrf.mxu0
        %v6589 = vadd.f32 %v6500, %v6588
        %v6590 = vpop.f32.mrf.mxu0
        %v6591 = vadd.f32 %v6502, %v6590
        %6592 = vmatmul.bf16.gmra.mxu0 %v6152
        %v6593 = vpop.f32.mrf.mxu0
        %v6594 = vadd.f32 %v6505, %v6593
        %v6595 = vpop.f32.mrf.mxu0
        %v6596 = vadd.f32 %v6507, %v6595
        %6597 = vmatmul.bf16.gmra.mxu0 %v6155
        %v6598 = vpop.f32.mrf.mxu0
        %v6599 = vadd.f32 %v6510, %v6598
        %v6600 = vpop.f32.mrf.mxu0
        %v6601 = vadd.f32 %v6512, %v6600
        %6602 = vmatmul.bf16.gmra.mxu0 %v6158
        %v6603 = vpop.f32.mrf.mxu0
        %v6604 = vadd.f32 %v6515, %v6603
        %v6605 = vpop.f32.mrf.mxu0
        %v6606 = vadd.f32 %v6517, %v6605
        %6607 = vmatmul.bf16.gmra.mxu0 %v6161
        %v6608 = vpop.f32.mrf.mxu0
        %v6609 = vadd.f32 %v6520, %v6608
        %v6610 = vpop.f32.mrf.mxu0
        %v6611 = vadd.f32 %v6522, %v6610
        %6612 = vmatmul.bf16.gmra.mxu0 %v6164
        %v6613 = vpop.f32.mrf.mxu0
        %v6614 = vadd.f32 %v6525, %v6613
        %v6615 = vpop.f32.mrf.mxu0
        %v6616 = vadd.f32 %v6527, %v6615
        %6617 = vmatmul.bf16.gmra.mxu0 %v6167
        %v6618 = vpop.f32.mrf.mxu0
        %v6619 = vadd.f32 %v6530, %v6618
        %v6620 = vpop.f32.mrf.mxu0
        %v6621 = vadd.f32 %v6532, %v6620
        %6622 = vmatmul.bf16.gmra.mxu0 %v6170
        %v6623 = vpop.f32.mrf.mxu0
        %v6624 = vadd.f32 %v6535, %v6623
        %v6625 = vpop.f32.mrf.mxu0
        %v6626 = vadd.f32 %v6537, %v6625
        %6627 = vmatmul.bf16.gmra.mxu0 %v6173
        %v6628 = vpop.f32.mrf.mxu0
        %v6629 = vadd.f32 %v6540, %v6628
        %v6630 = vpop.f32.mrf.mxu0
        %v6631 = vadd.f32 %v6542, %v6630
        %6632 = vdwg.mxu0
        %v6697 = vunpack.c.l.b16 %v5741
        %v6698 = vunpack.c.h.b16 %v5741
        %v6699 = vunpack.c.l.b16 %v5742
        %v6700 = vunpack.c.l.b16 %v5743
        %v6701 = vunpack.c.h.b16 %v5743
        %v6702 = vunpack.c.l.b16 %v5744
        %v6703 = vunpack.c.l.b16 %v5745
        %v6704 = vunpack.c.h.b16 %v5745
        %v6705 = vunpack.c.l.b16 %v5746
        %v6706 = vunpack.c.l.b16 %v5747
        %v6707 = vunpack.c.h.b16 %v5747
        %v6708 = vunpack.c.l.b16 %v5748
        %v6709 = vunpack.c.l.b16 %v5749
        %v6710 = vunpack.c.h.b16 %v5749
        %v6711 = vunpack.c.l.b16 %v5750
        %v6712 = vunpack.c.l.b16 %v5751
        %v6713 = vunpack.c.h.b16 %v5751
        %v6714 = vunpack.c.l.b16 %v5752
        %v6715 = vunpack.c.l.b16 %v5753
        %v6716 = vunpack.c.h.b16 %v5753
        %v6717 = vunpack.c.l.b16 %v5754
        %v6718 = vunpack.c.l.b16 %v5755
        %v6719 = vunpack.c.h.b16 %v5755
        %v6720 = vunpack.c.l.b16 %v5756
        %v6721 = vunpack.c.l.b16 %v5757
        %v6722 = vunpack.c.h.b16 %v5757
        %v6723 = vunpack.c.l.b16 %v5758
        %v6724 = vunpack.c.l.b16 %v5759
        %v6725 = vunpack.c.h.b16 %v5759
        %v6726 = vunpack.c.l.b16 %v5760
        %v6727 = vunpack.c.l.b16 %v5761
        %v6728 = vunpack.c.h.b16 %v5761
        %v6729 = vunpack.c.l.b16 %v5762
        %v6730 = vunpack.c.l.b16 %v5763
        %v6731 = vunpack.c.h.b16 %v5763
        %v6732 = vunpack.c.l.b16 %v5764
        %v6733 = vunpack.c.l.b16 %v5765
        %v6734 = vunpack.c.h.b16 %v5765
        %v6735 = vunpack.c.l.b16 %v5766
        %v6736 = vunpack.c.l.b16 %v5767
        %v6737 = vunpack.c.h.b16 %v5767
        %v6738 = vunpack.c.l.b16 %v5768
        %v6739 = vunpack.c.l.b16 %v5769
        %v6740 = vunpack.c.h.b16 %v5769
        %v6741 = vunpack.c.l.b16 %v5770
        %v6742 = vunpack.c.l.b16 %v5771
        %v6743 = vunpack.c.h.b16 %v5771
        %v6744 = vunpack.c.l.b16 %v5772
        %v6745 = vunpack.c.l.b16 %v5773
        %v6746 = vunpack.c.h.b16 %v5773
        %v6747 = vunpack.c.l.b16 %v5774
        %v6748 = vunpack.c.l.b16 %v5775
        %v6749 = vunpack.c.h.b16 %v5775
        %v6750 = vunpack.c.l.b16 %v5776
        %v6751 = vunpack.c.l.b16 %v5777
        %v6752 = vunpack.c.h.b16 %v5777
        %v6753 = vunpack.c.l.b16 %v5778
        %v6754 = vunpack.c.l.b16 %v5779
        %v6755 = vunpack.c.h.b16 %v5779
        %v6756 = vunpack.c.l.b16 %v5780
        %v6757 = vunpack.c.l.b16 %v5781
        %v6758 = vunpack.c.h.b16 %v5781
        %v6759 = vunpack.c.l.b16 %v5782
        %v6760 = vunpack.c.l.b16 %v5783
        %v6761 = vunpack.c.h.b16 %v5783
        %v6762 = vunpack.c.l.b16 %v5784
        %v6763 = vunpack.c.l.b16 %v5785
        %v6764 = vunpack.c.h.b16 %v5785
        %v6765 = vunpack.c.l.b16 %v5786
        %v6766 = vunpack.c.l.b16 %v5787
        %v6767 = vunpack.c.h.b16 %v5787
        %v6768 = vunpack.c.l.b16 %v5788
        %v6769 = vunpack.c.l.b16 %v5789
        %v6770 = vunpack.c.h.b16 %v5789
        %v6771 = vunpack.c.l.b16 %v5790
        %v6772 = vunpack.c.l.b16 %v5791
        %v6773 = vunpack.c.h.b16 %v5791
        %v6774 = vunpack.c.l.b16 %v5792
        %v6775 = vunpack.c.l.b16 %v5793
        %v6776 = vunpack.c.h.b16 %v5793
        %v6777 = vunpack.c.l.b16 %v5794
        %v6778 = vunpack.c.l.b16 %v5795
        %v6779 = vunpack.c.h.b16 %v5795
        %v6780 = vunpack.c.l.b16 %v5796
        %v6781 = vunpack.c.l.b16 %v5797
        %v6782 = vunpack.c.h.b16 %v5797
        %v6783 = vunpack.c.l.b16 %v5798
        %v6784 = vunpack.c.l.b16 %v5799
        %v6785 = vunpack.c.h.b16 %v5799
        %v6786 = vunpack.c.l.b16 %v5800
        %v6787 = vunpack.c.l.b16 %v5801
        %v6788 = vunpack.c.h.b16 %v5801
        %v6789 = vunpack.c.l.b16 %v5802
        %v6790 = vunpack.c.l.b16 %v5803
        %v6791 = vunpack.c.h.b16 %v5803
        %v6792 = vunpack.c.l.b16 %v5804
        %v6793 = vpack.c.b16 %v6700, %v6697
        %v6794 = vpack.c.b16 %v6701, %v6698
        %v6795 = vpack.c.b16 %v6702, %v6699
        %v6796 = vpack.c.b16 %v6706, %v6703
        %v6797 = vpack.c.b16 %v6707, %v6704
        %v6798 = vpack.c.b16 %v6708, %v6705
        %v6799 = vpack.c.b16 %v6712, %v6709
        %v6800 = vpack.c.b16 %v6713, %v6710
        %v6801 = vpack.c.b16 %v6714, %v6711
        %v6802 = vpack.c.b16 %v6718, %v6715
        %v6803 = vpack.c.b16 %v6719, %v6716
        %v6804 = vpack.c.b16 %v6720, %v6717
        %v6805 = vpack.c.b16 %v6724, %v6721
        %v6806 = vpack.c.b16 %v6725, %v6722
        %v6807 = vpack.c.b16 %v6726, %v6723
        %v6808 = vpack.c.b16 %v6730, %v6727
        %v6809 = vpack.c.b16 %v6731, %v6728
        %v6810 = vpack.c.b16 %v6732, %v6729
        %v6811 = vpack.c.b16 %v6736, %v6733
        %v6812 = vpack.c.b16 %v6737, %v6734
        %v6813 = vpack.c.b16 %v6738, %v6735
        %v6814 = vpack.c.b16 %v6742, %v6739
        %v6815 = vpack.c.b16 %v6743, %v6740
        %v6816 = vpack.c.b16 %v6744, %v6741
        %v6817 = vpack.c.b16 %v6748, %v6745
        %v6818 = vpack.c.b16 %v6749, %v6746
        %v6819 = vpack.c.b16 %v6750, %v6747
        %v6820 = vpack.c.b16 %v6754, %v6751
        %v6821 = vpack.c.b16 %v6755, %v6752
        %v6822 = vpack.c.b16 %v6756, %v6753
        %v6823 = vpack.c.b16 %v6760, %v6757
        %v6824 = vpack.c.b16 %v6761, %v6758
        %v6825 = vpack.c.b16 %v6762, %v6759
        %v6826 = vpack.c.b16 %v6766, %v6763
        %v6827 = vpack.c.b16 %v6767, %v6764
        %v6828 = vpack.c.b16 %v6768, %v6765
        %v6829 = vpack.c.b16 %v6772, %v6769
        %v6830 = vpack.c.b16 %v6773, %v6770
        %v6831 = vpack.c.b16 %v6774, %v6771
        %v6832 = vpack.c.b16 %v6778, %v6775
        %v6833 = vpack.c.b16 %v6779, %v6776
        %v6834 = vpack.c.b16 %v6780, %v6777
        %v6835 = vpack.c.b16 %v6784, %v6781
        %v6836 = vpack.c.b16 %v6785, %v6782
        %v6837 = vpack.c.b16 %v6786, %v6783
        %v6838 = vpack.c.b16 %v6790, %v6787
        %v6839 = vpack.c.b16 %v6791, %v6788
        %v6840 = vpack.c.b16 %v6792, %v6789
        %v6937 = vunpack.c.l.b16 %v5805
        %v6938 = vunpack.c.l.b16 %v5806
        %v6939 = vunpack.c.l.b16 %v5807
        %v6940 = vunpack.c.l.b16 %v5808
        %v6941 = vunpack.c.l.b16 %v5809
        %v6942 = vunpack.c.l.b16 %v5810
        %v6943 = vunpack.c.l.b16 %v5811
        %v6944 = vunpack.c.l.b16 %v5812
        %v6945 = vunpack.c.l.b16 %v5813
        %v6946 = vunpack.c.l.b16 %v5814
        %v6947 = vunpack.c.l.b16 %v5815
        %v6948 = vunpack.c.l.b16 %v5816
        %v6949 = vunpack.c.l.b16 %v5817
        %v6950 = vunpack.c.l.b16 %v5818
        %v6951 = vunpack.c.l.b16 %v5819
        %v6952 = vunpack.c.l.b16 %v5820
        %v6953 = vunpack.c.l.b16 %v5821
        %v6954 = vunpack.c.l.b16 %v5822
        %v6955 = vunpack.c.l.b16 %v5823
        %v6956 = vunpack.c.l.b16 %v5824
        %v6957 = vunpack.c.l.b16 %v5825
        %v6958 = vunpack.c.l.b16 %v5826
        %v6959 = vunpack.c.l.b16 %v5827
        %v6960 = vunpack.c.l.b16 %v5828
        %v6961 = vunpack.c.l.b16 %v5829
        %v6962 = vunpack.c.l.b16 %v5830
        %v6963 = vunpack.c.l.b16 %v5831
        %v6964 = vunpack.c.l.b16 %v5832
        %v6965 = vunpack.c.l.b16 %v5833
        %v6966 = vunpack.c.l.b16 %v5834
        %v6967 = vunpack.c.l.b16 %v5835
        %v6968 = vunpack.c.l.b16 %v5836
        %v6969 = vunpack.c.l.b16 %v5837
        %v6970 = vunpack.c.l.b16 %v5838
        %v6971 = vunpack.c.l.b16 %v5839
        %v6972 = vunpack.c.l.b16 %v5840
        %v6973 = vunpack.c.l.b16 %v5841
        %v6974 = vunpack.c.l.b16 %v5842
        %v6975 = vunpack.c.l.b16 %v5843
        %v6976 = vunpack.c.l.b16 %v5844
        %v6977 = vunpack.c.l.b16 %v5845
        %v6978 = vunpack.c.l.b16 %v5846
        %v6979 = vunpack.c.l.b16 %v5847
        %v6980 = vunpack.c.l.b16 %v5848
        %v6981 = vunpack.c.l.b16 %v5849
        %v6982 = vunpack.c.l.b16 %v5850
        %v6983 = vunpack.c.l.b16 %v5851
        %v6984 = vunpack.c.l.b16 %v5852
        %v6985 = vpack.c.b16 %v6938, %v6937
        %v6986 = vpack.c.b16 %v6940, %v6939
        %v6987 = vpack.c.b16 %v6942, %v6941
        %v6988 = vpack.c.b16 %v6944, %v6943
        %v6989 = vpack.c.b16 %v6946, %v6945
        %v6990 = vpack.c.b16 %v6948, %v6947
        %v6991 = vpack.c.b16 %v6950, %v6949
        %v6992 = vpack.c.b16 %v6952, %v6951
        %v6993 = vpack.c.b16 %v6954, %v6953
        %v6994 = vpack.c.b16 %v6956, %v6955
        %v6995 = vpack.c.b16 %v6958, %v6957
        %v6996 = vpack.c.b16 %v6960, %v6959
        %v6997 = vpack.c.b16 %v6962, %v6961
        %v6998 = vpack.c.b16 %v6964, %v6963
        %v6999 = vpack.c.b16 %v6966, %v6965
        %v7000 = vpack.c.b16 %v6968, %v6967
        %v7001 = vpack.c.b16 %v6970, %v6969
        %v7002 = vpack.c.b16 %v6972, %v6971
        %v7003 = vpack.c.b16 %v6974, %v6973
        %v7004 = vpack.c.b16 %v6976, %v6975
        %v7005 = vpack.c.b16 %v6978, %v6977
        %v7006 = vpack.c.b16 %v6980, %v6979
        %v7007 = vpack.c.b16 %v6982, %v6981
        %v7008 = vpack.c.b16 %v6984, %v6983
        %7033 = vmatpush.bf16.msra.mxu0 %v6992
        %7034 = vmatpush.bf16.msra.mxu0 %v6991
        %7035 = vmatpush.bf16.msra.mxu0 %v6990
        %7036 = vmatpush.bf16.msra.mxu0 %v6989
        %7037 = vmatpush.bf16.msra.mxu0 %v6988
        %7038 = vmatpush.bf16.msra.mxu0 %v6987
        %7039 = vmatpush.bf16.msra.mxu0 %v6986
        %7040 = vmatpush.bf16.msra.mxu0 %v6985
        %7041 = vmatmul.bf16.gmra.mxu0 %v6793
        %v7042 = vpop.f32.mrf.mxu0
        %v7043 = vadd.f32 %v6554, %v7042
        %v7044 = vpop.f32.mrf.mxu0
        %v7045 = vadd.f32 %v6556, %v7044
        %7046 = vmatmul.bf16.gmra.mxu0 %v6796
        %v7047 = vpop.f32.mrf.mxu0
        %v7048 = vadd.f32 %v6559, %v7047
        %v7049 = vpop.f32.mrf.mxu0
        %v7050 = vadd.f32 %v6561, %v7049
        %7051 = vmatmul.bf16.gmra.mxu0 %v6799
        %v7052 = vpop.f32.mrf.mxu0
        %v7053 = vadd.f32 %v6564, %v7052
        %v7054 = vpop.f32.mrf.mxu0
        %v7055 = vadd.f32 %v6566, %v7054
        %7056 = vmatmul.bf16.gmra.mxu0 %v6802
        %v7057 = vpop.f32.mrf.mxu0
        %v7058 = vadd.f32 %v6569, %v7057
        %v7059 = vpop.f32.mrf.mxu0
        %v7060 = vadd.f32 %v6571, %v7059
        %7061 = vmatmul.bf16.gmra.mxu0 %v6805
        %v7062 = vpop.f32.mrf.mxu0
        %v7063 = vadd.f32 %v6574, %v7062
        %v7064 = vpop.f32.mrf.mxu0
        %v7065 = vadd.f32 %v6576, %v7064
        %7066 = vmatmul.bf16.gmra.mxu0 %v6808
        %v7067 = vpop.f32.mrf.mxu0
        %v7068 = vadd.f32 %v6579, %v7067
        %v7069 = vpop.f32.mrf.mxu0
        %v7070 = vadd.f32 %v6581, %v7069
        %7071 = vmatmul.bf16.gmra.mxu0 %v6811
        %v7072 = vpop.f32.mrf.mxu0
        %v7073 = vadd.f32 %v6584, %v7072
        %v7074 = vpop.f32.mrf.mxu0
        %v7075 = vadd.f32 %v6586, %v7074
        %7076 = vmatmul.bf16.gmra.mxu0 %v6814
        %v7077 = vpop.f32.mrf.mxu0
        %v7078 = vadd.f32 %v6589, %v7077
        %v7079 = vpop.f32.mrf.mxu0
        %v7080 = vadd.f32 %v6591, %v7079
        %7081 = vmatmul.bf16.gmra.mxu0 %v6817
        %v7082 = vpop.f32.mrf.mxu0
        %v7083 = vadd.f32 %v6594, %v7082
        %v7084 = vpop.f32.mrf.mxu0
        %v7085 = vadd.f32 %v6596, %v7084
        %7086 = vmatmul.bf16.gmra.mxu0 %v6820
        %v7087 = vpop.f32.mrf.mxu0
        %v7088 = vadd.f32 %v6599, %v7087
        %v7089 = vpop.f32.mrf.mxu0
        %v7090 = vadd.f32 %v6601, %v7089
        %7091 = vmatmul.bf16.gmra.mxu0 %v6823
        %v7092 = vpop.f32.mrf.mxu0
        %v7093 = vadd.f32 %v6604, %v7092
        %v7094 = vpop.f32.mrf.mxu0
        %v7095 = vadd.f32 %v6606, %v7094
        %7096 = vmatmul.bf16.gmra.mxu0 %v6826
        %v7097 = vpop.f32.mrf.mxu0
        %v7098 = vadd.f32 %v6609, %v7097
        %v7099 = vpop.f32.mrf.mxu0
        %v7100 = vadd.f32 %v6611, %v7099
        %7101 = vmatmul.bf16.gmra.mxu0 %v6829
        %v7102 = vpop.f32.mrf.mxu0
        %v7103 = vadd.f32 %v6614, %v7102
        %v7104 = vpop.f32.mrf.mxu0
        %v7105 = vadd.f32 %v6616, %v7104
        %7106 = vmatmul.bf16.gmra.mxu0 %v6832
        %v7107 = vpop.f32.mrf.mxu0
        %v7108 = vadd.f32 %v6619, %v7107
        %v7109 = vpop.f32.mrf.mxu0
        %v7110 = vadd.f32 %v6621, %v7109
        %7111 = vmatmul.bf16.gmra.mxu0 %v6835
        %v7112 = vpop.f32.mrf.mxu0
        %v7113 = vadd.f32 %v6624, %v7112
        %v7114 = vpop.f32.mrf.mxu0
        %v7115 = vadd.f32 %v6626, %v7114
        %7116 = vmatmul.bf16.gmra.mxu0 %v6838
        %v7117 = vpop.f32.mrf.mxu0
        %v7118 = vadd.f32 %v6629, %v7117
        %v7119 = vpop.f32.mrf.mxu0
        %v7120 = vadd.f32 %v6631, %v7119
        %7121 = vdwg.mxu0
        %7122 = vmatpush.bf16.msra.mxu0 %v7000
        %7123 = vmatpush.bf16.msra.mxu0 %v6999
        %7124 = vmatpush.bf16.msra.mxu0 %v6998
        %7125 = vmatpush.bf16.msra.mxu0 %v6997
        %7126 = vmatpush.bf16.msra.mxu0 %v6996
        %7127 = vmatpush.bf16.msra.mxu0 %v6995
        %7128 = vmatpush.bf16.msra.mxu0 %v6994
        %7129 = vmatpush.bf16.msra.mxu0 %v6993
        %7130 = vmatmul.bf16.gmra.mxu0 %v6794
        %v7131 = vpop.f32.mrf.mxu0
        %v7132 = vadd.f32 %v7043, %v7131
        %v7133 = vpop.f32.mrf.mxu0
        %v7134 = vadd.f32 %v7045, %v7133
        %7135 = vmatmul.bf16.gmra.mxu0 %v6797
        %v7136 = vpop.f32.mrf.mxu0
        %v7137 = vadd.f32 %v7048, %v7136
        %v7138 = vpop.f32.mrf.mxu0
        %v7139 = vadd.f32 %v7050, %v7138
        %7140 = vmatmul.bf16.gmra.mxu0 %v6800
        %v7141 = vpop.f32.mrf.mxu0
        %v7142 = vadd.f32 %v7053, %v7141
        %v7143 = vpop.f32.mrf.mxu0
        %v7144 = vadd.f32 %v7055, %v7143
        %7145 = vmatmul.bf16.gmra.mxu0 %v6803
        %v7146 = vpop.f32.mrf.mxu0
        %v7147 = vadd.f32 %v7058, %v7146
        %v7148 = vpop.f32.mrf.mxu0
        %v7149 = vadd.f32 %v7060, %v7148
        %7150 = vmatmul.bf16.gmra.mxu0 %v6806
        %v7151 = vpop.f32.mrf.mxu0
        %v7152 = vadd.f32 %v7063, %v7151
        %v7153 = vpop.f32.mrf.mxu0
        %v7154 = vadd.f32 %v7065, %v7153
        %7155 = vmatmul.bf16.gmra.mxu0 %v6809
        %v7156 = vpop.f32.mrf.mxu0
        %v7157 = vadd.f32 %v7068, %v7156
        %v7158 = vpop.f32.mrf.mxu0
        %v7159 = vadd.f32 %v7070, %v7158
        %7160 = vmatmul.bf16.gmra.mxu0 %v6812
        %v7161 = vpop.f32.mrf.mxu0
        %v7162 = vadd.f32 %v7073, %v7161
        %v7163 = vpop.f32.mrf.mxu0
        %v7164 = vadd.f32 %v7075, %v7163
        %7165 = vmatmul.bf16.gmra.mxu0 %v6815
        %v7166 = vpop.f32.mrf.mxu0
        %v7167 = vadd.f32 %v7078, %v7166
        %v7168 = vpop.f32.mrf.mxu0
        %v7169 = vadd.f32 %v7080, %v7168
        %7170 = vmatmul.bf16.gmra.mxu0 %v6818
        %v7171 = vpop.f32.mrf.mxu0
        %v7172 = vadd.f32 %v7083, %v7171
        %v7173 = vpop.f32.mrf.mxu0
        %v7174 = vadd.f32 %v7085, %v7173
        %7175 = vmatmul.bf16.gmra.mxu0 %v6821
        %v7176 = vpop.f32.mrf.mxu0
        %v7177 = vadd.f32 %v7088, %v7176
        %v7178 = vpop.f32.mrf.mxu0
        %v7179 = vadd.f32 %v7090, %v7178
        %7180 = vmatmul.bf16.gmra.mxu0 %v6824
        %v7181 = vpop.f32.mrf.mxu0
        %v7182 = vadd.f32 %v7093, %v7181
        %v7183 = vpop.f32.mrf.mxu0
        %v7184 = vadd.f32 %v7095, %v7183
        %7185 = vmatmul.bf16.gmra.mxu0 %v6827
        %v7186 = vpop.f32.mrf.mxu0
        %v7187 = vadd.f32 %v7098, %v7186
        %v7188 = vpop.f32.mrf.mxu0
        %v7189 = vadd.f32 %v7100, %v7188
        %7190 = vmatmul.bf16.gmra.mxu0 %v6830
        %v7191 = vpop.f32.mrf.mxu0
        %v7192 = vadd.f32 %v7103, %v7191
        %v7193 = vpop.f32.mrf.mxu0
        %v7194 = vadd.f32 %v7105, %v7193
        %7195 = vmatmul.bf16.gmra.mxu0 %v6833
        %v7196 = vpop.f32.mrf.mxu0
        %v7197 = vadd.f32 %v7108, %v7196
        %v7198 = vpop.f32.mrf.mxu0
        %v7199 = vadd.f32 %v7110, %v7198
        %7200 = vmatmul.bf16.gmra.mxu0 %v6836
        %v7201 = vpop.f32.mrf.mxu0
        %v7202 = vadd.f32 %v7113, %v7201
        %v7203 = vpop.f32.mrf.mxu0
        %v7204 = vadd.f32 %v7115, %v7203
        %7205 = vmatmul.bf16.gmra.mxu0 %v6839
        %v7206 = vpop.f32.mrf.mxu0
        %v7207 = vadd.f32 %v7118, %v7206
        %v7208 = vpop.f32.mrf.mxu0
        %v7209 = vadd.f32 %v7120, %v7208
        %7210 = vdwg.mxu0
        %7211 = vmatpush.bf16.msra.mxu0 %v7008
        %7212 = vmatpush.bf16.msra.mxu0 %v7007
        %7213 = vmatpush.bf16.msra.mxu0 %v7006
        %7214 = vmatpush.bf16.msra.mxu0 %v7005
        %7215 = vmatpush.bf16.msra.mxu0 %v7004
        %7216 = vmatpush.bf16.msra.mxu0 %v7003
        %7217 = vmatpush.bf16.msra.mxu0 %v7002
        %7218 = vmatpush.bf16.msra.mxu0 %v7001
        %7219 = vmatmul.bf16.gmra.mxu0 %v6795
        %v7220 = vpop.f32.mrf.mxu0
        %v7221 = vadd.f32 %v7132, %v7220
        %v7222 = vpop.f32.mrf.mxu0
        %v7223 = vadd.f32 %v7134, %v7222
        %7224 = vmatmul.bf16.gmra.mxu0 %v6798
        %v7225 = vpop.f32.mrf.mxu0
        %v7226 = vadd.f32 %v7137, %v7225
        %v7227 = vpop.f32.mrf.mxu0
        %v7228 = vadd.f32 %v7139, %v7227
        %7229 = vmatmul.bf16.gmra.mxu0 %v6801
        %v7230 = vpop.f32.mrf.mxu0
        %v7231 = vadd.f32 %v7142, %v7230
        %v7232 = vpop.f32.mrf.mxu0
        %v7233 = vadd.f32 %v7144, %v7232
        %7234 = vmatmul.bf16.gmra.mxu0 %v6804
        %v7235 = vpop.f32.mrf.mxu0
        %v7236 = vadd.f32 %v7147, %v7235
        %v7237 = vpop.f32.mrf.mxu0
        %v7238 = vadd.f32 %v7149, %v7237
        %7239 = vmatmul.bf16.gmra.mxu0 %v6807
        %v7240 = vpop.f32.mrf.mxu0
        %v7241 = vadd.f32 %v7152, %v7240
        %v7242 = vpop.f32.mrf.mxu0
        %v7243 = vadd.f32 %v7154, %v7242
        %7244 = vmatmul.bf16.gmra.mxu0 %v6810
        %v7245 = vpop.f32.mrf.mxu0
        %v7246 = vadd.f32 %v7157, %v7245
        %v7247 = vpop.f32.mrf.mxu0
        %v7248 = vadd.f32 %v7159, %v7247
        %7249 = vmatmul.bf16.gmra.mxu0 %v6813
        %v7250 = vpop.f32.mrf.mxu0
        %v7251 = vadd.f32 %v7162, %v7250
        %v7252 = vpop.f32.mrf.mxu0
        %v7253 = vadd.f32 %v7164, %v7252
        %7254 = vmatmul.bf16.gmra.mxu0 %v6816
        %v7255 = vpop.f32.mrf.mxu0
        %v7256 = vadd.f32 %v7167, %v7255
        %v7257 = vpop.f32.mrf.mxu0
        %v7258 = vadd.f32 %v7169, %v7257
        %7259 = vmatmul.bf16.gmra.mxu0 %v6819
        %v7260 = vpop.f32.mrf.mxu0
        %v7261 = vadd.f32 %v7172, %v7260
        %v7262 = vpop.f32.mrf.mxu0
        %v7263 = vadd.f32 %v7174, %v7262
        %7264 = vmatmul.bf16.gmra.mxu0 %v6822
        %v7265 = vpop.f32.mrf.mxu0
        %v7266 = vadd.f32 %v7177, %v7265
        %v7267 = vpop.f32.mrf.mxu0
        %v7268 = vadd.f32 %v7179, %v7267
        %7269 = vmatmul.bf16.gmra.mxu0 %v6825
        %v7270 = vpop.f32.mrf.mxu0
        %v7271 = vadd.f32 %v7182, %v7270
        %v7272 = vpop.f32.mrf.mxu0
        %v7273 = vadd.f32 %v7184, %v7272
        %7274 = vmatmul.bf16.gmra.mxu0 %v6828
        %v7275 = vpop.f32.mrf.mxu0
        %v7276 = vadd.f32 %v7187, %v7275
        %v7277 = vpop.f32.mrf.mxu0
        %v7278 = vadd.f32 %v7189, %v7277
        %7279 = vmatmul.bf16.gmra.mxu0 %v6831
        %v7280 = vpop.f32.mrf.mxu0
        %v7281 = vadd.f32 %v7192, %v7280
        %v7282 = vpop.f32.mrf.mxu0
        %v7283 = vadd.f32 %v7194, %v7282
        %7284 = vmatmul.bf16.gmra.mxu0 %v6834
        %v7285 = vpop.f32.mrf.mxu0
        %v7286 = vadd.f32 %v7197, %v7285
        %v7287 = vpop.f32.mrf.mxu0
        %v7288 = vadd.f32 %v7199, %v7287
        %7289 = vmatmul.bf16.gmra.mxu0 %v6837
        %v7290 = vpop.f32.mrf.mxu0
        %v7291 = vadd.f32 %v7202, %v7290
        %v7292 = vpop.f32.mrf.mxu0
        %v7293 = vadd.f32 %v7204, %v7292
        %7294 = vmatmul.bf16.gmra.mxu0 %v6840
        %v7295 = vpop.f32.mrf.mxu0
        %v7296 = vadd.f32 %v7207, %v7295
        %v7297 = vpop.f32.mrf.mxu0
        %v7298 = vadd.f32 %v7209, %v7297
        %7299 = vdwg.mxu0
        %v7300 = vld [vmem:[%s3424] sm:$0xff]
        %v7301 = vld [vmem:[%s3424 + $0x8] sm:$0xf]
        %v7302 = vld [vmem:[%s3424 + $0xc] sm:$0xff]
        %v7303 = vld [vmem:[%s3424 + $0x14] sm:$0xf]
        %v7304 = vld [vmem:[%s3424 + $0x18] sm:$0xff]
        %v7305 = vld [vmem:[%s3424 + $0x20] sm:$0xf]
        %v7306 = vld [vmem:[%s3424 + $0x24] sm:$0xff]
        %v7307 = vld [vmem:[%s3424 + $0x2c] sm:$0xf]
        %v7308 = vld [vmem:[%s3424 + $0x30] sm:$0xff]
        %v7309 = vld [vmem:[%s3424 + $0x38] sm:$0xf]
        %v7310 = vld [vmem:[%s3424 + $0x3c] sm:$0xff]
        %v7311 = vld [vmem:[%s3424 + $0x44] sm:$0xf]
        %v7312 = vld [vmem:[%s3424 + $0x48] sm:$0xff]
        %v7313 = vld [vmem:[%s3424 + $0x50] sm:$0xf]
        %v7314 = vld [vmem:[%s3424 + $0x54] sm:$0xff]
        %v7315 = vld [vmem:[%s3424 + $0x5c] sm:$0xf]
        %v7316 = vld [vmem:[%s3424 + $0x60] sm:$0xff]
        %v7317 = vld [vmem:[%s3424 + $0x68] sm:$0xf]
        %v7318 = vld [vmem:[%s3424 + $0x6c] sm:$0xff]
        %v7319 = vld [vmem:[%s3424 + $0x74] sm:$0xf]
        %v7320 = vld [vmem:[%s3424 + $0x78] sm:$0xff]
        %v7321 = vld [vmem:[%s3424 + $0x80] sm:$0xf]
        %v7322 = vld [vmem:[%s3424 + $0x84] sm:$0xff]
        %v7323 = vld [vmem:[%s3424 + $0x8c] sm:$0xf]
        %v7324 = vld [vmem:[%s3424 + $0x90] sm:$0xff]
        %v7325 = vld [vmem:[%s3424 + $0x98] sm:$0xf]
        %v7326 = vld [vmem:[%s3424 + $0x9c] sm:$0xff]
        %v7327 = vld [vmem:[%s3424 + $0xa4] sm:$0xf]
        %v7328 = vld [vmem:[%s3424 + $0xa8] sm:$0xff]
        %v7329 = vld [vmem:[%s3424 + $0xb0] sm:$0xf]
        %v7330 = vld [vmem:[%s3424 + $0xb4] sm:$0xff]
        %v7331 = vld [vmem:[%s3424 + $0xbc] sm:$0xf]
        %v7332 = vld [vmem:[%s3424 + $0xc0] sm:$0xff]
        %v7333 = vld [vmem:[%s3424 + $0xc8] sm:$0xf]
        %v7334 = vld [vmem:[%s3424 + $0xcc] sm:$0xff]
        %v7335 = vld [vmem:[%s3424 + $0xd4] sm:$0xf]
        %v7336 = vld [vmem:[%s3424 + $0xd8] sm:$0xff]
        %v7337 = vld [vmem:[%s3424 + $0xe0] sm:$0xf]
        %v7338 = vld [vmem:[%s3424 + $0xe4] sm:$0xff]
        %v7339 = vld [vmem:[%s3424 + $0xec] sm:$0xf]
        %v7340 = vld [vmem:[%s3424 + $0xf0] sm:$0xff]
        %v7341 = vld [vmem:[%s3424 + $0xf8] sm:$0xf]
        %v7342 = vld [vmem:[%s3424 + $0xfc] sm:$0xff]
        %v7343 = vld [vmem:[%s3424 + $0x104] sm:$0xf]
        %v7344 = vld [vmem:[%s3424 + $0x108] sm:$0xff]
        %v7345 = vld [vmem:[%s3424 + $0x110] sm:$0xf]
        %v7346 = vld [vmem:[%s3424 + $0x114] sm:$0xff]
        %v7347 = vld [vmem:[%s3424 + $0x11c] sm:$0xf]
        %v7348 = vld [vmem:[%s3424 + $0x120] sm:$0xff]
        %v7349 = vld [vmem:[%s3424 + $0x128] sm:$0xf]
        %v7350 = vld [vmem:[%s3424 + $0x12c] sm:$0xff]
        %v7351 = vld [vmem:[%s3424 + $0x134] sm:$0xf]
        %v7352 = vld [vmem:[%s3424 + $0x138] sm:$0xff]
        %v7353 = vld [vmem:[%s3424 + $0x140] sm:$0xf]
        %v7354 = vld [vmem:[%s3424 + $0x144] sm:$0xff]
        %v7355 = vld [vmem:[%s3424 + $0x14c] sm:$0xf]
        %v7356 = vld [vmem:[%s3424 + $0x150] sm:$0xff]
        %v7357 = vld [vmem:[%s3424 + $0x158] sm:$0xf]
        %v7358 = vld [vmem:[%s3424 + $0x15c] sm:$0xff]
        %v7359 = vld [vmem:[%s3424 + $0x164] sm:$0xf]
        %v7360 = vld [vmem:[%s3424 + $0x168] sm:$0xff]
        %v7361 = vld [vmem:[%s3424 + $0x170] sm:$0xf]
        %v7362 = vld [vmem:[%s3424 + $0x174] sm:$0xff]
        %v7363 = vld [vmem:[%s3424 + $0x17c] sm:$0xf]
        %s7364 = scalar_lea.vmem [#allocation9], 384
        %v7365 = vld [vmem:[%s7364] sm:$0xf]
        %v7366 = vld [vmem:[%s7364 + $0x4] sm:$0xf]
        %v7367 = vld [vmem:[%s7364 + $0x8] sm:$0xf]
        %v7368 = vld [vmem:[%s7364 + $0xc] sm:$0xf]
        %v7369 = vld [vmem:[%s7364 + $0x10] sm:$0xf]
        %v7370 = vld [vmem:[%s7364 + $0x14] sm:$0xf]
        %v7371 = vld [vmem:[%s7364 + $0x18] sm:$0xf]
        %v7372 = vld [vmem:[%s7364 + $0x1c] sm:$0xf]
        %v7373 = vld [vmem:[%s7364 + $0x20] sm:$0xf]
        %v7374 = vld [vmem:[%s7364 + $0x24] sm:$0xf]
        %v7375 = vld [vmem:[%s7364 + $0x28] sm:$0xf]
        %v7376 = vld [vmem:[%s7364 + $0x2c] sm:$0xf]
        %v7377 = vld [vmem:[%s7364 + $0x30] sm:$0xf]
        %v7378 = vld [vmem:[%s7364 + $0x34] sm:$0xf]
        %v7379 = vld [vmem:[%s7364 + $0x38] sm:$0xf]
        %v7380 = vld [vmem:[%s7364 + $0x3c] sm:$0xf]
        %v7381 = vld [vmem:[%s7364 + $0x40] sm:$0xf]
        %v7382 = vld [vmem:[%s7364 + $0x44] sm:$0xf]
        %v7383 = vld [vmem:[%s7364 + $0x48] sm:$0xf]
        %v7384 = vld [vmem:[%s7364 + $0x4c] sm:$0xf]
        %v7385 = vld [vmem:[%s7364 + $0x50] sm:$0xf]
        %v7386 = vld [vmem:[%s7364 + $0x54] sm:$0xf]
        %v7387 = vld [vmem:[%s7364 + $0x58] sm:$0xf]
        %v7388 = vld [vmem:[%s7364 + $0x5c] sm:$0xf]
        %v7389 = vld [vmem:[%s7364 + $0x60] sm:$0xf]
        %v7390 = vld [vmem:[%s7364 + $0x64] sm:$0xf]
        %v7391 = vld [vmem:[%s7364 + $0x68] sm:$0xf]
        %v7392 = vld [vmem:[%s7364 + $0x6c] sm:$0xf]
        %v7393 = vld [vmem:[%s7364 + $0x70] sm:$0xf]
        %v7394 = vld [vmem:[%s7364 + $0x74] sm:$0xf]
        %v7395 = vld [vmem:[%s7364 + $0x78] sm:$0xf]
        %v7396 = vld [vmem:[%s7364 + $0x7c] sm:$0xf]
        %v7397 = vld [vmem:[%s7364 + $0x80] sm:$0xf]
        %v7398 = vld [vmem:[%s7364 + $0x84] sm:$0xf]
        %v7399 = vld [vmem:[%s7364 + $0x88] sm:$0xf]
        %v7400 = vld [vmem:[%s7364 + $0x8c] sm:$0xf]
        %v7401 = vld [vmem:[%s7364 + $0x90] sm:$0xf]
        %v7402 = vld [vmem:[%s7364 + $0x94] sm:$0xf]
        %v7403 = vld [vmem:[%s7364 + $0x98] sm:$0xf]
        %v7404 = vld [vmem:[%s7364 + $0x9c] sm:$0xf]
        %v7405 = vld [vmem:[%s7364 + $0xa0] sm:$0xf]
        %v7406 = vld [vmem:[%s7364 + $0xa4] sm:$0xf]
        %v7407 = vld [vmem:[%s7364 + $0xa8] sm:$0xf]
        %v7408 = vld [vmem:[%s7364 + $0xac] sm:$0xf]
        %v7409 = vld [vmem:[%s7364 + $0xb0] sm:$0xf]
        %v7410 = vld [vmem:[%s7364 + $0xb4] sm:$0xf]
        %v7411 = vld [vmem:[%s7364 + $0xb8] sm:$0xf]
        %v7412 = vld [vmem:[%s7364 + $0xbc] sm:$0xf]
        %v7477 = vunpack.c.l.b16 %v7300
        %v7478 = vunpack.c.h.b16 %v7300
        %v7479 = vunpack.c.l.b16 %v7301
        %v7480 = vunpack.c.l.b16 %v7302
        %v7481 = vunpack.c.h.b16 %v7302
        %v7482 = vunpack.c.l.b16 %v7303
        %v7483 = vunpack.c.l.b16 %v7304
        %v7484 = vunpack.c.h.b16 %v7304
        %v7485 = vunpack.c.l.b16 %v7305
        %v7486 = vunpack.c.l.b16 %v7306
        %v7487 = vunpack.c.h.b16 %v7306
        %v7488 = vunpack.c.l.b16 %v7307
        %v7489 = vunpack.c.l.b16 %v7308
        %v7490 = vunpack.c.h.b16 %v7308
        %v7491 = vunpack.c.l.b16 %v7309
        %v7492 = vunpack.c.l.b16 %v7310
        %v7493 = vunpack.c.h.b16 %v7310
        %v7494 = vunpack.c.l.b16 %v7311
        %v7495 = vunpack.c.l.b16 %v7312
        %v7496 = vunpack.c.h.b16 %v7312
        %v7497 = vunpack.c.l.b16 %v7313
        %v7498 = vunpack.c.l.b16 %v7314
        %v7499 = vunpack.c.h.b16 %v7314
        %v7500 = vunpack.c.l.b16 %v7315
        %v7501 = vunpack.c.l.b16 %v7316
        %v7502 = vunpack.c.h.b16 %v7316
        %v7503 = vunpack.c.l.b16 %v7317
        %v7504 = vunpack.c.l.b16 %v7318
        %v7505 = vunpack.c.h.b16 %v7318
        %v7506 = vunpack.c.l.b16 %v7319
        %v7507 = vunpack.c.l.b16 %v7320
        %v7508 = vunpack.c.h.b16 %v7320
        %v7509 = vunpack.c.l.b16 %v7321
        %v7510 = vunpack.c.l.b16 %v7322
        %v7511 = vunpack.c.h.b16 %v7322
        %v7512 = vunpack.c.l.b16 %v7323
        %v7513 = vunpack.c.l.b16 %v7324
        %v7514 = vunpack.c.h.b16 %v7324
        %v7515 = vunpack.c.l.b16 %v7325
        %v7516 = vunpack.c.l.b16 %v7326
        %v7517 = vunpack.c.h.b16 %v7326
        %v7518 = vunpack.c.l.b16 %v7327
        %v7519 = vunpack.c.l.b16 %v7328
        %v7520 = vunpack.c.h.b16 %v7328
        %v7521 = vunpack.c.l.b16 %v7329
        %v7522 = vunpack.c.l.b16 %v7330
        %v7523 = vunpack.c.h.b16 %v7330
        %v7524 = vunpack.c.l.b16 %v7331
        %v7525 = vunpack.c.l.b16 %v7332
        %v7526 = vunpack.c.h.b16 %v7332
        %v7527 = vunpack.c.l.b16 %v7333
        %v7528 = vunpack.c.l.b16 %v7334
        %v7529 = vunpack.c.h.b16 %v7334
        %v7530 = vunpack.c.l.b16 %v7335
        %v7531 = vunpack.c.l.b16 %v7336
        %v7532 = vunpack.c.h.b16 %v7336
        %v7533 = vunpack.c.l.b16 %v7337
        %v7534 = vunpack.c.l.b16 %v7338
        %v7535 = vunpack.c.h.b16 %v7338
        %v7536 = vunpack.c.l.b16 %v7339
        %v7537 = vunpack.c.l.b16 %v7340
        %v7538 = vunpack.c.h.b16 %v7340
        %v7539 = vunpack.c.l.b16 %v7341
        %v7540 = vunpack.c.l.b16 %v7342
        %v7541 = vunpack.c.h.b16 %v7342
        %v7542 = vunpack.c.l.b16 %v7343
        %v7543 = vunpack.c.l.b16 %v7344
        %v7544 = vunpack.c.h.b16 %v7344
        %v7545 = vunpack.c.l.b16 %v7345
        %v7546 = vunpack.c.l.b16 %v7346
        %v7547 = vunpack.c.h.b16 %v7346
        %v7548 = vunpack.c.l.b16 %v7347
        %v7549 = vunpack.c.l.b16 %v7348
        %v7550 = vunpack.c.h.b16 %v7348
        %v7551 = vunpack.c.l.b16 %v7349
        %v7552 = vunpack.c.l.b16 %v7350
        %v7553 = vunpack.c.h.b16 %v7350
        %v7554 = vunpack.c.l.b16 %v7351
        %v7555 = vunpack.c.l.b16 %v7352
        %v7556 = vunpack.c.h.b16 %v7352
        %v7557 = vunpack.c.l.b16 %v7353
        %v7558 = vunpack.c.l.b16 %v7354
        %v7559 = vunpack.c.h.b16 %v7354
        %v7560 = vunpack.c.l.b16 %v7355
        %v7561 = vunpack.c.l.b16 %v7356
        %v7562 = vunpack.c.h.b16 %v7356
        %v7563 = vunpack.c.l.b16 %v7357
        %v7564 = vunpack.c.l.b16 %v7358
        %v7565 = vunpack.c.h.b16 %v7358
        %v7566 = vunpack.c.l.b16 %v7359
        %v7567 = vunpack.c.l.b16 %v7360
        %v7568 = vunpack.c.h.b16 %v7360
        %v7569 = vunpack.c.l.b16 %v7361
        %v7570 = vunpack.c.l.b16 %v7362
        %v7571 = vunpack.c.h.b16 %v7362
        %v7572 = vunpack.c.l.b16 %v7363
        %v7573 = vpack.c.b16 %v7480, %v7477
        %v7574 = vpack.c.b16 %v7481, %v7478
        %v7575 = vpack.c.b16 %v7482, %v7479
        %v7576 = vpack.c.b16 %v7486, %v7483
        %v7577 = vpack.c.b16 %v7487, %v7484
        %v7578 = vpack.c.b16 %v7488, %v7485
        %v7579 = vpack.c.b16 %v7492, %v7489
        %v7580 = vpack.c.b16 %v7493, %v7490
        %v7581 = vpack.c.b16 %v7494, %v7491
        %v7582 = vpack.c.b16 %v7498, %v7495
        %v7583 = vpack.c.b16 %v7499, %v7496
        %v7584 = vpack.c.b16 %v7500, %v7497
        %v7585 = vpack.c.b16 %v7504, %v7501
        %v7586 = vpack.c.b16 %v7505, %v7502
        %v7587 = vpack.c.b16 %v7506, %v7503
        %v7588 = vpack.c.b16 %v7510, %v7507
        %v7589 = vpack.c.b16 %v7511, %v7508
        %v7590 = vpack.c.b16 %v7512, %v7509
        %v7591 = vpack.c.b16 %v7516, %v7513
        %v7592 = vpack.c.b16 %v7517, %v7514
        %v7593 = vpack.c.b16 %v7518, %v7515
        %v7594 = vpack.c.b16 %v7522, %v7519
        %v7595 = vpack.c.b16 %v7523, %v7520
        %v7596 = vpack.c.b16 %v7524, %v7521
        %v7597 = vpack.c.b16 %v7528, %v7525
        %v7598 = vpack.c.b16 %v7529, %v7526
        %v7599 = vpack.c.b16 %v7530, %v7527
        %v7600 = vpack.c.b16 %v7534, %v7531
        %v7601 = vpack.c.b16 %v7535, %v7532
        %v7602 = vpack.c.b16 %v7536, %v7533
        %v7603 = vpack.c.b16 %v7540, %v7537
        %v7604 = vpack.c.b16 %v7541, %v7538
        %v7605 = vpack.c.b16 %v7542, %v7539
        %v7606 = vpack.c.b16 %v7546, %v7543
        %v7607 = vpack.c.b16 %v7547, %v7544
        %v7608 = vpack.c.b16 %v7548, %v7545
        %v7609 = vpack.c.b16 %v7552, %v7549
        %v7610 = vpack.c.b16 %v7553, %v7550
        %v7611 = vpack.c.b16 %v7554, %v7551
        %v7612 = vpack.c.b16 %v7558, %v7555
        %v7613 = vpack.c.b16 %v7559, %v7556
        %v7614 = vpack.c.b16 %v7560, %v7557
        %v7615 = vpack.c.b16 %v7564, %v7561
        %v7616 = vpack.c.b16 %v7565, %v7562
        %v7617 = vpack.c.b16 %v7566, %v7563
        %v7618 = vpack.c.b16 %v7570, %v7567
        %v7619 = vpack.c.b16 %v7571, %v7568
        %v7620 = vpack.c.b16 %v7572, %v7569
        %v7717 = vunpack.c.l.b16 %v7365
        %v7718 = vunpack.c.l.b16 %v7366
        %v7719 = vunpack.c.l.b16 %v7367
        %v7720 = vunpack.c.l.b16 %v7368
        %v7721 = vunpack.c.l.b16 %v7369
        %v7722 = vunpack.c.l.b16 %v7370
        %v7723 = vunpack.c.l.b16 %v7371
        %v7724 = vunpack.c.l.b16 %v7372
        %v7725 = vunpack.c.l.b16 %v7373
        %v7726 = vunpack.c.l.b16 %v7374
        %v7727 = vunpack.c.l.b16 %v7375
        %v7728 = vunpack.c.l.b16 %v7376
        %v7729 = vunpack.c.l.b16 %v7377
        %v7730 = vunpack.c.l.b16 %v7378
        %v7731 = vunpack.c.l.b16 %v7379
        %v7732 = vunpack.c.l.b16 %v7380
        %v7733 = vunpack.c.l.b16 %v7381
        %v7734 = vunpack.c.l.b16 %v7382
        %v7735 = vunpack.c.l.b16 %v7383
        %v7736 = vunpack.c.l.b16 %v7384
        %v7737 = vunpack.c.l.b16 %v7385
        %v7738 = vunpack.c.l.b16 %v7386
        %v7739 = vunpack.c.l.b16 %v7387
        %v7740 = vunpack.c.l.b16 %v7388
        %v7741 = vunpack.c.l.b16 %v7389
        %v7742 = vunpack.c.l.b16 %v7390
        %v7743 = vunpack.c.l.b16 %v7391
        %v7744 = vunpack.c.l.b16 %v7392
        %v7745 = vunpack.c.l.b16 %v7393
        %v7746 = vunpack.c.l.b16 %v7394
        %v7747 = vunpack.c.l.b16 %v7395
        %v7748 = vunpack.c.l.b16 %v7396
        %v7749 = vunpack.c.l.b16 %v7397
        %v7750 = vunpack.c.l.b16 %v7398
        %v7751 = vunpack.c.l.b16 %v7399
        %v7752 = vunpack.c.l.b16 %v7400
        %v7753 = vunpack.c.l.b16 %v7401
        %v7754 = vunpack.c.l.b16 %v7402
        %v7755 = vunpack.c.l.b16 %v7403
        %v7756 = vunpack.c.l.b16 %v7404
        %v7757 = vunpack.c.l.b16 %v7405
        %v7758 = vunpack.c.l.b16 %v7406
        %v7759 = vunpack.c.l.b16 %v7407
        %v7760 = vunpack.c.l.b16 %v7408
        %v7761 = vunpack.c.l.b16 %v7409
        %v7762 = vunpack.c.l.b16 %v7410
        %v7763 = vunpack.c.l.b16 %v7411
        %v7764 = vunpack.c.l.b16 %v7412
        %v7765 = vpack.c.b16 %v7718, %v7717
        %v7766 = vpack.c.b16 %v7720, %v7719
        %v7767 = vpack.c.b16 %v7722, %v7721
        %v7768 = vpack.c.b16 %v7724, %v7723
        %v7769 = vpack.c.b16 %v7726, %v7725
        %v7770 = vpack.c.b16 %v7728, %v7727
        %v7771 = vpack.c.b16 %v7730, %v7729
        %v7772 = vpack.c.b16 %v7732, %v7731
        %v7773 = vpack.c.b16 %v7734, %v7733
        %v7774 = vpack.c.b16 %v7736, %v7735
        %v7775 = vpack.c.b16 %v7738, %v7737
        %v7776 = vpack.c.b16 %v7740, %v7739
        %v7777 = vpack.c.b16 %v7742, %v7741
        %v7778 = vpack.c.b16 %v7744, %v7743
        %v7779 = vpack.c.b16 %v7746, %v7745
        %v7780 = vpack.c.b16 %v7748, %v7747
        %v7781 = vpack.c.b16 %v7750, %v7749
        %v7782 = vpack.c.b16 %v7752, %v7751
        %v7783 = vpack.c.b16 %v7754, %v7753
        %v7784 = vpack.c.b16 %v7756, %v7755
        %v7785 = vpack.c.b16 %v7758, %v7757
        %v7786 = vpack.c.b16 %v7760, %v7759
        %v7787 = vpack.c.b16 %v7762, %v7761
        %v7788 = vpack.c.b16 %v7764, %v7763
        %7813 = vmatpush.bf16.msra.mxu0 %v7772
        %7814 = vmatpush.bf16.msra.mxu0 %v7771
        %7815 = vmatpush.bf16.msra.mxu0 %v7770
        %7816 = vmatpush.bf16.msra.mxu0 %v7769
        %7817 = vmatpush.bf16.msra.mxu0 %v7768
        %7818 = vmatpush.bf16.msra.mxu0 %v7767
        %7819 = vmatpush.bf16.msra.mxu0 %v7766
        %7820 = vmatpush.bf16.msra.mxu0 %v7765
        %7821 = vmatmul.bf16.gmra.mxu0 %v7573
        %v7822 = vpop.f32.mrf.mxu0
        %v7823 = vadd.f32 0.0, %v7822
        %v7824 = vpop.f32.mrf.mxu0
        %v7825 = vadd.f32 0.0, %v7824
        %7826 = vmatmul.bf16.gmra.mxu0 %v7576
        %v7827 = vpop.f32.mrf.mxu0
        %v7828 = vadd.f32 0.0, %v7827
        %v7829 = vpop.f32.mrf.mxu0
        %v7830 = vadd.f32 0.0, %v7829
        %7831 = vmatmul.bf16.gmra.mxu0 %v7579
        %v7832 = vpop.f32.mrf.mxu0
        %v7833 = vadd.f32 0.0, %v7832
        %v7834 = vpop.f32.mrf.mxu0
        %v7835 = vadd.f32 0.0, %v7834
        %7836 = vmatmul.bf16.gmra.mxu0 %v7582
        %v7837 = vpop.f32.mrf.mxu0
        %v7838 = vadd.f32 0.0, %v7837
        %v7839 = vpop.f32.mrf.mxu0
        %v7840 = vadd.f32 0.0, %v7839
        %7841 = vmatmul.bf16.gmra.mxu0 %v7585
        %v7842 = vpop.f32.mrf.mxu0
        %v7843 = vadd.f32 0.0, %v7842
        %v7844 = vpop.f32.mrf.mxu0
        %v7845 = vadd.f32 0.0, %v7844
        %7846 = vmatmul.bf16.gmra.mxu0 %v7588
        %v7847 = vpop.f32.mrf.mxu0
        %v7848 = vadd.f32 0.0, %v7847
        %v7849 = vpop.f32.mrf.mxu0
        %v7850 = vadd.f32 0.0, %v7849
        %7851 = vmatmul.bf16.gmra.mxu0 %v7591
        %v7852 = vpop.f32.mrf.mxu0
        %v7853 = vadd.f32 0.0, %v7852
        %v7854 = vpop.f32.mrf.mxu0
        %v7855 = vadd.f32 0.0, %v7854
        %7856 = vmatmul.bf16.gmra.mxu0 %v7594
        %v7857 = vpop.f32.mrf.mxu0
        %v7858 = vadd.f32 0.0, %v7857
        %v7859 = vpop.f32.mrf.mxu0
        %v7860 = vadd.f32 0.0, %v7859
        %7861 = vmatmul.bf16.gmra.mxu0 %v7597
        %v7862 = vpop.f32.mrf.mxu0
        %v7863 = vadd.f32 0.0, %v7862
        %v7864 = vpop.f32.mrf.mxu0
        %v7865 = vadd.f32 0.0, %v7864
        %7866 = vmatmul.bf16.gmra.mxu0 %v7600
        %v7867 = vpop.f32.mrf.mxu0
        %v7868 = vadd.f32 0.0, %v7867
        %v7869 = vpop.f32.mrf.mxu0
        %v7870 = vadd.f32 0.0, %v7869
        %7871 = vmatmul.bf16.gmra.mxu0 %v7603
        %v7872 = vpop.f32.mrf.mxu0
        %v7873 = vadd.f32 0.0, %v7872
        %v7874 = vpop.f32.mrf.mxu0
        %v7875 = vadd.f32 0.0, %v7874
        %7876 = vmatmul.bf16.gmra.mxu0 %v7606
        %v7877 = vpop.f32.mrf.mxu0
        %v7878 = vadd.f32 0.0, %v7877
        %v7879 = vpop.f32.mrf.mxu0
        %v7880 = vadd.f32 0.0, %v7879
        %7881 = vmatmul.bf16.gmra.mxu0 %v7609
        %v7882 = vpop.f32.mrf.mxu0
        %v7883 = vadd.f32 0.0, %v7882
        %v7884 = vpop.f32.mrf.mxu0
        %v7885 = vadd.f32 0.0, %v7884
        %7886 = vmatmul.bf16.gmra.mxu0 %v7612
        %v7887 = vpop.f32.mrf.mxu0
        %v7888 = vadd.f32 0.0, %v7887
        %v7889 = vpop.f32.mrf.mxu0
        %v7890 = vadd.f32 0.0, %v7889
        %7891 = vmatmul.bf16.gmra.mxu0 %v7615
        %v7892 = vpop.f32.mrf.mxu0
        %v7893 = vadd.f32 0.0, %v7892
        %v7894 = vpop.f32.mrf.mxu0
        %v7895 = vadd.f32 0.0, %v7894
        %7896 = vmatmul.bf16.gmra.mxu0 %v7618
        %v7897 = vpop.f32.mrf.mxu0
        %v7898 = vadd.f32 0.0, %v7897
        %v7899 = vpop.f32.mrf.mxu0
        %v7900 = vadd.f32 0.0, %v7899
        %7901 = vdwg.mxu0
        %7902 = vmatpush.bf16.msra.mxu0 %v7780
        %7903 = vmatpush.bf16.msra.mxu0 %v7779
        %7904 = vmatpush.bf16.msra.mxu0 %v7778
        %7905 = vmatpush.bf16.msra.mxu0 %v7777
        %7906 = vmatpush.bf16.msra.mxu0 %v7776
        %7907 = vmatpush.bf16.msra.mxu0 %v7775
        %7908 = vmatpush.bf16.msra.mxu0 %v7774
        %7909 = vmatpush.bf16.msra.mxu0 %v7773
        %7910 = vmatmul.bf16.gmra.mxu0 %v7574
        %v7911 = vpop.f32.mrf.mxu0
        %v7912 = vadd.f32 %v7823, %v7911
        %v7913 = vpop.f32.mrf.mxu0
        %v7914 = vadd.f32 %v7825, %v7913
        %7915 = vmatmul.bf16.gmra.mxu0 %v7577
        %v7916 = vpop.f32.mrf.mxu0
        %v7917 = vadd.f32 %v7828, %v7916
        %v7918 = vpop.f32.mrf.mxu0
        %v7919 = vadd.f32 %v7830, %v7918
        %7920 = vmatmul.bf16.gmra.mxu0 %v7580
        %v7921 = vpop.f32.mrf.mxu0
        %v7922 = vadd.f32 %v7833, %v7921
        %v7923 = vpop.f32.mrf.mxu0
        %v7924 = vadd.f32 %v7835, %v7923
        %7925 = vmatmul.bf16.gmra.mxu0 %v7583
        %v7926 = vpop.f32.mrf.mxu0
        %v7927 = vadd.f32 %v7838, %v7926
        %v7928 = vpop.f32.mrf.mxu0
        %v7929 = vadd.f32 %v7840, %v7928
        %7930 = vmatmul.bf16.gmra.mxu0 %v7586
        %v7931 = vpop.f32.mrf.mxu0
        %v7932 = vadd.f32 %v7843, %v7931
        %v7933 = vpop.f32.mrf.mxu0
        %v7934 = vadd.f32 %v7845, %v7933
        %7935 = vmatmul.bf16.gmra.mxu0 %v7589
        %v7936 = vpop.f32.mrf.mxu0
        %v7937 = vadd.f32 %v7848, %v7936
        %v7938 = vpop.f32.mrf.mxu0
        %v7939 = vadd.f32 %v7850, %v7938
        %7940 = vmatmul.bf16.gmra.mxu0 %v7592
        %v7941 = vpop.f32.mrf.mxu0
        %v7942 = vadd.f32 %v7853, %v7941
        %v7943 = vpop.f32.mrf.mxu0
        %v7944 = vadd.f32 %v7855, %v7943
        %7945 = vmatmul.bf16.gmra.mxu0 %v7595
        %v7946 = vpop.f32.mrf.mxu0
        %v7947 = vadd.f32 %v7858, %v7946
        %v7948 = vpop.f32.mrf.mxu0
        %v7949 = vadd.f32 %v7860, %v7948
        %7950 = vmatmul.bf16.gmra.mxu0 %v7598
        %v7951 = vpop.f32.mrf.mxu0
        %v7952 = vadd.f32 %v7863, %v7951
        %v7953 = vpop.f32.mrf.mxu0
        %v7954 = vadd.f32 %v7865, %v7953
        %7955 = vmatmul.bf16.gmra.mxu0 %v7601
        %v7956 = vpop.f32.mrf.mxu0
        %v7957 = vadd.f32 %v7868, %v7956
        %v7958 = vpop.f32.mrf.mxu0
        %v7959 = vadd.f32 %v7870, %v7958
        %7960 = vmatmul.bf16.gmra.mxu0 %v7604
        %v7961 = vpop.f32.mrf.mxu0
        %v7962 = vadd.f32 %v7873, %v7961
        %v7963 = vpop.f32.mrf.mxu0
        %v7964 = vadd.f32 %v7875, %v7963
        %7965 = vmatmul.bf16.gmra.mxu0 %v7607
        %v7966 = vpop.f32.mrf.mxu0
        %v7967 = vadd.f32 %v7878, %v7966
        %v7968 = vpop.f32.mrf.mxu0
        %v7969 = vadd.f32 %v7880, %v7968
        %7970 = vmatmul.bf16.gmra.mxu0 %v7610
        %v7971 = vpop.f32.mrf.mxu0
        %v7972 = vadd.f32 %v7883, %v7971
        %v7973 = vpop.f32.mrf.mxu0
        %v7974 = vadd.f32 %v7885, %v7973
        %7975 = vmatmul.bf16.gmra.mxu0 %v7613
        %v7976 = vpop.f32.mrf.mxu0
        %v7977 = vadd.f32 %v7888, %v7976
        %v7978 = vpop.f32.mrf.mxu0
        %v7979 = vadd.f32 %v7890, %v7978
        %7980 = vmatmul.bf16.gmra.mxu0 %v7616
        %v7981 = vpop.f32.mrf.mxu0
        %v7982 = vadd.f32 %v7893, %v7981
        %v7983 = vpop.f32.mrf.mxu0
        %v7984 = vadd.f32 %v7895, %v7983
        %7985 = vmatmul.bf16.gmra.mxu0 %v7619
        %v7986 = vpop.f32.mrf.mxu0
        %v7987 = vadd.f32 %v7898, %v7986
        %v7988 = vpop.f32.mrf.mxu0
        %v7989 = vadd.f32 %v7900, %v7988
        %7990 = vdwg.mxu0
        %7991 = vmatpush.bf16.msra.mxu0 %v7788
        %7992 = vmatpush.bf16.msra.mxu0 %v7787
        %7993 = vmatpush.bf16.msra.mxu0 %v7786
        %7994 = vmatpush.bf16.msra.mxu0 %v7785
        %7995 = vmatpush.bf16.msra.mxu0 %v7784
        %7996 = vmatpush.bf16.msra.mxu0 %v7783
        %7997 = vmatpush.bf16.msra.mxu0 %v7782
        %7998 = vmatpush.bf16.msra.mxu0 %v7781
        %7999 = vmatmul.bf16.gmra.mxu0 %v7575
        %v8000 = vpop.f32.mrf.mxu0
        %v8001 = vadd.f32 %v7912, %v8000
        %v8002 = vpop.f32.mrf.mxu0
        %v8003 = vadd.f32 %v7914, %v8002
        %8004 = vmatmul.bf16.gmra.mxu0 %v7578
        %v8005 = vpop.f32.mrf.mxu0
        %v8006 = vadd.f32 %v7917, %v8005
        %v8007 = vpop.f32.mrf.mxu0
        %v8008 = vadd.f32 %v7919, %v8007
        %8009 = vmatmul.bf16.gmra.mxu0 %v7581
        %v8010 = vpop.f32.mrf.mxu0
        %v8011 = vadd.f32 %v7922, %v8010
        %v8012 = vpop.f32.mrf.mxu0
        %v8013 = vadd.f32 %v7924, %v8012
        %8014 = vmatmul.bf16.gmra.mxu0 %v7584
        %v8015 = vpop.f32.mrf.mxu0
        %v8016 = vadd.f32 %v7927, %v8015
        %v8017 = vpop.f32.mrf.mxu0
        %v8018 = vadd.f32 %v7929, %v8017
        %8019 = vmatmul.bf16.gmra.mxu0 %v7587
        %v8020 = vpop.f32.mrf.mxu0
        %v8021 = vadd.f32 %v7932, %v8020
        %v8022 = vpop.f32.mrf.mxu0
        %v8023 = vadd.f32 %v7934, %v8022
        %8024 = vmatmul.bf16.gmra.mxu0 %v7590
        %v8025 = vpop.f32.mrf.mxu0
        %v8026 = vadd.f32 %v7937, %v8025
        %v8027 = vpop.f32.mrf.mxu0
        %v8028 = vadd.f32 %v7939, %v8027
        %8029 = vmatmul.bf16.gmra.mxu0 %v7593
        %v8030 = vpop.f32.mrf.mxu0
        %v8031 = vadd.f32 %v7942, %v8030
        %v8032 = vpop.f32.mrf.mxu0
        %v8033 = vadd.f32 %v7944, %v8032
        %8034 = vmatmul.bf16.gmra.mxu0 %v7596
        %v8035 = vpop.f32.mrf.mxu0
        %v8036 = vadd.f32 %v7947, %v8035
        %v8037 = vpop.f32.mrf.mxu0
        %v8038 = vadd.f32 %v7949, %v8037
        %8039 = vmatmul.bf16.gmra.mxu0 %v7599
        %v8040 = vpop.f32.mrf.mxu0
        %v8041 = vadd.f32 %v7952, %v8040
        %v8042 = vpop.f32.mrf.mxu0
        %v8043 = vadd.f32 %v7954, %v8042
        %8044 = vmatmul.bf16.gmra.mxu0 %v7602
        %v8045 = vpop.f32.mrf.mxu0
        %v8046 = vadd.f32 %v7957, %v8045
        %v8047 = vpop.f32.mrf.mxu0
        %v8048 = vadd.f32 %v7959, %v8047
        %8049 = vmatmul.bf16.gmra.mxu0 %v7605
        %v8050 = vpop.f32.mrf.mxu0
        %v8051 = vadd.f32 %v7962, %v8050
        %v8052 = vpop.f32.mrf.mxu0
        %v8053 = vadd.f32 %v7964, %v8052
        %8054 = vmatmul.bf16.gmra.mxu0 %v7608
        %v8055 = vpop.f32.mrf.mxu0
        %v8056 = vadd.f32 %v7967, %v8055
        %v8057 = vpop.f32.mrf.mxu0
        %v8058 = vadd.f32 %v7969, %v8057
        %8059 = vmatmul.bf16.gmra.mxu0 %v7611
        %v8060 = vpop.f32.mrf.mxu0
        %v8061 = vadd.f32 %v7972, %v8060
        %v8062 = vpop.f32.mrf.mxu0
        %v8063 = vadd.f32 %v7974, %v8062
        %8064 = vmatmul.bf16.gmra.mxu0 %v7614
        %v8065 = vpop.f32.mrf.mxu0
        %v8066 = vadd.f32 %v7977, %v8065
        %v8067 = vpop.f32.mrf.mxu0
        %v8068 = vadd.f32 %v7979, %v8067
        %8069 = vmatmul.bf16.gmra.mxu0 %v7617
        %v8070 = vpop.f32.mrf.mxu0
        %v8071 = vadd.f32 %v7982, %v8070
        %v8072 = vpop.f32.mrf.mxu0
        %v8073 = vadd.f32 %v7984, %v8072
        %8074 = vmatmul.bf16.gmra.mxu0 %v7620
        %v8075 = vpop.f32.mrf.mxu0
        %v8076 = vadd.f32 %v7987, %v8075
        %v8077 = vpop.f32.mrf.mxu0
        %v8078 = vadd.f32 %v7989, %v8077
        %8079 = vdwg.mxu0
        %v8080 = vadd.f32 %v7221, %v8001
        %v8081 = vadd.f32 %v7223, %v8003
        %v8082 = vadd.f32 %v7226, %v8006
        %v8083 = vadd.f32 %v7228, %v8008
        %v8084 = vadd.f32 %v7231, %v8011
        %v8085 = vadd.f32 %v7233, %v8013
        %v8086 = vadd.f32 %v7236, %v8016
        %v8087 = vadd.f32 %v7238, %v8018
        %v8088 = vadd.f32 %v7241, %v8021
        %v8089 = vadd.f32 %v7243, %v8023
        %v8090 = vadd.f32 %v7246, %v8026
        %v8091 = vadd.f32 %v7248, %v8028
        %v8092 = vadd.f32 %v7251, %v8031
        %v8093 = vadd.f32 %v7253, %v8033
        %v8094 = vadd.f32 %v7256, %v8036
        %v8095 = vadd.f32 %v7258, %v8038
        %v8096 = vadd.f32 %v7261, %v8041
        %v8097 = vadd.f32 %v7263, %v8043
        %v8098 = vadd.f32 %v7266, %v8046
        %v8099 = vadd.f32 %v7268, %v8048
        %v8100 = vadd.f32 %v7271, %v8051
        %v8101 = vadd.f32 %v7273, %v8053
        %v8102 = vadd.f32 %v7276, %v8056
        %v8103 = vadd.f32 %v7278, %v8058
        %v8104 = vadd.f32 %v7281, %v8061
        %v8105 = vadd.f32 %v7283, %v8063
        %v8106 = vadd.f32 %v7286, %v8066
        %v8107 = vadd.f32 %v7288, %v8068
        %v8108 = vadd.f32 %v7291, %v8071
        %v8109 = vadd.f32 %v7293, %v8073
        %v8110 = vadd.f32 %v7296, %v8076
        %v8111 = vadd.f32 %v7298, %v8078
        %v8112 = vld [vmem:[%s5] sm:$0x1]
        %v8114 = vperm.slane %v8112, 0
        %v8116 = vmul.f32 %v8080, %v8114
        %v8117 = vmul.f32 %v8081, %v8114
        %v8118 = vmul.f32 %v8082, %v8114
        %v8119 = vmul.f32 %v8083, %v8114
        %v8120 = vmul.f32 %v8084, %v8114
        %v8121 = vmul.f32 %v8085, %v8114
        %v8122 = vmul.f32 %v8086, %v8114
        %v8123 = vmul.f32 %v8087, %v8114
        %v8124 = vmul.f32 %v8088, %v8114
        %v8125 = vmul.f32 %v8089, %v8114
        %v8126 = vmul.f32 %v8090, %v8114
        %v8127 = vmul.f32 %v8091, %v8114
        %v8128 = vmul.f32 %v8092, %v8114
        %v8129 = vmul.f32 %v8093, %v8114
        %v8130 = vmul.f32 %v8094, %v8114
        %v8131 = vmul.f32 %v8095, %v8114
        %v8132 = vmul.f32 %v8096, %v8114
        %v8133 = vmul.f32 %v8097, %v8114
        %v8134 = vmul.f32 %v8098, %v8114
        %v8135 = vmul.f32 %v8099, %v8114
        %v8136 = vmul.f32 %v8100, %v8114
        %v8137 = vmul.f32 %v8101, %v8114
        %v8138 = vmul.f32 %v8102, %v8114
        %v8139 = vmul.f32 %v8103, %v8114
        %v8140 = vmul.f32 %v8104, %v8114
        %v8141 = vmul.f32 %v8105, %v8114
        %v8142 = vmul.f32 %v8106, %v8114
        %v8143 = vmul.f32 %v8107, %v8114
        %v8144 = vmul.f32 %v8108, %v8114
        %v8145 = vmul.f32 %v8109, %v8114
        %v8146 = vmul.f32 %v8110, %v8114
        %v8147 = vmul.f32 %v8111, %v8114
        %v8148 = vld [vmem:[%s6] sm:$0x1]
        %v8150 = vperm.slane %v8148, 0
        %v8152 = vadd.f32 %v8116, %v8150
        %v8153 = vadd.f32 %v8117, %v8150
        %v8154 = vadd.f32 %v8118, %v8150
        %v8155 = vadd.f32 %v8119, %v8150
        %v8156 = vadd.f32 %v8120, %v8150
        %v8157 = vadd.f32 %v8121, %v8150
        %v8158 = vadd.f32 %v8122, %v8150
        %v8159 = vadd.f32 %v8123, %v8150
        %v8160 = vadd.f32 %v8124, %v8150
        %v8161 = vadd.f32 %v8125, %v8150
        %v8162 = vadd.f32 %v8126, %v8150
        %v8163 = vadd.f32 %v8127, %v8150
        %v8164 = vadd.f32 %v8128, %v8150
        %v8165 = vadd.f32 %v8129, %v8150
        %v8166 = vadd.f32 %v8130, %v8150
        %v8167 = vadd.f32 %v8131, %v8150
        %v8168 = vadd.f32 %v8132, %v8150
        %v8169 = vadd.f32 %v8133, %v8150
        %v8170 = vadd.f32 %v8134, %v8150
        %v8171 = vadd.f32 %v8135, %v8150
        %v8172 = vadd.f32 %v8136, %v8150
        %v8173 = vadd.f32 %v8137, %v8150
        %v8174 = vadd.f32 %v8138, %v8150
        %v8175 = vadd.f32 %v8139, %v8150
        %v8176 = vadd.f32 %v8140, %v8150
        %v8177 = vadd.f32 %v8141, %v8150
        %v8178 = vadd.f32 %v8142, %v8150
        %v8179 = vadd.f32 %v8143, %v8150
        %v8180 = vadd.f32 %v8144, %v8150
        %v8181 = vadd.f32 %v8145, %v8150
        %v8182 = vadd.f32 %v8146, %v8150
        %v8183 = vadd.f32 %v8147, %v8150
        %v8184 = vld [vmem:[%s290] sm:$0xf]
        %v8185 = vld [vmem:[%s290 + $0x4] sm:$0xf]
        %v8186 = vld [vmem:[%s290 + $0x8] sm:$0xf]
        %v8187 = vld [vmem:[%s290 + $0xc] sm:$0xf]
        %v8188 = vld [vmem:[%s290 + $0x10] sm:$0xf]
        %v8189 = vld [vmem:[%s290 + $0x14] sm:$0xf]
        %v8190 = vld [vmem:[%s290 + $0x18] sm:$0xf]
        %v8191 = vld [vmem:[%s290 + $0x1c] sm:$0xf]
        %v8192 = vld [vmem:[%s290 + $0x20] sm:$0xf]
        %v8193 = vld [vmem:[%s290 + $0x24] sm:$0xf]
        %v8194 = vld [vmem:[%s290 + $0x28] sm:$0xf]
        %v8195 = vld [vmem:[%s290 + $0x2c] sm:$0xf]
        %v8196 = vld [vmem:[%s290 + $0x30] sm:$0xf]
        %v8197 = vld [vmem:[%s290 + $0x34] sm:$0xf]
        %v8198 = vld [vmem:[%s290 + $0x38] sm:$0xf]
        %v8199 = vld [vmem:[%s290 + $0x3c] sm:$0xf]
        %v8200 = vld [vmem:[%s290 + $0x40] sm:$0xf]
        %v8201 = vld [vmem:[%s290 + $0x44] sm:$0xf]
        %v8202 = vld [vmem:[%s290 + $0x48] sm:$0xf]
        %v8203 = vld [vmem:[%s290 + $0x4c] sm:$0xf]
        %v8204 = vld [vmem:[%s290 + $0x50] sm:$0xf]
        %v8205 = vld [vmem:[%s290 + $0x54] sm:$0xf]
        %v8206 = vld [vmem:[%s290 + $0x58] sm:$0xf]
        %v8207 = vld [vmem:[%s290 + $0x5c] sm:$0xf]
        %v8208 = vld [vmem:[%s290 + $0x60] sm:$0xf]
        %v8209 = vld [vmem:[%s290 + $0x64] sm:$0xf]
        %v8210 = vld [vmem:[%s290 + $0x68] sm:$0xf]
        %v8211 = vld [vmem:[%s290 + $0x6c] sm:$0xf]
        %v8212 = vld [vmem:[%s290 + $0x70] sm:$0xf]
        %v8213 = vld [vmem:[%s290 + $0x74] sm:$0xf]
        %v8214 = vld [vmem:[%s290 + $0x78] sm:$0xf]
        %v8215 = vld [vmem:[%s290 + $0x7c] sm:$0xf]
        %v8216 = vunpack.c.l.bf16 %v8184
        %v8217 = vunpack.c.l.bf16 %v8185
        %v8218 = vunpack.c.l.bf16 %v8186
        %v8219 = vunpack.c.l.bf16 %v8187
        %v8220 = vunpack.c.l.bf16 %v8188
        %v8221 = vunpack.c.l.bf16 %v8189
        %v8222 = vunpack.c.l.bf16 %v8190
        %v8223 = vunpack.c.l.bf16 %v8191
        %v8224 = vunpack.c.l.bf16 %v8192
        %v8225 = vunpack.c.l.bf16 %v8193
        %v8226 = vunpack.c.l.bf16 %v8194
        %v8227 = vunpack.c.l.bf16 %v8195
        %v8228 = vunpack.c.l.bf16 %v8196
        %v8229 = vunpack.c.l.bf16 %v8197
        %v8230 = vunpack.c.l.bf16 %v8198
        %v8231 = vunpack.c.l.bf16 %v8199
        %v8232 = vunpack.c.l.bf16 %v8200
        %v8233 = vunpack.c.l.bf16 %v8201
        %v8234 = vunpack.c.l.bf16 %v8202
        %v8235 = vunpack.c.l.bf16 %v8203
        %v8236 = vunpack.c.l.bf16 %v8204
        %v8237 = vunpack.c.l.bf16 %v8205
        %v8238 = vunpack.c.l.bf16 %v8206
        %v8239 = vunpack.c.l.bf16 %v8207
        %v8240 = vunpack.c.l.bf16 %v8208
        %v8241 = vunpack.c.l.bf16 %v8209
        %v8242 = vunpack.c.l.bf16 %v8210
        %v8243 = vunpack.c.l.bf16 %v8211
        %v8244 = vunpack.c.l.bf16 %v8212
        %v8245 = vunpack.c.l.bf16 %v8213
        %v8246 = vunpack.c.l.bf16 %v8214
        %v8247 = vunpack.c.l.bf16 %v8215
        %v8248 = vadd.f32 %v8152, %v8216
        %v8249 = vadd.f32 %v8153, %v8217
        %v8250 = vadd.f32 %v8154, %v8218
        %v8251 = vadd.f32 %v8155, %v8219
        %v8252 = vadd.f32 %v8156, %v8220
        %v8253 = vadd.f32 %v8157, %v8221
        %v8254 = vadd.f32 %v8158, %v8222
        %v8255 = vadd.f32 %v8159, %v8223
        %v8256 = vadd.f32 %v8160, %v8224
        %v8257 = vadd.f32 %v8161, %v8225
        %v8258 = vadd.f32 %v8162, %v8226
        %v8259 = vadd.f32 %v8163, %v8227
        %v8260 = vadd.f32 %v8164, %v8228
        %v8261 = vadd.f32 %v8165, %v8229
        %v8262 = vadd.f32 %v8166, %v8230
        %v8263 = vadd.f32 %v8167, %v8231
        %v8264 = vadd.f32 %v8168, %v8232
        %v8265 = vadd.f32 %v8169, %v8233
        %v8266 = vadd.f32 %v8170, %v8234
        %v8267 = vadd.f32 %v8171, %v8235
        %v8268 = vadd.f32 %v8172, %v8236
        %v8269 = vadd.f32 %v8173, %v8237
        %v8270 = vadd.f32 %v8174, %v8238
        %v8271 = vadd.f32 %v8175, %v8239
        %v8272 = vadd.f32 %v8176, %v8240
        %v8273 = vadd.f32 %v8177, %v8241
        %v8274 = vadd.f32 %v8178, %v8242
        %v8275 = vadd.f32 %v8179, %v8243
        %v8276 = vadd.f32 %v8180, %v8244
        %v8277 = vadd.f32 %v8181, %v8245
        %v8278 = vadd.f32 %v8182, %v8246
        %v8279 = vadd.f32 %v8183, %v8247
        %v8280 = vmax.f32 %v8248, 0.0
        %v8281 = vmax.f32 %v8249, 0.0
        %v8282 = vmax.f32 %v8250, 0.0
        %v8283 = vmax.f32 %v8251, 0.0
        %v8284 = vmax.f32 %v8252, 0.0
        %v8285 = vmax.f32 %v8253, 0.0
        %v8286 = vmax.f32 %v8254, 0.0
        %v8287 = vmax.f32 %v8255, 0.0
        %v8288 = vmax.f32 %v8256, 0.0
        %v8289 = vmax.f32 %v8257, 0.0
        %v8290 = vmax.f32 %v8258, 0.0
        %v8291 = vmax.f32 %v8259, 0.0
        %v8292 = vmax.f32 %v8260, 0.0
        %v8293 = vmax.f32 %v8261, 0.0
        %v8294 = vmax.f32 %v8262, 0.0
        %v8295 = vmax.f32 %v8263, 0.0
        %v8296 = vmax.f32 %v8264, 0.0
        %v8297 = vmax.f32 %v8265, 0.0
        %v8298 = vmax.f32 %v8266, 0.0
        %v8299 = vmax.f32 %v8267, 0.0
        %v8300 = vmax.f32 %v8268, 0.0
        %v8301 = vmax.f32 %v8269, 0.0
        %v8302 = vmax.f32 %v8270, 0.0
        %v8303 = vmax.f32 %v8271, 0.0
        %v8304 = vmax.f32 %v8272, 0.0
        %v8305 = vmax.f32 %v8273, 0.0
        %v8306 = vmax.f32 %v8274, 0.0
        %v8307 = vmax.f32 %v8275, 0.0
        %v8308 = vmax.f32 %v8276, 0.0
        %v8309 = vmax.f32 %v8277, 0.0
        %v8310 = vmax.f32 %v8278, 0.0
        %v8311 = vmax.f32 %v8279, 0.0
        %v8312 = vpack.c.bf16 %v8280, %v8280
        %v8313 = vpack.c.bf16 %v8281, %v8281
        %v8314 = vpack.c.bf16 %v8282, %v8282
        %v8315 = vpack.c.bf16 %v8283, %v8283
        %v8316 = vpack.c.bf16 %v8284, %v8284
        %v8317 = vpack.c.bf16 %v8285, %v8285
        %v8318 = vpack.c.bf16 %v8286, %v8286
        %v8319 = vpack.c.bf16 %v8287, %v8287
        %v8320 = vpack.c.bf16 %v8288, %v8288
        %v8321 = vpack.c.bf16 %v8289, %v8289
        %v8322 = vpack.c.bf16 %v8290, %v8290
        %v8323 = vpack.c.bf16 %v8291, %v8291
        %v8324 = vpack.c.bf16 %v8292, %v8292
        %v8325 = vpack.c.bf16 %v8293, %v8293
        %v8326 = vpack.c.bf16 %v8294, %v8294
        %v8327 = vpack.c.bf16 %v8295, %v8295
        %v8328 = vpack.c.bf16 %v8296, %v8296
        %v8329 = vpack.c.bf16 %v8297, %v8297
        %v8330 = vpack.c.bf16 %v8298, %v8298
        %v8331 = vpack.c.bf16 %v8299, %v8299
        %v8332 = vpack.c.bf16 %v8300, %v8300
        %v8333 = vpack.c.bf16 %v8301, %v8301
        %v8334 = vpack.c.bf16 %v8302, %v8302
        %v8335 = vpack.c.bf16 %v8303, %v8303
        %v8336 = vpack.c.bf16 %v8304, %v8304
        %v8337 = vpack.c.bf16 %v8305, %v8305
        %v8338 = vpack.c.bf16 %v8306, %v8306
        %v8339 = vpack.c.bf16 %v8307, %v8307
        %v8340 = vpack.c.bf16 %v8308, %v8308
        %v8341 = vpack.c.bf16 %v8309, %v8309
        %v8342 = vpack.c.bf16 %v8310, %v8310
        %v8343 = vpack.c.bf16 %v8311, %v8311
        %8344 = vst [vmem:[%s331] sm:$0xf] %v8312
        %8345 = vst [vmem:[%s331 + $0x4] sm:$0xf] %v8313
        %8346 = vst [vmem:[%s331 + $0x8] sm:$0xf] %v8314
        %8347 = vst [vmem:[%s331 + $0xc] sm:$0xf] %v8315
        %8348 = vst [vmem:[%s331 + $0x10] sm:$0xf] %v8316
        %8349 = vst [vmem:[%s331 + $0x14] sm:$0xf] %v8317
        %8350 = vst [vmem:[%s331 + $0x18] sm:$0xf] %v8318
        %8351 = vst [vmem:[%s331 + $0x1c] sm:$0xf] %v8319
        %8352 = vst [vmem:[%s331 + $0x20] sm:$0xf] %v8320
        %8353 = vst [vmem:[%s331 + $0x24] sm:$0xf] %v8321
        %8354 = vst [vmem:[%s331 + $0x28] sm:$0xf] %v8322
        %8355 = vst [vmem:[%s331 + $0x2c] sm:$0xf] %v8323
        %8356 = vst [vmem:[%s331 + $0x30] sm:$0xf] %v8324
        %8357 = vst [vmem:[%s331 + $0x34] sm:$0xf] %v8325
        %8358 = vst [vmem:[%s331 + $0x38] sm:$0xf] %v8326
        %8359 = vst [vmem:[%s331 + $0x3c] sm:$0xf] %v8327
        %8360 = vst [vmem:[%s331 + $0x40] sm:$0xf] %v8328
        %8361 = vst [vmem:[%s331 + $0x44] sm:$0xf] %v8329
        %8362 = vst [vmem:[%s331 + $0x48] sm:$0xf] %v8330
        %8363 = vst [vmem:[%s331 + $0x4c] sm:$0xf] %v8331
        %8364 = vst [vmem:[%s331 + $0x50] sm:$0xf] %v8332
        %8365 = vst [vmem:[%s331 + $0x54] sm:$0xf] %v8333
        %8366 = vst [vmem:[%s331 + $0x58] sm:$0xf] %v8334
        %8367 = vst [vmem:[%s331 + $0x5c] sm:$0xf] %v8335
        %8368 = vst [vmem:[%s331 + $0x60] sm:$0xf] %v8336
        %8369 = vst [vmem:[%s331 + $0x64] sm:$0xf] %v8337
        %8370 = vst [vmem:[%s331 + $0x68] sm:$0xf] %v8338
        %8371 = vst [vmem:[%s331 + $0x6c] sm:$0xf] %v8339
        %8372 = vst [vmem:[%s331 + $0x70] sm:$0xf] %v8340
        %8373 = vst [vmem:[%s331 + $0x74] sm:$0xf] %v8341
        %8374 = vst [vmem:[%s331 + $0x78] sm:$0xf] %v8342
        %8375 = vst [vmem:[%s331 + $0x7c] sm:$0xf] %v8343
        %s8376 = sand.u32 %s185, 1
        %s8377 = scalar_lea.sflag [#allocation6], %s8376
        %s8378 = sand.u32 %s185, 1
        %s8379 = smul.addr %s8378, 128
        %s8380 = scalar_lea.vmem [#allocation10], %s8379
        // Predicated region
        $region61: #{tpu_custom_call.1} parent=47 // pred_check
          %p8381 = pneg %p195
        $region62: #{tpu_custom_call.1} parent=47 // pred_check_branch
          %8383 = sbr.rel (%p8381) target = $region64
        $region63: #{tpu_custom_call.1} parent=47 // pred_region
          %8385 = vsyncadd %s8377, 0
          %s8386 = smul.addr %s25, 32
          %s8387 = smul.addr %s8386, 4
          %s8388 = scalar_lea.hbm %s7, %s8387
          %s8389 = sshll.u32 %s8380, 4
          %s8390 = int_to_ptr.vmem [resolvable:$true] %s8389
          %s8391 = sshll.u32 %s8388, 4
          %s8392 = int_to_ptr.hbm [resolvable:$true] %s8391
          %8397 = dma.vmem_to_hbm [thread:$0]  %s8390, 2048, %s8392, %s8377, 64, 64, 4
        $region64: #{tpu_custom_call.1} parent=47 // pred_fallthru
          _
      $region48: #{tpu_custom_call.1} parent=5 // pred_fallthru
        _
      %p8398 = scmp.le.s32.totalorder 2, %s20
      // Predicated region
      $region65: #{tpu_custom_call.1} parent=5 // pred_check
        %p8399 = pneg %p8398
      $region66: #{tpu_custom_call.1} parent=5 // pred_check_branch
        %8401 = sbr.rel (%p8399) target = $region68
      $region67: #{tpu_custom_call.1} parent=5 // pred_region
        %s8402 = ssub.s32 %s20, 2
        // Predicated region
        $region69: #{tpu_custom_call.1} parent=67 // pred_check
          %p8403 = pneg %p201
        $region70: #{tpu_custom_call.1} parent=67 // pred_check_branch
          %8405 = sbr.rel (%p8403) target = $region72
        $region71: #{tpu_custom_call.1} parent=67 // pred_region
          %s8406 = sand.u32 %s186, 1
          %s8407 = scalar_lea.sflag [#allocation6], %s8406
          %s8408 = sand.u32 %s186, 1
          %s8409 = smul.addr %s8408, 128
          %s8410 = scalar_lea.vmem [#allocation10], %s8409
          %8412 = dma.done %s8407, 2048
        $region72: #{tpu_custom_call.1} parent=67 // pred_fallthru
          _
      $region68: #{tpu_custom_call.1} parent=5 // pred_fallthru
        _
    $region6: #{tpu_custom_call.1} parent=1 // loop_footer
      %s24 = sadd.s32 1, %s20
    $region7: #{tpu_custom_call.1} parent=1 // loop_footer_branch
      %19 = sbr.rel target = $region3
    $region8: #{tpu_custom_call.1} parent=1 // loop_exit
      _
    %8413 = vsyncpa [#allocation5], 1
    %s8414 = scalar_lea.sflag [#allocation5], 1
    %8415 = vsyncpa %s8414, 1
    %8416 = vsyncpa [#allocation8], 1
    %8417 = vsyncpa [#allocation6], 1
    %s8418 = scalar_lea.sflag [#allocation6], 1
    %8419 = vsyncpa %s8418, 1

</llo_original>
